<compile_context>
chip_gen: v7x
topology: tpu7x:2x2x1
jax: 0.10.0
libtpu: 0.0.40
codegen_flags: <defaults>
</compile_context>

<pallas_src>
import jax
import jax.numpy as jnp
from jax.experimental import pallas as pl
from jax.experimental.pallas import tpu as pltpu


LAYER_DIMS = [(5008, 2000), (2000, 500), (500, 100), (100, 20), (20, 2)]
_VMEM_LIMIT = 40 * 1024 * 1024


def _round_up(v, m):
    return ((v + m - 1) // m) * m


def _is_multi_tensorcore_chip():
    """v7x has 2 TensorCores per chip; v5e/v6e have 1. Fall back to fused path."""
    try:
        kind = jax.devices()[0].device_kind.lower()
    except Exception:
        return False
    return "v7" in kind


# --------------------------------------------------------------------------
# Default path: whole network in ONE pallas_call.
# Grid = (K1 // tk,): layer-1 K-reduction only (full-N output block resident
# in a VMEM scratch accumulator). Tail weights are resident (constant
# index_map) and the tail runs in the epilogue on the last k step.
# --------------------------------------------------------------------------
def _ann_fused_kernel(x_ref, w1_ref, b1_ref, w2_ref, b2_ref, w3_ref, b3_ref,
                      w4_ref, b4_ref, w5_ref, b5_ref, o_ref, h_ref):
    k = pl.program_id(0)

    @pl.when(k == 0)
    def _():
        h_ref[...] = jnp.zeros_like(h_ref)

    # bf16 weights, f32 activations -> f32 accumulation.
    h_ref[...] += jnp.dot(x_ref[...], w1_ref[...],
                          preferred_element_type=jnp.float32)

    @pl.when(k == pl.num_programs(0) - 1)
    def _():
        h = jnp.maximum(h_ref[...] + b1_ref[...], 0.0)
        h = jnp.maximum(
            jnp.dot(h, w2_ref[...], preferred_element_type=jnp.float32)
            + b2_ref[...], 0.0)
        h = jnp.maximum(
            jnp.dot(h, w3_ref[...], preferred_element_type=jnp.float32)
            + b3_ref[...], 0.0)
        h = jnp.maximum(
            jnp.dot(h, w4_ref[...], preferred_element_type=jnp.float32)
            + b4_ref[...], 0.0)
        o_ref[...] = (
            jnp.dot(h, w5_ref[...], preferred_element_type=jnp.float32)
            + b5_ref[...]).astype(o_ref.dtype)


def ann_fused_pallas(xp, weights, *, tk=1024):
    """xp: (M, K1) f32 padded; weights: [(W_bf16_pad, b_f32_pad), ...] x 5."""
    M, K1 = xp.shape
    w1, b1 = weights[0]
    K1w, N1 = w1.shape
    assert K1 == K1w and M % 8 == 0 and K1 % 128 == 0 and N1 % 128 == 0

    tk = min(tk, K1)
    assert K1 % tk == 0
    nk = K1 // tk

    in_specs = [
        pl.BlockSpec((M, tk), lambda k: (0, k)),       # x, streamed along K
        pl.BlockSpec((tk, N1), lambda k: (k, 0)),      # W1 tile, streamed along K
        pl.BlockSpec((1, N1), lambda k: (0, 0)),       # b1, resident
    ]
    args = [xp, w1, b1.reshape(1, N1)]
    for (w, b) in weights[1:]:
        kp, np_ = w.shape
        assert kp % 128 == 0 and np_ % 128 == 0 and b.shape == (np_,)
        in_specs.append(pl.BlockSpec((kp, np_), lambda k: (0, 0)))  # resident
        in_specs.append(pl.BlockSpec((1, np_), lambda k: (0, 0)))   # resident
        args.append(w)
        args.append(b.reshape(1, np_))

    n_out = weights[-1][0].shape[1]
    return pl.pallas_call(
        _ann_fused_kernel,
        out_shape=jax.ShapeDtypeStruct((M, n_out), jnp.float32),
        grid_spec=pltpu.PrefetchScalarGridSpec(
            num_scalar_prefetch=0,
            grid=(nk,),                                # reduction axis only
            in_specs=in_specs,
            out_specs=pl.BlockSpec((M, n_out), lambda k: (0, 0)),
            scratch_shapes=[pltpu.VMEM((M, N1), jnp.float32)],
        ),
        compiler_params=pltpu.CompilerParams(
            dimension_semantics=("arbitrary",),
            vmem_limit_bytes=_VMEM_LIMIT,
        ),
    )(*args)


# --------------------------------------------------------------------------
# v7x path (2 TensorCores): layer 1 with j=2 "parallel" N split + big tk,
# then a separate fully-resident fused tail.
# --------------------------------------------------------------------------
def _linear_relu_kernel(x_ref, w_ref, b_ref, o_ref):
    k = pl.program_id(1)

    @pl.when(k == 0)
    def _():
        o_ref[...] = jnp.zeros_like(o_ref)

    o_ref[...] += jnp.dot(x_ref[...], w_ref[...],
                          preferred_element_type=jnp.float32)

    @pl.when(k == pl.num_programs(1) - 1)
    def _():
        o_ref[...] = jnp.maximum(o_ref[...] + b_ref[...], 0.0)


def linear_relu_pallas(x, w, b, *, tn=1024, tk=2560):
    """y = relu(x @ w + b); x: (M, K) f32, w: (K, N) bf16, b: (N,) f32."""
    M, K = x.shape
    K2, N = w.shape
    assert K == K2 and b.shape == (N,)
    assert M % 8 == 0 and K % 128 == 0 and N % 128 == 0

    tn = min(N, tn)
    tk = min(K, tk)
    assert N % tn == 0 and K % tk == 0
    grid = (N // tn, K // tk)  # reduction axis (k) last

    return pl.pallas_call(
        _linear_relu_kernel,
        out_shape=jax.ShapeDtypeStruct((M, N), jnp.float32),
        grid_spec=pltpu.PrefetchScalarGridSpec(
            num_scalar_prefetch=0,
            grid=grid,
            in_specs=[
                pl.BlockSpec((M, tk), lambda j, k: (0, k)),
                pl.BlockSpec((tk, tn), lambda j, k: (k, j)),
                pl.BlockSpec((1, tn), lambda j, k: (0, j)),
            ],
            out_specs=pl.BlockSpec((M, tn), lambda j, k: (0, j)),
        ),
        compiler_params=pltpu.CompilerParams(
            dimension_semantics=("parallel", "arbitrary"),
            vmem_limit_bytes=_VMEM_LIMIT,
        ),
    )(x, w, b.reshape(1, N))


def _mlp_tail_kernel(h_ref, w2_ref, b2_ref, w3_ref, b3_ref,
                     w4_ref, b4_ref, w5_ref, b5_ref, o_ref):
    h = h_ref[...]
    h = jnp.maximum(
        jnp.dot(h, w2_ref[...], preferred_element_type=jnp.float32) + b2_ref[...], 0.0)
    h = jnp.maximum(
        jnp.dot(h, w3_ref[...], preferred_element_type=jnp.float32) + b3_ref[...], 0.0)
    h = jnp.maximum(
        jnp.dot(h, w4_ref[...], preferred_element_type=jnp.float32) + b4_ref[...], 0.0)
    o_ref[...] = (
        jnp.dot(h, w5_ref[...], preferred_element_type=jnp.float32) + b5_ref[...]
    ).astype(o_ref.dtype)


def mlp_tail_pallas(h, tail_params):
    """Fused layers 2..5, everything resident in VMEM (single grid step)."""
    M, K2 = h.shape
    assert M % 8 == 0 and K2 % 128 == 0

    in_specs = [pl.BlockSpec((M, K2), lambda i: (0, 0))]
    args = [h]
    for (w, b) in tail_params:
        kp, np_ = w.shape
        assert kp % 128 == 0 and np_ % 128 == 0 and b.shape == (np_,)
        in_specs.append(pl.BlockSpec((kp, np_), lambda i: (0, 0)))
        in_specs.append(pl.BlockSpec((1, np_), lambda i: (0, 0)))
        args.append(w)
        args.append(b.reshape(1, np_))

    n_out = tail_params[-1][0].shape[1]
    return pl.pallas_call(
        _mlp_tail_kernel,
        out_shape=jax.ShapeDtypeStruct((M, n_out), jnp.float32),
        grid_spec=pltpu.PrefetchScalarGridSpec(
            num_scalar_prefetch=0,
            grid=(1,),
            in_specs=in_specs,
            out_specs=pl.BlockSpec((M, n_out), lambda i: (0, 0)),
        ),
        compiler_params=pltpu.CompilerParams(
            dimension_semantics=("arbitrary",),
            vmem_limit_bytes=_VMEM_LIMIT,
        ),
    )(*args)


# --------------------------------------------------------------------------
# Parameter construction (deterministic, PyTorch-style uniform init) + padding
# --------------------------------------------------------------------------
def init_params(key):
    """Returns list of (W_pad_bf16 (K_pad, N_pad), b_pad_f32 (N_pad,), fan_in, fan_out)."""
    params = []
    for (fan_in, fan_out) in LAYER_DIMS:
        key, kw, kb = jax.random.split(key, 3)
        bound = 1.0 / jnp.sqrt(fan_in)
        w = jax.random.uniform(kw, (fan_in, fan_out), jnp.float32, -bound, bound)
        b = jax.random.uniform(kb, (fan_out,), jnp.float32, -bound, bound)
        kp, np_ = _round_up(fan_in, 128), _round_up(fan_out, 128)
        w_pad = jnp.zeros((kp, np_), jnp.float32).at[:fan_in, :fan_out].set(w)
        b_pad = jnp.zeros((np_,), jnp.float32).at[:fan_out].set(b)
        params.append((w_pad.astype(jnp.bfloat16), b_pad, fan_in, fan_out))
    return params


def ann_forward(x, params):
    """x: (B, 5008) float32 -> logits (B, 2)."""
    B, F = x.shape
    assert F == LAYER_DIMS[0][0]
    m_pad = _round_up(max(B, 8), 8)
    k_pad = _round_up(F, 128)
    xp = jnp.zeros((m_pad, k_pad), jnp.float32).at[:B, :F].set(x)

    weights = [(w, b) for (w, b, _, _) in params]

    if _is_multi_tensorcore_chip():
        # v7x: split N across the two TensorCores for the big layer-1 stream,
        # 2 grid steps per TC; tail fully resident in a second call.
        h = linear_relu_pallas(xp, weights[0][0], weights[0][1], tn=1024, tk=2560)
        logits_pad = mlp_tail_pallas(h, weights[1:])
    else:
        # v5e/v6e (single TC) and safe fallback: one fused call, full-N blocks,
        # K-reduction grid only, tail in the epilogue.
        logits_pad = ann_fused_pallas(xp, weights, tk=1024)

    out_dim = params[-1][3]
    return logits_pad[:B, :out_dim]


def ann_forward_ref(x, params):
    """Pure-JAX reference using the same bf16 weight values, f32 math."""
    h = x
    n_layers = len(params)
    for idx, (w, b, fin, fout) in enumerate(params):
        wf = w[:fin, :fout].astype(jnp.float32)
        h = jnp.dot(h, wf, precision=jax.lax.Precision.HIGHEST) + b[:fout]
        if idx < n_layers - 1:
            h = jnp.maximum(h, 0.0)
    return h


# --------------------------------------------------------------------------
if __name__ == "__main__":
    key = jax.random.PRNGKey(0)
    key, kx = jax.random.split(key)

    B = 4
    x = jax.random.normal(kx, (B, 5008), jnp.float32)

    params = init_params(key)

    out = ann_forward(x, params)
    out = jax.block_until_ready(out)

    ref = ann_forward_ref(x, params)
    assert out.shape == (B, 2)
    assert jnp.allclose(out, ref, atol=5e-3, rtol=5e-3), "mismatch vs reference"

    print("KERNEL_OK")
</pallas_src>

<mosaic_0001>
module attributes {stable_mosaic.version = 11 : i64} {
  func.func @_ann_fused_kernel(%arg0: i32, %arg1: memref<8x1024xf32, #tpu.memory_space<vmem>>, %arg2: memref<1024x2048xbf16, #tpu.memory_space<vmem>>, %arg3: memref<1x2048xf32, #tpu.memory_space<vmem>>, %arg4: memref<2048x512xbf16, #tpu.memory_space<vmem>>, %arg5: memref<1x512xf32, #tpu.memory_space<vmem>>, %arg6: memref<512x128xbf16, #tpu.memory_space<vmem>>, %arg7: memref<1x128xf32, #tpu.memory_space<vmem>>, %arg8: memref<128x128xbf16, #tpu.memory_space<vmem>>, %arg9: memref<1x128xf32, #tpu.memory_space<vmem>>, %arg10: memref<128x128xbf16, #tpu.memory_space<vmem>>, %arg11: memref<1x128xf32, #tpu.memory_space<vmem>>, %arg12: memref<8x128xf32, #tpu.memory_space<vmem>>, %arg13: memref<8x2048xf32, #tpu.memory_space<vmem>>) attributes {dimension_semantics = [#tpu.dimension_semantics<arbitrary>], iteration_bounds = array<i64: 5>, scalar_prefetch = 0 : i64, scratch_operands = 1 : i64, tpu.core_type = #tpu.core_type<tc>, window_params = [{transform_indices = @transform_0, window_bounds = array<i64: 8, 1024>}, {transform_indices = @transform_1, window_bounds = array<i64: 1024, 2048>}, {pipeline_mode = #tpu.pipeline_mode<synchronous>, transform_indices = @transform_2, window_bounds = array<i64: 1, 2048>}, {pipeline_mode = #tpu.pipeline_mode<synchronous>, transform_indices = @transform_3, window_bounds = array<i64: 2048, 512>}, {pipeline_mode = #tpu.pipeline_mode<synchronous>, transform_indices = @transform_4, window_bounds = array<i64: 1, 512>}, {pipeline_mode = #tpu.pipeline_mode<synchronous>, transform_indices = @transform_5, window_bounds = array<i64: 512, 128>}, {pipeline_mode = #tpu.pipeline_mode<synchronous>, transform_indices = @transform_6, window_bounds = array<i64: 1, 128>}, {pipeline_mode = #tpu.pipeline_mode<synchronous>, transform_indices = @transform_7, window_bounds = array<i64: 128, 128>}, {pipeline_mode = #tpu.pipeline_mode<synchronous>, transform_indices = @transform_8, window_bounds = array<i64: 1, 128>}, {pipeline_mode = #tpu.pipeline_mode<synchronous>, transform_indices = @transform_9, window_bounds = array<i64: 128, 128>}, {pipeline_mode = #tpu.pipeline_mode<synchronous>, transform_indices = @transform_10, window_bounds = array<i64: 1, 128>}, {pipeline_mode = #tpu.pipeline_mode<synchronous>, transform_indices = @transform_11, window_bounds = array<i64: 8, 128>}]} {
    %c0_i32 = arith.constant 0 : i32
    %0 = arith.cmpi eq, %arg0, %c0_i32 : i32
    %1 = arith.extui %0 : i1 to i32
    %c0_i32_0 = arith.constant 0 : i32
    %2 = arith.cmpi ne, %1, %c0_i32_0 : i32
    scf.if %2 {
      %cst_9 = arith.constant 0.000000e+00 : f32
      %12 = vector.broadcast %cst_9 : f32 to vector<8x2048xf32>
      %c0_10 = arith.constant 0 : index
      %c0_11 = arith.constant 0 : index
      %13 = vector.load %arg13[%c0_10, %c0_11] : memref<8x2048xf32, #tpu.memory_space<vmem>>, vector<8x2048xf32>
      tpu.vector_store %arg13[%c0_10, %c0_11], %12 {strides = array<i32>} : memref<8x2048xf32, #tpu.memory_space<vmem>>, vector<8x2048xf32>,
    } else {
    }
    %c0 = arith.constant 0 : index
    %c0_1 = arith.constant 0 : index
    %3 = vector.load %arg13[%c0, %c0_1] : memref<8x2048xf32, #tpu.memory_space<vmem>>, vector<8x2048xf32>
    %c0_2 = arith.constant 0 : index
    %c0_3 = arith.constant 0 : index
    %4 = vector.load %arg1[%c0_2, %c0_3] : memref<8x1024xf32, #tpu.memory_space<vmem>>, vector<8x1024xf32>
    %c0_4 = arith.constant 0 : index
    %c0_5 = arith.constant 0 : index
    %5 = vector.load %arg2[%c0_4, %c0_5] : memref<1024x2048xbf16, #tpu.memory_space<vmem>>, vector<1024x2048xbf16>
    %cst = arith.constant dense<0.000000e+00> : vector<8x2048xf32>
    %6 = tpu.matmul %4, %5, %cst {dimension_numbers = #tpu.dot_dimension_numbers<[1], [0], [0], [1], [0, 0, 1, 1], [], []>} : vector<8x1024xf32>, vector<1024x2048xbf16>, vector<8x2048xf32> -> vector<8x2048xf32>
    %7 = arith.addf %3, %6 : vector<8x2048xf32>
    %c0_6 = arith.constant 0 : index
    %c0_7 = arith.constant 0 : index
    %8 = vector.load %arg13[%c0_6, %c0_7] : memref<8x2048xf32, #tpu.memory_space<vmem>>, vector<8x2048xf32>
    tpu.vector_store %arg13[%c0_6, %c0_7], %7 {strides = array<i32>} : memref<8x2048xf32, #tpu.memory_space<vmem>>, vector<8x2048xf32>,
    %c4_i32 = arith.constant 4 : i32
    %9 = arith.cmpi eq, %arg0, %c4_i32 : i32
    %10 = arith.extui %9 : i1 to i32
    %c0_i32_8 = arith.constant 0 : i32
    %11 = arith.cmpi ne, %10, %c0_i32_8 : i32
    scf.if %11 {
      %c0_9 = arith.constant 0 : index
      %c0_10 = arith.constant 0 : index
      %12 = vector.load %arg13[%c0_9, %c0_10] : memref<8x2048xf32, #tpu.memory_space<vmem>>, vector<8x2048xf32>
      %c0_11 = arith.constant 0 : index
      %c0_12 = arith.constant 0 : index
      %13 = vector.load %arg3[%c0_11, %c0_12] : memref<1x2048xf32, #tpu.memory_space<vmem>>, vector<1x2048xf32>
      %14 = vector.broadcast %13 : vector<1x2048xf32> to vector<8x2048xf32>
      %15 = arith.addf %12, %14 : vector<8x2048xf32>
      %cst_13 = arith.constant 0.000000e+00 : f32
      %16 = vector.broadcast %cst_13 : f32 to vector<8x2048xf32>
      %17 = arith.maximumf %15, %16 : vector<8x2048xf32>
      %c0_14 = arith.constant 0 : index
      %c0_15 = arith.constant 0 : index
      %18 = vector.load %arg4[%c0_14, %c0_15] : memref<2048x512xbf16, #tpu.memory_space<vmem>>, vector<2048x512xbf16>
      %cst_16 = arith.constant dense<0.000000e+00> : vector<8x512xf32>
      %19 = tpu.matmul %17, %18, %cst_16 {dimension_numbers = #tpu.dot_dimension_numbers<[1], [0], [0], [1], [0, 0, 1, 1], [], []>} : vector<8x2048xf32>, vector<2048x512xbf16>, vector<8x512xf32> -> vector<8x512xf32>
      %c0_17 = arith.constant 0 : index
      %c0_18 = arith.constant 0 : index
      %20 = vector.load %arg5[%c0_17, %c0_18] : memref<1x512xf32, #tpu.memory_space<vmem>>, vector<1x512xf32>
      %21 = vector.broadcast %20 : vector<1x512xf32> to vector<8x512xf32>
      %22 = arith.addf %19, %21 : vector<8x512xf32>
      %cst_19 = arith.constant 0.000000e+00 : f32
      %23 = vector.broadcast %cst_19 : f32 to vector<8x512xf32>
      %24 = arith.maximumf %22, %23 : vector<8x512xf32>
      %c0_20 = arith.constant 0 : index
      %c0_21 = arith.constant 0 : index
      %25 = vector.load %arg6[%c0_20, %c0_21] : memref<512x128xbf16, #tpu.memory_space<vmem>>, vector<512x128xbf16>
      %cst_22 = arith.constant dense<0.000000e+00> : vector<8x128xf32>
      %26 = tpu.matmul %24, %25, %cst_22 {dimension_numbers = #tpu.dot_dimension_numbers<[1], [0], [0], [1], [0, 0, 1, 1], [], []>} : vector<8x512xf32>, vector<512x128xbf16>, vector<8x128xf32> -> vector<8x128xf32>
      %c0_23 = arith.constant 0 : index
      %c0_24 = arith.constant 0 : index
      %27 = vector.load %arg7[%c0_23, %c0_24] : memref<1x128xf32, #tpu.memory_space<vmem>>, vector<1x128xf32>
      %28 = vector.broadcast %27 : vector<1x128xf32> to vector<8x128xf32>
      %29 = arith.addf %26, %28 : vector<8x128xf32>
      %cst_25 = arith.constant 0.000000e+00 : f32
      %30 = vector.broadcast %cst_25 : f32 to vector<8x128xf32>
      %31 = arith.maximumf %29, %30 : vector<8x128xf32>
      %c0_26 = arith.constant 0 : index
      %c0_27 = arith.constant 0 : index
      %32 = vector.load %arg8[%c0_26, %c0_27] : memref<128x128xbf16, #tpu.memory_space<vmem>>, vector<128x128xbf16>
      %cst_28 = arith.constant dense<0.000000e+00> : vector<8x128xf32>
      %33 = tpu.matmul %31, %32, %cst_28 {dimension_numbers = #tpu.dot_dimension_numbers<[1], [0], [0], [1], [0, 0, 1, 1], [], []>} : vector<8x128xf32>, vector<128x128xbf16>, vector<8x128xf32> -> vector<8x128xf32>
      %c0_29 = arith.constant 0 : index
      %c0_30 = arith.constant 0 : index
      %34 = vector.load %arg9[%c0_29, %c0_30] : memref<1x128xf32, #tpu.memory_space<vmem>>, vector<1x128xf32>
      %35 = vector.broadcast %34 : vector<1x128xf32> to vector<8x128xf32>
      %36 = arith.addf %33, %35 : vector<8x128xf32>
      %cst_31 = arith.constant 0.000000e+00 : f32
      %37 = vector.broadcast %cst_31 : f32 to vector<8x128xf32>
      %38 = arith.maximumf %36, %37 : vector<8x128xf32>
      %c0_32 = arith.constant 0 : index
      %c0_33 = arith.constant 0 : index
      %39 = vector.load %arg10[%c0_32, %c0_33] : memref<128x128xbf16, #tpu.memory_space<vmem>>, vector<128x128xbf16>
      %cst_34 = arith.constant dense<0.000000e+00> : vector<8x128xf32>
      %40 = tpu.matmul %38, %39, %cst_34 {dimension_numbers = #tpu.dot_dimension_numbers<[1], [0], [0], [1], [0, 0, 1, 1], [], []>} : vector<8x128xf32>, vector<128x128xbf16>, vector<8x128xf32> -> vector<8x128xf32>
      %c0_35 = arith.constant 0 : index
      %c0_36 = arith.constant 0 : index
      %41 = vector.load %arg11[%c0_35, %c0_36] : memref<1x128xf32, #tpu.memory_space<vmem>>, vector<1x128xf32>
      %42 = vector.broadcast %41 : vector<1x128xf32> to vector<8x128xf32>
      %43 = arith.addf %40, %42 : vector<8x128xf32>
      %c0_37 = arith.constant 0 : index
      %c0_38 = arith.constant 0 : index
      %44 = vector.load %arg12[%c0_37, %c0_38] : memref<8x128xf32, #tpu.memory_space<vmem>>, vector<8x128xf32>
      tpu.vector_store %arg12[%c0_37, %c0_38], %43 {strides = array<i32>} : memref<8x128xf32, #tpu.memory_space<vmem>>, vector<8x128xf32>,
    } else {
    }
    return
  }
  func.func @transform_0(%arg0: i32) -> (i32, i32) {
    %c0_i32 = arith.constant 0 : i32
    %c0_i32_0 = arith.constant 0 : i32
    return %c0_i32, %arg0 : i32, i32
  }
  func.func @transform_1(%arg0: i32) -> (i32, i32) {
    %c0_i32 = arith.constant 0 : i32
    %c0_i32_0 = arith.constant 0 : i32
    return %arg0, %c0_i32 : i32, i32
  }
  func.func @transform_2(%arg0: i32) -> (i32, i32) {
    %c0_i32 = arith.constant 0 : i32
    %c0_i32_0 = arith.constant 0 : i32
    %c0_i32_1 = arith.constant 0 : i32
    return %c0_i32, %c0_i32_0 : i32, i32
  }
  func.func @transform_3(%arg0: i32) -> (i32, i32) {
    %c0_i32 = arith.constant 0 : i32
    %c0_i32_0 = arith.constant 0 : i32
    %c0_i32_1 = arith.constant 0 : i32
    return %c0_i32, %c0_i32_0 : i32, i32
  }
  func.func @transform_4(%arg0: i32) -> (i32, i32) {
    %c0_i32 = arith.constant 0 : i32
    %c0_i32_0 = arith.constant 0 : i32
    %c0_i32_1 = arith.constant 0 : i32
    return %c0_i32, %c0_i32_0 : i32, i32
  }
  func.func @transform_5(%arg0: i32) -> (i32, i32) {
    %c0_i32 = arith.constant 0 : i32
    %c0_i32_0 = arith.constant 0 : i32
    %c0_i32_1 = arith.constant 0 : i32
    return %c0_i32, %c0_i32_0 : i32, i32
  }
  func.func @transform_6(%arg0: i32) -> (i32, i32) {
    %c0_i32 = arith.constant 0 : i32
    %c0_i32_0 = arith.constant 0 : i32
    %c0_i32_1 = arith.constant 0 : i32
    return %c0_i32, %c0_i32_0 : i32, i32
  }
  func.func @transform_7(%arg0: i32) -> (i32, i32) {
    %c0_i32 = arith.constant 0 : i32
    %c0_i32_0 = arith.constant 0 : i32
    %c0_i32_1 = arith.constant 0 : i32
    return %c0_i32, %c0_i32_0 : i32, i32
  }
  func.func @transform_8(%arg0: i32) -> (i32, i32) {
    %c0_i32 = arith.constant 0 : i32
    %c0_i32_0 = arith.constant 0 : i32
    %c0_i32_1 = arith.constant 0 : i32
    return %c0_i32, %c0_i32_0 : i32, i32
  }
  func.func @transform_9(%arg0: i32) -> (i32, i32) {
    %c0_i32 = arith.constant 0 : i32
    %c0_i32_0 = arith.constant 0 : i32
    %c0_i32_1 = arith.constant 0 : i32
    return %c0_i32, %c0_i32_0 : i32, i32
  }
  func.func @transform_10(%arg0: i32) -> (i32, i32) {
    %c0_i32 = arith.constant 0 : i32
    %c0_i32_0 = arith.constant 0 : i32
    %c0_i32_1 = arith.constant 0 : i32
    return %c0_i32, %c0_i32_0 : i32, i32
  }
  func.func @transform_11(%arg0: i32) -> (i32, i32) {
    %c0_i32 = arith.constant 0 : i32
    %c0_i32_0 = arith.constant 0 : i32
    %c0_i32_1 = arith.constant 0 : i32
    return %c0_i32, %c0_i32_0 : i32, i32
  }
}

</mosaic_0001>

<llo_original>
// kernel: tpu_custom_call.1
$region0: #{tpu_custom_call.1}
  #allocation0 [shape = 'u32[]', space=smem, size = 0x4, offset = 0x4, fixed_abs, tag = 'smem constant byte address 0x4 - core index']
  #allocation1 [shape = 'u32[144,128]{1,0:T(1,128)}', space=vmem, size = 0x12000, scoped, tag = 'internal scratch']
  #allocation2 [shape = 'f32[8,2048]{1,0:T(8,128)}', space=vmem, size = 0x10000, scoped, tag = 'scratch operand']
  %s0 = inlined_call_operand.hbm [shape: f32[8,5120], index: 0, kind: input, shape index: {}]
  %s1 = inlined_call_operand.hbm [shape: bf16[5120,2048], index: 1, kind: input, shape index: {}]
  %s2 = inlined_call_operand.hbm [shape: f32[1,2048], index: 2, kind: input, shape index: {}]
  %s3 = inlined_call_operand.hbm [shape: bf16[2048,512], index: 3, kind: input, shape index: {}]
  %s4 = inlined_call_operand.hbm [shape: f32[1,512], index: 4, kind: input, shape index: {}]
  %s5 = inlined_call_operand.hbm [shape: bf16[512,128], index: 5, kind: input, shape index: {}]
  %s6 = inlined_call_operand.hbm [shape: f32[1,128], index: 6, kind: input, shape index: {}]
  %s7 = inlined_call_operand.hbm [shape: bf16[128,128], index: 7, kind: input, shape index: {}]
  %s8 = inlined_call_operand.hbm [shape: f32[1,128], index: 8, kind: input, shape index: {}]
  %s9 = inlined_call_operand.hbm [shape: bf16[128,128], index: 9, kind: input, shape index: {}]
  %s10 = inlined_call_operand.hbm [shape: f32[1,128], index: 10, kind: input, shape index: {}]
  %s11 = inlined_call_operand.hbm [shape: f32[8,128], index: 11, kind: output, shape index: {}]
  %s12 = sld [smem:[#allocation0]]
  $region129: #{tpu_custom_call.1} parent=0
    _
  %s14 = ssub.s32 1, %s12
  %s15 = scalar_select 0, %s14, %s12
  $region1: #{tpu_custom_call.1} parent=0
    #allocation3 [shape = 'u8[65536]{0}', space=vmem, size = 0x10000, scoped, tag = 'input window, operand 0']
    #allocation4 [shape = 's32[2]{0}', space=sflag, size = 0x8, scoped, tag = 'scoped memory for tpu_custom_call.1']
    #allocation5 [shape = 's32[2]{0}', space=sflag, size = 0x8, scoped, tag = 'scoped memory for tpu_custom_call.1']
    #allocation6 [shape = 'u8[8388608]{0}', space=vmem, size = 0x800000, scoped, tag = 'input window, operand 1']
    #allocation7 [shape = 's32[2]{0}', space=sflag, size = 0x8, scoped, tag = 'scoped memory for tpu_custom_call.1']
    #allocation8 [shape = 'u8[8192]{0}', space=vmem, size = 0x2000, scoped, tag = 'input window, operand 2, single buffered']
    #allocation9 [shape = 'u8[2097152]{0}', space=vmem, size = 0x200000, scoped, tag = 'input window, operand 3, single buffered']
    #allocation10 [shape = 's32[1]{0}', space=sflag, size = 0x4, scoped, tag = 'scoped memory for tpu_custom_call.1']
    #allocation11 [shape = 'u8[2048]{0}', space=vmem, size = 0x800, scoped, tag = 'input window, operand 4, single buffered']
    #allocation12 [shape = 'u8[131072]{0}', space=vmem, size = 0x20000, scoped, tag = 'input window, operand 5, single buffered']
    #allocation13 [shape = 's32[1]{0}', space=sflag, size = 0x4, scoped, tag = 'scoped memory for tpu_custom_call.1']
    #allocation14 [shape = 'u8[512]{0}', space=vmem, size = 0x400, scoped, tag = 'input window, operand 6, single buffered']
    #allocation15 [shape = 'u8[32768]{0}', space=vmem, size = 0x8000, scoped, tag = 'input window, operand 7, single buffered']
    #allocation16 [shape = 's32[1]{0}', space=sflag, size = 0x4, scoped, tag = 'scoped memory for tpu_custom_call.1']
    #allocation17 [shape = 'u8[512]{0}', space=vmem, size = 0x400, scoped, tag = 'input window, operand 8, single buffered']
    #allocation18 [shape = 'u8[32768]{0}', space=vmem, size = 0x8000, scoped, tag = 'input window, operand 9, single buffered']
    #allocation19 [shape = 's32[1]{0}', space=sflag, size = 0x4, scoped, tag = 'scoped memory for tpu_custom_call.1']
    #allocation20 [shape = 'u8[512]{0}', space=vmem, size = 0x400, scoped, tag = 'input window, operand 10, single buffered']
    #allocation21 [shape = 'u8[4096]{0}', space=vmem, size = 0x1000, scoped, tag = 'output window, operand 0, single buffered']
    %16 = vsyncpa [#allocation4], 0
    %s17 = scalar_lea.sflag [#allocation4], 1
    %18 = vsyncpa %s17, 0
    %19 = vsyncpa [#allocation7], 0
    %s20 = scalar_lea.sflag [#allocation7], 1
    %21 = vsyncpa %s20, 0
    %22 = vsyncpa [#allocation10], 0
    %23 = vsyncpa [#allocation13], 0
    %24 = vsyncpa [#allocation16], 0
    %25 = vsyncpa [#allocation19], 0
    %26 = vsyncpa [#allocation5], 0
    loop: start=0, step=1, limit=7
    $region2: #{tpu_custom_call.1} parent=1 // loop_pre_header
      _
    $region3: #{tpu_custom_call.1} parent=1 // loop_header
      %s28 = sphi 0, %s32
      %p29 = scmp.ge.s32.totalorder %s28, 7
      %s38 = sphi 0, %s40
      %s41 = sphi 0, %s38
      %s42 = sphi 0, %s41
      %s58 = sphi 0, %s42
      %s64 = sphi 0, %s66
      %s67 = sphi 0, %s64
      %s68 = sphi 0, %s67
      %s84 = sphi 0, %s68
      %s88 = sphi 0, %s88
      %s90 = sphi 0, %s88
      %s91 = sphi 0, %s90
      %s105 = sphi 0, %s91
      %s109 = sphi 0, %s109
      %s111 = sphi 0, %s109
      %s112 = sphi 0, %s111
      %s126 = sphi 0, %s112
      %s130 = sphi 0, %s130
      %s132 = sphi 0, %s130
      %s133 = sphi 0, %s132
      %s147 = sphi 0, %s133
      %s151 = sphi 0, %s151
      %s153 = sphi 0, %s151
      %s154 = sphi 0, %s153
      %s168 = sphi 0, %s154
      %s172 = sphi 0, %s172
      %s174 = sphi 0, %s172
      %s175 = sphi 0, %s174
      %s189 = sphi 0, %s175
      %s193 = sphi 0, %s193
      %s195 = sphi 0, %s193
      %s196 = sphi 0, %s195
      %s210 = sphi 0, %s196
      %s214 = sphi 0, %s214
      %s216 = sphi 0, %s214
      %s217 = sphi 0, %s216
      %s231 = sphi 0, %s217
      %s235 = sphi 0, %s235
      %s237 = sphi 0, %s235
      %s238 = sphi 0, %s237
      %s252 = sphi 0, %s238
      %s256 = sphi 0, %s256
      %s258 = sphi 0, %s256
      %s259 = sphi 0, %s258
      %s273 = sphi 0, %s259
      %s277 = sphi 0, %s277
      %s279 = sphi 0, %s277
      %s280 = sphi 0, %s279
      %s294 = sphi 0, %s280
    $region4: #{tpu_custom_call.1} parent=1 // loop_header_branch
      %31 = sbr.rel (%p29) target = $region8
    $region5: #{tpu_custom_call.1} parent=1 // loop_body
      %s33 = ssub.s32 %s28, 1
      %s34 = ssub.s32 %s28, 2
      %s35 = sadd.s32 %s28, 1
      %s36 = ssub.s32 %s28, %s35
      %p37 = scmp.eq.s32.totalorder %s36, 0
      %s39 = sadd.s32 %s38, 1
      %s40 = scalar_select %p37, %s38, %s39
      %p43 = pneg %p37
      %p44 = scmp.eq.s32.totalorder %s28, 4
      %p45 = por %p43, %p44
      %p46 = scmp.ne.s32.totalorder %s38, %s41
      %p47 = scmp.eq.s32.totalorder %s28, 0
      %p48 = por %p46, %p47
      %p49 = scmp.ne.s32.totalorder %s38, %s41
      %p50 = scmp.eq.s32.totalorder %s33, 4
      %p51 = por %p49, %p50
      %p52 = scmp.ne.s32.totalorder %s41, %s42
      %p53 = scmp.eq.s32.totalorder %s33, 0
      %p54 = por %p52, %p53
      %p55 = scmp.ne.s32.totalorder %s41, %s42
      %p56 = scmp.eq.s32.totalorder %s34, 4
      %p57 = por %p55, %p56
      %p59 = scmp.ne.s32.totalorder %s42, %s58
      %p60 = scmp.eq.s32.totalorder %s34, 0
      %p61 = por %p59, %p60
      %s62 = ssub.s32 %s28, %s35
      %p63 = scmp.eq.s32.totalorder %s62, 0
      %s65 = sadd.s32 %s64, 1
      %s66 = scalar_select %p63, %s64, %s65
      %p69 = pneg %p63
      %p70 = scmp.eq.s32.totalorder %s28, 4
      %p71 = por %p69, %p70
      %p72 = scmp.ne.s32.totalorder %s64, %s67
      %p73 = scmp.eq.s32.totalorder %s28, 0
      %p74 = por %p72, %p73
      %p75 = scmp.ne.s32.totalorder %s64, %s67
      %p76 = scmp.eq.s32.totalorder %s33, 4
      %p77 = por %p75, %p76
      %p78 = scmp.ne.s32.totalorder %s67, %s68
      %p79 = scmp.eq.s32.totalorder %s33, 0
      %p80 = por %p78, %p79
      %p81 = scmp.ne.s32.totalorder %s67, %s68
      %p82 = scmp.eq.s32.totalorder %s34, 4
      %p83 = por %p81, %p82
      %p85 = scmp.ne.s32.totalorder %s68, %s84
      %p86 = scmp.eq.s32.totalorder %s34, 0
      %p87 = por %p85, %p86
      %s89 = sadd.s32 %s88, 1
      %p92 = scmp.eq.s32.totalorder %s28, 4
      %p93 = scmp.ne.s32.totalorder %s88, %s90
      %p94 = scmp.eq.s32.totalorder %s28, 0
      %p95 = por %p93, %p94
      %p96 = scmp.ne.s32.totalorder %s88, %s90
      %p97 = scmp.eq.s32.totalorder %s33, 4
      %p98 = por %p96, %p97
      %p99 = scmp.ne.s32.totalorder %s90, %s91
      %p100 = scmp.eq.s32.totalorder %s33, 0
      %p101 = por %p99, %p100
      %p102 = scmp.ne.s32.totalorder %s90, %s91
      %p103 = scmp.eq.s32.totalorder %s34, 4
      %p104 = por %p102, %p103
      %p106 = scmp.ne.s32.totalorder %s91, %s105
      %p107 = scmp.eq.s32.totalorder %s34, 0
      %p108 = por %p106, %p107
      %s110 = sadd.s32 %s109, 1
      %p113 = scmp.eq.s32.totalorder %s28, 4
      %p114 = scmp.ne.s32.totalorder %s109, %s111
      %p115 = scmp.eq.s32.totalorder %s28, 0
      %p116 = por %p114, %p115
      %p117 = scmp.ne.s32.totalorder %s109, %s111
      %p118 = scmp.eq.s32.totalorder %s33, 4
      %p119 = por %p117, %p118
      %p120 = scmp.ne.s32.totalorder %s111, %s112
      %p121 = scmp.eq.s32.totalorder %s33, 0
      %p122 = por %p120, %p121
      %p123 = scmp.ne.s32.totalorder %s111, %s112
      %p124 = scmp.eq.s32.totalorder %s34, 4
      %p125 = por %p123, %p124
      %p127 = scmp.ne.s32.totalorder %s112, %s126
      %p128 = scmp.eq.s32.totalorder %s34, 0
      %p129 = por %p127, %p128
      %s131 = sadd.s32 %s130, 1
      %p134 = scmp.eq.s32.totalorder %s28, 4
      %p135 = scmp.ne.s32.totalorder %s130, %s132
      %p136 = scmp.eq.s32.totalorder %s28, 0
      %p137 = por %p135, %p136
      %p138 = scmp.ne.s32.totalorder %s130, %s132
      %p139 = scmp.eq.s32.totalorder %s33, 4
      %p140 = por %p138, %p139
      %p141 = scmp.ne.s32.totalorder %s132, %s133
      %p142 = scmp.eq.s32.totalorder %s33, 0
      %p143 = por %p141, %p142
      %p144 = scmp.ne.s32.totalorder %s132, %s133
      %p145 = scmp.eq.s32.totalorder %s34, 4
      %p146 = por %p144, %p145
      %p148 = scmp.ne.s32.totalorder %s133, %s147
      %p149 = scmp.eq.s32.totalorder %s34, 0
      %p150 = por %p148, %p149
      %s152 = sadd.s32 %s151, 1
      %p155 = scmp.eq.s32.totalorder %s28, 4
      %p156 = scmp.ne.s32.totalorder %s151, %s153
      %p157 = scmp.eq.s32.totalorder %s28, 0
      %p158 = por %p156, %p157
      %p159 = scmp.ne.s32.totalorder %s151, %s153
      %p160 = scmp.eq.s32.totalorder %s33, 4
      %p161 = por %p159, %p160
      %p162 = scmp.ne.s32.totalorder %s153, %s154
      %p163 = scmp.eq.s32.totalorder %s33, 0
      %p164 = por %p162, %p163
      %p165 = scmp.ne.s32.totalorder %s153, %s154
      %p166 = scmp.eq.s32.totalorder %s34, 4
      %p167 = por %p165, %p166
      %p169 = scmp.ne.s32.totalorder %s154, %s168
      %p170 = scmp.eq.s32.totalorder %s34, 0
      %p171 = por %p169, %p170
      %s173 = sadd.s32 %s172, 1
      %p176 = scmp.eq.s32.totalorder %s28, 4
      %p177 = scmp.ne.s32.totalorder %s172, %s174
      %p178 = scmp.eq.s32.totalorder %s28, 0
      %p179 = por %p177, %p178
      %p180 = scmp.ne.s32.totalorder %s172, %s174
      %p181 = scmp.eq.s32.totalorder %s33, 4
      %p182 = por %p180, %p181
      %p183 = scmp.ne.s32.totalorder %s174, %s175
      %p184 = scmp.eq.s32.totalorder %s33, 0
      %p185 = por %p183, %p184
      %p186 = scmp.ne.s32.totalorder %s174, %s175
      %p187 = scmp.eq.s32.totalorder %s34, 4
      %p188 = por %p186, %p187
      %p190 = scmp.ne.s32.totalorder %s175, %s189
      %p191 = scmp.eq.s32.totalorder %s34, 0
      %p192 = por %p190, %p191
      %s194 = sadd.s32 %s193, 1
      %p197 = scmp.eq.s32.totalorder %s28, 4
      %p198 = scmp.ne.s32.totalorder %s193, %s195
      %p199 = scmp.eq.s32.totalorder %s28, 0
      %p200 = por %p198, %p199
      %p201 = scmp.ne.s32.totalorder %s193, %s195
      %p202 = scmp.eq.s32.totalorder %s33, 4
      %p203 = por %p201, %p202
      %p204 = scmp.ne.s32.totalorder %s195, %s196
      %p205 = scmp.eq.s32.totalorder %s33, 0
      %p206 = por %p204, %p205
      %p207 = scmp.ne.s32.totalorder %s195, %s196
      %p208 = scmp.eq.s32.totalorder %s34, 4
      %p209 = por %p207, %p208
      %p211 = scmp.ne.s32.totalorder %s196, %s210
      %p212 = scmp.eq.s32.totalorder %s34, 0
      %p213 = por %p211, %p212
      %s215 = sadd.s32 %s214, 1
      %p218 = scmp.eq.s32.totalorder %s28, 4
      %p219 = scmp.ne.s32.totalorder %s214, %s216
      %p220 = scmp.eq.s32.totalorder %s28, 0
      %p221 = por %p219, %p220
      %p222 = scmp.ne.s32.totalorder %s214, %s216
      %p223 = scmp.eq.s32.totalorder %s33, 4
      %p224 = por %p222, %p223
      %p225 = scmp.ne.s32.totalorder %s216, %s217
      %p226 = scmp.eq.s32.totalorder %s33, 0
      %p227 = por %p225, %p226
      %p228 = scmp.ne.s32.totalorder %s216, %s217
      %p229 = scmp.eq.s32.totalorder %s34, 4
      %p230 = por %p228, %p229
      %p232 = scmp.ne.s32.totalorder %s217, %s231
      %p233 = scmp.eq.s32.totalorder %s34, 0
      %p234 = por %p232, %p233
      %s236 = sadd.s32 %s235, 1
      %p239 = scmp.eq.s32.totalorder %s28, 4
      %p240 = scmp.ne.s32.totalorder %s235, %s237
      %p241 = scmp.eq.s32.totalorder %s28, 0
      %p242 = por %p240, %p241
      %p243 = scmp.ne.s32.totalorder %s235, %s237
      %p244 = scmp.eq.s32.totalorder %s33, 4
      %p245 = por %p243, %p244
      %p246 = scmp.ne.s32.totalorder %s237, %s238
      %p247 = scmp.eq.s32.totalorder %s33, 0
      %p248 = por %p246, %p247
      %p249 = scmp.ne.s32.totalorder %s237, %s238
      %p250 = scmp.eq.s32.totalorder %s34, 4
      %p251 = por %p249, %p250
      %p253 = scmp.ne.s32.totalorder %s238, %s252
      %p254 = scmp.eq.s32.totalorder %s34, 0
      %p255 = por %p253, %p254
      %s257 = sadd.s32 %s256, 1
      %p260 = scmp.eq.s32.totalorder %s28, 4
      %p261 = scmp.ne.s32.totalorder %s256, %s258
      %p262 = scmp.eq.s32.totalorder %s28, 0
      %p263 = por %p261, %p262
      %p264 = scmp.ne.s32.totalorder %s256, %s258
      %p265 = scmp.eq.s32.totalorder %s33, 4
      %p266 = por %p264, %p265
      %p267 = scmp.ne.s32.totalorder %s258, %s259
      %p268 = scmp.eq.s32.totalorder %s33, 0
      %p269 = por %p267, %p268
      %p270 = scmp.ne.s32.totalorder %s258, %s259
      %p271 = scmp.eq.s32.totalorder %s34, 4
      %p272 = por %p270, %p271
      %p274 = scmp.ne.s32.totalorder %s259, %s273
      %p275 = scmp.eq.s32.totalorder %s34, 0
      %p276 = por %p274, %p275
      %s278 = sadd.s32 %s277, 1
      %p281 = scmp.eq.s32.totalorder %s28, 4
      %p282 = scmp.ne.s32.totalorder %s277, %s279
      %p283 = scmp.eq.s32.totalorder %s28, 0
      %p284 = por %p282, %p283
      %p285 = scmp.ne.s32.totalorder %s277, %s279
      %p286 = scmp.eq.s32.totalorder %s33, 4
      %p287 = por %p285, %p286
      %p288 = scmp.ne.s32.totalorder %s279, %s280
      %p289 = scmp.eq.s32.totalorder %s33, 0
      %p290 = por %p288, %p289
      %p291 = scmp.ne.s32.totalorder %s279, %s280
      %p292 = scmp.eq.s32.totalorder %s34, 4
      %p293 = por %p291, %p292
      %p295 = scmp.ne.s32.totalorder %s280, %s294
      %p296 = scmp.eq.s32.totalorder %s34, 0
      %p297 = por %p295, %p296
      %p298 = scmp.le.s32.totalorder 1, %s28
      %p299 = scmp.lt.s32.totalorder %s28, 6
      %p300 = pnand %p298, %p299
      %p301 = pneg %p300
      // Predicated region
      $region9: #{tpu_custom_call.1} parent=5 // pred_check
        _
      $region10: #{tpu_custom_call.1} parent=5 // pred_check_branch
        %303 = sbr.rel (%p300) target = $region12
      $region11: #{tpu_custom_call.1} parent=5 // pred_region
        %s304 = ssub.s32 %s28, 1
        // Predicated region
        $region13: #{tpu_custom_call.1} parent=11 // pred_check
          %p305 = pneg %p101
        $region14: #{tpu_custom_call.1} parent=11 // pred_check_branch
          %307 = sbr.rel (%p305) target = $region16
        $region15: #{tpu_custom_call.1} parent=11 // pred_region
          %s309 = ssub.s32 256, 256
          %310 = vsyncadd [#allocation7], %s309
          %s312 = sshll.u32 [#allocation8], 4
          %s313 = int_to_ptr.vmem [resolvable:$true] %s312
          %315 = dma.hbm_to_vmem [thread:$0]  %s2, 256, %s313, [#allocation7]
        $region16: #{tpu_custom_call.1} parent=11 // pred_fallthru
          _
        // Predicated region
        $region17: #{tpu_custom_call.1} parent=11 // pred_check
          %p316 = pneg %p122
        $region18: #{tpu_custom_call.1} parent=11 // pred_check_branch
          %318 = sbr.rel (%p316) target = $region20
        $region19: #{tpu_custom_call.1} parent=11 // pred_region
          %s320 = ssub.s32 65536, 65536
          %321 = vsyncadd [#allocation10], %s320
          %s322 = sshll.u32 [#allocation9], 4
          %s323 = int_to_ptr.vmem [resolvable:$true] %s322
          %328 = dma.hbm_to_vmem [thread:$0]  %s3, 65536, %s323, [#allocation10], 256, 256, 16
        $region20: #{tpu_custom_call.1} parent=11 // pred_fallthru
          _
        // Predicated region
        $region21: #{tpu_custom_call.1} parent=11 // pred_check
          %p329 = pneg %p143
        $region22: #{tpu_custom_call.1} parent=11 // pred_check_branch
          %331 = sbr.rel (%p329) target = $region24
        $region23: #{tpu_custom_call.1} parent=11 // pred_region
          %s333 = ssub.s32 64, 64
          %334 = vsyncadd [#allocation10], %s333
          %s336 = sshll.u32 [#allocation11], 4
          %s337 = int_to_ptr.vmem [resolvable:$true] %s336
          %339 = dma.hbm_to_vmem [thread:$0]  %s4, 64, %s337, [#allocation10]
        $region24: #{tpu_custom_call.1} parent=11 // pred_fallthru
          _
        // Predicated region
        $region25: #{tpu_custom_call.1} parent=11 // pred_check
          %p340 = pneg %p164
        $region26: #{tpu_custom_call.1} parent=11 // pred_check_branch
          %342 = sbr.rel (%p340) target = $region28
        $region27: #{tpu_custom_call.1} parent=11 // pred_region
          %s344 = ssub.s32 4096, 4096
          %345 = vsyncadd [#allocation13], %s344
          %s346 = sshll.u32 [#allocation12], 4
          %s347 = int_to_ptr.vmem [resolvable:$true] %s346
          %352 = dma.hbm_to_vmem [thread:$0]  %s5, 4096, %s347, [#allocation13], 64, 64, 4
        $region28: #{tpu_custom_call.1} parent=11 // pred_fallthru
          _
        // Predicated region
        $region29: #{tpu_custom_call.1} parent=11 // pred_check
          %p353 = pneg %p185
        $region30: #{tpu_custom_call.1} parent=11 // pred_check_branch
          %355 = sbr.rel (%p353) target = $region32
        $region31: #{tpu_custom_call.1} parent=11 // pred_region
          %s357 = ssub.s32 16, 16
          %358 = vsyncadd [#allocation13], %s357
          %s360 = sshll.u32 [#allocation14], 4
          %s361 = int_to_ptr.vmem [resolvable:$true] %s360
          %363 = dma.hbm_to_vmem [thread:$0]  %s6, 16, %s361, [#allocation13]
        $region32: #{tpu_custom_call.1} parent=11 // pred_fallthru
          _
        // Predicated region
        $region33: #{tpu_custom_call.1} parent=11 // pred_check
          %p364 = pneg %p206
        $region34: #{tpu_custom_call.1} parent=11 // pred_check_branch
          %366 = sbr.rel (%p364) target = $region36
        $region35: #{tpu_custom_call.1} parent=11 // pred_region
          %s368 = ssub.s32 1024, 1024
          %369 = vsyncadd [#allocation16], %s368
          %s370 = sshll.u32 [#allocation15], 4
          %s371 = int_to_ptr.vmem [resolvable:$true] %s370
          %376 = dma.hbm_to_vmem [thread:$0]  %s7, 1024, %s371, [#allocation16], 64, 64, 4
        $region36: #{tpu_custom_call.1} parent=11 // pred_fallthru
          _
        // Predicated region
        $region37: #{tpu_custom_call.1} parent=11 // pred_check
          %p377 = pneg %p227
        $region38: #{tpu_custom_call.1} parent=11 // pred_check_branch
          %379 = sbr.rel (%p377) target = $region40
        $region39: #{tpu_custom_call.1} parent=11 // pred_region
          %s381 = ssub.s32 16, 16
          %382 = vsyncadd [#allocation16], %s381
          %s384 = sshll.u32 [#allocation17], 4
          %s385 = int_to_ptr.vmem [resolvable:$true] %s384
          %387 = dma.hbm_to_vmem [thread:$0]  %s8, 16, %s385, [#allocation16]
        $region40: #{tpu_custom_call.1} parent=11 // pred_fallthru
          _
        // Predicated region
        $region41: #{tpu_custom_call.1} parent=11 // pred_check
          %p388 = pneg %p248
        $region42: #{tpu_custom_call.1} parent=11 // pred_check_branch
          %390 = sbr.rel (%p388) target = $region44
        $region43: #{tpu_custom_call.1} parent=11 // pred_region
          %s392 = ssub.s32 1024, 1024
          %393 = vsyncadd [#allocation19], %s392
          %s394 = sshll.u32 [#allocation18], 4
          %s395 = int_to_ptr.vmem [resolvable:$true] %s394
          %400 = dma.hbm_to_vmem [thread:$0]  %s9, 1024, %s395, [#allocation19], 64, 64, 4
        $region44: #{tpu_custom_call.1} parent=11 // pred_fallthru
          _
        // Predicated region
        $region45: #{tpu_custom_call.1} parent=11 // pred_check
          %p401 = pneg %p269
        $region46: #{tpu_custom_call.1} parent=11 // pred_check_branch
          %403 = sbr.rel (%p401) target = $region48
        $region47: #{tpu_custom_call.1} parent=11 // pred_region
          %s405 = ssub.s32 16, 16
          %406 = vsyncadd [#allocation19], %s405
          %s408 = sshll.u32 [#allocation20], 4
          %s409 = int_to_ptr.vmem [resolvable:$true] %s408
          %411 = dma.hbm_to_vmem [thread:$0]  %s10, 16, %s409, [#allocation19]
        $region48: #{tpu_custom_call.1} parent=11 // pred_fallthru
          _
      $region12: #{tpu_custom_call.1} parent=5 // pred_fallthru
        _
      %p412 = scmp.lt.s32.totalorder %s28, 5
      // Predicated region
      $region49: #{tpu_custom_call.1} parent=5 // pred_check
        %p413 = pneg %p412
      $region50: #{tpu_custom_call.1} parent=5 // pred_check_branch
        %415 = sbr.rel (%p413) target = $region52
      $region51: #{tpu_custom_call.1} parent=5 // pred_region
        // Predicated region
        $region53: #{tpu_custom_call.1} parent=51 // pred_check
          %p416 = pneg %p48
        $region54: #{tpu_custom_call.1} parent=51 // pred_check_branch
          %418 = sbr.rel (%p416) target = $region56
        $region55: #{tpu_custom_call.1} parent=51 // pred_region
          %s419 = sand.u32 %s38, 1
          %s420 = scalar_lea.sflag [#allocation4], %s419
          %s421 = sand.u32 %s38, 1
          %s422 = smul.addr %s421, 64
          %s423 = scalar_lea.vmem [#allocation3], %s422
          %s424 = smul.u32 8, %s28
          %s426 = ssub.s32 1024, 1024
          %427 = vsyncadd %s420, %s426
          %s428 = smul.addr %s424, 128
          %s429 = scalar_lea.hbm %s0, %s428
          %s431 = sshll.u32 %s423, 4
          %s432 = int_to_ptr.vmem [resolvable:$true] %s431
          %434 = dma.hbm_to_vmem [thread:$0]  %s429, 1024, %s432, %s420
        $region56: #{tpu_custom_call.1} parent=51 // pred_fallthru
          _
        // Predicated region
        $region57: #{tpu_custom_call.1} parent=51 // pred_check
          %p435 = pneg %p74
        $region58: #{tpu_custom_call.1} parent=51 // pred_check_branch
          %437 = sbr.rel (%p435) target = $region60
        $region59: #{tpu_custom_call.1} parent=51 // pred_region
          %s438 = sand.u32 %s28, 1
          %s439 = scalar_lea.sflag [#allocation7], %s438
          %s440 = sand.u32 %s64, 1
          %s441 = smul.addr %s440, 8192
          %s442 = scalar_lea.vmem [#allocation6], %s441
          %s443 = smul.u32 128, %s28
          %s445 = ssub.s32 131072, 131072
          %446 = vsyncadd %s439, %s445
          %s447 = smul.addr %s443, 16
          %s448 = smul.addr %s447, 64
          %s449 = scalar_lea.hbm %s1, %s448
          %s450 = sshll.u32 %s442, 4
          %s451 = int_to_ptr.vmem [resolvable:$true] %s450
          %456 = dma.hbm_to_vmem [thread:$0]  %s449, 131072, %s451, %s439, 1024, 1024, 64
        $region60: #{tpu_custom_call.1} parent=51 // pred_fallthru
          _
      $region52: #{tpu_custom_call.1} parent=5 // pred_fallthru
        _
      %p457 = scmp.le.s32.totalorder 1, %s28
      %p458 = scmp.lt.s32.totalorder %s28, 6
      %p459 = pnand %p457, %p458
      %p460 = pneg %p459
      // Predicated region
      $region61: #{tpu_custom_call.1} parent=5 // pred_check
        _
      $region62: #{tpu_custom_call.1} parent=5 // pred_check_branch
        %462 = sbr.rel (%p459) target = $region64
      $region63: #{tpu_custom_call.1} parent=5 // pred_region
        %s463 = ssub.s32 %s28, 1
        %s464 = sand.u32 %s41, 1
        %s465 = scalar_lea.sflag [#allocation4], %s464
        %s466 = sand.u32 %s41, 1
        %s467 = smul.addr %s466, 64
        %s468 = scalar_lea.vmem [#allocation3], %s467
        // Predicated region
        $region65: #{tpu_custom_call.1} parent=63 // pred_check
          %p469 = pneg %p54
        $region66: #{tpu_custom_call.1} parent=63 // pred_check_branch
          %471 = sbr.rel (%p469) target = $region68
        $region67: #{tpu_custom_call.1} parent=63 // pred_region
          %472 = dma.done %s465, 1024
        $region68: #{tpu_custom_call.1} parent=63 // pred_fallthru
          _
        %s473 = sand.u32 %s33, 1
        %s474 = scalar_lea.sflag [#allocation7], %s473
        %s475 = sand.u32 %s67, 1
        %s476 = smul.addr %s475, 8192
        %s477 = scalar_lea.vmem [#allocation6], %s476
        // Predicated region
        $region69: #{tpu_custom_call.1} parent=63 // pred_check
          %p478 = pneg %p80
        $region70: #{tpu_custom_call.1} parent=63 // pred_check_branch
          %480 = sbr.rel (%p478) target = $region72
        $region71: #{tpu_custom_call.1} parent=63 // pred_region
          %481 = dma.done %s474, 131072
        $region72: #{tpu_custom_call.1} parent=63 // pred_fallthru
          _
        // Predicated region
        $region73: #{tpu_custom_call.1} parent=63 // pred_check
          %p482 = pneg %p101
        $region74: #{tpu_custom_call.1} parent=63 // pred_check_branch
          %484 = sbr.rel (%p482) target = $region76
        $region75: #{tpu_custom_call.1} parent=63 // pred_region
          %485 = dma.done [#allocation7], 256
        $region76: #{tpu_custom_call.1} parent=63 // pred_fallthru
          _
        // Predicated region
        $region77: #{tpu_custom_call.1} parent=63 // pred_check
          %p486 = pneg %p122
        $region78: #{tpu_custom_call.1} parent=63 // pred_check_branch
          %488 = sbr.rel (%p486) target = $region80
        $region79: #{tpu_custom_call.1} parent=63 // pred_region
          %489 = dma.done [#allocation10], 65536
        $region80: #{tpu_custom_call.1} parent=63 // pred_fallthru
          _
        // Predicated region
        $region81: #{tpu_custom_call.1} parent=63 // pred_check
          %p490 = pneg %p143
        $region82: #{tpu_custom_call.1} parent=63 // pred_check_branch
          %492 = sbr.rel (%p490) target = $region84
        $region83: #{tpu_custom_call.1} parent=63 // pred_region
          %493 = dma.done [#allocation10], 64
        $region84: #{tpu_custom_call.1} parent=63 // pred_fallthru
          _
        // Predicated region
        $region85: #{tpu_custom_call.1} parent=63 // pred_check
          %p494 = pneg %p164
        $region86: #{tpu_custom_call.1} parent=63 // pred_check_branch
          %496 = sbr.rel (%p494) target = $region88
        $region87: #{tpu_custom_call.1} parent=63 // pred_region
          %497 = dma.done [#allocation13], 4096
        $region88: #{tpu_custom_call.1} parent=63 // pred_fallthru
          _
        // Predicated region
        $region89: #{tpu_custom_call.1} parent=63 // pred_check
          %p498 = pneg %p185
        $region90: #{tpu_custom_call.1} parent=63 // pred_check_branch
          %500 = sbr.rel (%p498) target = $region92
        $region91: #{tpu_custom_call.1} parent=63 // pred_region
          %501 = dma.done [#allocation13], 16
        $region92: #{tpu_custom_call.1} parent=63 // pred_fallthru
          _
        // Predicated region
        $region93: #{tpu_custom_call.1} parent=63 // pred_check
          %p502 = pneg %p206
        $region94: #{tpu_custom_call.1} parent=63 // pred_check_branch
          %504 = sbr.rel (%p502) target = $region96
        $region95: #{tpu_custom_call.1} parent=63 // pred_region
          %505 = dma.done [#allocation16], 1024
        $region96: #{tpu_custom_call.1} parent=63 // pred_fallthru
          _
        // Predicated region
        $region97: #{tpu_custom_call.1} parent=63 // pred_check
          %p506 = pneg %p227
        $region98: #{tpu_custom_call.1} parent=63 // pred_check_branch
          %508 = sbr.rel (%p506) target = $region100
        $region99: #{tpu_custom_call.1} parent=63 // pred_region
          %509 = dma.done [#allocation16], 16
        $region100: #{tpu_custom_call.1} parent=63 // pred_fallthru
          _
        // Predicated region
        $region101: #{tpu_custom_call.1} parent=63 // pred_check
          %p510 = pneg %p248
        $region102: #{tpu_custom_call.1} parent=63 // pred_check_branch
          %512 = sbr.rel (%p510) target = $region104
        $region103: #{tpu_custom_call.1} parent=63 // pred_region
          %513 = dma.done [#allocation19], 1024
        $region104: #{tpu_custom_call.1} parent=63 // pred_fallthru
          _
        // Predicated region
        $region105: #{tpu_custom_call.1} parent=63 // pred_check
          %p514 = pneg %p269
        $region106: #{tpu_custom_call.1} parent=63 // pred_check_branch
          %516 = sbr.rel (%p514) target = $region108
        $region107: #{tpu_custom_call.1} parent=63 // pred_region
          %517 = dma.done [#allocation19], 16
        $region108: #{tpu_custom_call.1} parent=63 // pred_fallthru
          _
        %s518 = sand.u32 %s41, 1
        %s519 = scalar_lea.sflag [#allocation4], %s518
        %s520 = sand.u32 %s41, 1
        %s521 = smul.addr %s520, 64
        %s522 = scalar_lea.vmem [#allocation3], %s521
        %p523 = pneg %p54
        %p524 = pneg %p51
        %s525 = sand.u32 %s33, 1
        %s526 = scalar_lea.sflag [#allocation7], %s525
        %s527 = sand.u32 %s67, 1
        %s528 = smul.addr %s527, 8192
        %s529 = scalar_lea.vmem [#allocation6], %s528
        %p530 = pneg %p80
        %p531 = pneg %p77
        %p532 = pneg %p101
        %p533 = pneg %p98
        %p534 = pneg %p122
        %p535 = pneg %p119
        %p536 = pneg %p143
        %p537 = pneg %p140
        %p538 = pneg %p164
        %p539 = pneg %p161
        %p540 = pneg %p185
        %p541 = pneg %p182
        %p542 = pneg %p206
        %p543 = pneg %p203
        %p544 = pneg %p227
        %p545 = pneg %p224
        %p546 = pneg %p248
        %p547 = pneg %p245
        %p548 = pneg %p269
        %p549 = pneg %p266
        %p550 = pneg %p290
        %p551 = pneg %p287
        %s552 = smul.u32 8, %s33
        %s553 = smul.u32 128, %s33
        %p555 = scmp.eq.s32.totalorder %s33, 0
        // Predicated region
        $region109: #{tpu_custom_call.1} parent=63 // pred_check
          %p556 = pneg %p555
        $region110: #{tpu_custom_call.1} parent=63 // pred_check_branch
          %558 = sbr.rel (%p556) target = $region112
        $region111: #{tpu_custom_call.1} parent=63 // pred_region
          %559 = vst [vmem:[#allocation2] sm:$0xff] 0.0
          %560 = vst [vmem:[#allocation2 + $0x8] sm:$0xff] 0.0
          %561 = vst [vmem:[#allocation2 + $0x10] sm:$0xff] 0.0
          %562 = vst [vmem:[#allocation2 + $0x18] sm:$0xff] 0.0
          %563 = vst [vmem:[#allocation2 + $0x20] sm:$0xff] 0.0
          %564 = vst [vmem:[#allocation2 + $0x28] sm:$0xff] 0.0
          %565 = vst [vmem:[#allocation2 + $0x30] sm:$0xff] 0.0
          %566 = vst [vmem:[#allocation2 + $0x38] sm:$0xff] 0.0
          %567 = vst [vmem:[#allocation2 + $0x40] sm:$0xff] 0.0
          %568 = vst [vmem:[#allocation2 + $0x48] sm:$0xff] 0.0
          %569 = vst [vmem:[#allocation2 + $0x50] sm:$0xff] 0.0
          %570 = vst [vmem:[#allocation2 + $0x58] sm:$0xff] 0.0
          %571 = vst [vmem:[#allocation2 + $0x60] sm:$0xff] 0.0
          %572 = vst [vmem:[#allocation2 + $0x68] sm:$0xff] 0.0
          %573 = vst [vmem:[#allocation2 + $0x70] sm:$0xff] 0.0
          %574 = vst [vmem:[#allocation2 + $0x78] sm:$0xff] 0.0
        $region112: #{tpu_custom_call.1} parent=63 // pred_fallthru
          _
        %v575 = vld [vmem:[#allocation2] sm:$0xff]
        %v576 = vld [vmem:[#allocation2 + $0x8] sm:$0xff]
        %v577 = vld [vmem:[#allocation2 + $0x10] sm:$0xff]
        %v578 = vld [vmem:[#allocation2 + $0x18] sm:$0xff]
        %v579 = vld [vmem:[#allocation2 + $0x20] sm:$0xff]
        %v580 = vld [vmem:[#allocation2 + $0x28] sm:$0xff]
        %v581 = vld [vmem:[#allocation2 + $0x30] sm:$0xff]
        %v582 = vld [vmem:[#allocation2 + $0x38] sm:$0xff]
        %v583 = vld [vmem:[#allocation2 + $0x40] sm:$0xff]
        %v584 = vld [vmem:[#allocation2 + $0x48] sm:$0xff]
        %v585 = vld [vmem:[#allocation2 + $0x50] sm:$0xff]
        %v586 = vld [vmem:[#allocation2 + $0x58] sm:$0xff]
        %v587 = vld [vmem:[#allocation2 + $0x60] sm:$0xff]
        %v588 = vld [vmem:[#allocation2 + $0x68] sm:$0xff]
        %v589 = vld [vmem:[#allocation2 + $0x70] sm:$0xff]
        %v590 = vld [vmem:[#allocation2 + $0x78] sm:$0xff]
        %v591 = vld [vmem:[%s468] sm:$0xff]
        %v592 = vld [vmem:[%s468 + $0x8] sm:$0xff]
        %v593 = vld [vmem:[%s468 + $0x10] sm:$0xff]
        %v594 = vld [vmem:[%s468 + $0x18] sm:$0xff]
        %v595 = vld [vmem:[%s468 + $0x20] sm:$0xff]
        %v596 = vld [vmem:[%s468 + $0x28] sm:$0xff]
        %v597 = vld [vmem:[%s468 + $0x30] sm:$0xff]
        %v598 = vld [vmem:[%s468 + $0x38] sm:$0xff]
        %v599 = vld [vmem:[%s477] sm:$0xff]
        %v600 = vld [vmem:[%s477 + $0x8] sm:$0xff]
        %v601 = vld [vmem:[%s477 + $0x10] sm:$0xff]
        %v602 = vld [vmem:[%s477 + $0x18] sm:$0xff]
        %v603 = vld [vmem:[%s477 + $0x20] sm:$0xff]
        %v604 = vld [vmem:[%s477 + $0x28] sm:$0xff]
        %v605 = vld [vmem:[%s477 + $0x30] sm:$0xff]
        %v606 = vld [vmem:[%s477 + $0x38] sm:$0xff]
        %v607 = vld [vmem:[%s477 + $0x40] sm:$0xff]
        %v608 = vld [vmem:[%s477 + $0x48] sm:$0xff]
        %v609 = vld [vmem:[%s477 + $0x50] sm:$0xff]
        %v610 = vld [vmem:[%s477 + $0x58] sm:$0xff]
        %v611 = vld [vmem:[%s477 + $0x60] sm:$0xff]
        %v612 = vld [vmem:[%s477 + $0x68] sm:$0xff]
        %v613 = vld [vmem:[%s477 + $0x70] sm:$0xff]
        %v614 = vld [vmem:[%s477 + $0x78] sm:$0xff]
        %v615 = vld [vmem:[%s477 + $0x80] sm:$0xff]
        %v616 = vld [vmem:[%s477 + $0x88] sm:$0xff]
        %v617 = vld [vmem:[%s477 + $0x90] sm:$0xff]
        %v618 = vld [vmem:[%s477 + $0x98] sm:$0xff]
        %v619 = vld [vmem:[%s477 + $0xa0] sm:$0xff]
        %v620 = vld [vmem:[%s477 + $0xa8] sm:$0xff]
        %v621 = vld [vmem:[%s477 + $0xb0] sm:$0xff]
        %v622 = vld [vmem:[%s477 + $0xb8] sm:$0xff]
        %v623 = vld [vmem:[%s477 + $0xc0] sm:$0xff]
        %v624 = vld [vmem:[%s477 + $0xc8] sm:$0xff]
        %v625 = vld [vmem:[%s477 + $0xd0] sm:$0xff]
        %v626 = vld [vmem:[%s477 + $0xd8] sm:$0xff]
        %v627 = vld [vmem:[%s477 + $0xe0] sm:$0xff]
        %v628 = vld [vmem:[%s477 + $0xe8] sm:$0xff]
        %v629 = vld [vmem:[%s477 + $0xf0] sm:$0xff]
        %v630 = vld [vmem:[%s477 + $0xf8] sm:$0xff]
        %v631 = vld [vmem:[%s477 + $0x100] sm:$0xff]
        %v632 = vld [vmem:[%s477 + $0x108] sm:$0xff]
        %v633 = vld [vmem:[%s477 + $0x110] sm:$0xff]
        %v634 = vld [vmem:[%s477 + $0x118] sm:$0xff]
        %v635 = vld [vmem:[%s477 + $0x120] sm:$0xff]
        %v636 = vld [vmem:[%s477 + $0x128] sm:$0xff]
        %v637 = vld [vmem:[%s477 + $0x130] sm:$0xff]
        %v638 = vld [vmem:[%s477 + $0x138] sm:$0xff]
        %v639 = vld [vmem:[%s477 + $0x140] sm:$0xff]
        %v640 = vld [vmem:[%s477 + $0x148] sm:$0xff]
        %v641 = vld [vmem:[%s477 + $0x150] sm:$0xff]
        %v642 = vld [vmem:[%s477 + $0x158] sm:$0xff]
        %v643 = vld [vmem:[%s477 + $0x160] sm:$0xff]
        %v644 = vld [vmem:[%s477 + $0x168] sm:$0xff]
        %v645 = vld [vmem:[%s477 + $0x170] sm:$0xff]
        %v646 = vld [vmem:[%s477 + $0x178] sm:$0xff]
        %v647 = vld [vmem:[%s477 + $0x180] sm:$0xff]
        %v648 = vld [vmem:[%s477 + $0x188] sm:$0xff]
        %v649 = vld [vmem:[%s477 + $0x190] sm:$0xff]
        %v650 = vld [vmem:[%s477 + $0x198] sm:$0xff]
        %v651 = vld [vmem:[%s477 + $0x1a0] sm:$0xff]
        %v652 = vld [vmem:[%s477 + $0x1a8] sm:$0xff]
        %v653 = vld [vmem:[%s477 + $0x1b0] sm:$0xff]
        %v654 = vld [vmem:[%s477 + $0x1b8] sm:$0xff]
        %v655 = vld [vmem:[%s477 + $0x1c0] sm:$0xff]
        %v656 = vld [vmem:[%s477 + $0x1c8] sm:$0xff]
        %v657 = vld [vmem:[%s477 + $0x1d0] sm:$0xff]
        %v658 = vld [vmem:[%s477 + $0x1d8] sm:$0xff]
        %v659 = vld [vmem:[%s477 + $0x1e0] sm:$0xff]
        %v660 = vld [vmem:[%s477 + $0x1e8] sm:$0xff]
        %v661 = vld [vmem:[%s477 + $0x1f0] sm:$0xff]
        %v662 = vld [vmem:[%s477 + $0x1f8] sm:$0xff]
        %v663 = vld [vmem:[%s477 + $0x200] sm:$0xff]
        %v664 = vld [vmem:[%s477 + $0x208] sm:$0xff]
        %v665 = vld [vmem:[%s477 + $0x210] sm:$0xff]
        %v666 = vld [vmem:[%s477 + $0x218] sm:$0xff]
        %v667 = vld [vmem:[%s477 + $0x220] sm:$0xff]
        %v668 = vld [vmem:[%s477 + $0x228] sm:$0xff]
        %v669 = vld [vmem:[%s477 + $0x230] sm:$0xff]
        %v670 = vld [vmem:[%s477 + $0x238] sm:$0xff]
        %v671 = vld [vmem:[%s477 + $0x240] sm:$0xff]
        %v672 = vld [vmem:[%s477 + $0x248] sm:$0xff]
        %v673 = vld [vmem:[%s477 + $0x250] sm:$0xff]
        %v674 = vld [vmem:[%s477 + $0x258] sm:$0xff]
        %v675 = vld [vmem:[%s477 + $0x260] sm:$0xff]
        %v676 = vld [vmem:[%s477 + $0x268] sm:$0xff]
        %v677 = vld [vmem:[%s477 + $0x270] sm:$0xff]
        %v678 = vld [vmem:[%s477 + $0x278] sm:$0xff]
        %v679 = vld [vmem:[%s477 + $0x280] sm:$0xff]
        %v680 = vld [vmem:[%s477 + $0x288] sm:$0xff]
        %v681 = vld [vmem:[%s477 + $0x290] sm:$0xff]
        %v682 = vld [vmem:[%s477 + $0x298] sm:$0xff]
        %v683 = vld [vmem:[%s477 + $0x2a0] sm:$0xff]
        %v684 = vld [vmem:[%s477 + $0x2a8] sm:$0xff]
        %v685 = vld [vmem:[%s477 + $0x2b0] sm:$0xff]
        %v686 = vld [vmem:[%s477 + $0x2b8] sm:$0xff]
        %v687 = vld [vmem:[%s477 + $0x2c0] sm:$0xff]
        %v688 = vld [vmem:[%s477 + $0x2c8] sm:$0xff]
        %v689 = vld [vmem:[%s477 + $0x2d0] sm:$0xff]
        %v690 = vld [vmem:[%s477 + $0x2d8] sm:$0xff]
        %v691 = vld [vmem:[%s477 + $0x2e0] sm:$0xff]
        %v692 = vld [vmem:[%s477 + $0x2e8] sm:$0xff]
        %v693 = vld [vmem:[%s477 + $0x2f0] sm:$0xff]
        %v694 = vld [vmem:[%s477 + $0x2f8] sm:$0xff]
        %v695 = vld [vmem:[%s477 + $0x300] sm:$0xff]
        %v696 = vld [vmem:[%s477 + $0x308] sm:$0xff]
        %v697 = vld [vmem:[%s477 + $0x310] sm:$0xff]
        %v698 = vld [vmem:[%s477 + $0x318] sm:$0xff]
        %v699 = vld [vmem:[%s477 + $0x320] sm:$0xff]
        %v700 = vld [vmem:[%s477 + $0x328] sm:$0xff]
        %v701 = vld [vmem:[%s477 + $0x330] sm:$0xff]
        %v702 = vld [vmem:[%s477 + $0x338] sm:$0xff]
        %v703 = vld [vmem:[%s477 + $0x340] sm:$0xff]
        %v704 = vld [vmem:[%s477 + $0x348] sm:$0xff]
        %v705 = vld [vmem:[%s477 + $0x350] sm:$0xff]
        %v706 = vld [vmem:[%s477 + $0x358] sm:$0xff]
        %v707 = vld [vmem:[%s477 + $0x360] sm:$0xff]
        %v708 = vld [vmem:[%s477 + $0x368] sm:$0xff]
        %v709 = vld [vmem:[%s477 + $0x370] sm:$0xff]
        %v710 = vld [vmem:[%s477 + $0x378] sm:$0xff]
        %v711 = vld [vmem:[%s477 + $0x380] sm:$0xff]
        %v712 = vld [vmem:[%s477 + $0x388] sm:$0xff]
        %v713 = vld [vmem:[%s477 + $0x390] sm:$0xff]
        %v714 = vld [vmem:[%s477 + $0x398] sm:$0xff]
        %v715 = vld [vmem:[%s477 + $0x3a0] sm:$0xff]
        %v716 = vld [vmem:[%s477 + $0x3a8] sm:$0xff]
        %v717 = vld [vmem:[%s477 + $0x3b0] sm:$0xff]
        %v718 = vld [vmem:[%s477 + $0x3b8] sm:$0xff]
        %v719 = vld [vmem:[%s477 + $0x3c0] sm:$0xff]
        %v720 = vld [vmem:[%s477 + $0x3c8] sm:$0xff]
        %v721 = vld [vmem:[%s477 + $0x3d0] sm:$0xff]
        %v722 = vld [vmem:[%s477 + $0x3d8] sm:$0xff]
        %v723 = vld [vmem:[%s477 + $0x3e0] sm:$0xff]
        %v724 = vld [vmem:[%s477 + $0x3e8] sm:$0xff]
        %v725 = vld [vmem:[%s477 + $0x3f0] sm:$0xff]
        %v726 = vld [vmem:[%s477 + $0x3f8] sm:$0xff]
        %v727 = vld [vmem:[%s477 + $0x400] sm:$0xff]
        %v728 = vld [vmem:[%s477 + $0x408] sm:$0xff]
        %v729 = vld [vmem:[%s477 + $0x410] sm:$0xff]
        %v730 = vld [vmem:[%s477 + $0x418] sm:$0xff]
        %v731 = vld [vmem:[%s477 + $0x420] sm:$0xff]
        %v732 = vld [vmem:[%s477 + $0x428] sm:$0xff]
        %v733 = vld [vmem:[%s477 + $0x430] sm:$0xff]
        %v734 = vld [vmem:[%s477 + $0x438] sm:$0xff]
        %v735 = vld [vmem:[%s477 + $0x440] sm:$0xff]
        %v736 = vld [vmem:[%s477 + $0x448] sm:$0xff]
        %v737 = vld [vmem:[%s477 + $0x450] sm:$0xff]
        %v738 = vld [vmem:[%s477 + $0x458] sm:$0xff]
        %v739 = vld [vmem:[%s477 + $0x460] sm:$0xff]
        %v740 = vld [vmem:[%s477 + $0x468] sm:$0xff]
        %v741 = vld [vmem:[%s477 + $0x470] sm:$0xff]
        %v742 = vld [vmem:[%s477 + $0x478] sm:$0xff]
        %v743 = vld [vmem:[%s477 + $0x480] sm:$0xff]
        %v744 = vld [vmem:[%s477 + $0x488] sm:$0xff]
        %v745 = vld [vmem:[%s477 + $0x490] sm:$0xff]
        %v746 = vld [vmem:[%s477 + $0x498] sm:$0xff]
        %v747 = vld [vmem:[%s477 + $0x4a0] sm:$0xff]
        %v748 = vld [vmem:[%s477 + $0x4a8] sm:$0xff]
        %v749 = vld [vmem:[%s477 + $0x4b0] sm:$0xff]
        %v750 = vld [vmem:[%s477 + $0x4b8] sm:$0xff]
        %v751 = vld [vmem:[%s477 + $0x4c0] sm:$0xff]
        %v752 = vld [vmem:[%s477 + $0x4c8] sm:$0xff]
        %v753 = vld [vmem:[%s477 + $0x4d0] sm:$0xff]
        %v754 = vld [vmem:[%s477 + $0x4d8] sm:$0xff]
        %v755 = vld [vmem:[%s477 + $0x4e0] sm:$0xff]
        %v756 = vld [vmem:[%s477 + $0x4e8] sm:$0xff]
        %v757 = vld [vmem:[%s477 + $0x4f0] sm:$0xff]
        %v758 = vld [vmem:[%s477 + $0x4f8] sm:$0xff]
        %v759 = vld [vmem:[%s477 + $0x500] sm:$0xff]
        %v760 = vld [vmem:[%s477 + $0x508] sm:$0xff]
        %v761 = vld [vmem:[%s477 + $0x510] sm:$0xff]
        %v762 = vld [vmem:[%s477 + $0x518] sm:$0xff]
        %v763 = vld [vmem:[%s477 + $0x520] sm:$0xff]
        %v764 = vld [vmem:[%s477 + $0x528] sm:$0xff]
        %v765 = vld [vmem:[%s477 + $0x530] sm:$0xff]
        %v766 = vld [vmem:[%s477 + $0x538] sm:$0xff]
        %v767 = vld [vmem:[%s477 + $0x540] sm:$0xff]
        %v768 = vld [vmem:[%s477 + $0x548] sm:$0xff]
        %v769 = vld [vmem:[%s477 + $0x550] sm:$0xff]
        %v770 = vld [vmem:[%s477 + $0x558] sm:$0xff]
        %v771 = vld [vmem:[%s477 + $0x560] sm:$0xff]
        %v772 = vld [vmem:[%s477 + $0x568] sm:$0xff]
        %v773 = vld [vmem:[%s477 + $0x570] sm:$0xff]
        %v774 = vld [vmem:[%s477 + $0x578] sm:$0xff]
        %v775 = vld [vmem:[%s477 + $0x580] sm:$0xff]
        %v776 = vld [vmem:[%s477 + $0x588] sm:$0xff]
        %v777 = vld [vmem:[%s477 + $0x590] sm:$0xff]
        %v778 = vld [vmem:[%s477 + $0x598] sm:$0xff]
        %v779 = vld [vmem:[%s477 + $0x5a0] sm:$0xff]
        %v780 = vld [vmem:[%s477 + $0x5a8] sm:$0xff]
        %v781 = vld [vmem:[%s477 + $0x5b0] sm:$0xff]
        %v782 = vld [vmem:[%s477 + $0x5b8] sm:$0xff]
        %v783 = vld [vmem:[%s477 + $0x5c0] sm:$0xff]
        %v784 = vld [vmem:[%s477 + $0x5c8] sm:$0xff]
        %v785 = vld [vmem:[%s477 + $0x5d0] sm:$0xff]
        %v786 = vld [vmem:[%s477 + $0x5d8] sm:$0xff]
        %v787 = vld [vmem:[%s477 + $0x5e0] sm:$0xff]
        %v788 = vld [vmem:[%s477 + $0x5e8] sm:$0xff]
        %v789 = vld [vmem:[%s477 + $0x5f0] sm:$0xff]
        %v790 = vld [vmem:[%s477 + $0x5f8] sm:$0xff]
        %v791 = vld [vmem:[%s477 + $0x600] sm:$0xff]
        %v792 = vld [vmem:[%s477 + $0x608] sm:$0xff]
        %v793 = vld [vmem:[%s477 + $0x610] sm:$0xff]
        %v794 = vld [vmem:[%s477 + $0x618] sm:$0xff]
        %v795 = vld [vmem:[%s477 + $0x620] sm:$0xff]
        %v796 = vld [vmem:[%s477 + $0x628] sm:$0xff]
        %v797 = vld [vmem:[%s477 + $0x630] sm:$0xff]
        %v798 = vld [vmem:[%s477 + $0x638] sm:$0xff]
        %v799 = vld [vmem:[%s477 + $0x640] sm:$0xff]
        %v800 = vld [vmem:[%s477 + $0x648] sm:$0xff]
        %v801 = vld [vmem:[%s477 + $0x650] sm:$0xff]
        %v802 = vld [vmem:[%s477 + $0x658] sm:$0xff]
        %v803 = vld [vmem:[%s477 + $0x660] sm:$0xff]
        %v804 = vld [vmem:[%s477 + $0x668] sm:$0xff]
        %v805 = vld [vmem:[%s477 + $0x670] sm:$0xff]
        %v806 = vld [vmem:[%s477 + $0x678] sm:$0xff]
        %v807 = vld [vmem:[%s477 + $0x680] sm:$0xff]
        %v808 = vld [vmem:[%s477 + $0x688] sm:$0xff]
        %v809 = vld [vmem:[%s477 + $0x690] sm:$0xff]
        %v810 = vld [vmem:[%s477 + $0x698] sm:$0xff]
        %v811 = vld [vmem:[%s477 + $0x6a0] sm:$0xff]
        %v812 = vld [vmem:[%s477 + $0x6a8] sm:$0xff]
        %v813 = vld [vmem:[%s477 + $0x6b0] sm:$0xff]
        %v814 = vld [vmem:[%s477 + $0x6b8] sm:$0xff]
        %v815 = vld [vmem:[%s477 + $0x6c0] sm:$0xff]
        %v816 = vld [vmem:[%s477 + $0x6c8] sm:$0xff]
        %v817 = vld [vmem:[%s477 + $0x6d0] sm:$0xff]
        %v818 = vld [vmem:[%s477 + $0x6d8] sm:$0xff]
        %v819 = vld [vmem:[%s477 + $0x6e0] sm:$0xff]
        %v820 = vld [vmem:[%s477 + $0x6e8] sm:$0xff]
        %v821 = vld [vmem:[%s477 + $0x6f0] sm:$0xff]
        %v822 = vld [vmem:[%s477 + $0x6f8] sm:$0xff]
        %v823 = vld [vmem:[%s477 + $0x700] sm:$0xff]
        %v824 = vld [vmem:[%s477 + $0x708] sm:$0xff]
        %v825 = vld [vmem:[%s477 + $0x710] sm:$0xff]
        %v826 = vld [vmem:[%s477 + $0x718] sm:$0xff]
        %v827 = vld [vmem:[%s477 + $0x720] sm:$0xff]
        %v828 = vld [vmem:[%s477 + $0x728] sm:$0xff]
        %v829 = vld [vmem:[%s477 + $0x730] sm:$0xff]
        %v830 = vld [vmem:[%s477 + $0x738] sm:$0xff]
        %v831 = vld [vmem:[%s477 + $0x740] sm:$0xff]
        %v832 = vld [vmem:[%s477 + $0x748] sm:$0xff]
        %v833 = vld [vmem:[%s477 + $0x750] sm:$0xff]
        %v834 = vld [vmem:[%s477 + $0x758] sm:$0xff]
        %v835 = vld [vmem:[%s477 + $0x760] sm:$0xff]
        %v836 = vld [vmem:[%s477 + $0x768] sm:$0xff]
        %v837 = vld [vmem:[%s477 + $0x770] sm:$0xff]
        %v838 = vld [vmem:[%s477 + $0x778] sm:$0xff]
        %v839 = vld [vmem:[%s477 + $0x780] sm:$0xff]
        %v840 = vld [vmem:[%s477 + $0x788] sm:$0xff]
        %v841 = vld [vmem:[%s477 + $0x790] sm:$0xff]
        %v842 = vld [vmem:[%s477 + $0x798] sm:$0xff]
        %v843 = vld [vmem:[%s477 + $0x7a0] sm:$0xff]
        %v844 = vld [vmem:[%s477 + $0x7a8] sm:$0xff]
        %v845 = vld [vmem:[%s477 + $0x7b0] sm:$0xff]
        %v846 = vld [vmem:[%s477 + $0x7b8] sm:$0xff]
        %v847 = vld [vmem:[%s477 + $0x7c0] sm:$0xff]
        %v848 = vld [vmem:[%s477 + $0x7c8] sm:$0xff]
        %v849 = vld [vmem:[%s477 + $0x7d0] sm:$0xff]
        %v850 = vld [vmem:[%s477 + $0x7d8] sm:$0xff]
        %v851 = vld [vmem:[%s477 + $0x7e0] sm:$0xff]
        %v852 = vld [vmem:[%s477 + $0x7e8] sm:$0xff]
        %v853 = vld [vmem:[%s477 + $0x7f0] sm:$0xff]
        %v854 = vld [vmem:[%s477 + $0x7f8] sm:$0xff]
        %v855 = vld [vmem:[%s477 + $0x800] sm:$0xff]
        %v856 = vld [vmem:[%s477 + $0x808] sm:$0xff]
        %v857 = vld [vmem:[%s477 + $0x810] sm:$0xff]
        %v858 = vld [vmem:[%s477 + $0x818] sm:$0xff]
        %v859 = vld [vmem:[%s477 + $0x820] sm:$0xff]
        %v860 = vld [vmem:[%s477 + $0x828] sm:$0xff]
        %v861 = vld [vmem:[%s477 + $0x830] sm:$0xff]
        %v862 = vld [vmem:[%s477 + $0x838] sm:$0xff]
        %v863 = vld [vmem:[%s477 + $0x840] sm:$0xff]
        %v864 = vld [vmem:[%s477 + $0x848] sm:$0xff]
        %v865 = vld [vmem:[%s477 + $0x850] sm:$0xff]
        %v866 = vld [vmem:[%s477 + $0x858] sm:$0xff]
        %v867 = vld [vmem:[%s477 + $0x860] sm:$0xff]
        %v868 = vld [vmem:[%s477 + $0x868] sm:$0xff]
        %v869 = vld [vmem:[%s477 + $0x870] sm:$0xff]
        %v870 = vld [vmem:[%s477 + $0x878] sm:$0xff]
        %v871 = vld [vmem:[%s477 + $0x880] sm:$0xff]
        %v872 = vld [vmem:[%s477 + $0x888] sm:$0xff]
        %v873 = vld [vmem:[%s477 + $0x890] sm:$0xff]
        %v874 = vld [vmem:[%s477 + $0x898] sm:$0xff]
        %v875 = vld [vmem:[%s477 + $0x8a0] sm:$0xff]
        %v876 = vld [vmem:[%s477 + $0x8a8] sm:$0xff]
        %v877 = vld [vmem:[%s477 + $0x8b0] sm:$0xff]
        %v878 = vld [vmem:[%s477 + $0x8b8] sm:$0xff]
        %v879 = vld [vmem:[%s477 + $0x8c0] sm:$0xff]
        %v880 = vld [vmem:[%s477 + $0x8c8] sm:$0xff]
        %v881 = vld [vmem:[%s477 + $0x8d0] sm:$0xff]
        %v882 = vld [vmem:[%s477 + $0x8d8] sm:$0xff]
        %v883 = vld [vmem:[%s477 + $0x8e0] sm:$0xff]
        %v884 = vld [vmem:[%s477 + $0x8e8] sm:$0xff]
        %v885 = vld [vmem:[%s477 + $0x8f0] sm:$0xff]
        %v886 = vld [vmem:[%s477 + $0x8f8] sm:$0xff]
        %v887 = vld [vmem:[%s477 + $0x900] sm:$0xff]
        %v888 = vld [vmem:[%s477 + $0x908] sm:$0xff]
        %v889 = vld [vmem:[%s477 + $0x910] sm:$0xff]
        %v890 = vld [vmem:[%s477 + $0x918] sm:$0xff]
        %v891 = vld [vmem:[%s477 + $0x920] sm:$0xff]
        %v892 = vld [vmem:[%s477 + $0x928] sm:$0xff]
        %v893 = vld [vmem:[%s477 + $0x930] sm:$0xff]
        %v894 = vld [vmem:[%s477 + $0x938] sm:$0xff]
        %v895 = vld [vmem:[%s477 + $0x940] sm:$0xff]
        %v896 = vld [vmem:[%s477 + $0x948] sm:$0xff]
        %v897 = vld [vmem:[%s477 + $0x950] sm:$0xff]
        %v898 = vld [vmem:[%s477 + $0x958] sm:$0xff]
        %v899 = vld [vmem:[%s477 + $0x960] sm:$0xff]
        %v900 = vld [vmem:[%s477 + $0x968] sm:$0xff]
        %v901 = vld [vmem:[%s477 + $0x970] sm:$0xff]
        %v902 = vld [vmem:[%s477 + $0x978] sm:$0xff]
        %v903 = vld [vmem:[%s477 + $0x980] sm:$0xff]
        %v904 = vld [vmem:[%s477 + $0x988] sm:$0xff]
        %v905 = vld [vmem:[%s477 + $0x990] sm:$0xff]
        %v906 = vld [vmem:[%s477 + $0x998] sm:$0xff]
        %v907 = vld [vmem:[%s477 + $0x9a0] sm:$0xff]
        %v908 = vld [vmem:[%s477 + $0x9a8] sm:$0xff]
        %v909 = vld [vmem:[%s477 + $0x9b0] sm:$0xff]
        %v910 = vld [vmem:[%s477 + $0x9b8] sm:$0xff]
        %v911 = vld [vmem:[%s477 + $0x9c0] sm:$0xff]
        %v912 = vld [vmem:[%s477 + $0x9c8] sm:$0xff]
        %v913 = vld [vmem:[%s477 + $0x9d0] sm:$0xff]
        %v914 = vld [vmem:[%s477 + $0x9d8] sm:$0xff]
        %v915 = vld [vmem:[%s477 + $0x9e0] sm:$0xff]
        %v916 = vld [vmem:[%s477 + $0x9e8] sm:$0xff]
        %v917 = vld [vmem:[%s477 + $0x9f0] sm:$0xff]
        %v918 = vld [vmem:[%s477 + $0x9f8] sm:$0xff]
        %v919 = vld [vmem:[%s477 + $0xa00] sm:$0xff]
        %v920 = vld [vmem:[%s477 + $0xa08] sm:$0xff]
        %v921 = vld [vmem:[%s477 + $0xa10] sm:$0xff]
        %v922 = vld [vmem:[%s477 + $0xa18] sm:$0xff]
        %v923 = vld [vmem:[%s477 + $0xa20] sm:$0xff]
        %v924 = vld [vmem:[%s477 + $0xa28] sm:$0xff]
        %v925 = vld [vmem:[%s477 + $0xa30] sm:$0xff]
        %v926 = vld [vmem:[%s477 + $0xa38] sm:$0xff]
        %v927 = vld [vmem:[%s477 + $0xa40] sm:$0xff]
        %v928 = vld [vmem:[%s477 + $0xa48] sm:$0xff]
        %v929 = vld [vmem:[%s477 + $0xa50] sm:$0xff]
        %v930 = vld [vmem:[%s477 + $0xa58] sm:$0xff]
        %v931 = vld [vmem:[%s477 + $0xa60] sm:$0xff]
        %v932 = vld [vmem:[%s477 + $0xa68] sm:$0xff]
        %v933 = vld [vmem:[%s477 + $0xa70] sm:$0xff]
        %v934 = vld [vmem:[%s477 + $0xa78] sm:$0xff]
        %v935 = vld [vmem:[%s477 + $0xa80] sm:$0xff]
        %v936 = vld [vmem:[%s477 + $0xa88] sm:$0xff]
        %v937 = vld [vmem:[%s477 + $0xa90] sm:$0xff]
        %v938 = vld [vmem:[%s477 + $0xa98] sm:$0xff]
        %v939 = vld [vmem:[%s477 + $0xaa0] sm:$0xff]
        %v940 = vld [vmem:[%s477 + $0xaa8] sm:$0xff]
        %v941 = vld [vmem:[%s477 + $0xab0] sm:$0xff]
        %v942 = vld [vmem:[%s477 + $0xab8] sm:$0xff]
        %v943 = vld [vmem:[%s477 + $0xac0] sm:$0xff]
        %v944 = vld [vmem:[%s477 + $0xac8] sm:$0xff]
        %v945 = vld [vmem:[%s477 + $0xad0] sm:$0xff]
        %v946 = vld [vmem:[%s477 + $0xad8] sm:$0xff]
        %v947 = vld [vmem:[%s477 + $0xae0] sm:$0xff]
        %v948 = vld [vmem:[%s477 + $0xae8] sm:$0xff]
        %v949 = vld [vmem:[%s477 + $0xaf0] sm:$0xff]
        %v950 = vld [vmem:[%s477 + $0xaf8] sm:$0xff]
        %v951 = vld [vmem:[%s477 + $0xb00] sm:$0xff]
        %v952 = vld [vmem:[%s477 + $0xb08] sm:$0xff]
        %v953 = vld [vmem:[%s477 + $0xb10] sm:$0xff]
        %v954 = vld [vmem:[%s477 + $0xb18] sm:$0xff]
        %v955 = vld [vmem:[%s477 + $0xb20] sm:$0xff]
        %v956 = vld [vmem:[%s477 + $0xb28] sm:$0xff]
        %v957 = vld [vmem:[%s477 + $0xb30] sm:$0xff]
        %v958 = vld [vmem:[%s477 + $0xb38] sm:$0xff]
        %v959 = vld [vmem:[%s477 + $0xb40] sm:$0xff]
        %v960 = vld [vmem:[%s477 + $0xb48] sm:$0xff]
        %v961 = vld [vmem:[%s477 + $0xb50] sm:$0xff]
        %v962 = vld [vmem:[%s477 + $0xb58] sm:$0xff]
        %v963 = vld [vmem:[%s477 + $0xb60] sm:$0xff]
        %v964 = vld [vmem:[%s477 + $0xb68] sm:$0xff]
        %v965 = vld [vmem:[%s477 + $0xb70] sm:$0xff]
        %v966 = vld [vmem:[%s477 + $0xb78] sm:$0xff]
        %v967 = vld [vmem:[%s477 + $0xb80] sm:$0xff]
        %v968 = vld [vmem:[%s477 + $0xb88] sm:$0xff]
        %v969 = vld [vmem:[%s477 + $0xb90] sm:$0xff]
        %v970 = vld [vmem:[%s477 + $0xb98] sm:$0xff]
        %v971 = vld [vmem:[%s477 + $0xba0] sm:$0xff]
        %v972 = vld [vmem:[%s477 + $0xba8] sm:$0xff]
        %v973 = vld [vmem:[%s477 + $0xbb0] sm:$0xff]
        %v974 = vld [vmem:[%s477 + $0xbb8] sm:$0xff]
        %v975 = vld [vmem:[%s477 + $0xbc0] sm:$0xff]
        %v976 = vld [vmem:[%s477 + $0xbc8] sm:$0xff]
        %v977 = vld [vmem:[%s477 + $0xbd0] sm:$0xff]
        %v978 = vld [vmem:[%s477 + $0xbd8] sm:$0xff]
        %v979 = vld [vmem:[%s477 + $0xbe0] sm:$0xff]
        %v980 = vld [vmem:[%s477 + $0xbe8] sm:$0xff]
        %v981 = vld [vmem:[%s477 + $0xbf0] sm:$0xff]
        %v982 = vld [vmem:[%s477 + $0xbf8] sm:$0xff]
        %v983 = vld [vmem:[%s477 + $0xc00] sm:$0xff]
        %v984 = vld [vmem:[%s477 + $0xc08] sm:$0xff]
        %v985 = vld [vmem:[%s477 + $0xc10] sm:$0xff]
        %v986 = vld [vmem:[%s477 + $0xc18] sm:$0xff]
        %v987 = vld [vmem:[%s477 + $0xc20] sm:$0xff]
        %v988 = vld [vmem:[%s477 + $0xc28] sm:$0xff]
        %v989 = vld [vmem:[%s477 + $0xc30] sm:$0xff]
        %v990 = vld [vmem:[%s477 + $0xc38] sm:$0xff]
        %v991 = vld [vmem:[%s477 + $0xc40] sm:$0xff]
        %v992 = vld [vmem:[%s477 + $0xc48] sm:$0xff]
        %v993 = vld [vmem:[%s477 + $0xc50] sm:$0xff]
        %v994 = vld [vmem:[%s477 + $0xc58] sm:$0xff]
        %v995 = vld [vmem:[%s477 + $0xc60] sm:$0xff]
        %v996 = vld [vmem:[%s477 + $0xc68] sm:$0xff]
        %v997 = vld [vmem:[%s477 + $0xc70] sm:$0xff]
        %v998 = vld [vmem:[%s477 + $0xc78] sm:$0xff]
        %v999 = vld [vmem:[%s477 + $0xc80] sm:$0xff]
        %v1000 = vld [vmem:[%s477 + $0xc88] sm:$0xff]
        %v1001 = vld [vmem:[%s477 + $0xc90] sm:$0xff]
        %v1002 = vld [vmem:[%s477 + $0xc98] sm:$0xff]
        %v1003 = vld [vmem:[%s477 + $0xca0] sm:$0xff]
        %v1004 = vld [vmem:[%s477 + $0xca8] sm:$0xff]
        %v1005 = vld [vmem:[%s477 + $0xcb0] sm:$0xff]
        %v1006 = vld [vmem:[%s477 + $0xcb8] sm:$0xff]
        %v1007 = vld [vmem:[%s477 + $0xcc0] sm:$0xff]
        %v1008 = vld [vmem:[%s477 + $0xcc8] sm:$0xff]
        %v1009 = vld [vmem:[%s477 + $0xcd0] sm:$0xff]
        %v1010 = vld [vmem:[%s477 + $0xcd8] sm:$0xff]
        %v1011 = vld [vmem:[%s477 + $0xce0] sm:$0xff]
        %v1012 = vld [vmem:[%s477 + $0xce8] sm:$0xff]
        %v1013 = vld [vmem:[%s477 + $0xcf0] sm:$0xff]
        %v1014 = vld [vmem:[%s477 + $0xcf8] sm:$0xff]
        %v1015 = vld [vmem:[%s477 + $0xd00] sm:$0xff]
        %v1016 = vld [vmem:[%s477 + $0xd08] sm:$0xff]
        %v1017 = vld [vmem:[%s477 + $0xd10] sm:$0xff]
        %v1018 = vld [vmem:[%s477 + $0xd18] sm:$0xff]
        %v1019 = vld [vmem:[%s477 + $0xd20] sm:$0xff]
        %v1020 = vld [vmem:[%s477 + $0xd28] sm:$0xff]
        %v1021 = vld [vmem:[%s477 + $0xd30] sm:$0xff]
        %v1022 = vld [vmem:[%s477 + $0xd38] sm:$0xff]
        %v1023 = vld [vmem:[%s477 + $0xd40] sm:$0xff]
        %v1024 = vld [vmem:[%s477 + $0xd48] sm:$0xff]
        %v1025 = vld [vmem:[%s477 + $0xd50] sm:$0xff]
        %v1026 = vld [vmem:[%s477 + $0xd58] sm:$0xff]
        %v1027 = vld [vmem:[%s477 + $0xd60] sm:$0xff]
        %v1028 = vld [vmem:[%s477 + $0xd68] sm:$0xff]
        %v1029 = vld [vmem:[%s477 + $0xd70] sm:$0xff]
        %v1030 = vld [vmem:[%s477 + $0xd78] sm:$0xff]
        %v1031 = vld [vmem:[%s477 + $0xd80] sm:$0xff]
        %v1032 = vld [vmem:[%s477 + $0xd88] sm:$0xff]
        %v1033 = vld [vmem:[%s477 + $0xd90] sm:$0xff]
        %v1034 = vld [vmem:[%s477 + $0xd98] sm:$0xff]
        %v1035 = vld [vmem:[%s477 + $0xda0] sm:$0xff]
        %v1036 = vld [vmem:[%s477 + $0xda8] sm:$0xff]
        %v1037 = vld [vmem:[%s477 + $0xdb0] sm:$0xff]
        %v1038 = vld [vmem:[%s477 + $0xdb8] sm:$0xff]
        %v1039 = vld [vmem:[%s477 + $0xdc0] sm:$0xff]
        %v1040 = vld [vmem:[%s477 + $0xdc8] sm:$0xff]
        %v1041 = vld [vmem:[%s477 + $0xdd0] sm:$0xff]
        %v1042 = vld [vmem:[%s477 + $0xdd8] sm:$0xff]
        %v1043 = vld [vmem:[%s477 + $0xde0] sm:$0xff]
        %v1044 = vld [vmem:[%s477 + $0xde8] sm:$0xff]
        %v1045 = vld [vmem:[%s477 + $0xdf0] sm:$0xff]
        %v1046 = vld [vmem:[%s477 + $0xdf8] sm:$0xff]
        %v1047 = vld [vmem:[%s477 + $0xe00] sm:$0xff]
        %v1048 = vld [vmem:[%s477 + $0xe08] sm:$0xff]
        %v1049 = vld [vmem:[%s477 + $0xe10] sm:$0xff]
        %v1050 = vld [vmem:[%s477 + $0xe18] sm:$0xff]
        %v1051 = vld [vmem:[%s477 + $0xe20] sm:$0xff]
        %v1052 = vld [vmem:[%s477 + $0xe28] sm:$0xff]
        %v1053 = vld [vmem:[%s477 + $0xe30] sm:$0xff]
        %v1054 = vld [vmem:[%s477 + $0xe38] sm:$0xff]
        %v1055 = vld [vmem:[%s477 + $0xe40] sm:$0xff]
        %v1056 = vld [vmem:[%s477 + $0xe48] sm:$0xff]
        %v1057 = vld [vmem:[%s477 + $0xe50] sm:$0xff]
        %v1058 = vld [vmem:[%s477 + $0xe58] sm:$0xff]
        %v1059 = vld [vmem:[%s477 + $0xe60] sm:$0xff]
        %v1060 = vld [vmem:[%s477 + $0xe68] sm:$0xff]
        %v1061 = vld [vmem:[%s477 + $0xe70] sm:$0xff]
        %v1062 = vld [vmem:[%s477 + $0xe78] sm:$0xff]
        %v1063 = vld [vmem:[%s477 + $0xe80] sm:$0xff]
        %v1064 = vld [vmem:[%s477 + $0xe88] sm:$0xff]
        %v1065 = vld [vmem:[%s477 + $0xe90] sm:$0xff]
        %v1066 = vld [vmem:[%s477 + $0xe98] sm:$0xff]
        %v1067 = vld [vmem:[%s477 + $0xea0] sm:$0xff]
        %v1068 = vld [vmem:[%s477 + $0xea8] sm:$0xff]
        %v1069 = vld [vmem:[%s477 + $0xeb0] sm:$0xff]
        %v1070 = vld [vmem:[%s477 + $0xeb8] sm:$0xff]
        %v1071 = vld [vmem:[%s477 + $0xec0] sm:$0xff]
        %v1072 = vld [vmem:[%s477 + $0xec8] sm:$0xff]
        %v1073 = vld [vmem:[%s477 + $0xed0] sm:$0xff]
        %v1074 = vld [vmem:[%s477 + $0xed8] sm:$0xff]
        %v1075 = vld [vmem:[%s477 + $0xee0] sm:$0xff]
        %v1076 = vld [vmem:[%s477 + $0xee8] sm:$0xff]
        %v1077 = vld [vmem:[%s477 + $0xef0] sm:$0xff]
        %v1078 = vld [vmem:[%s477 + $0xef8] sm:$0xff]
        %v1079 = vld [vmem:[%s477 + $0xf00] sm:$0xff]
        %v1080 = vld [vmem:[%s477 + $0xf08] sm:$0xff]
        %v1081 = vld [vmem:[%s477 + $0xf10] sm:$0xff]
        %v1082 = vld [vmem:[%s477 + $0xf18] sm:$0xff]
        %v1083 = vld [vmem:[%s477 + $0xf20] sm:$0xff]
        %v1084 = vld [vmem:[%s477 + $0xf28] sm:$0xff]
        %v1085 = vld [vmem:[%s477 + $0xf30] sm:$0xff]
        %v1086 = vld [vmem:[%s477 + $0xf38] sm:$0xff]
        %v1087 = vld [vmem:[%s477 + $0xf40] sm:$0xff]
        %v1088 = vld [vmem:[%s477 + $0xf48] sm:$0xff]
        %v1089 = vld [vmem:[%s477 + $0xf50] sm:$0xff]
        %v1090 = vld [vmem:[%s477 + $0xf58] sm:$0xff]
        %v1091 = vld [vmem:[%s477 + $0xf60] sm:$0xff]
        %v1092 = vld [vmem:[%s477 + $0xf68] sm:$0xff]
        %v1093 = vld [vmem:[%s477 + $0xf70] sm:$0xff]
        %v1094 = vld [vmem:[%s477 + $0xf78] sm:$0xff]
        %v1095 = vld [vmem:[%s477 + $0xf80] sm:$0xff]
        %v1096 = vld [vmem:[%s477 + $0xf88] sm:$0xff]
        %v1097 = vld [vmem:[%s477 + $0xf90] sm:$0xff]
        %v1098 = vld [vmem:[%s477 + $0xf98] sm:$0xff]
        %v1099 = vld [vmem:[%s477 + $0xfa0] sm:$0xff]
        %v1100 = vld [vmem:[%s477 + $0xfa8] sm:$0xff]
        %v1101 = vld [vmem:[%s477 + $0xfb0] sm:$0xff]
        %v1102 = vld [vmem:[%s477 + $0xfb8] sm:$0xff]
        %v1103 = vld [vmem:[%s477 + $0xfc0] sm:$0xff]
        %v1104 = vld [vmem:[%s477 + $0xfc8] sm:$0xff]
        %v1105 = vld [vmem:[%s477 + $0xfd0] sm:$0xff]
        %v1106 = vld [vmem:[%s477 + $0xfd8] sm:$0xff]
        %v1107 = vld [vmem:[%s477 + $0xfe0] sm:$0xff]
        %v1108 = vld [vmem:[%s477 + $0xfe8] sm:$0xff]
        %v1109 = vld [vmem:[%s477 + $0xff0] sm:$0xff]
        %v1110 = vld [vmem:[%s477 + $0xff8] sm:$0xff]
        %v1111 = vld [vmem:[%s477 + $0x1000] sm:$0xff]
        %v1112 = vld [vmem:[%s477 + $0x1008] sm:$0xff]
        %v1113 = vld [vmem:[%s477 + $0x1010] sm:$0xff]
        %v1114 = vld [vmem:[%s477 + $0x1018] sm:$0xff]
        %v1115 = vld [vmem:[%s477 + $0x1020] sm:$0xff]
        %v1116 = vld [vmem:[%s477 + $0x1028] sm:$0xff]
        %v1117 = vld [vmem:[%s477 + $0x1030] sm:$0xff]
        %v1118 = vld [vmem:[%s477 + $0x1038] sm:$0xff]
        %v1119 = vld [vmem:[%s477 + $0x1040] sm:$0xff]
        %v1120 = vld [vmem:[%s477 + $0x1048] sm:$0xff]
        %v1121 = vld [vmem:[%s477 + $0x1050] sm:$0xff]
        %v1122 = vld [vmem:[%s477 + $0x1058] sm:$0xff]
        %v1123 = vld [vmem:[%s477 + $0x1060] sm:$0xff]
        %v1124 = vld [vmem:[%s477 + $0x1068] sm:$0xff]
        %v1125 = vld [vmem:[%s477 + $0x1070] sm:$0xff]
        %v1126 = vld [vmem:[%s477 + $0x1078] sm:$0xff]
        %v1127 = vld [vmem:[%s477 + $0x1080] sm:$0xff]
        %v1128 = vld [vmem:[%s477 + $0x1088] sm:$0xff]
        %v1129 = vld [vmem:[%s477 + $0x1090] sm:$0xff]
        %v1130 = vld [vmem:[%s477 + $0x1098] sm:$0xff]
        %v1131 = vld [vmem:[%s477 + $0x10a0] sm:$0xff]
        %v1132 = vld [vmem:[%s477 + $0x10a8] sm:$0xff]
        %v1133 = vld [vmem:[%s477 + $0x10b0] sm:$0xff]
        %v1134 = vld [vmem:[%s477 + $0x10b8] sm:$0xff]
        %v1135 = vld [vmem:[%s477 + $0x10c0] sm:$0xff]
        %v1136 = vld [vmem:[%s477 + $0x10c8] sm:$0xff]
        %v1137 = vld [vmem:[%s477 + $0x10d0] sm:$0xff]
        %v1138 = vld [vmem:[%s477 + $0x10d8] sm:$0xff]
        %v1139 = vld [vmem:[%s477 + $0x10e0] sm:$0xff]
        %v1140 = vld [vmem:[%s477 + $0x10e8] sm:$0xff]
        %v1141 = vld [vmem:[%s477 + $0x10f0] sm:$0xff]
        %v1142 = vld [vmem:[%s477 + $0x10f8] sm:$0xff]
        %v1143 = vld [vmem:[%s477 + $0x1100] sm:$0xff]
        %v1144 = vld [vmem:[%s477 + $0x1108] sm:$0xff]
        %v1145 = vld [vmem:[%s477 + $0x1110] sm:$0xff]
        %v1146 = vld [vmem:[%s477 + $0x1118] sm:$0xff]
        %v1147 = vld [vmem:[%s477 + $0x1120] sm:$0xff]
        %v1148 = vld [vmem:[%s477 + $0x1128] sm:$0xff]
        %v1149 = vld [vmem:[%s477 + $0x1130] sm:$0xff]
        %v1150 = vld [vmem:[%s477 + $0x1138] sm:$0xff]
        %v1151 = vld [vmem:[%s477 + $0x1140] sm:$0xff]
        %v1152 = vld [vmem:[%s477 + $0x1148] sm:$0xff]
        %v1153 = vld [vmem:[%s477 + $0x1150] sm:$0xff]
        %v1154 = vld [vmem:[%s477 + $0x1158] sm:$0xff]
        %v1155 = vld [vmem:[%s477 + $0x1160] sm:$0xff]
        %v1156 = vld [vmem:[%s477 + $0x1168] sm:$0xff]
        %v1157 = vld [vmem:[%s477 + $0x1170] sm:$0xff]
        %v1158 = vld [vmem:[%s477 + $0x1178] sm:$0xff]
        %v1159 = vld [vmem:[%s477 + $0x1180] sm:$0xff]
        %v1160 = vld [vmem:[%s477 + $0x1188] sm:$0xff]
        %v1161 = vld [vmem:[%s477 + $0x1190] sm:$0xff]
        %v1162 = vld [vmem:[%s477 + $0x1198] sm:$0xff]
        %v1163 = vld [vmem:[%s477 + $0x11a0] sm:$0xff]
        %v1164 = vld [vmem:[%s477 + $0x11a8] sm:$0xff]
        %v1165 = vld [vmem:[%s477 + $0x11b0] sm:$0xff]
        %v1166 = vld [vmem:[%s477 + $0x11b8] sm:$0xff]
        %v1167 = vld [vmem:[%s477 + $0x11c0] sm:$0xff]
        %v1168 = vld [vmem:[%s477 + $0x11c8] sm:$0xff]
        %v1169 = vld [vmem:[%s477 + $0x11d0] sm:$0xff]
        %v1170 = vld [vmem:[%s477 + $0x11d8] sm:$0xff]
        %v1171 = vld [vmem:[%s477 + $0x11e0] sm:$0xff]
        %v1172 = vld [vmem:[%s477 + $0x11e8] sm:$0xff]
        %v1173 = vld [vmem:[%s477 + $0x11f0] sm:$0xff]
        %v1174 = vld [vmem:[%s477 + $0x11f8] sm:$0xff]
        %v1175 = vld [vmem:[%s477 + $0x1200] sm:$0xff]
        %v1176 = vld [vmem:[%s477 + $0x1208] sm:$0xff]
        %v1177 = vld [vmem:[%s477 + $0x1210] sm:$0xff]
        %v1178 = vld [vmem:[%s477 + $0x1218] sm:$0xff]
        %v1179 = vld [vmem:[%s477 + $0x1220] sm:$0xff]
        %v1180 = vld [vmem:[%s477 + $0x1228] sm:$0xff]
        %v1181 = vld [vmem:[%s477 + $0x1230] sm:$0xff]
        %v1182 = vld [vmem:[%s477 + $0x1238] sm:$0xff]
        %v1183 = vld [vmem:[%s477 + $0x1240] sm:$0xff]
        %v1184 = vld [vmem:[%s477 + $0x1248] sm:$0xff]
        %v1185 = vld [vmem:[%s477 + $0x1250] sm:$0xff]
        %v1186 = vld [vmem:[%s477 + $0x1258] sm:$0xff]
        %v1187 = vld [vmem:[%s477 + $0x1260] sm:$0xff]
        %v1188 = vld [vmem:[%s477 + $0x1268] sm:$0xff]
        %v1189 = vld [vmem:[%s477 + $0x1270] sm:$0xff]
        %v1190 = vld [vmem:[%s477 + $0x1278] sm:$0xff]
        %v1191 = vld [vmem:[%s477 + $0x1280] sm:$0xff]
        %v1192 = vld [vmem:[%s477 + $0x1288] sm:$0xff]
        %v1193 = vld [vmem:[%s477 + $0x1290] sm:$0xff]
        %v1194 = vld [vmem:[%s477 + $0x1298] sm:$0xff]
        %v1195 = vld [vmem:[%s477 + $0x12a0] sm:$0xff]
        %v1196 = vld [vmem:[%s477 + $0x12a8] sm:$0xff]
        %v1197 = vld [vmem:[%s477 + $0x12b0] sm:$0xff]
        %v1198 = vld [vmem:[%s477 + $0x12b8] sm:$0xff]
        %v1199 = vld [vmem:[%s477 + $0x12c0] sm:$0xff]
        %v1200 = vld [vmem:[%s477 + $0x12c8] sm:$0xff]
        %v1201 = vld [vmem:[%s477 + $0x12d0] sm:$0xff]
        %v1202 = vld [vmem:[%s477 + $0x12d8] sm:$0xff]
        %v1203 = vld [vmem:[%s477 + $0x12e0] sm:$0xff]
        %v1204 = vld [vmem:[%s477 + $0x12e8] sm:$0xff]
        %v1205 = vld [vmem:[%s477 + $0x12f0] sm:$0xff]
        %v1206 = vld [vmem:[%s477 + $0x12f8] sm:$0xff]
        %v1207 = vld [vmem:[%s477 + $0x1300] sm:$0xff]
        %v1208 = vld [vmem:[%s477 + $0x1308] sm:$0xff]
        %v1209 = vld [vmem:[%s477 + $0x1310] sm:$0xff]
        %v1210 = vld [vmem:[%s477 + $0x1318] sm:$0xff]
        %v1211 = vld [vmem:[%s477 + $0x1320] sm:$0xff]
        %v1212 = vld [vmem:[%s477 + $0x1328] sm:$0xff]
        %v1213 = vld [vmem:[%s477 + $0x1330] sm:$0xff]
        %v1214 = vld [vmem:[%s477 + $0x1338] sm:$0xff]
        %v1215 = vld [vmem:[%s477 + $0x1340] sm:$0xff]
        %v1216 = vld [vmem:[%s477 + $0x1348] sm:$0xff]
        %v1217 = vld [vmem:[%s477 + $0x1350] sm:$0xff]
        %v1218 = vld [vmem:[%s477 + $0x1358] sm:$0xff]
        %v1219 = vld [vmem:[%s477 + $0x1360] sm:$0xff]
        %v1220 = vld [vmem:[%s477 + $0x1368] sm:$0xff]
        %v1221 = vld [vmem:[%s477 + $0x1370] sm:$0xff]
        %v1222 = vld [vmem:[%s477 + $0x1378] sm:$0xff]
        %v1223 = vld [vmem:[%s477 + $0x1380] sm:$0xff]
        %v1224 = vld [vmem:[%s477 + $0x1388] sm:$0xff]
        %v1225 = vld [vmem:[%s477 + $0x1390] sm:$0xff]
        %v1226 = vld [vmem:[%s477 + $0x1398] sm:$0xff]
        %v1227 = vld [vmem:[%s477 + $0x13a0] sm:$0xff]
        %v1228 = vld [vmem:[%s477 + $0x13a8] sm:$0xff]
        %v1229 = vld [vmem:[%s477 + $0x13b0] sm:$0xff]
        %v1230 = vld [vmem:[%s477 + $0x13b8] sm:$0xff]
        %v1231 = vld [vmem:[%s477 + $0x13c0] sm:$0xff]
        %v1232 = vld [vmem:[%s477 + $0x13c8] sm:$0xff]
        %v1233 = vld [vmem:[%s477 + $0x13d0] sm:$0xff]
        %v1234 = vld [vmem:[%s477 + $0x13d8] sm:$0xff]
        %v1235 = vld [vmem:[%s477 + $0x13e0] sm:$0xff]
        %v1236 = vld [vmem:[%s477 + $0x13e8] sm:$0xff]
        %v1237 = vld [vmem:[%s477 + $0x13f0] sm:$0xff]
        %v1238 = vld [vmem:[%s477 + $0x13f8] sm:$0xff]
        %v1239 = vld [vmem:[%s477 + $0x1400] sm:$0xff]
        %v1240 = vld [vmem:[%s477 + $0x1408] sm:$0xff]
        %v1241 = vld [vmem:[%s477 + $0x1410] sm:$0xff]
        %v1242 = vld [vmem:[%s477 + $0x1418] sm:$0xff]
        %v1243 = vld [vmem:[%s477 + $0x1420] sm:$0xff]
        %v1244 = vld [vmem:[%s477 + $0x1428] sm:$0xff]
        %v1245 = vld [vmem:[%s477 + $0x1430] sm:$0xff]
        %v1246 = vld [vmem:[%s477 + $0x1438] sm:$0xff]
        %v1247 = vld [vmem:[%s477 + $0x1440] sm:$0xff]
        %v1248 = vld [vmem:[%s477 + $0x1448] sm:$0xff]
        %v1249 = vld [vmem:[%s477 + $0x1450] sm:$0xff]
        %v1250 = vld [vmem:[%s477 + $0x1458] sm:$0xff]
        %v1251 = vld [vmem:[%s477 + $0x1460] sm:$0xff]
        %v1252 = vld [vmem:[%s477 + $0x1468] sm:$0xff]
        %v1253 = vld [vmem:[%s477 + $0x1470] sm:$0xff]
        %v1254 = vld [vmem:[%s477 + $0x1478] sm:$0xff]
        %v1255 = vld [vmem:[%s477 + $0x1480] sm:$0xff]
        %v1256 = vld [vmem:[%s477 + $0x1488] sm:$0xff]
        %v1257 = vld [vmem:[%s477 + $0x1490] sm:$0xff]
        %v1258 = vld [vmem:[%s477 + $0x1498] sm:$0xff]
        %v1259 = vld [vmem:[%s477 + $0x14a0] sm:$0xff]
        %v1260 = vld [vmem:[%s477 + $0x14a8] sm:$0xff]
        %v1261 = vld [vmem:[%s477 + $0x14b0] sm:$0xff]
        %v1262 = vld [vmem:[%s477 + $0x14b8] sm:$0xff]
        %v1263 = vld [vmem:[%s477 + $0x14c0] sm:$0xff]
        %v1264 = vld [vmem:[%s477 + $0x14c8] sm:$0xff]
        %v1265 = vld [vmem:[%s477 + $0x14d0] sm:$0xff]
        %v1266 = vld [vmem:[%s477 + $0x14d8] sm:$0xff]
        %v1267 = vld [vmem:[%s477 + $0x14e0] sm:$0xff]
        %v1268 = vld [vmem:[%s477 + $0x14e8] sm:$0xff]
        %v1269 = vld [vmem:[%s477 + $0x14f0] sm:$0xff]
        %v1270 = vld [vmem:[%s477 + $0x14f8] sm:$0xff]
        %v1271 = vld [vmem:[%s477 + $0x1500] sm:$0xff]
        %v1272 = vld [vmem:[%s477 + $0x1508] sm:$0xff]
        %v1273 = vld [vmem:[%s477 + $0x1510] sm:$0xff]
        %v1274 = vld [vmem:[%s477 + $0x1518] sm:$0xff]
        %v1275 = vld [vmem:[%s477 + $0x1520] sm:$0xff]
        %v1276 = vld [vmem:[%s477 + $0x1528] sm:$0xff]
        %v1277 = vld [vmem:[%s477 + $0x1530] sm:$0xff]
        %v1278 = vld [vmem:[%s477 + $0x1538] sm:$0xff]
        %v1279 = vld [vmem:[%s477 + $0x1540] sm:$0xff]
        %v1280 = vld [vmem:[%s477 + $0x1548] sm:$0xff]
        %v1281 = vld [vmem:[%s477 + $0x1550] sm:$0xff]
        %v1282 = vld [vmem:[%s477 + $0x1558] sm:$0xff]
        %v1283 = vld [vmem:[%s477 + $0x1560] sm:$0xff]
        %v1284 = vld [vmem:[%s477 + $0x1568] sm:$0xff]
        %v1285 = vld [vmem:[%s477 + $0x1570] sm:$0xff]
        %v1286 = vld [vmem:[%s477 + $0x1578] sm:$0xff]
        %v1287 = vld [vmem:[%s477 + $0x1580] sm:$0xff]
        %v1288 = vld [vmem:[%s477 + $0x1588] sm:$0xff]
        %v1289 = vld [vmem:[%s477 + $0x1590] sm:$0xff]
        %v1290 = vld [vmem:[%s477 + $0x1598] sm:$0xff]
        %v1291 = vld [vmem:[%s477 + $0x15a0] sm:$0xff]
        %v1292 = vld [vmem:[%s477 + $0x15a8] sm:$0xff]
        %v1293 = vld [vmem:[%s477 + $0x15b0] sm:$0xff]
        %v1294 = vld [vmem:[%s477 + $0x15b8] sm:$0xff]
        %v1295 = vld [vmem:[%s477 + $0x15c0] sm:$0xff]
        %v1296 = vld [vmem:[%s477 + $0x15c8] sm:$0xff]
        %v1297 = vld [vmem:[%s477 + $0x15d0] sm:$0xff]
        %v1298 = vld [vmem:[%s477 + $0x15d8] sm:$0xff]
        %v1299 = vld [vmem:[%s477 + $0x15e0] sm:$0xff]
        %v1300 = vld [vmem:[%s477 + $0x15e8] sm:$0xff]
        %v1301 = vld [vmem:[%s477 + $0x15f0] sm:$0xff]
        %v1302 = vld [vmem:[%s477 + $0x15f8] sm:$0xff]
        %v1303 = vld [vmem:[%s477 + $0x1600] sm:$0xff]
        %v1304 = vld [vmem:[%s477 + $0x1608] sm:$0xff]
        %v1305 = vld [vmem:[%s477 + $0x1610] sm:$0xff]
        %v1306 = vld [vmem:[%s477 + $0x1618] sm:$0xff]
        %v1307 = vld [vmem:[%s477 + $0x1620] sm:$0xff]
        %v1308 = vld [vmem:[%s477 + $0x1628] sm:$0xff]
        %v1309 = vld [vmem:[%s477 + $0x1630] sm:$0xff]
        %v1310 = vld [vmem:[%s477 + $0x1638] sm:$0xff]
        %v1311 = vld [vmem:[%s477 + $0x1640] sm:$0xff]
        %v1312 = vld [vmem:[%s477 + $0x1648] sm:$0xff]
        %v1313 = vld [vmem:[%s477 + $0x1650] sm:$0xff]
        %v1314 = vld [vmem:[%s477 + $0x1658] sm:$0xff]
        %v1315 = vld [vmem:[%s477 + $0x1660] sm:$0xff]
        %v1316 = vld [vmem:[%s477 + $0x1668] sm:$0xff]
        %v1317 = vld [vmem:[%s477 + $0x1670] sm:$0xff]
        %v1318 = vld [vmem:[%s477 + $0x1678] sm:$0xff]
        %v1319 = vld [vmem:[%s477 + $0x1680] sm:$0xff]
        %v1320 = vld [vmem:[%s477 + $0x1688] sm:$0xff]
        %v1321 = vld [vmem:[%s477 + $0x1690] sm:$0xff]
        %v1322 = vld [vmem:[%s477 + $0x1698] sm:$0xff]
        %v1323 = vld [vmem:[%s477 + $0x16a0] sm:$0xff]
        %v1324 = vld [vmem:[%s477 + $0x16a8] sm:$0xff]
        %v1325 = vld [vmem:[%s477 + $0x16b0] sm:$0xff]
        %v1326 = vld [vmem:[%s477 + $0x16b8] sm:$0xff]
        %v1327 = vld [vmem:[%s477 + $0x16c0] sm:$0xff]
        %v1328 = vld [vmem:[%s477 + $0x16c8] sm:$0xff]
        %v1329 = vld [vmem:[%s477 + $0x16d0] sm:$0xff]
        %v1330 = vld [vmem:[%s477 + $0x16d8] sm:$0xff]
        %v1331 = vld [vmem:[%s477 + $0x16e0] sm:$0xff]
        %v1332 = vld [vmem:[%s477 + $0x16e8] sm:$0xff]
        %v1333 = vld [vmem:[%s477 + $0x16f0] sm:$0xff]
        %v1334 = vld [vmem:[%s477 + $0x16f8] sm:$0xff]
        %v1335 = vld [vmem:[%s477 + $0x1700] sm:$0xff]
        %v1336 = vld [vmem:[%s477 + $0x1708] sm:$0xff]
        %v1337 = vld [vmem:[%s477 + $0x1710] sm:$0xff]
        %v1338 = vld [vmem:[%s477 + $0x1718] sm:$0xff]
        %v1339 = vld [vmem:[%s477 + $0x1720] sm:$0xff]
        %v1340 = vld [vmem:[%s477 + $0x1728] sm:$0xff]
        %v1341 = vld [vmem:[%s477 + $0x1730] sm:$0xff]
        %v1342 = vld [vmem:[%s477 + $0x1738] sm:$0xff]
        %v1343 = vld [vmem:[%s477 + $0x1740] sm:$0xff]
        %v1344 = vld [vmem:[%s477 + $0x1748] sm:$0xff]
        %v1345 = vld [vmem:[%s477 + $0x1750] sm:$0xff]
        %v1346 = vld [vmem:[%s477 + $0x1758] sm:$0xff]
        %v1347 = vld [vmem:[%s477 + $0x1760] sm:$0xff]
        %v1348 = vld [vmem:[%s477 + $0x1768] sm:$0xff]
        %v1349 = vld [vmem:[%s477 + $0x1770] sm:$0xff]
        %v1350 = vld [vmem:[%s477 + $0x1778] sm:$0xff]
        %v1351 = vld [vmem:[%s477 + $0x1780] sm:$0xff]
        %v1352 = vld [vmem:[%s477 + $0x1788] sm:$0xff]
        %v1353 = vld [vmem:[%s477 + $0x1790] sm:$0xff]
        %v1354 = vld [vmem:[%s477 + $0x1798] sm:$0xff]
        %v1355 = vld [vmem:[%s477 + $0x17a0] sm:$0xff]
        %v1356 = vld [vmem:[%s477 + $0x17a8] sm:$0xff]
        %v1357 = vld [vmem:[%s477 + $0x17b0] sm:$0xff]
        %v1358 = vld [vmem:[%s477 + $0x17b8] sm:$0xff]
        %v1359 = vld [vmem:[%s477 + $0x17c0] sm:$0xff]
        %v1360 = vld [vmem:[%s477 + $0x17c8] sm:$0xff]
        %v1361 = vld [vmem:[%s477 + $0x17d0] sm:$0xff]
        %v1362 = vld [vmem:[%s477 + $0x17d8] sm:$0xff]
        %v1363 = vld [vmem:[%s477 + $0x17e0] sm:$0xff]
        %v1364 = vld [vmem:[%s477 + $0x17e8] sm:$0xff]
        %v1365 = vld [vmem:[%s477 + $0x17f0] sm:$0xff]
        %v1366 = vld [vmem:[%s477 + $0x17f8] sm:$0xff]
        %v1367 = vld [vmem:[%s477 + $0x1800] sm:$0xff]
        %v1368 = vld [vmem:[%s477 + $0x1808] sm:$0xff]
        %v1369 = vld [vmem:[%s477 + $0x1810] sm:$0xff]
        %v1370 = vld [vmem:[%s477 + $0x1818] sm:$0xff]
        %v1371 = vld [vmem:[%s477 + $0x1820] sm:$0xff]
        %v1372 = vld [vmem:[%s477 + $0x1828] sm:$0xff]
        %v1373 = vld [vmem:[%s477 + $0x1830] sm:$0xff]
        %v1374 = vld [vmem:[%s477 + $0x1838] sm:$0xff]
        %v1375 = vld [vmem:[%s477 + $0x1840] sm:$0xff]
        %v1376 = vld [vmem:[%s477 + $0x1848] sm:$0xff]
        %v1377 = vld [vmem:[%s477 + $0x1850] sm:$0xff]
        %v1378 = vld [vmem:[%s477 + $0x1858] sm:$0xff]
        %v1379 = vld [vmem:[%s477 + $0x1860] sm:$0xff]
        %v1380 = vld [vmem:[%s477 + $0x1868] sm:$0xff]
        %v1381 = vld [vmem:[%s477 + $0x1870] sm:$0xff]
        %v1382 = vld [vmem:[%s477 + $0x1878] sm:$0xff]
        %v1383 = vld [vmem:[%s477 + $0x1880] sm:$0xff]
        %v1384 = vld [vmem:[%s477 + $0x1888] sm:$0xff]
        %v1385 = vld [vmem:[%s477 + $0x1890] sm:$0xff]
        %v1386 = vld [vmem:[%s477 + $0x1898] sm:$0xff]
        %v1387 = vld [vmem:[%s477 + $0x18a0] sm:$0xff]
        %v1388 = vld [vmem:[%s477 + $0x18a8] sm:$0xff]
        %v1389 = vld [vmem:[%s477 + $0x18b0] sm:$0xff]
        %v1390 = vld [vmem:[%s477 + $0x18b8] sm:$0xff]
        %v1391 = vld [vmem:[%s477 + $0x18c0] sm:$0xff]
        %v1392 = vld [vmem:[%s477 + $0x18c8] sm:$0xff]
        %v1393 = vld [vmem:[%s477 + $0x18d0] sm:$0xff]
        %v1394 = vld [vmem:[%s477 + $0x18d8] sm:$0xff]
        %v1395 = vld [vmem:[%s477 + $0x18e0] sm:$0xff]
        %v1396 = vld [vmem:[%s477 + $0x18e8] sm:$0xff]
        %v1397 = vld [vmem:[%s477 + $0x18f0] sm:$0xff]
        %v1398 = vld [vmem:[%s477 + $0x18f8] sm:$0xff]
        %v1399 = vld [vmem:[%s477 + $0x1900] sm:$0xff]
        %v1400 = vld [vmem:[%s477 + $0x1908] sm:$0xff]
        %v1401 = vld [vmem:[%s477 + $0x1910] sm:$0xff]
        %v1402 = vld [vmem:[%s477 + $0x1918] sm:$0xff]
        %v1403 = vld [vmem:[%s477 + $0x1920] sm:$0xff]
        %v1404 = vld [vmem:[%s477 + $0x1928] sm:$0xff]
        %v1405 = vld [vmem:[%s477 + $0x1930] sm:$0xff]
        %v1406 = vld [vmem:[%s477 + $0x1938] sm:$0xff]
        %v1407 = vld [vmem:[%s477 + $0x1940] sm:$0xff]
        %v1408 = vld [vmem:[%s477 + $0x1948] sm:$0xff]
        %v1409 = vld [vmem:[%s477 + $0x1950] sm:$0xff]
        %v1410 = vld [vmem:[%s477 + $0x1958] sm:$0xff]
        %v1411 = vld [vmem:[%s477 + $0x1960] sm:$0xff]
        %v1412 = vld [vmem:[%s477 + $0x1968] sm:$0xff]
        %v1413 = vld [vmem:[%s477 + $0x1970] sm:$0xff]
        %v1414 = vld [vmem:[%s477 + $0x1978] sm:$0xff]
        %v1415 = vld [vmem:[%s477 + $0x1980] sm:$0xff]
        %v1416 = vld [vmem:[%s477 + $0x1988] sm:$0xff]
        %v1417 = vld [vmem:[%s477 + $0x1990] sm:$0xff]
        %v1418 = vld [vmem:[%s477 + $0x1998] sm:$0xff]
        %v1419 = vld [vmem:[%s477 + $0x19a0] sm:$0xff]
        %v1420 = vld [vmem:[%s477 + $0x19a8] sm:$0xff]
        %v1421 = vld [vmem:[%s477 + $0x19b0] sm:$0xff]
        %v1422 = vld [vmem:[%s477 + $0x19b8] sm:$0xff]
        %v1423 = vld [vmem:[%s477 + $0x19c0] sm:$0xff]
        %v1424 = vld [vmem:[%s477 + $0x19c8] sm:$0xff]
        %v1425 = vld [vmem:[%s477 + $0x19d0] sm:$0xff]
        %v1426 = vld [vmem:[%s477 + $0x19d8] sm:$0xff]
        %v1427 = vld [vmem:[%s477 + $0x19e0] sm:$0xff]
        %v1428 = vld [vmem:[%s477 + $0x19e8] sm:$0xff]
        %v1429 = vld [vmem:[%s477 + $0x19f0] sm:$0xff]
        %v1430 = vld [vmem:[%s477 + $0x19f8] sm:$0xff]
        %v1431 = vld [vmem:[%s477 + $0x1a00] sm:$0xff]
        %v1432 = vld [vmem:[%s477 + $0x1a08] sm:$0xff]
        %v1433 = vld [vmem:[%s477 + $0x1a10] sm:$0xff]
        %v1434 = vld [vmem:[%s477 + $0x1a18] sm:$0xff]
        %v1435 = vld [vmem:[%s477 + $0x1a20] sm:$0xff]
        %v1436 = vld [vmem:[%s477 + $0x1a28] sm:$0xff]
        %v1437 = vld [vmem:[%s477 + $0x1a30] sm:$0xff]
        %v1438 = vld [vmem:[%s477 + $0x1a38] sm:$0xff]
        %v1439 = vld [vmem:[%s477 + $0x1a40] sm:$0xff]
        %v1440 = vld [vmem:[%s477 + $0x1a48] sm:$0xff]
        %v1441 = vld [vmem:[%s477 + $0x1a50] sm:$0xff]
        %v1442 = vld [vmem:[%s477 + $0x1a58] sm:$0xff]
        %v1443 = vld [vmem:[%s477 + $0x1a60] sm:$0xff]
        %v1444 = vld [vmem:[%s477 + $0x1a68] sm:$0xff]
        %v1445 = vld [vmem:[%s477 + $0x1a70] sm:$0xff]
        %v1446 = vld [vmem:[%s477 + $0x1a78] sm:$0xff]
        %v1447 = vld [vmem:[%s477 + $0x1a80] sm:$0xff]
        %v1448 = vld [vmem:[%s477 + $0x1a88] sm:$0xff]
        %v1449 = vld [vmem:[%s477 + $0x1a90] sm:$0xff]
        %v1450 = vld [vmem:[%s477 + $0x1a98] sm:$0xff]
        %v1451 = vld [vmem:[%s477 + $0x1aa0] sm:$0xff]
        %v1452 = vld [vmem:[%s477 + $0x1aa8] sm:$0xff]
        %v1453 = vld [vmem:[%s477 + $0x1ab0] sm:$0xff]
        %v1454 = vld [vmem:[%s477 + $0x1ab8] sm:$0xff]
        %v1455 = vld [vmem:[%s477 + $0x1ac0] sm:$0xff]
        %v1456 = vld [vmem:[%s477 + $0x1ac8] sm:$0xff]
        %v1457 = vld [vmem:[%s477 + $0x1ad0] sm:$0xff]
        %v1458 = vld [vmem:[%s477 + $0x1ad8] sm:$0xff]
        %v1459 = vld [vmem:[%s477 + $0x1ae0] sm:$0xff]
        %v1460 = vld [vmem:[%s477 + $0x1ae8] sm:$0xff]
        %v1461 = vld [vmem:[%s477 + $0x1af0] sm:$0xff]
        %v1462 = vld [vmem:[%s477 + $0x1af8] sm:$0xff]
        %v1463 = vld [vmem:[%s477 + $0x1b00] sm:$0xff]
        %v1464 = vld [vmem:[%s477 + $0x1b08] sm:$0xff]
        %v1465 = vld [vmem:[%s477 + $0x1b10] sm:$0xff]
        %v1466 = vld [vmem:[%s477 + $0x1b18] sm:$0xff]
        %v1467 = vld [vmem:[%s477 + $0x1b20] sm:$0xff]
        %v1468 = vld [vmem:[%s477 + $0x1b28] sm:$0xff]
        %v1469 = vld [vmem:[%s477 + $0x1b30] sm:$0xff]
        %v1470 = vld [vmem:[%s477 + $0x1b38] sm:$0xff]
        %v1471 = vld [vmem:[%s477 + $0x1b40] sm:$0xff]
        %v1472 = vld [vmem:[%s477 + $0x1b48] sm:$0xff]
        %v1473 = vld [vmem:[%s477 + $0x1b50] sm:$0xff]
        %v1474 = vld [vmem:[%s477 + $0x1b58] sm:$0xff]
        %v1475 = vld [vmem:[%s477 + $0x1b60] sm:$0xff]
        %v1476 = vld [vmem:[%s477 + $0x1b68] sm:$0xff]
        %v1477 = vld [vmem:[%s477 + $0x1b70] sm:$0xff]
        %v1478 = vld [vmem:[%s477 + $0x1b78] sm:$0xff]
        %v1479 = vld [vmem:[%s477 + $0x1b80] sm:$0xff]
        %v1480 = vld [vmem:[%s477 + $0x1b88] sm:$0xff]
        %v1481 = vld [vmem:[%s477 + $0x1b90] sm:$0xff]
        %v1482 = vld [vmem:[%s477 + $0x1b98] sm:$0xff]
        %v1483 = vld [vmem:[%s477 + $0x1ba0] sm:$0xff]
        %v1484 = vld [vmem:[%s477 + $0x1ba8] sm:$0xff]
        %v1485 = vld [vmem:[%s477 + $0x1bb0] sm:$0xff]
        %v1486 = vld [vmem:[%s477 + $0x1bb8] sm:$0xff]
        %v1487 = vld [vmem:[%s477 + $0x1bc0] sm:$0xff]
        %v1488 = vld [vmem:[%s477 + $0x1bc8] sm:$0xff]
        %v1489 = vld [vmem:[%s477 + $0x1bd0] sm:$0xff]
        %v1490 = vld [vmem:[%s477 + $0x1bd8] sm:$0xff]
        %v1491 = vld [vmem:[%s477 + $0x1be0] sm:$0xff]
        %v1492 = vld [vmem:[%s477 + $0x1be8] sm:$0xff]
        %v1493 = vld [vmem:[%s477 + $0x1bf0] sm:$0xff]
        %v1494 = vld [vmem:[%s477 + $0x1bf8] sm:$0xff]
        %v1495 = vld [vmem:[%s477 + $0x1c00] sm:$0xff]
        %v1496 = vld [vmem:[%s477 + $0x1c08] sm:$0xff]
        %v1497 = vld [vmem:[%s477 + $0x1c10] sm:$0xff]
        %v1498 = vld [vmem:[%s477 + $0x1c18] sm:$0xff]
        %v1499 = vld [vmem:[%s477 + $0x1c20] sm:$0xff]
        %v1500 = vld [vmem:[%s477 + $0x1c28] sm:$0xff]
        %v1501 = vld [vmem:[%s477 + $0x1c30] sm:$0xff]
        %v1502 = vld [vmem:[%s477 + $0x1c38] sm:$0xff]
        %v1503 = vld [vmem:[%s477 + $0x1c40] sm:$0xff]
        %v1504 = vld [vmem:[%s477 + $0x1c48] sm:$0xff]
        %v1505 = vld [vmem:[%s477 + $0x1c50] sm:$0xff]
        %v1506 = vld [vmem:[%s477 + $0x1c58] sm:$0xff]
        %v1507 = vld [vmem:[%s477 + $0x1c60] sm:$0xff]
        %v1508 = vld [vmem:[%s477 + $0x1c68] sm:$0xff]
        %v1509 = vld [vmem:[%s477 + $0x1c70] sm:$0xff]
        %v1510 = vld [vmem:[%s477 + $0x1c78] sm:$0xff]
        %v1511 = vld [vmem:[%s477 + $0x1c80] sm:$0xff]
        %v1512 = vld [vmem:[%s477 + $0x1c88] sm:$0xff]
        %v1513 = vld [vmem:[%s477 + $0x1c90] sm:$0xff]
        %v1514 = vld [vmem:[%s477 + $0x1c98] sm:$0xff]
        %v1515 = vld [vmem:[%s477 + $0x1ca0] sm:$0xff]
        %v1516 = vld [vmem:[%s477 + $0x1ca8] sm:$0xff]
        %v1517 = vld [vmem:[%s477 + $0x1cb0] sm:$0xff]
        %v1518 = vld [vmem:[%s477 + $0x1cb8] sm:$0xff]
        %v1519 = vld [vmem:[%s477 + $0x1cc0] sm:$0xff]
        %v1520 = vld [vmem:[%s477 + $0x1cc8] sm:$0xff]
        %v1521 = vld [vmem:[%s477 + $0x1cd0] sm:$0xff]
        %v1522 = vld [vmem:[%s477 + $0x1cd8] sm:$0xff]
        %v1523 = vld [vmem:[%s477 + $0x1ce0] sm:$0xff]
        %v1524 = vld [vmem:[%s477 + $0x1ce8] sm:$0xff]
        %v1525 = vld [vmem:[%s477 + $0x1cf0] sm:$0xff]
        %v1526 = vld [vmem:[%s477 + $0x1cf8] sm:$0xff]
        %v1527 = vld [vmem:[%s477 + $0x1d00] sm:$0xff]
        %v1528 = vld [vmem:[%s477 + $0x1d08] sm:$0xff]
        %v1529 = vld [vmem:[%s477 + $0x1d10] sm:$0xff]
        %v1530 = vld [vmem:[%s477 + $0x1d18] sm:$0xff]
        %v1531 = vld [vmem:[%s477 + $0x1d20] sm:$0xff]
        %v1532 = vld [vmem:[%s477 + $0x1d28] sm:$0xff]
        %v1533 = vld [vmem:[%s477 + $0x1d30] sm:$0xff]
        %v1534 = vld [vmem:[%s477 + $0x1d38] sm:$0xff]
        %v1535 = vld [vmem:[%s477 + $0x1d40] sm:$0xff]
        %v1536 = vld [vmem:[%s477 + $0x1d48] sm:$0xff]
        %v1537 = vld [vmem:[%s477 + $0x1d50] sm:$0xff]
        %v1538 = vld [vmem:[%s477 + $0x1d58] sm:$0xff]
        %v1539 = vld [vmem:[%s477 + $0x1d60] sm:$0xff]
        %v1540 = vld [vmem:[%s477 + $0x1d68] sm:$0xff]
        %v1541 = vld [vmem:[%s477 + $0x1d70] sm:$0xff]
        %v1542 = vld [vmem:[%s477 + $0x1d78] sm:$0xff]
        %v1543 = vld [vmem:[%s477 + $0x1d80] sm:$0xff]
        %v1544 = vld [vmem:[%s477 + $0x1d88] sm:$0xff]
        %v1545 = vld [vmem:[%s477 + $0x1d90] sm:$0xff]
        %v1546 = vld [vmem:[%s477 + $0x1d98] sm:$0xff]
        %v1547 = vld [vmem:[%s477 + $0x1da0] sm:$0xff]
        %v1548 = vld [vmem:[%s477 + $0x1da8] sm:$0xff]
        %v1549 = vld [vmem:[%s477 + $0x1db0] sm:$0xff]
        %v1550 = vld [vmem:[%s477 + $0x1db8] sm:$0xff]
        %v1551 = vld [vmem:[%s477 + $0x1dc0] sm:$0xff]
        %v1552 = vld [vmem:[%s477 + $0x1dc8] sm:$0xff]
        %v1553 = vld [vmem:[%s477 + $0x1dd0] sm:$0xff]
        %v1554 = vld [vmem:[%s477 + $0x1dd8] sm:$0xff]
        %v1555 = vld [vmem:[%s477 + $0x1de0] sm:$0xff]
        %v1556 = vld [vmem:[%s477 + $0x1de8] sm:$0xff]
        %v1557 = vld [vmem:[%s477 + $0x1df0] sm:$0xff]
        %v1558 = vld [vmem:[%s477 + $0x1df8] sm:$0xff]
        %v1559 = vld [vmem:[%s477 + $0x1e00] sm:$0xff]
        %v1560 = vld [vmem:[%s477 + $0x1e08] sm:$0xff]
        %v1561 = vld [vmem:[%s477 + $0x1e10] sm:$0xff]
        %v1562 = vld [vmem:[%s477 + $0x1e18] sm:$0xff]
        %v1563 = vld [vmem:[%s477 + $0x1e20] sm:$0xff]
        %v1564 = vld [vmem:[%s477 + $0x1e28] sm:$0xff]
        %v1565 = vld [vmem:[%s477 + $0x1e30] sm:$0xff]
        %v1566 = vld [vmem:[%s477 + $0x1e38] sm:$0xff]
        %v1567 = vld [vmem:[%s477 + $0x1e40] sm:$0xff]
        %v1568 = vld [vmem:[%s477 + $0x1e48] sm:$0xff]
        %v1569 = vld [vmem:[%s477 + $0x1e50] sm:$0xff]
        %v1570 = vld [vmem:[%s477 + $0x1e58] sm:$0xff]
        %v1571 = vld [vmem:[%s477 + $0x1e60] sm:$0xff]
        %v1572 = vld [vmem:[%s477 + $0x1e68] sm:$0xff]
        %v1573 = vld [vmem:[%s477 + $0x1e70] sm:$0xff]
        %v1574 = vld [vmem:[%s477 + $0x1e78] sm:$0xff]
        %v1575 = vld [vmem:[%s477 + $0x1e80] sm:$0xff]
        %v1576 = vld [vmem:[%s477 + $0x1e88] sm:$0xff]
        %v1577 = vld [vmem:[%s477 + $0x1e90] sm:$0xff]
        %v1578 = vld [vmem:[%s477 + $0x1e98] sm:$0xff]
        %v1579 = vld [vmem:[%s477 + $0x1ea0] sm:$0xff]
        %v1580 = vld [vmem:[%s477 + $0x1ea8] sm:$0xff]
        %v1581 = vld [vmem:[%s477 + $0x1eb0] sm:$0xff]
        %v1582 = vld [vmem:[%s477 + $0x1eb8] sm:$0xff]
        %v1583 = vld [vmem:[%s477 + $0x1ec0] sm:$0xff]
        %v1584 = vld [vmem:[%s477 + $0x1ec8] sm:$0xff]
        %v1585 = vld [vmem:[%s477 + $0x1ed0] sm:$0xff]
        %v1586 = vld [vmem:[%s477 + $0x1ed8] sm:$0xff]
        %v1587 = vld [vmem:[%s477 + $0x1ee0] sm:$0xff]
        %v1588 = vld [vmem:[%s477 + $0x1ee8] sm:$0xff]
        %v1589 = vld [vmem:[%s477 + $0x1ef0] sm:$0xff]
        %v1590 = vld [vmem:[%s477 + $0x1ef8] sm:$0xff]
        %v1591 = vld [vmem:[%s477 + $0x1f00] sm:$0xff]
        %v1592 = vld [vmem:[%s477 + $0x1f08] sm:$0xff]
        %v1593 = vld [vmem:[%s477 + $0x1f10] sm:$0xff]
        %v1594 = vld [vmem:[%s477 + $0x1f18] sm:$0xff]
        %v1595 = vld [vmem:[%s477 + $0x1f20] sm:$0xff]
        %v1596 = vld [vmem:[%s477 + $0x1f28] sm:$0xff]
        %v1597 = vld [vmem:[%s477 + $0x1f30] sm:$0xff]
        %v1598 = vld [vmem:[%s477 + $0x1f38] sm:$0xff]
        %v1599 = vld [vmem:[%s477 + $0x1f40] sm:$0xff]
        %v1600 = vld [vmem:[%s477 + $0x1f48] sm:$0xff]
        %v1601 = vld [vmem:[%s477 + $0x1f50] sm:$0xff]
        %v1602 = vld [vmem:[%s477 + $0x1f58] sm:$0xff]
        %v1603 = vld [vmem:[%s477 + $0x1f60] sm:$0xff]
        %v1604 = vld [vmem:[%s477 + $0x1f68] sm:$0xff]
        %v1605 = vld [vmem:[%s477 + $0x1f70] sm:$0xff]
        %v1606 = vld [vmem:[%s477 + $0x1f78] sm:$0xff]
        %v1607 = vld [vmem:[%s477 + $0x1f80] sm:$0xff]
        %v1608 = vld [vmem:[%s477 + $0x1f88] sm:$0xff]
        %v1609 = vld [vmem:[%s477 + $0x1f90] sm:$0xff]
        %v1610 = vld [vmem:[%s477 + $0x1f98] sm:$0xff]
        %v1611 = vld [vmem:[%s477 + $0x1fa0] sm:$0xff]
        %v1612 = vld [vmem:[%s477 + $0x1fa8] sm:$0xff]
        %v1613 = vld [vmem:[%s477 + $0x1fb0] sm:$0xff]
        %v1614 = vld [vmem:[%s477 + $0x1fb8] sm:$0xff]
        %v1615 = vld [vmem:[%s477 + $0x1fc0] sm:$0xff]
        %v1616 = vld [vmem:[%s477 + $0x1fc8] sm:$0xff]
        %v1617 = vld [vmem:[%s477 + $0x1fd0] sm:$0xff]
        %v1618 = vld [vmem:[%s477 + $0x1fd8] sm:$0xff]
        %v1619 = vld [vmem:[%s477 + $0x1fe0] sm:$0xff]
        %v1620 = vld [vmem:[%s477 + $0x1fe8] sm:$0xff]
        %v1621 = vld [vmem:[%s477 + $0x1ff0] sm:$0xff]
        %v1622 = vld [vmem:[%s477 + $0x1ff8] sm:$0xff]
        %v2647 = vunpack.c.l.b16 %v599
        %v2648 = vunpack.c.h.b16 %v599
        %v2649 = vunpack.c.l.b16 %v600
        %v2650 = vunpack.c.h.b16 %v600
        %v2651 = vunpack.c.l.b16 %v601
        %v2652 = vunpack.c.h.b16 %v601
        %v2653 = vunpack.c.l.b16 %v602
        %v2654 = vunpack.c.h.b16 %v602
        %v2655 = vunpack.c.l.b16 %v603
        %v2656 = vunpack.c.h.b16 %v603
        %v2657 = vunpack.c.l.b16 %v604
        %v2658 = vunpack.c.h.b16 %v604
        %v2659 = vunpack.c.l.b16 %v605
        %v2660 = vunpack.c.h.b16 %v605
        %v2661 = vunpack.c.l.b16 %v606
        %v2662 = vunpack.c.h.b16 %v606
        %v2663 = vunpack.c.l.b16 %v607
        %v2664 = vunpack.c.h.b16 %v607
        %v2665 = vunpack.c.l.b16 %v608
        %v2666 = vunpack.c.h.b16 %v608
        %v2667 = vunpack.c.l.b16 %v609
        %v2668 = vunpack.c.h.b16 %v609
        %v2669 = vunpack.c.l.b16 %v610
        %v2670 = vunpack.c.h.b16 %v610
        %v2671 = vunpack.c.l.b16 %v611
        %v2672 = vunpack.c.h.b16 %v611
        %v2673 = vunpack.c.l.b16 %v612
        %v2674 = vunpack.c.h.b16 %v612
        %v2675 = vunpack.c.l.b16 %v613
        %v2676 = vunpack.c.h.b16 %v613
        %v2677 = vunpack.c.l.b16 %v614
        %v2678 = vunpack.c.h.b16 %v614
        %v2679 = vunpack.c.l.b16 %v615
        %v2680 = vunpack.c.h.b16 %v615
        %v2681 = vunpack.c.l.b16 %v616
        %v2682 = vunpack.c.h.b16 %v616
        %v2683 = vunpack.c.l.b16 %v617
        %v2684 = vunpack.c.h.b16 %v617
        %v2685 = vunpack.c.l.b16 %v618
        %v2686 = vunpack.c.h.b16 %v618
        %v2687 = vunpack.c.l.b16 %v619
        %v2688 = vunpack.c.h.b16 %v619
        %v2689 = vunpack.c.l.b16 %v620
        %v2690 = vunpack.c.h.b16 %v620
        %v2691 = vunpack.c.l.b16 %v621
        %v2692 = vunpack.c.h.b16 %v621
        %v2693 = vunpack.c.l.b16 %v622
        %v2694 = vunpack.c.h.b16 %v622
        %v2695 = vunpack.c.l.b16 %v623
        %v2696 = vunpack.c.h.b16 %v623
        %v2697 = vunpack.c.l.b16 %v624
        %v2698 = vunpack.c.h.b16 %v624
        %v2699 = vunpack.c.l.b16 %v625
        %v2700 = vunpack.c.h.b16 %v625
        %v2701 = vunpack.c.l.b16 %v626
        %v2702 = vunpack.c.h.b16 %v626
        %v2703 = vunpack.c.l.b16 %v627
        %v2704 = vunpack.c.h.b16 %v627
        %v2705 = vunpack.c.l.b16 %v628
        %v2706 = vunpack.c.h.b16 %v628
        %v2707 = vunpack.c.l.b16 %v629
        %v2708 = vunpack.c.h.b16 %v629
        %v2709 = vunpack.c.l.b16 %v630
        %v2710 = vunpack.c.h.b16 %v630
        %v2711 = vunpack.c.l.b16 %v631
        %v2712 = vunpack.c.h.b16 %v631
        %v2713 = vunpack.c.l.b16 %v632
        %v2714 = vunpack.c.h.b16 %v632
        %v2715 = vunpack.c.l.b16 %v633
        %v2716 = vunpack.c.h.b16 %v633
        %v2717 = vunpack.c.l.b16 %v634
        %v2718 = vunpack.c.h.b16 %v634
        %v2719 = vunpack.c.l.b16 %v635
        %v2720 = vunpack.c.h.b16 %v635
        %v2721 = vunpack.c.l.b16 %v636
        %v2722 = vunpack.c.h.b16 %v636
        %v2723 = vunpack.c.l.b16 %v637
        %v2724 = vunpack.c.h.b16 %v637
        %v2725 = vunpack.c.l.b16 %v638
        %v2726 = vunpack.c.h.b16 %v638
        %v2727 = vunpack.c.l.b16 %v639
        %v2728 = vunpack.c.h.b16 %v639
        %v2729 = vunpack.c.l.b16 %v640
        %v2730 = vunpack.c.h.b16 %v640
        %v2731 = vunpack.c.l.b16 %v641
        %v2732 = vunpack.c.h.b16 %v641
        %v2733 = vunpack.c.l.b16 %v642
        %v2734 = vunpack.c.h.b16 %v642
        %v2735 = vunpack.c.l.b16 %v643
        %v2736 = vunpack.c.h.b16 %v643
        %v2737 = vunpack.c.l.b16 %v644
        %v2738 = vunpack.c.h.b16 %v644
        %v2739 = vunpack.c.l.b16 %v645
        %v2740 = vunpack.c.h.b16 %v645
        %v2741 = vunpack.c.l.b16 %v646
        %v2742 = vunpack.c.h.b16 %v646
        %v2743 = vunpack.c.l.b16 %v647
        %v2744 = vunpack.c.h.b16 %v647
        %v2745 = vunpack.c.l.b16 %v648
        %v2746 = vunpack.c.h.b16 %v648
        %v2747 = vunpack.c.l.b16 %v649
        %v2748 = vunpack.c.h.b16 %v649
        %v2749 = vunpack.c.l.b16 %v650
        %v2750 = vunpack.c.h.b16 %v650
        %v2751 = vunpack.c.l.b16 %v651
        %v2752 = vunpack.c.h.b16 %v651
        %v2753 = vunpack.c.l.b16 %v652
        %v2754 = vunpack.c.h.b16 %v652
        %v2755 = vunpack.c.l.b16 %v653
        %v2756 = vunpack.c.h.b16 %v653
        %v2757 = vunpack.c.l.b16 %v654
        %v2758 = vunpack.c.h.b16 %v654
        %v2759 = vunpack.c.l.b16 %v655
        %v2760 = vunpack.c.h.b16 %v655
        %v2761 = vunpack.c.l.b16 %v656
        %v2762 = vunpack.c.h.b16 %v656
        %v2763 = vunpack.c.l.b16 %v657
        %v2764 = vunpack.c.h.b16 %v657
        %v2765 = vunpack.c.l.b16 %v658
        %v2766 = vunpack.c.h.b16 %v658
        %v2767 = vunpack.c.l.b16 %v659
        %v2768 = vunpack.c.h.b16 %v659
        %v2769 = vunpack.c.l.b16 %v660
        %v2770 = vunpack.c.h.b16 %v660
        %v2771 = vunpack.c.l.b16 %v661
        %v2772 = vunpack.c.h.b16 %v661
        %v2773 = vunpack.c.l.b16 %v662
        %v2774 = vunpack.c.h.b16 %v662
        %v2775 = vunpack.c.l.b16 %v663
        %v2776 = vunpack.c.h.b16 %v663
        %v2777 = vunpack.c.l.b16 %v664
        %v2778 = vunpack.c.h.b16 %v664
        %v2779 = vunpack.c.l.b16 %v665
        %v2780 = vunpack.c.h.b16 %v665
        %v2781 = vunpack.c.l.b16 %v666
        %v2782 = vunpack.c.h.b16 %v666
        %v2783 = vunpack.c.l.b16 %v667
        %v2784 = vunpack.c.h.b16 %v667
        %v2785 = vunpack.c.l.b16 %v668
        %v2786 = vunpack.c.h.b16 %v668
        %v2787 = vunpack.c.l.b16 %v669
        %v2788 = vunpack.c.h.b16 %v669
        %v2789 = vunpack.c.l.b16 %v670
        %v2790 = vunpack.c.h.b16 %v670
        %v2791 = vunpack.c.l.b16 %v671
        %v2792 = vunpack.c.h.b16 %v671
        %v2793 = vunpack.c.l.b16 %v672
        %v2794 = vunpack.c.h.b16 %v672
        %v2795 = vunpack.c.l.b16 %v673
        %v2796 = vunpack.c.h.b16 %v673
        %v2797 = vunpack.c.l.b16 %v674
        %v2798 = vunpack.c.h.b16 %v674
        %v2799 = vunpack.c.l.b16 %v675
        %v2800 = vunpack.c.h.b16 %v675
        %v2801 = vunpack.c.l.b16 %v676
        %v2802 = vunpack.c.h.b16 %v676
        %v2803 = vunpack.c.l.b16 %v677
        %v2804 = vunpack.c.h.b16 %v677
        %v2805 = vunpack.c.l.b16 %v678
        %v2806 = vunpack.c.h.b16 %v678
        %v2807 = vunpack.c.l.b16 %v679
        %v2808 = vunpack.c.h.b16 %v679
        %v2809 = vunpack.c.l.b16 %v680
        %v2810 = vunpack.c.h.b16 %v680
        %v2811 = vunpack.c.l.b16 %v681
        %v2812 = vunpack.c.h.b16 %v681
        %v2813 = vunpack.c.l.b16 %v682
        %v2814 = vunpack.c.h.b16 %v682
        %v2815 = vunpack.c.l.b16 %v683
        %v2816 = vunpack.c.h.b16 %v683
        %v2817 = vunpack.c.l.b16 %v684
        %v2818 = vunpack.c.h.b16 %v684
        %v2819 = vunpack.c.l.b16 %v685
        %v2820 = vunpack.c.h.b16 %v685
        %v2821 = vunpack.c.l.b16 %v686
        %v2822 = vunpack.c.h.b16 %v686
        %v2823 = vunpack.c.l.b16 %v687
        %v2824 = vunpack.c.h.b16 %v687
        %v2825 = vunpack.c.l.b16 %v688
        %v2826 = vunpack.c.h.b16 %v688
        %v2827 = vunpack.c.l.b16 %v689
        %v2828 = vunpack.c.h.b16 %v689
        %v2829 = vunpack.c.l.b16 %v690
        %v2830 = vunpack.c.h.b16 %v690
        %v2831 = vunpack.c.l.b16 %v691
        %v2832 = vunpack.c.h.b16 %v691
        %v2833 = vunpack.c.l.b16 %v692
        %v2834 = vunpack.c.h.b16 %v692
        %v2835 = vunpack.c.l.b16 %v693
        %v2836 = vunpack.c.h.b16 %v693
        %v2837 = vunpack.c.l.b16 %v694
        %v2838 = vunpack.c.h.b16 %v694
        %v2839 = vunpack.c.l.b16 %v695
        %v2840 = vunpack.c.h.b16 %v695
        %v2841 = vunpack.c.l.b16 %v696
        %v2842 = vunpack.c.h.b16 %v696
        %v2843 = vunpack.c.l.b16 %v697
        %v2844 = vunpack.c.h.b16 %v697
        %v2845 = vunpack.c.l.b16 %v698
        %v2846 = vunpack.c.h.b16 %v698
        %v2847 = vunpack.c.l.b16 %v699
        %v2848 = vunpack.c.h.b16 %v699
        %v2849 = vunpack.c.l.b16 %v700
        %v2850 = vunpack.c.h.b16 %v700
        %v2851 = vunpack.c.l.b16 %v701
        %v2852 = vunpack.c.h.b16 %v701
        %v2853 = vunpack.c.l.b16 %v702
        %v2854 = vunpack.c.h.b16 %v702
        %v2855 = vunpack.c.l.b16 %v703
        %v2856 = vunpack.c.h.b16 %v703
        %v2857 = vunpack.c.l.b16 %v704
        %v2858 = vunpack.c.h.b16 %v704
        %v2859 = vunpack.c.l.b16 %v705
        %v2860 = vunpack.c.h.b16 %v705
        %v2861 = vunpack.c.l.b16 %v706
        %v2862 = vunpack.c.h.b16 %v706
        %v2863 = vunpack.c.l.b16 %v707
        %v2864 = vunpack.c.h.b16 %v707
        %v2865 = vunpack.c.l.b16 %v708
        %v2866 = vunpack.c.h.b16 %v708
        %v2867 = vunpack.c.l.b16 %v709
        %v2868 = vunpack.c.h.b16 %v709
        %v2869 = vunpack.c.l.b16 %v710
        %v2870 = vunpack.c.h.b16 %v710
        %v2871 = vunpack.c.l.b16 %v711
        %v2872 = vunpack.c.h.b16 %v711
        %v2873 = vunpack.c.l.b16 %v712
        %v2874 = vunpack.c.h.b16 %v712
        %v2875 = vunpack.c.l.b16 %v713
        %v2876 = vunpack.c.h.b16 %v713
        %v2877 = vunpack.c.l.b16 %v714
        %v2878 = vunpack.c.h.b16 %v714
        %v2879 = vunpack.c.l.b16 %v715
        %v2880 = vunpack.c.h.b16 %v715
        %v2881 = vunpack.c.l.b16 %v716
        %v2882 = vunpack.c.h.b16 %v716
        %v2883 = vunpack.c.l.b16 %v717
        %v2884 = vunpack.c.h.b16 %v717
        %v2885 = vunpack.c.l.b16 %v718
        %v2886 = vunpack.c.h.b16 %v718
        %v2887 = vunpack.c.l.b16 %v719
        %v2888 = vunpack.c.h.b16 %v719
        %v2889 = vunpack.c.l.b16 %v720
        %v2890 = vunpack.c.h.b16 %v720
        %v2891 = vunpack.c.l.b16 %v721
        %v2892 = vunpack.c.h.b16 %v721
        %v2893 = vunpack.c.l.b16 %v722
        %v2894 = vunpack.c.h.b16 %v722
        %v2895 = vunpack.c.l.b16 %v723
        %v2896 = vunpack.c.h.b16 %v723
        %v2897 = vunpack.c.l.b16 %v724
        %v2898 = vunpack.c.h.b16 %v724
        %v2899 = vunpack.c.l.b16 %v725
        %v2900 = vunpack.c.h.b16 %v725
        %v2901 = vunpack.c.l.b16 %v726
        %v2902 = vunpack.c.h.b16 %v726
        %v2903 = vunpack.c.l.b16 %v727
        %v2904 = vunpack.c.h.b16 %v727
        %v2905 = vunpack.c.l.b16 %v728
        %v2906 = vunpack.c.h.b16 %v728
        %v2907 = vunpack.c.l.b16 %v729
        %v2908 = vunpack.c.h.b16 %v729
        %v2909 = vunpack.c.l.b16 %v730
        %v2910 = vunpack.c.h.b16 %v730
        %v2911 = vunpack.c.l.b16 %v731
        %v2912 = vunpack.c.h.b16 %v731
        %v2913 = vunpack.c.l.b16 %v732
        %v2914 = vunpack.c.h.b16 %v732
        %v2915 = vunpack.c.l.b16 %v733
        %v2916 = vunpack.c.h.b16 %v733
        %v2917 = vunpack.c.l.b16 %v734
        %v2918 = vunpack.c.h.b16 %v734
        %v2919 = vunpack.c.l.b16 %v735
        %v2920 = vunpack.c.h.b16 %v735
        %v2921 = vunpack.c.l.b16 %v736
        %v2922 = vunpack.c.h.b16 %v736
        %v2923 = vunpack.c.l.b16 %v737
        %v2924 = vunpack.c.h.b16 %v737
        %v2925 = vunpack.c.l.b16 %v738
        %v2926 = vunpack.c.h.b16 %v738
        %v2927 = vunpack.c.l.b16 %v739
        %v2928 = vunpack.c.h.b16 %v739
        %v2929 = vunpack.c.l.b16 %v740
        %v2930 = vunpack.c.h.b16 %v740
        %v2931 = vunpack.c.l.b16 %v741
        %v2932 = vunpack.c.h.b16 %v741
        %v2933 = vunpack.c.l.b16 %v742
        %v2934 = vunpack.c.h.b16 %v742
        %v2935 = vunpack.c.l.b16 %v743
        %v2936 = vunpack.c.h.b16 %v743
        %v2937 = vunpack.c.l.b16 %v744
        %v2938 = vunpack.c.h.b16 %v744
        %v2939 = vunpack.c.l.b16 %v745
        %v2940 = vunpack.c.h.b16 %v745
        %v2941 = vunpack.c.l.b16 %v746
        %v2942 = vunpack.c.h.b16 %v746
        %v2943 = vunpack.c.l.b16 %v747
        %v2944 = vunpack.c.h.b16 %v747
        %v2945 = vunpack.c.l.b16 %v748
        %v2946 = vunpack.c.h.b16 %v748
        %v2947 = vunpack.c.l.b16 %v749
        %v2948 = vunpack.c.h.b16 %v749
        %v2949 = vunpack.c.l.b16 %v750
        %v2950 = vunpack.c.h.b16 %v750
        %v2951 = vunpack.c.l.b16 %v751
        %v2952 = vunpack.c.h.b16 %v751
        %v2953 = vunpack.c.l.b16 %v752
        %v2954 = vunpack.c.h.b16 %v752
        %v2955 = vunpack.c.l.b16 %v753
        %v2956 = vunpack.c.h.b16 %v753
        %v2957 = vunpack.c.l.b16 %v754
        %v2958 = vunpack.c.h.b16 %v754
        %v2959 = vunpack.c.l.b16 %v755
        %v2960 = vunpack.c.h.b16 %v755
        %v2961 = vunpack.c.l.b16 %v756
        %v2962 = vunpack.c.h.b16 %v756
        %v2963 = vunpack.c.l.b16 %v757
        %v2964 = vunpack.c.h.b16 %v757
        %v2965 = vunpack.c.l.b16 %v758
        %v2966 = vunpack.c.h.b16 %v758
        %v2967 = vunpack.c.l.b16 %v759
        %v2968 = vunpack.c.h.b16 %v759
        %v2969 = vunpack.c.l.b16 %v760
        %v2970 = vunpack.c.h.b16 %v760
        %v2971 = vunpack.c.l.b16 %v761
        %v2972 = vunpack.c.h.b16 %v761
        %v2973 = vunpack.c.l.b16 %v762
        %v2974 = vunpack.c.h.b16 %v762
        %v2975 = vunpack.c.l.b16 %v763
        %v2976 = vunpack.c.h.b16 %v763
        %v2977 = vunpack.c.l.b16 %v764
        %v2978 = vunpack.c.h.b16 %v764
        %v2979 = vunpack.c.l.b16 %v765
        %v2980 = vunpack.c.h.b16 %v765
        %v2981 = vunpack.c.l.b16 %v766
        %v2982 = vunpack.c.h.b16 %v766
        %v2983 = vunpack.c.l.b16 %v767
        %v2984 = vunpack.c.h.b16 %v767
        %v2985 = vunpack.c.l.b16 %v768
        %v2986 = vunpack.c.h.b16 %v768
        %v2987 = vunpack.c.l.b16 %v769
        %v2988 = vunpack.c.h.b16 %v769
        %v2989 = vunpack.c.l.b16 %v770
        %v2990 = vunpack.c.h.b16 %v770
        %v2991 = vunpack.c.l.b16 %v771
        %v2992 = vunpack.c.h.b16 %v771
        %v2993 = vunpack.c.l.b16 %v772
        %v2994 = vunpack.c.h.b16 %v772
        %v2995 = vunpack.c.l.b16 %v773
        %v2996 = vunpack.c.h.b16 %v773
        %v2997 = vunpack.c.l.b16 %v774
        %v2998 = vunpack.c.h.b16 %v774
        %v2999 = vunpack.c.l.b16 %v775
        %v3000 = vunpack.c.h.b16 %v775
        %v3001 = vunpack.c.l.b16 %v776
        %v3002 = vunpack.c.h.b16 %v776
        %v3003 = vunpack.c.l.b16 %v777
        %v3004 = vunpack.c.h.b16 %v777
        %v3005 = vunpack.c.l.b16 %v778
        %v3006 = vunpack.c.h.b16 %v778
        %v3007 = vunpack.c.l.b16 %v779
        %v3008 = vunpack.c.h.b16 %v779
        %v3009 = vunpack.c.l.b16 %v780
        %v3010 = vunpack.c.h.b16 %v780
        %v3011 = vunpack.c.l.b16 %v781
        %v3012 = vunpack.c.h.b16 %v781
        %v3013 = vunpack.c.l.b16 %v782
        %v3014 = vunpack.c.h.b16 %v782
        %v3015 = vunpack.c.l.b16 %v783
        %v3016 = vunpack.c.h.b16 %v783
        %v3017 = vunpack.c.l.b16 %v784
        %v3018 = vunpack.c.h.b16 %v784
        %v3019 = vunpack.c.l.b16 %v785
        %v3020 = vunpack.c.h.b16 %v785
        %v3021 = vunpack.c.l.b16 %v786
        %v3022 = vunpack.c.h.b16 %v786
        %v3023 = vunpack.c.l.b16 %v787
        %v3024 = vunpack.c.h.b16 %v787
        %v3025 = vunpack.c.l.b16 %v788
        %v3026 = vunpack.c.h.b16 %v788
        %v3027 = vunpack.c.l.b16 %v789
        %v3028 = vunpack.c.h.b16 %v789
        %v3029 = vunpack.c.l.b16 %v790
        %v3030 = vunpack.c.h.b16 %v790
        %v3031 = vunpack.c.l.b16 %v791
        %v3032 = vunpack.c.h.b16 %v791
        %v3033 = vunpack.c.l.b16 %v792
        %v3034 = vunpack.c.h.b16 %v792
        %v3035 = vunpack.c.l.b16 %v793
        %v3036 = vunpack.c.h.b16 %v793
        %v3037 = vunpack.c.l.b16 %v794
        %v3038 = vunpack.c.h.b16 %v794
        %v3039 = vunpack.c.l.b16 %v795
        %v3040 = vunpack.c.h.b16 %v795
        %v3041 = vunpack.c.l.b16 %v796
        %v3042 = vunpack.c.h.b16 %v796
        %v3043 = vunpack.c.l.b16 %v797
        %v3044 = vunpack.c.h.b16 %v797
        %v3045 = vunpack.c.l.b16 %v798
        %v3046 = vunpack.c.h.b16 %v798
        %v3047 = vunpack.c.l.b16 %v799
        %v3048 = vunpack.c.h.b16 %v799
        %v3049 = vunpack.c.l.b16 %v800
        %v3050 = vunpack.c.h.b16 %v800
        %v3051 = vunpack.c.l.b16 %v801
        %v3052 = vunpack.c.h.b16 %v801
        %v3053 = vunpack.c.l.b16 %v802
        %v3054 = vunpack.c.h.b16 %v802
        %v3055 = vunpack.c.l.b16 %v803
        %v3056 = vunpack.c.h.b16 %v803
        %v3057 = vunpack.c.l.b16 %v804
        %v3058 = vunpack.c.h.b16 %v804
        %v3059 = vunpack.c.l.b16 %v805
        %v3060 = vunpack.c.h.b16 %v805
        %v3061 = vunpack.c.l.b16 %v806
        %v3062 = vunpack.c.h.b16 %v806
        %v3063 = vunpack.c.l.b16 %v807
        %v3064 = vunpack.c.h.b16 %v807
        %v3065 = vunpack.c.l.b16 %v808
        %v3066 = vunpack.c.h.b16 %v808
        %v3067 = vunpack.c.l.b16 %v809
        %v3068 = vunpack.c.h.b16 %v809
        %v3069 = vunpack.c.l.b16 %v810
        %v3070 = vunpack.c.h.b16 %v810
        %v3071 = vunpack.c.l.b16 %v811
        %v3072 = vunpack.c.h.b16 %v811
        %v3073 = vunpack.c.l.b16 %v812
        %v3074 = vunpack.c.h.b16 %v812
        %v3075 = vunpack.c.l.b16 %v813
        %v3076 = vunpack.c.h.b16 %v813
        %v3077 = vunpack.c.l.b16 %v814
        %v3078 = vunpack.c.h.b16 %v814
        %v3079 = vunpack.c.l.b16 %v815
        %v3080 = vunpack.c.h.b16 %v815
        %v3081 = vunpack.c.l.b16 %v816
        %v3082 = vunpack.c.h.b16 %v816
        %v3083 = vunpack.c.l.b16 %v817
        %v3084 = vunpack.c.h.b16 %v817
        %v3085 = vunpack.c.l.b16 %v818
        %v3086 = vunpack.c.h.b16 %v818
        %v3087 = vunpack.c.l.b16 %v819
        %v3088 = vunpack.c.h.b16 %v819
        %v3089 = vunpack.c.l.b16 %v820
        %v3090 = vunpack.c.h.b16 %v820
        %v3091 = vunpack.c.l.b16 %v821
        %v3092 = vunpack.c.h.b16 %v821
        %v3093 = vunpack.c.l.b16 %v822
        %v3094 = vunpack.c.h.b16 %v822
        %v3095 = vunpack.c.l.b16 %v823
        %v3096 = vunpack.c.h.b16 %v823
        %v3097 = vunpack.c.l.b16 %v824
        %v3098 = vunpack.c.h.b16 %v824
        %v3099 = vunpack.c.l.b16 %v825
        %v3100 = vunpack.c.h.b16 %v825
        %v3101 = vunpack.c.l.b16 %v826
        %v3102 = vunpack.c.h.b16 %v826
        %v3103 = vunpack.c.l.b16 %v827
        %v3104 = vunpack.c.h.b16 %v827
        %v3105 = vunpack.c.l.b16 %v828
        %v3106 = vunpack.c.h.b16 %v828
        %v3107 = vunpack.c.l.b16 %v829
        %v3108 = vunpack.c.h.b16 %v829
        %v3109 = vunpack.c.l.b16 %v830
        %v3110 = vunpack.c.h.b16 %v830
        %v3111 = vunpack.c.l.b16 %v831
        %v3112 = vunpack.c.h.b16 %v831
        %v3113 = vunpack.c.l.b16 %v832
        %v3114 = vunpack.c.h.b16 %v832
        %v3115 = vunpack.c.l.b16 %v833
        %v3116 = vunpack.c.h.b16 %v833
        %v3117 = vunpack.c.l.b16 %v834
        %v3118 = vunpack.c.h.b16 %v834
        %v3119 = vunpack.c.l.b16 %v835
        %v3120 = vunpack.c.h.b16 %v835
        %v3121 = vunpack.c.l.b16 %v836
        %v3122 = vunpack.c.h.b16 %v836
        %v3123 = vunpack.c.l.b16 %v837
        %v3124 = vunpack.c.h.b16 %v837
        %v3125 = vunpack.c.l.b16 %v838
        %v3126 = vunpack.c.h.b16 %v838
        %v3127 = vunpack.c.l.b16 %v839
        %v3128 = vunpack.c.h.b16 %v839
        %v3129 = vunpack.c.l.b16 %v840
        %v3130 = vunpack.c.h.b16 %v840
        %v3131 = vunpack.c.l.b16 %v841
        %v3132 = vunpack.c.h.b16 %v841
        %v3133 = vunpack.c.l.b16 %v842
        %v3134 = vunpack.c.h.b16 %v842
        %v3135 = vunpack.c.l.b16 %v843
        %v3136 = vunpack.c.h.b16 %v843
        %v3137 = vunpack.c.l.b16 %v844
        %v3138 = vunpack.c.h.b16 %v844
        %v3139 = vunpack.c.l.b16 %v845
        %v3140 = vunpack.c.h.b16 %v845
        %v3141 = vunpack.c.l.b16 %v846
        %v3142 = vunpack.c.h.b16 %v846
        %v3143 = vunpack.c.l.b16 %v847
        %v3144 = vunpack.c.h.b16 %v847
        %v3145 = vunpack.c.l.b16 %v848
        %v3146 = vunpack.c.h.b16 %v848
        %v3147 = vunpack.c.l.b16 %v849
        %v3148 = vunpack.c.h.b16 %v849
        %v3149 = vunpack.c.l.b16 %v850
        %v3150 = vunpack.c.h.b16 %v850
        %v3151 = vunpack.c.l.b16 %v851
        %v3152 = vunpack.c.h.b16 %v851
        %v3153 = vunpack.c.l.b16 %v852
        %v3154 = vunpack.c.h.b16 %v852
        %v3155 = vunpack.c.l.b16 %v853
        %v3156 = vunpack.c.h.b16 %v853
        %v3157 = vunpack.c.l.b16 %v854
        %v3158 = vunpack.c.h.b16 %v854
        %v3159 = vunpack.c.l.b16 %v855
        %v3160 = vunpack.c.h.b16 %v855
        %v3161 = vunpack.c.l.b16 %v856
        %v3162 = vunpack.c.h.b16 %v856
        %v3163 = vunpack.c.l.b16 %v857
        %v3164 = vunpack.c.h.b16 %v857
        %v3165 = vunpack.c.l.b16 %v858
        %v3166 = vunpack.c.h.b16 %v858
        %v3167 = vunpack.c.l.b16 %v859
        %v3168 = vunpack.c.h.b16 %v859
        %v3169 = vunpack.c.l.b16 %v860
        %v3170 = vunpack.c.h.b16 %v860
        %v3171 = vunpack.c.l.b16 %v861
        %v3172 = vunpack.c.h.b16 %v861
        %v3173 = vunpack.c.l.b16 %v862
        %v3174 = vunpack.c.h.b16 %v862
        %v3175 = vunpack.c.l.b16 %v863
        %v3176 = vunpack.c.h.b16 %v863
        %v3177 = vunpack.c.l.b16 %v864
        %v3178 = vunpack.c.h.b16 %v864
        %v3179 = vunpack.c.l.b16 %v865
        %v3180 = vunpack.c.h.b16 %v865
        %v3181 = vunpack.c.l.b16 %v866
        %v3182 = vunpack.c.h.b16 %v866
        %v3183 = vunpack.c.l.b16 %v867
        %v3184 = vunpack.c.h.b16 %v867
        %v3185 = vunpack.c.l.b16 %v868
        %v3186 = vunpack.c.h.b16 %v868
        %v3187 = vunpack.c.l.b16 %v869
        %v3188 = vunpack.c.h.b16 %v869
        %v3189 = vunpack.c.l.b16 %v870
        %v3190 = vunpack.c.h.b16 %v870
        %v3191 = vunpack.c.l.b16 %v871
        %v3192 = vunpack.c.h.b16 %v871
        %v3193 = vunpack.c.l.b16 %v872
        %v3194 = vunpack.c.h.b16 %v872
        %v3195 = vunpack.c.l.b16 %v873
        %v3196 = vunpack.c.h.b16 %v873
        %v3197 = vunpack.c.l.b16 %v874
        %v3198 = vunpack.c.h.b16 %v874
        %v3199 = vunpack.c.l.b16 %v875
        %v3200 = vunpack.c.h.b16 %v875
        %v3201 = vunpack.c.l.b16 %v876
        %v3202 = vunpack.c.h.b16 %v876
        %v3203 = vunpack.c.l.b16 %v877
        %v3204 = vunpack.c.h.b16 %v877
        %v3205 = vunpack.c.l.b16 %v878
        %v3206 = vunpack.c.h.b16 %v878
        %v3207 = vunpack.c.l.b16 %v879
        %v3208 = vunpack.c.h.b16 %v879
        %v3209 = vunpack.c.l.b16 %v880
        %v3210 = vunpack.c.h.b16 %v880
        %v3211 = vunpack.c.l.b16 %v881
        %v3212 = vunpack.c.h.b16 %v881
        %v3213 = vunpack.c.l.b16 %v882
        %v3214 = vunpack.c.h.b16 %v882
        %v3215 = vunpack.c.l.b16 %v883
        %v3216 = vunpack.c.h.b16 %v883
        %v3217 = vunpack.c.l.b16 %v884
        %v3218 = vunpack.c.h.b16 %v884
        %v3219 = vunpack.c.l.b16 %v885
        %v3220 = vunpack.c.h.b16 %v885
        %v3221 = vunpack.c.l.b16 %v886
        %v3222 = vunpack.c.h.b16 %v886
        %v3223 = vunpack.c.l.b16 %v887
        %v3224 = vunpack.c.h.b16 %v887
        %v3225 = vunpack.c.l.b16 %v888
        %v3226 = vunpack.c.h.b16 %v888
        %v3227 = vunpack.c.l.b16 %v889
        %v3228 = vunpack.c.h.b16 %v889
        %v3229 = vunpack.c.l.b16 %v890
        %v3230 = vunpack.c.h.b16 %v890
        %v3231 = vunpack.c.l.b16 %v891
        %v3232 = vunpack.c.h.b16 %v891
        %v3233 = vunpack.c.l.b16 %v892
        %v3234 = vunpack.c.h.b16 %v892
        %v3235 = vunpack.c.l.b16 %v893
        %v3236 = vunpack.c.h.b16 %v893
        %v3237 = vunpack.c.l.b16 %v894
        %v3238 = vunpack.c.h.b16 %v894
        %v3239 = vunpack.c.l.b16 %v895
        %v3240 = vunpack.c.h.b16 %v895
        %v3241 = vunpack.c.l.b16 %v896
        %v3242 = vunpack.c.h.b16 %v896
        %v3243 = vunpack.c.l.b16 %v897
        %v3244 = vunpack.c.h.b16 %v897
        %v3245 = vunpack.c.l.b16 %v898
        %v3246 = vunpack.c.h.b16 %v898
        %v3247 = vunpack.c.l.b16 %v899
        %v3248 = vunpack.c.h.b16 %v899
        %v3249 = vunpack.c.l.b16 %v900
        %v3250 = vunpack.c.h.b16 %v900
        %v3251 = vunpack.c.l.b16 %v901
        %v3252 = vunpack.c.h.b16 %v901
        %v3253 = vunpack.c.l.b16 %v902
        %v3254 = vunpack.c.h.b16 %v902
        %v3255 = vunpack.c.l.b16 %v903
        %v3256 = vunpack.c.h.b16 %v903
        %v3257 = vunpack.c.l.b16 %v904
        %v3258 = vunpack.c.h.b16 %v904
        %v3259 = vunpack.c.l.b16 %v905
        %v3260 = vunpack.c.h.b16 %v905
        %v3261 = vunpack.c.l.b16 %v906
        %v3262 = vunpack.c.h.b16 %v906
        %v3263 = vunpack.c.l.b16 %v907
        %v3264 = vunpack.c.h.b16 %v907
        %v3265 = vunpack.c.l.b16 %v908
        %v3266 = vunpack.c.h.b16 %v908
        %v3267 = vunpack.c.l.b16 %v909
        %v3268 = vunpack.c.h.b16 %v909
        %v3269 = vunpack.c.l.b16 %v910
        %v3270 = vunpack.c.h.b16 %v910
        %v3271 = vunpack.c.l.b16 %v911
        %v3272 = vunpack.c.h.b16 %v911
        %v3273 = vunpack.c.l.b16 %v912
        %v3274 = vunpack.c.h.b16 %v912
        %v3275 = vunpack.c.l.b16 %v913
        %v3276 = vunpack.c.h.b16 %v913
        %v3277 = vunpack.c.l.b16 %v914
        %v3278 = vunpack.c.h.b16 %v914
        %v3279 = vunpack.c.l.b16 %v915
        %v3280 = vunpack.c.h.b16 %v915
        %v3281 = vunpack.c.l.b16 %v916
        %v3282 = vunpack.c.h.b16 %v916
        %v3283 = vunpack.c.l.b16 %v917
        %v3284 = vunpack.c.h.b16 %v917
        %v3285 = vunpack.c.l.b16 %v918
        %v3286 = vunpack.c.h.b16 %v918
        %v3287 = vunpack.c.l.b16 %v919
        %v3288 = vunpack.c.h.b16 %v919
        %v3289 = vunpack.c.l.b16 %v920
        %v3290 = vunpack.c.h.b16 %v920
        %v3291 = vunpack.c.l.b16 %v921
        %v3292 = vunpack.c.h.b16 %v921
        %v3293 = vunpack.c.l.b16 %v922
        %v3294 = vunpack.c.h.b16 %v922
        %v3295 = vunpack.c.l.b16 %v923
        %v3296 = vunpack.c.h.b16 %v923
        %v3297 = vunpack.c.l.b16 %v924
        %v3298 = vunpack.c.h.b16 %v924
        %v3299 = vunpack.c.l.b16 %v925
        %v3300 = vunpack.c.h.b16 %v925
        %v3301 = vunpack.c.l.b16 %v926
        %v3302 = vunpack.c.h.b16 %v926
        %v3303 = vunpack.c.l.b16 %v927
        %v3304 = vunpack.c.h.b16 %v927
        %v3305 = vunpack.c.l.b16 %v928
        %v3306 = vunpack.c.h.b16 %v928
        %v3307 = vunpack.c.l.b16 %v929
        %v3308 = vunpack.c.h.b16 %v929
        %v3309 = vunpack.c.l.b16 %v930
        %v3310 = vunpack.c.h.b16 %v930
        %v3311 = vunpack.c.l.b16 %v931
        %v3312 = vunpack.c.h.b16 %v931
        %v3313 = vunpack.c.l.b16 %v932
        %v3314 = vunpack.c.h.b16 %v932
        %v3315 = vunpack.c.l.b16 %v933
        %v3316 = vunpack.c.h.b16 %v933
        %v3317 = vunpack.c.l.b16 %v934
        %v3318 = vunpack.c.h.b16 %v934
        %v3319 = vunpack.c.l.b16 %v935
        %v3320 = vunpack.c.h.b16 %v935
        %v3321 = vunpack.c.l.b16 %v936
        %v3322 = vunpack.c.h.b16 %v936
        %v3323 = vunpack.c.l.b16 %v937
        %v3324 = vunpack.c.h.b16 %v937
        %v3325 = vunpack.c.l.b16 %v938
        %v3326 = vunpack.c.h.b16 %v938
        %v3327 = vunpack.c.l.b16 %v939
        %v3328 = vunpack.c.h.b16 %v939
        %v3329 = vunpack.c.l.b16 %v940
        %v3330 = vunpack.c.h.b16 %v940
        %v3331 = vunpack.c.l.b16 %v941
        %v3332 = vunpack.c.h.b16 %v941
        %v3333 = vunpack.c.l.b16 %v942
        %v3334 = vunpack.c.h.b16 %v942
        %v3335 = vunpack.c.l.b16 %v943
        %v3336 = vunpack.c.h.b16 %v943
        %v3337 = vunpack.c.l.b16 %v944
        %v3338 = vunpack.c.h.b16 %v944
        %v3339 = vunpack.c.l.b16 %v945
        %v3340 = vunpack.c.h.b16 %v945
        %v3341 = vunpack.c.l.b16 %v946
        %v3342 = vunpack.c.h.b16 %v946
        %v3343 = vunpack.c.l.b16 %v947
        %v3344 = vunpack.c.h.b16 %v947
        %v3345 = vunpack.c.l.b16 %v948
        %v3346 = vunpack.c.h.b16 %v948
        %v3347 = vunpack.c.l.b16 %v949
        %v3348 = vunpack.c.h.b16 %v949
        %v3349 = vunpack.c.l.b16 %v950
        %v3350 = vunpack.c.h.b16 %v950
        %v3351 = vunpack.c.l.b16 %v951
        %v3352 = vunpack.c.h.b16 %v951
        %v3353 = vunpack.c.l.b16 %v952
        %v3354 = vunpack.c.h.b16 %v952
        %v3355 = vunpack.c.l.b16 %v953
        %v3356 = vunpack.c.h.b16 %v953
        %v3357 = vunpack.c.l.b16 %v954
        %v3358 = vunpack.c.h.b16 %v954
        %v3359 = vunpack.c.l.b16 %v955
        %v3360 = vunpack.c.h.b16 %v955
        %v3361 = vunpack.c.l.b16 %v956
        %v3362 = vunpack.c.h.b16 %v956
        %v3363 = vunpack.c.l.b16 %v957
        %v3364 = vunpack.c.h.b16 %v957
        %v3365 = vunpack.c.l.b16 %v958
        %v3366 = vunpack.c.h.b16 %v958
        %v3367 = vunpack.c.l.b16 %v959
        %v3368 = vunpack.c.h.b16 %v959
        %v3369 = vunpack.c.l.b16 %v960
        %v3370 = vunpack.c.h.b16 %v960
        %v3371 = vunpack.c.l.b16 %v961
        %v3372 = vunpack.c.h.b16 %v961
        %v3373 = vunpack.c.l.b16 %v962
        %v3374 = vunpack.c.h.b16 %v962
        %v3375 = vunpack.c.l.b16 %v963
        %v3376 = vunpack.c.h.b16 %v963
        %v3377 = vunpack.c.l.b16 %v964
        %v3378 = vunpack.c.h.b16 %v964
        %v3379 = vunpack.c.l.b16 %v965
        %v3380 = vunpack.c.h.b16 %v965
        %v3381 = vunpack.c.l.b16 %v966
        %v3382 = vunpack.c.h.b16 %v966
        %v3383 = vunpack.c.l.b16 %v967
        %v3384 = vunpack.c.h.b16 %v967
        %v3385 = vunpack.c.l.b16 %v968
        %v3386 = vunpack.c.h.b16 %v968
        %v3387 = vunpack.c.l.b16 %v969
        %v3388 = vunpack.c.h.b16 %v969
        %v3389 = vunpack.c.l.b16 %v970
        %v3390 = vunpack.c.h.b16 %v970
        %v3391 = vunpack.c.l.b16 %v971
        %v3392 = vunpack.c.h.b16 %v971
        %v3393 = vunpack.c.l.b16 %v972
        %v3394 = vunpack.c.h.b16 %v972
        %v3395 = vunpack.c.l.b16 %v973
        %v3396 = vunpack.c.h.b16 %v973
        %v3397 = vunpack.c.l.b16 %v974
        %v3398 = vunpack.c.h.b16 %v974
        %v3399 = vunpack.c.l.b16 %v975
        %v3400 = vunpack.c.h.b16 %v975
        %v3401 = vunpack.c.l.b16 %v976
        %v3402 = vunpack.c.h.b16 %v976
        %v3403 = vunpack.c.l.b16 %v977
        %v3404 = vunpack.c.h.b16 %v977
        %v3405 = vunpack.c.l.b16 %v978
        %v3406 = vunpack.c.h.b16 %v978
        %v3407 = vunpack.c.l.b16 %v979
        %v3408 = vunpack.c.h.b16 %v979
        %v3409 = vunpack.c.l.b16 %v980
        %v3410 = vunpack.c.h.b16 %v980
        %v3411 = vunpack.c.l.b16 %v981
        %v3412 = vunpack.c.h.b16 %v981
        %v3413 = vunpack.c.l.b16 %v982
        %v3414 = vunpack.c.h.b16 %v982
        %v3415 = vunpack.c.l.b16 %v983
        %v3416 = vunpack.c.h.b16 %v983
        %v3417 = vunpack.c.l.b16 %v984
        %v3418 = vunpack.c.h.b16 %v984
        %v3419 = vunpack.c.l.b16 %v985
        %v3420 = vunpack.c.h.b16 %v985
        %v3421 = vunpack.c.l.b16 %v986
        %v3422 = vunpack.c.h.b16 %v986
        %v3423 = vunpack.c.l.b16 %v987
        %v3424 = vunpack.c.h.b16 %v987
        %v3425 = vunpack.c.l.b16 %v988
        %v3426 = vunpack.c.h.b16 %v988
        %v3427 = vunpack.c.l.b16 %v989
        %v3428 = vunpack.c.h.b16 %v989
        %v3429 = vunpack.c.l.b16 %v990
        %v3430 = vunpack.c.h.b16 %v990
        %v3431 = vunpack.c.l.b16 %v991
        %v3432 = vunpack.c.h.b16 %v991
        %v3433 = vunpack.c.l.b16 %v992
        %v3434 = vunpack.c.h.b16 %v992
        %v3435 = vunpack.c.l.b16 %v993
        %v3436 = vunpack.c.h.b16 %v993
        %v3437 = vunpack.c.l.b16 %v994
        %v3438 = vunpack.c.h.b16 %v994
        %v3439 = vunpack.c.l.b16 %v995
        %v3440 = vunpack.c.h.b16 %v995
        %v3441 = vunpack.c.l.b16 %v996
        %v3442 = vunpack.c.h.b16 %v996
        %v3443 = vunpack.c.l.b16 %v997
        %v3444 = vunpack.c.h.b16 %v997
        %v3445 = vunpack.c.l.b16 %v998
        %v3446 = vunpack.c.h.b16 %v998
        %v3447 = vunpack.c.l.b16 %v999
        %v3448 = vunpack.c.h.b16 %v999
        %v3449 = vunpack.c.l.b16 %v1000
        %v3450 = vunpack.c.h.b16 %v1000
        %v3451 = vunpack.c.l.b16 %v1001
        %v3452 = vunpack.c.h.b16 %v1001
        %v3453 = vunpack.c.l.b16 %v1002
        %v3454 = vunpack.c.h.b16 %v1002
        %v3455 = vunpack.c.l.b16 %v1003
        %v3456 = vunpack.c.h.b16 %v1003
        %v3457 = vunpack.c.l.b16 %v1004
        %v3458 = vunpack.c.h.b16 %v1004
        %v3459 = vunpack.c.l.b16 %v1005
        %v3460 = vunpack.c.h.b16 %v1005
        %v3461 = vunpack.c.l.b16 %v1006
        %v3462 = vunpack.c.h.b16 %v1006
        %v3463 = vunpack.c.l.b16 %v1007
        %v3464 = vunpack.c.h.b16 %v1007
        %v3465 = vunpack.c.l.b16 %v1008
        %v3466 = vunpack.c.h.b16 %v1008
        %v3467 = vunpack.c.l.b16 %v1009
        %v3468 = vunpack.c.h.b16 %v1009
        %v3469 = vunpack.c.l.b16 %v1010
        %v3470 = vunpack.c.h.b16 %v1010
        %v3471 = vunpack.c.l.b16 %v1011
        %v3472 = vunpack.c.h.b16 %v1011
        %v3473 = vunpack.c.l.b16 %v1012
        %v3474 = vunpack.c.h.b16 %v1012
        %v3475 = vunpack.c.l.b16 %v1013
        %v3476 = vunpack.c.h.b16 %v1013
        %v3477 = vunpack.c.l.b16 %v1014
        %v3478 = vunpack.c.h.b16 %v1014
        %v3479 = vunpack.c.l.b16 %v1015
        %v3480 = vunpack.c.h.b16 %v1015
        %v3481 = vunpack.c.l.b16 %v1016
        %v3482 = vunpack.c.h.b16 %v1016
        %v3483 = vunpack.c.l.b16 %v1017
        %v3484 = vunpack.c.h.b16 %v1017
        %v3485 = vunpack.c.l.b16 %v1018
        %v3486 = vunpack.c.h.b16 %v1018
        %v3487 = vunpack.c.l.b16 %v1019
        %v3488 = vunpack.c.h.b16 %v1019
        %v3489 = vunpack.c.l.b16 %v1020
        %v3490 = vunpack.c.h.b16 %v1020
        %v3491 = vunpack.c.l.b16 %v1021
        %v3492 = vunpack.c.h.b16 %v1021
        %v3493 = vunpack.c.l.b16 %v1022
        %v3494 = vunpack.c.h.b16 %v1022
        %v3495 = vunpack.c.l.b16 %v1023
        %v3496 = vunpack.c.h.b16 %v1023
        %v3497 = vunpack.c.l.b16 %v1024
        %v3498 = vunpack.c.h.b16 %v1024
        %v3499 = vunpack.c.l.b16 %v1025
        %v3500 = vunpack.c.h.b16 %v1025
        %v3501 = vunpack.c.l.b16 %v1026
        %v3502 = vunpack.c.h.b16 %v1026
        %v3503 = vunpack.c.l.b16 %v1027
        %v3504 = vunpack.c.h.b16 %v1027
        %v3505 = vunpack.c.l.b16 %v1028
        %v3506 = vunpack.c.h.b16 %v1028
        %v3507 = vunpack.c.l.b16 %v1029
        %v3508 = vunpack.c.h.b16 %v1029
        %v3509 = vunpack.c.l.b16 %v1030
        %v3510 = vunpack.c.h.b16 %v1030
        %v3511 = vunpack.c.l.b16 %v1031
        %v3512 = vunpack.c.h.b16 %v1031
        %v3513 = vunpack.c.l.b16 %v1032
        %v3514 = vunpack.c.h.b16 %v1032
        %v3515 = vunpack.c.l.b16 %v1033
        %v3516 = vunpack.c.h.b16 %v1033
        %v3517 = vunpack.c.l.b16 %v1034
        %v3518 = vunpack.c.h.b16 %v1034
        %v3519 = vunpack.c.l.b16 %v1035
        %v3520 = vunpack.c.h.b16 %v1035
        %v3521 = vunpack.c.l.b16 %v1036
        %v3522 = vunpack.c.h.b16 %v1036
        %v3523 = vunpack.c.l.b16 %v1037
        %v3524 = vunpack.c.h.b16 %v1037
        %v3525 = vunpack.c.l.b16 %v1038
        %v3526 = vunpack.c.h.b16 %v1038
        %v3527 = vunpack.c.l.b16 %v1039
        %v3528 = vunpack.c.h.b16 %v1039
        %v3529 = vunpack.c.l.b16 %v1040
        %v3530 = vunpack.c.h.b16 %v1040
        %v3531 = vunpack.c.l.b16 %v1041
        %v3532 = vunpack.c.h.b16 %v1041
        %v3533 = vunpack.c.l.b16 %v1042
        %v3534 = vunpack.c.h.b16 %v1042
        %v3535 = vunpack.c.l.b16 %v1043
        %v3536 = vunpack.c.h.b16 %v1043
        %v3537 = vunpack.c.l.b16 %v1044
        %v3538 = vunpack.c.h.b16 %v1044
        %v3539 = vunpack.c.l.b16 %v1045
        %v3540 = vunpack.c.h.b16 %v1045
        %v3541 = vunpack.c.l.b16 %v1046
        %v3542 = vunpack.c.h.b16 %v1046
        %v3543 = vunpack.c.l.b16 %v1047
        %v3544 = vunpack.c.h.b16 %v1047
        %v3545 = vunpack.c.l.b16 %v1048
        %v3546 = vunpack.c.h.b16 %v1048
        %v3547 = vunpack.c.l.b16 %v1049
        %v3548 = vunpack.c.h.b16 %v1049
        %v3549 = vunpack.c.l.b16 %v1050
        %v3550 = vunpack.c.h.b16 %v1050
        %v3551 = vunpack.c.l.b16 %v1051
        %v3552 = vunpack.c.h.b16 %v1051
        %v3553 = vunpack.c.l.b16 %v1052
        %v3554 = vunpack.c.h.b16 %v1052
        %v3555 = vunpack.c.l.b16 %v1053
        %v3556 = vunpack.c.h.b16 %v1053
        %v3557 = vunpack.c.l.b16 %v1054
        %v3558 = vunpack.c.h.b16 %v1054
        %v3559 = vunpack.c.l.b16 %v1055
        %v3560 = vunpack.c.h.b16 %v1055
        %v3561 = vunpack.c.l.b16 %v1056
        %v3562 = vunpack.c.h.b16 %v1056
        %v3563 = vunpack.c.l.b16 %v1057
        %v3564 = vunpack.c.h.b16 %v1057
        %v3565 = vunpack.c.l.b16 %v1058
        %v3566 = vunpack.c.h.b16 %v1058
        %v3567 = vunpack.c.l.b16 %v1059
        %v3568 = vunpack.c.h.b16 %v1059
        %v3569 = vunpack.c.l.b16 %v1060
        %v3570 = vunpack.c.h.b16 %v1060
        %v3571 = vunpack.c.l.b16 %v1061
        %v3572 = vunpack.c.h.b16 %v1061
        %v3573 = vunpack.c.l.b16 %v1062
        %v3574 = vunpack.c.h.b16 %v1062
        %v3575 = vunpack.c.l.b16 %v1063
        %v3576 = vunpack.c.h.b16 %v1063
        %v3577 = vunpack.c.l.b16 %v1064
        %v3578 = vunpack.c.h.b16 %v1064
        %v3579 = vunpack.c.l.b16 %v1065
        %v3580 = vunpack.c.h.b16 %v1065
        %v3581 = vunpack.c.l.b16 %v1066
        %v3582 = vunpack.c.h.b16 %v1066
        %v3583 = vunpack.c.l.b16 %v1067
        %v3584 = vunpack.c.h.b16 %v1067
        %v3585 = vunpack.c.l.b16 %v1068
        %v3586 = vunpack.c.h.b16 %v1068
        %v3587 = vunpack.c.l.b16 %v1069
        %v3588 = vunpack.c.h.b16 %v1069
        %v3589 = vunpack.c.l.b16 %v1070
        %v3590 = vunpack.c.h.b16 %v1070
        %v3591 = vunpack.c.l.b16 %v1071
        %v3592 = vunpack.c.h.b16 %v1071
        %v3593 = vunpack.c.l.b16 %v1072
        %v3594 = vunpack.c.h.b16 %v1072
        %v3595 = vunpack.c.l.b16 %v1073
        %v3596 = vunpack.c.h.b16 %v1073
        %v3597 = vunpack.c.l.b16 %v1074
        %v3598 = vunpack.c.h.b16 %v1074
        %v3599 = vunpack.c.l.b16 %v1075
        %v3600 = vunpack.c.h.b16 %v1075
        %v3601 = vunpack.c.l.b16 %v1076
        %v3602 = vunpack.c.h.b16 %v1076
        %v3603 = vunpack.c.l.b16 %v1077
        %v3604 = vunpack.c.h.b16 %v1077
        %v3605 = vunpack.c.l.b16 %v1078
        %v3606 = vunpack.c.h.b16 %v1078
        %v3607 = vunpack.c.l.b16 %v1079
        %v3608 = vunpack.c.h.b16 %v1079
        %v3609 = vunpack.c.l.b16 %v1080
        %v3610 = vunpack.c.h.b16 %v1080
        %v3611 = vunpack.c.l.b16 %v1081
        %v3612 = vunpack.c.h.b16 %v1081
        %v3613 = vunpack.c.l.b16 %v1082
        %v3614 = vunpack.c.h.b16 %v1082
        %v3615 = vunpack.c.l.b16 %v1083
        %v3616 = vunpack.c.h.b16 %v1083
        %v3617 = vunpack.c.l.b16 %v1084
        %v3618 = vunpack.c.h.b16 %v1084
        %v3619 = vunpack.c.l.b16 %v1085
        %v3620 = vunpack.c.h.b16 %v1085
        %v3621 = vunpack.c.l.b16 %v1086
        %v3622 = vunpack.c.h.b16 %v1086
        %v3623 = vunpack.c.l.b16 %v1087
        %v3624 = vunpack.c.h.b16 %v1087
        %v3625 = vunpack.c.l.b16 %v1088
        %v3626 = vunpack.c.h.b16 %v1088
        %v3627 = vunpack.c.l.b16 %v1089
        %v3628 = vunpack.c.h.b16 %v1089
        %v3629 = vunpack.c.l.b16 %v1090
        %v3630 = vunpack.c.h.b16 %v1090
        %v3631 = vunpack.c.l.b16 %v1091
        %v3632 = vunpack.c.h.b16 %v1091
        %v3633 = vunpack.c.l.b16 %v1092
        %v3634 = vunpack.c.h.b16 %v1092
        %v3635 = vunpack.c.l.b16 %v1093
        %v3636 = vunpack.c.h.b16 %v1093
        %v3637 = vunpack.c.l.b16 %v1094
        %v3638 = vunpack.c.h.b16 %v1094
        %v3639 = vunpack.c.l.b16 %v1095
        %v3640 = vunpack.c.h.b16 %v1095
        %v3641 = vunpack.c.l.b16 %v1096
        %v3642 = vunpack.c.h.b16 %v1096
        %v3643 = vunpack.c.l.b16 %v1097
        %v3644 = vunpack.c.h.b16 %v1097
        %v3645 = vunpack.c.l.b16 %v1098
        %v3646 = vunpack.c.h.b16 %v1098
        %v3647 = vunpack.c.l.b16 %v1099
        %v3648 = vunpack.c.h.b16 %v1099
        %v3649 = vunpack.c.l.b16 %v1100
        %v3650 = vunpack.c.h.b16 %v1100
        %v3651 = vunpack.c.l.b16 %v1101
        %v3652 = vunpack.c.h.b16 %v1101
        %v3653 = vunpack.c.l.b16 %v1102
        %v3654 = vunpack.c.h.b16 %v1102
        %v3655 = vunpack.c.l.b16 %v1103
        %v3656 = vunpack.c.h.b16 %v1103
        %v3657 = vunpack.c.l.b16 %v1104
        %v3658 = vunpack.c.h.b16 %v1104
        %v3659 = vunpack.c.l.b16 %v1105
        %v3660 = vunpack.c.h.b16 %v1105
        %v3661 = vunpack.c.l.b16 %v1106
        %v3662 = vunpack.c.h.b16 %v1106
        %v3663 = vunpack.c.l.b16 %v1107
        %v3664 = vunpack.c.h.b16 %v1107
        %v3665 = vunpack.c.l.b16 %v1108
        %v3666 = vunpack.c.h.b16 %v1108
        %v3667 = vunpack.c.l.b16 %v1109
        %v3668 = vunpack.c.h.b16 %v1109
        %v3669 = vunpack.c.l.b16 %v1110
        %v3670 = vunpack.c.h.b16 %v1110
        %v3671 = vunpack.c.l.b16 %v1111
        %v3672 = vunpack.c.h.b16 %v1111
        %v3673 = vunpack.c.l.b16 %v1112
        %v3674 = vunpack.c.h.b16 %v1112
        %v3675 = vunpack.c.l.b16 %v1113
        %v3676 = vunpack.c.h.b16 %v1113
        %v3677 = vunpack.c.l.b16 %v1114
        %v3678 = vunpack.c.h.b16 %v1114
        %v3679 = vunpack.c.l.b16 %v1115
        %v3680 = vunpack.c.h.b16 %v1115
        %v3681 = vunpack.c.l.b16 %v1116
        %v3682 = vunpack.c.h.b16 %v1116
        %v3683 = vunpack.c.l.b16 %v1117
        %v3684 = vunpack.c.h.b16 %v1117
        %v3685 = vunpack.c.l.b16 %v1118
        %v3686 = vunpack.c.h.b16 %v1118
        %v3687 = vunpack.c.l.b16 %v1119
        %v3688 = vunpack.c.h.b16 %v1119
        %v3689 = vunpack.c.l.b16 %v1120
        %v3690 = vunpack.c.h.b16 %v1120
        %v3691 = vunpack.c.l.b16 %v1121
        %v3692 = vunpack.c.h.b16 %v1121
        %v3693 = vunpack.c.l.b16 %v1122
        %v3694 = vunpack.c.h.b16 %v1122
        %v3695 = vunpack.c.l.b16 %v1123
        %v3696 = vunpack.c.h.b16 %v1123
        %v3697 = vunpack.c.l.b16 %v1124
        %v3698 = vunpack.c.h.b16 %v1124
        %v3699 = vunpack.c.l.b16 %v1125
        %v3700 = vunpack.c.h.b16 %v1125
        %v3701 = vunpack.c.l.b16 %v1126
        %v3702 = vunpack.c.h.b16 %v1126
        %v3703 = vunpack.c.l.b16 %v1127
        %v3704 = vunpack.c.h.b16 %v1127
        %v3705 = vunpack.c.l.b16 %v1128
        %v3706 = vunpack.c.h.b16 %v1128
        %v3707 = vunpack.c.l.b16 %v1129
        %v3708 = vunpack.c.h.b16 %v1129
        %v3709 = vunpack.c.l.b16 %v1130
        %v3710 = vunpack.c.h.b16 %v1130
        %v3711 = vunpack.c.l.b16 %v1131
        %v3712 = vunpack.c.h.b16 %v1131
        %v3713 = vunpack.c.l.b16 %v1132
        %v3714 = vunpack.c.h.b16 %v1132
        %v3715 = vunpack.c.l.b16 %v1133
        %v3716 = vunpack.c.h.b16 %v1133
        %v3717 = vunpack.c.l.b16 %v1134
        %v3718 = vunpack.c.h.b16 %v1134
        %v3719 = vunpack.c.l.b16 %v1135
        %v3720 = vunpack.c.h.b16 %v1135
        %v3721 = vunpack.c.l.b16 %v1136
        %v3722 = vunpack.c.h.b16 %v1136
        %v3723 = vunpack.c.l.b16 %v1137
        %v3724 = vunpack.c.h.b16 %v1137
        %v3725 = vunpack.c.l.b16 %v1138
        %v3726 = vunpack.c.h.b16 %v1138
        %v3727 = vunpack.c.l.b16 %v1139
        %v3728 = vunpack.c.h.b16 %v1139
        %v3729 = vunpack.c.l.b16 %v1140
        %v3730 = vunpack.c.h.b16 %v1140
        %v3731 = vunpack.c.l.b16 %v1141
        %v3732 = vunpack.c.h.b16 %v1141
        %v3733 = vunpack.c.l.b16 %v1142
        %v3734 = vunpack.c.h.b16 %v1142
        %v3735 = vunpack.c.l.b16 %v1143
        %v3736 = vunpack.c.h.b16 %v1143
        %v3737 = vunpack.c.l.b16 %v1144
        %v3738 = vunpack.c.h.b16 %v1144
        %v3739 = vunpack.c.l.b16 %v1145
        %v3740 = vunpack.c.h.b16 %v1145
        %v3741 = vunpack.c.l.b16 %v1146
        %v3742 = vunpack.c.h.b16 %v1146
        %v3743 = vunpack.c.l.b16 %v1147
        %v3744 = vunpack.c.h.b16 %v1147
        %v3745 = vunpack.c.l.b16 %v1148
        %v3746 = vunpack.c.h.b16 %v1148
        %v3747 = vunpack.c.l.b16 %v1149
        %v3748 = vunpack.c.h.b16 %v1149
        %v3749 = vunpack.c.l.b16 %v1150
        %v3750 = vunpack.c.h.b16 %v1150
        %v3751 = vunpack.c.l.b16 %v1151
        %v3752 = vunpack.c.h.b16 %v1151
        %v3753 = vunpack.c.l.b16 %v1152
        %v3754 = vunpack.c.h.b16 %v1152
        %v3755 = vunpack.c.l.b16 %v1153
        %v3756 = vunpack.c.h.b16 %v1153
        %v3757 = vunpack.c.l.b16 %v1154
        %v3758 = vunpack.c.h.b16 %v1154
        %v3759 = vunpack.c.l.b16 %v1155
        %v3760 = vunpack.c.h.b16 %v1155
        %v3761 = vunpack.c.l.b16 %v1156
        %v3762 = vunpack.c.h.b16 %v1156
        %v3763 = vunpack.c.l.b16 %v1157
        %v3764 = vunpack.c.h.b16 %v1157
        %v3765 = vunpack.c.l.b16 %v1158
        %v3766 = vunpack.c.h.b16 %v1158
        %v3767 = vunpack.c.l.b16 %v1159
        %v3768 = vunpack.c.h.b16 %v1159
        %v3769 = vunpack.c.l.b16 %v1160
        %v3770 = vunpack.c.h.b16 %v1160
        %v3771 = vunpack.c.l.b16 %v1161
        %v3772 = vunpack.c.h.b16 %v1161
        %v3773 = vunpack.c.l.b16 %v1162
        %v3774 = vunpack.c.h.b16 %v1162
        %v3775 = vunpack.c.l.b16 %v1163
        %v3776 = vunpack.c.h.b16 %v1163
        %v3777 = vunpack.c.l.b16 %v1164
        %v3778 = vunpack.c.h.b16 %v1164
        %v3779 = vunpack.c.l.b16 %v1165
        %v3780 = vunpack.c.h.b16 %v1165
        %v3781 = vunpack.c.l.b16 %v1166
        %v3782 = vunpack.c.h.b16 %v1166
        %v3783 = vunpack.c.l.b16 %v1167
        %v3784 = vunpack.c.h.b16 %v1167
        %v3785 = vunpack.c.l.b16 %v1168
        %v3786 = vunpack.c.h.b16 %v1168
        %v3787 = vunpack.c.l.b16 %v1169
        %v3788 = vunpack.c.h.b16 %v1169
        %v3789 = vunpack.c.l.b16 %v1170
        %v3790 = vunpack.c.h.b16 %v1170
        %v3791 = vunpack.c.l.b16 %v1171
        %v3792 = vunpack.c.h.b16 %v1171
        %v3793 = vunpack.c.l.b16 %v1172
        %v3794 = vunpack.c.h.b16 %v1172
        %v3795 = vunpack.c.l.b16 %v1173
        %v3796 = vunpack.c.h.b16 %v1173
        %v3797 = vunpack.c.l.b16 %v1174
        %v3798 = vunpack.c.h.b16 %v1174
        %v3799 = vunpack.c.l.b16 %v1175
        %v3800 = vunpack.c.h.b16 %v1175
        %v3801 = vunpack.c.l.b16 %v1176
        %v3802 = vunpack.c.h.b16 %v1176
        %v3803 = vunpack.c.l.b16 %v1177
        %v3804 = vunpack.c.h.b16 %v1177
        %v3805 = vunpack.c.l.b16 %v1178
        %v3806 = vunpack.c.h.b16 %v1178
        %v3807 = vunpack.c.l.b16 %v1179
        %v3808 = vunpack.c.h.b16 %v1179
        %v3809 = vunpack.c.l.b16 %v1180
        %v3810 = vunpack.c.h.b16 %v1180
        %v3811 = vunpack.c.l.b16 %v1181
        %v3812 = vunpack.c.h.b16 %v1181
        %v3813 = vunpack.c.l.b16 %v1182
        %v3814 = vunpack.c.h.b16 %v1182
        %v3815 = vunpack.c.l.b16 %v1183
        %v3816 = vunpack.c.h.b16 %v1183
        %v3817 = vunpack.c.l.b16 %v1184
        %v3818 = vunpack.c.h.b16 %v1184
        %v3819 = vunpack.c.l.b16 %v1185
        %v3820 = vunpack.c.h.b16 %v1185
        %v3821 = vunpack.c.l.b16 %v1186
        %v3822 = vunpack.c.h.b16 %v1186
        %v3823 = vunpack.c.l.b16 %v1187
        %v3824 = vunpack.c.h.b16 %v1187
        %v3825 = vunpack.c.l.b16 %v1188
        %v3826 = vunpack.c.h.b16 %v1188
        %v3827 = vunpack.c.l.b16 %v1189
        %v3828 = vunpack.c.h.b16 %v1189
        %v3829 = vunpack.c.l.b16 %v1190
        %v3830 = vunpack.c.h.b16 %v1190
        %v3831 = vunpack.c.l.b16 %v1191
        %v3832 = vunpack.c.h.b16 %v1191
        %v3833 = vunpack.c.l.b16 %v1192
        %v3834 = vunpack.c.h.b16 %v1192
        %v3835 = vunpack.c.l.b16 %v1193
        %v3836 = vunpack.c.h.b16 %v1193
        %v3837 = vunpack.c.l.b16 %v1194
        %v3838 = vunpack.c.h.b16 %v1194
        %v3839 = vunpack.c.l.b16 %v1195
        %v3840 = vunpack.c.h.b16 %v1195
        %v3841 = vunpack.c.l.b16 %v1196
        %v3842 = vunpack.c.h.b16 %v1196
        %v3843 = vunpack.c.l.b16 %v1197
        %v3844 = vunpack.c.h.b16 %v1197
        %v3845 = vunpack.c.l.b16 %v1198
        %v3846 = vunpack.c.h.b16 %v1198
        %v3847 = vunpack.c.l.b16 %v1199
        %v3848 = vunpack.c.h.b16 %v1199
        %v3849 = vunpack.c.l.b16 %v1200
        %v3850 = vunpack.c.h.b16 %v1200
        %v3851 = vunpack.c.l.b16 %v1201
        %v3852 = vunpack.c.h.b16 %v1201
        %v3853 = vunpack.c.l.b16 %v1202
        %v3854 = vunpack.c.h.b16 %v1202
        %v3855 = vunpack.c.l.b16 %v1203
        %v3856 = vunpack.c.h.b16 %v1203
        %v3857 = vunpack.c.l.b16 %v1204
        %v3858 = vunpack.c.h.b16 %v1204
        %v3859 = vunpack.c.l.b16 %v1205
        %v3860 = vunpack.c.h.b16 %v1205
        %v3861 = vunpack.c.l.b16 %v1206
        %v3862 = vunpack.c.h.b16 %v1206
        %v3863 = vunpack.c.l.b16 %v1207
        %v3864 = vunpack.c.h.b16 %v1207
        %v3865 = vunpack.c.l.b16 %v1208
        %v3866 = vunpack.c.h.b16 %v1208
        %v3867 = vunpack.c.l.b16 %v1209
        %v3868 = vunpack.c.h.b16 %v1209
        %v3869 = vunpack.c.l.b16 %v1210
        %v3870 = vunpack.c.h.b16 %v1210
        %v3871 = vunpack.c.l.b16 %v1211
        %v3872 = vunpack.c.h.b16 %v1211
        %v3873 = vunpack.c.l.b16 %v1212
        %v3874 = vunpack.c.h.b16 %v1212
        %v3875 = vunpack.c.l.b16 %v1213
        %v3876 = vunpack.c.h.b16 %v1213
        %v3877 = vunpack.c.l.b16 %v1214
        %v3878 = vunpack.c.h.b16 %v1214
        %v3879 = vunpack.c.l.b16 %v1215
        %v3880 = vunpack.c.h.b16 %v1215
        %v3881 = vunpack.c.l.b16 %v1216
        %v3882 = vunpack.c.h.b16 %v1216
        %v3883 = vunpack.c.l.b16 %v1217
        %v3884 = vunpack.c.h.b16 %v1217
        %v3885 = vunpack.c.l.b16 %v1218
        %v3886 = vunpack.c.h.b16 %v1218
        %v3887 = vunpack.c.l.b16 %v1219
        %v3888 = vunpack.c.h.b16 %v1219
        %v3889 = vunpack.c.l.b16 %v1220
        %v3890 = vunpack.c.h.b16 %v1220
        %v3891 = vunpack.c.l.b16 %v1221
        %v3892 = vunpack.c.h.b16 %v1221
        %v3893 = vunpack.c.l.b16 %v1222
        %v3894 = vunpack.c.h.b16 %v1222
        %v3895 = vunpack.c.l.b16 %v1223
        %v3896 = vunpack.c.h.b16 %v1223
        %v3897 = vunpack.c.l.b16 %v1224
        %v3898 = vunpack.c.h.b16 %v1224
        %v3899 = vunpack.c.l.b16 %v1225
        %v3900 = vunpack.c.h.b16 %v1225
        %v3901 = vunpack.c.l.b16 %v1226
        %v3902 = vunpack.c.h.b16 %v1226
        %v3903 = vunpack.c.l.b16 %v1227
        %v3904 = vunpack.c.h.b16 %v1227
        %v3905 = vunpack.c.l.b16 %v1228
        %v3906 = vunpack.c.h.b16 %v1228
        %v3907 = vunpack.c.l.b16 %v1229
        %v3908 = vunpack.c.h.b16 %v1229
        %v3909 = vunpack.c.l.b16 %v1230
        %v3910 = vunpack.c.h.b16 %v1230
        %v3911 = vunpack.c.l.b16 %v1231
        %v3912 = vunpack.c.h.b16 %v1231
        %v3913 = vunpack.c.l.b16 %v1232
        %v3914 = vunpack.c.h.b16 %v1232
        %v3915 = vunpack.c.l.b16 %v1233
        %v3916 = vunpack.c.h.b16 %v1233
        %v3917 = vunpack.c.l.b16 %v1234
        %v3918 = vunpack.c.h.b16 %v1234
        %v3919 = vunpack.c.l.b16 %v1235
        %v3920 = vunpack.c.h.b16 %v1235
        %v3921 = vunpack.c.l.b16 %v1236
        %v3922 = vunpack.c.h.b16 %v1236
        %v3923 = vunpack.c.l.b16 %v1237
        %v3924 = vunpack.c.h.b16 %v1237
        %v3925 = vunpack.c.l.b16 %v1238
        %v3926 = vunpack.c.h.b16 %v1238
        %v3927 = vunpack.c.l.b16 %v1239
        %v3928 = vunpack.c.h.b16 %v1239
        %v3929 = vunpack.c.l.b16 %v1240
        %v3930 = vunpack.c.h.b16 %v1240
        %v3931 = vunpack.c.l.b16 %v1241
        %v3932 = vunpack.c.h.b16 %v1241
        %v3933 = vunpack.c.l.b16 %v1242
        %v3934 = vunpack.c.h.b16 %v1242
        %v3935 = vunpack.c.l.b16 %v1243
        %v3936 = vunpack.c.h.b16 %v1243
        %v3937 = vunpack.c.l.b16 %v1244
        %v3938 = vunpack.c.h.b16 %v1244
        %v3939 = vunpack.c.l.b16 %v1245
        %v3940 = vunpack.c.h.b16 %v1245
        %v3941 = vunpack.c.l.b16 %v1246
        %v3942 = vunpack.c.h.b16 %v1246
        %v3943 = vunpack.c.l.b16 %v1247
        %v3944 = vunpack.c.h.b16 %v1247
        %v3945 = vunpack.c.l.b16 %v1248
        %v3946 = vunpack.c.h.b16 %v1248
        %v3947 = vunpack.c.l.b16 %v1249
        %v3948 = vunpack.c.h.b16 %v1249
        %v3949 = vunpack.c.l.b16 %v1250
        %v3950 = vunpack.c.h.b16 %v1250
        %v3951 = vunpack.c.l.b16 %v1251
        %v3952 = vunpack.c.h.b16 %v1251
        %v3953 = vunpack.c.l.b16 %v1252
        %v3954 = vunpack.c.h.b16 %v1252
        %v3955 = vunpack.c.l.b16 %v1253
        %v3956 = vunpack.c.h.b16 %v1253
        %v3957 = vunpack.c.l.b16 %v1254
        %v3958 = vunpack.c.h.b16 %v1254
        %v3959 = vunpack.c.l.b16 %v1255
        %v3960 = vunpack.c.h.b16 %v1255
        %v3961 = vunpack.c.l.b16 %v1256
        %v3962 = vunpack.c.h.b16 %v1256
        %v3963 = vunpack.c.l.b16 %v1257
        %v3964 = vunpack.c.h.b16 %v1257
        %v3965 = vunpack.c.l.b16 %v1258
        %v3966 = vunpack.c.h.b16 %v1258
        %v3967 = vunpack.c.l.b16 %v1259
        %v3968 = vunpack.c.h.b16 %v1259
        %v3969 = vunpack.c.l.b16 %v1260
        %v3970 = vunpack.c.h.b16 %v1260
        %v3971 = vunpack.c.l.b16 %v1261
        %v3972 = vunpack.c.h.b16 %v1261
        %v3973 = vunpack.c.l.b16 %v1262
        %v3974 = vunpack.c.h.b16 %v1262
        %v3975 = vunpack.c.l.b16 %v1263
        %v3976 = vunpack.c.h.b16 %v1263
        %v3977 = vunpack.c.l.b16 %v1264
        %v3978 = vunpack.c.h.b16 %v1264
        %v3979 = vunpack.c.l.b16 %v1265
        %v3980 = vunpack.c.h.b16 %v1265
        %v3981 = vunpack.c.l.b16 %v1266
        %v3982 = vunpack.c.h.b16 %v1266
        %v3983 = vunpack.c.l.b16 %v1267
        %v3984 = vunpack.c.h.b16 %v1267
        %v3985 = vunpack.c.l.b16 %v1268
        %v3986 = vunpack.c.h.b16 %v1268
        %v3987 = vunpack.c.l.b16 %v1269
        %v3988 = vunpack.c.h.b16 %v1269
        %v3989 = vunpack.c.l.b16 %v1270
        %v3990 = vunpack.c.h.b16 %v1270
        %v3991 = vunpack.c.l.b16 %v1271
        %v3992 = vunpack.c.h.b16 %v1271
        %v3993 = vunpack.c.l.b16 %v1272
        %v3994 = vunpack.c.h.b16 %v1272
        %v3995 = vunpack.c.l.b16 %v1273
        %v3996 = vunpack.c.h.b16 %v1273
        %v3997 = vunpack.c.l.b16 %v1274
        %v3998 = vunpack.c.h.b16 %v1274
        %v3999 = vunpack.c.l.b16 %v1275
        %v4000 = vunpack.c.h.b16 %v1275
        %v4001 = vunpack.c.l.b16 %v1276
        %v4002 = vunpack.c.h.b16 %v1276
        %v4003 = vunpack.c.l.b16 %v1277
        %v4004 = vunpack.c.h.b16 %v1277
        %v4005 = vunpack.c.l.b16 %v1278
        %v4006 = vunpack.c.h.b16 %v1278
        %v4007 = vunpack.c.l.b16 %v1279
        %v4008 = vunpack.c.h.b16 %v1279
        %v4009 = vunpack.c.l.b16 %v1280
        %v4010 = vunpack.c.h.b16 %v1280
        %v4011 = vunpack.c.l.b16 %v1281
        %v4012 = vunpack.c.h.b16 %v1281
        %v4013 = vunpack.c.l.b16 %v1282
        %v4014 = vunpack.c.h.b16 %v1282
        %v4015 = vunpack.c.l.b16 %v1283
        %v4016 = vunpack.c.h.b16 %v1283
        %v4017 = vunpack.c.l.b16 %v1284
        %v4018 = vunpack.c.h.b16 %v1284
        %v4019 = vunpack.c.l.b16 %v1285
        %v4020 = vunpack.c.h.b16 %v1285
        %v4021 = vunpack.c.l.b16 %v1286
        %v4022 = vunpack.c.h.b16 %v1286
        %v4023 = vunpack.c.l.b16 %v1287
        %v4024 = vunpack.c.h.b16 %v1287
        %v4025 = vunpack.c.l.b16 %v1288
        %v4026 = vunpack.c.h.b16 %v1288
        %v4027 = vunpack.c.l.b16 %v1289
        %v4028 = vunpack.c.h.b16 %v1289
        %v4029 = vunpack.c.l.b16 %v1290
        %v4030 = vunpack.c.h.b16 %v1290
        %v4031 = vunpack.c.l.b16 %v1291
        %v4032 = vunpack.c.h.b16 %v1291
        %v4033 = vunpack.c.l.b16 %v1292
        %v4034 = vunpack.c.h.b16 %v1292
        %v4035 = vunpack.c.l.b16 %v1293
        %v4036 = vunpack.c.h.b16 %v1293
        %v4037 = vunpack.c.l.b16 %v1294
        %v4038 = vunpack.c.h.b16 %v1294
        %v4039 = vunpack.c.l.b16 %v1295
        %v4040 = vunpack.c.h.b16 %v1295
        %v4041 = vunpack.c.l.b16 %v1296
        %v4042 = vunpack.c.h.b16 %v1296
        %v4043 = vunpack.c.l.b16 %v1297
        %v4044 = vunpack.c.h.b16 %v1297
        %v4045 = vunpack.c.l.b16 %v1298
        %v4046 = vunpack.c.h.b16 %v1298
        %v4047 = vunpack.c.l.b16 %v1299
        %v4048 = vunpack.c.h.b16 %v1299
        %v4049 = vunpack.c.l.b16 %v1300
        %v4050 = vunpack.c.h.b16 %v1300
        %v4051 = vunpack.c.l.b16 %v1301
        %v4052 = vunpack.c.h.b16 %v1301
        %v4053 = vunpack.c.l.b16 %v1302
        %v4054 = vunpack.c.h.b16 %v1302
        %v4055 = vunpack.c.l.b16 %v1303
        %v4056 = vunpack.c.h.b16 %v1303
        %v4057 = vunpack.c.l.b16 %v1304
        %v4058 = vunpack.c.h.b16 %v1304
        %v4059 = vunpack.c.l.b16 %v1305
        %v4060 = vunpack.c.h.b16 %v1305
        %v4061 = vunpack.c.l.b16 %v1306
        %v4062 = vunpack.c.h.b16 %v1306
        %v4063 = vunpack.c.l.b16 %v1307
        %v4064 = vunpack.c.h.b16 %v1307
        %v4065 = vunpack.c.l.b16 %v1308
        %v4066 = vunpack.c.h.b16 %v1308
        %v4067 = vunpack.c.l.b16 %v1309
        %v4068 = vunpack.c.h.b16 %v1309
        %v4069 = vunpack.c.l.b16 %v1310
        %v4070 = vunpack.c.h.b16 %v1310
        %v4071 = vunpack.c.l.b16 %v1311
        %v4072 = vunpack.c.h.b16 %v1311
        %v4073 = vunpack.c.l.b16 %v1312
        %v4074 = vunpack.c.h.b16 %v1312
        %v4075 = vunpack.c.l.b16 %v1313
        %v4076 = vunpack.c.h.b16 %v1313
        %v4077 = vunpack.c.l.b16 %v1314
        %v4078 = vunpack.c.h.b16 %v1314
        %v4079 = vunpack.c.l.b16 %v1315
        %v4080 = vunpack.c.h.b16 %v1315
        %v4081 = vunpack.c.l.b16 %v1316
        %v4082 = vunpack.c.h.b16 %v1316
        %v4083 = vunpack.c.l.b16 %v1317
        %v4084 = vunpack.c.h.b16 %v1317
        %v4085 = vunpack.c.l.b16 %v1318
        %v4086 = vunpack.c.h.b16 %v1318
        %v4087 = vunpack.c.l.b16 %v1319
        %v4088 = vunpack.c.h.b16 %v1319
        %v4089 = vunpack.c.l.b16 %v1320
        %v4090 = vunpack.c.h.b16 %v1320
        %v4091 = vunpack.c.l.b16 %v1321
        %v4092 = vunpack.c.h.b16 %v1321
        %v4093 = vunpack.c.l.b16 %v1322
        %v4094 = vunpack.c.h.b16 %v1322
        %v4095 = vunpack.c.l.b16 %v1323
        %v4096 = vunpack.c.h.b16 %v1323
        %v4097 = vunpack.c.l.b16 %v1324
        %v4098 = vunpack.c.h.b16 %v1324
        %v4099 = vunpack.c.l.b16 %v1325
        %v4100 = vunpack.c.h.b16 %v1325
        %v4101 = vunpack.c.l.b16 %v1326
        %v4102 = vunpack.c.h.b16 %v1326
        %v4103 = vunpack.c.l.b16 %v1327
        %v4104 = vunpack.c.h.b16 %v1327
        %v4105 = vunpack.c.l.b16 %v1328
        %v4106 = vunpack.c.h.b16 %v1328
        %v4107 = vunpack.c.l.b16 %v1329
        %v4108 = vunpack.c.h.b16 %v1329
        %v4109 = vunpack.c.l.b16 %v1330
        %v4110 = vunpack.c.h.b16 %v1330
        %v4111 = vunpack.c.l.b16 %v1331
        %v4112 = vunpack.c.h.b16 %v1331
        %v4113 = vunpack.c.l.b16 %v1332
        %v4114 = vunpack.c.h.b16 %v1332
        %v4115 = vunpack.c.l.b16 %v1333
        %v4116 = vunpack.c.h.b16 %v1333
        %v4117 = vunpack.c.l.b16 %v1334
        %v4118 = vunpack.c.h.b16 %v1334
        %v4119 = vunpack.c.l.b16 %v1335
        %v4120 = vunpack.c.h.b16 %v1335
        %v4121 = vunpack.c.l.b16 %v1336
        %v4122 = vunpack.c.h.b16 %v1336
        %v4123 = vunpack.c.l.b16 %v1337
        %v4124 = vunpack.c.h.b16 %v1337
        %v4125 = vunpack.c.l.b16 %v1338
        %v4126 = vunpack.c.h.b16 %v1338
        %v4127 = vunpack.c.l.b16 %v1339
        %v4128 = vunpack.c.h.b16 %v1339
        %v4129 = vunpack.c.l.b16 %v1340
        %v4130 = vunpack.c.h.b16 %v1340
        %v4131 = vunpack.c.l.b16 %v1341
        %v4132 = vunpack.c.h.b16 %v1341
        %v4133 = vunpack.c.l.b16 %v1342
        %v4134 = vunpack.c.h.b16 %v1342
        %v4135 = vunpack.c.l.b16 %v1343
        %v4136 = vunpack.c.h.b16 %v1343
        %v4137 = vunpack.c.l.b16 %v1344
        %v4138 = vunpack.c.h.b16 %v1344
        %v4139 = vunpack.c.l.b16 %v1345
        %v4140 = vunpack.c.h.b16 %v1345
        %v4141 = vunpack.c.l.b16 %v1346
        %v4142 = vunpack.c.h.b16 %v1346
        %v4143 = vunpack.c.l.b16 %v1347
        %v4144 = vunpack.c.h.b16 %v1347
        %v4145 = vunpack.c.l.b16 %v1348
        %v4146 = vunpack.c.h.b16 %v1348
        %v4147 = vunpack.c.l.b16 %v1349
        %v4148 = vunpack.c.h.b16 %v1349
        %v4149 = vunpack.c.l.b16 %v1350
        %v4150 = vunpack.c.h.b16 %v1350
        %v4151 = vunpack.c.l.b16 %v1351
        %v4152 = vunpack.c.h.b16 %v1351
        %v4153 = vunpack.c.l.b16 %v1352
        %v4154 = vunpack.c.h.b16 %v1352
        %v4155 = vunpack.c.l.b16 %v1353
        %v4156 = vunpack.c.h.b16 %v1353
        %v4157 = vunpack.c.l.b16 %v1354
        %v4158 = vunpack.c.h.b16 %v1354
        %v4159 = vunpack.c.l.b16 %v1355
        %v4160 = vunpack.c.h.b16 %v1355
        %v4161 = vunpack.c.l.b16 %v1356
        %v4162 = vunpack.c.h.b16 %v1356
        %v4163 = vunpack.c.l.b16 %v1357
        %v4164 = vunpack.c.h.b16 %v1357
        %v4165 = vunpack.c.l.b16 %v1358
        %v4166 = vunpack.c.h.b16 %v1358
        %v4167 = vunpack.c.l.b16 %v1359
        %v4168 = vunpack.c.h.b16 %v1359
        %v4169 = vunpack.c.l.b16 %v1360
        %v4170 = vunpack.c.h.b16 %v1360
        %v4171 = vunpack.c.l.b16 %v1361
        %v4172 = vunpack.c.h.b16 %v1361
        %v4173 = vunpack.c.l.b16 %v1362
        %v4174 = vunpack.c.h.b16 %v1362
        %v4175 = vunpack.c.l.b16 %v1363
        %v4176 = vunpack.c.h.b16 %v1363
        %v4177 = vunpack.c.l.b16 %v1364
        %v4178 = vunpack.c.h.b16 %v1364
        %v4179 = vunpack.c.l.b16 %v1365
        %v4180 = vunpack.c.h.b16 %v1365
        %v4181 = vunpack.c.l.b16 %v1366
        %v4182 = vunpack.c.h.b16 %v1366
        %v4183 = vunpack.c.l.b16 %v1367
        %v4184 = vunpack.c.h.b16 %v1367
        %v4185 = vunpack.c.l.b16 %v1368
        %v4186 = vunpack.c.h.b16 %v1368
        %v4187 = vunpack.c.l.b16 %v1369
        %v4188 = vunpack.c.h.b16 %v1369
        %v4189 = vunpack.c.l.b16 %v1370
        %v4190 = vunpack.c.h.b16 %v1370
        %v4191 = vunpack.c.l.b16 %v1371
        %v4192 = vunpack.c.h.b16 %v1371
        %v4193 = vunpack.c.l.b16 %v1372
        %v4194 = vunpack.c.h.b16 %v1372
        %v4195 = vunpack.c.l.b16 %v1373
        %v4196 = vunpack.c.h.b16 %v1373
        %v4197 = vunpack.c.l.b16 %v1374
        %v4198 = vunpack.c.h.b16 %v1374
        %v4199 = vunpack.c.l.b16 %v1375
        %v4200 = vunpack.c.h.b16 %v1375
        %v4201 = vunpack.c.l.b16 %v1376
        %v4202 = vunpack.c.h.b16 %v1376
        %v4203 = vunpack.c.l.b16 %v1377
        %v4204 = vunpack.c.h.b16 %v1377
        %v4205 = vunpack.c.l.b16 %v1378
        %v4206 = vunpack.c.h.b16 %v1378
        %v4207 = vunpack.c.l.b16 %v1379
        %v4208 = vunpack.c.h.b16 %v1379
        %v4209 = vunpack.c.l.b16 %v1380
        %v4210 = vunpack.c.h.b16 %v1380
        %v4211 = vunpack.c.l.b16 %v1381
        %v4212 = vunpack.c.h.b16 %v1381
        %v4213 = vunpack.c.l.b16 %v1382
        %v4214 = vunpack.c.h.b16 %v1382
        %v4215 = vunpack.c.l.b16 %v1383
        %v4216 = vunpack.c.h.b16 %v1383
        %v4217 = vunpack.c.l.b16 %v1384
        %v4218 = vunpack.c.h.b16 %v1384
        %v4219 = vunpack.c.l.b16 %v1385
        %v4220 = vunpack.c.h.b16 %v1385
        %v4221 = vunpack.c.l.b16 %v1386
        %v4222 = vunpack.c.h.b16 %v1386
        %v4223 = vunpack.c.l.b16 %v1387
        %v4224 = vunpack.c.h.b16 %v1387
        %v4225 = vunpack.c.l.b16 %v1388
        %v4226 = vunpack.c.h.b16 %v1388
        %v4227 = vunpack.c.l.b16 %v1389
        %v4228 = vunpack.c.h.b16 %v1389
        %v4229 = vunpack.c.l.b16 %v1390
        %v4230 = vunpack.c.h.b16 %v1390
        %v4231 = vunpack.c.l.b16 %v1391
        %v4232 = vunpack.c.h.b16 %v1391
        %v4233 = vunpack.c.l.b16 %v1392
        %v4234 = vunpack.c.h.b16 %v1392
        %v4235 = vunpack.c.l.b16 %v1393
        %v4236 = vunpack.c.h.b16 %v1393
        %v4237 = vunpack.c.l.b16 %v1394
        %v4238 = vunpack.c.h.b16 %v1394
        %v4239 = vunpack.c.l.b16 %v1395
        %v4240 = vunpack.c.h.b16 %v1395
        %v4241 = vunpack.c.l.b16 %v1396
        %v4242 = vunpack.c.h.b16 %v1396
        %v4243 = vunpack.c.l.b16 %v1397
        %v4244 = vunpack.c.h.b16 %v1397
        %v4245 = vunpack.c.l.b16 %v1398
        %v4246 = vunpack.c.h.b16 %v1398
        %v4247 = vunpack.c.l.b16 %v1399
        %v4248 = vunpack.c.h.b16 %v1399
        %v4249 = vunpack.c.l.b16 %v1400
        %v4250 = vunpack.c.h.b16 %v1400
        %v4251 = vunpack.c.l.b16 %v1401
        %v4252 = vunpack.c.h.b16 %v1401
        %v4253 = vunpack.c.l.b16 %v1402
        %v4254 = vunpack.c.h.b16 %v1402
        %v4255 = vunpack.c.l.b16 %v1403
        %v4256 = vunpack.c.h.b16 %v1403
        %v4257 = vunpack.c.l.b16 %v1404
        %v4258 = vunpack.c.h.b16 %v1404
        %v4259 = vunpack.c.l.b16 %v1405
        %v4260 = vunpack.c.h.b16 %v1405
        %v4261 = vunpack.c.l.b16 %v1406
        %v4262 = vunpack.c.h.b16 %v1406
        %v4263 = vunpack.c.l.b16 %v1407
        %v4264 = vunpack.c.h.b16 %v1407
        %v4265 = vunpack.c.l.b16 %v1408
        %v4266 = vunpack.c.h.b16 %v1408
        %v4267 = vunpack.c.l.b16 %v1409
        %v4268 = vunpack.c.h.b16 %v1409
        %v4269 = vunpack.c.l.b16 %v1410
        %v4270 = vunpack.c.h.b16 %v1410
        %v4271 = vunpack.c.l.b16 %v1411
        %v4272 = vunpack.c.h.b16 %v1411
        %v4273 = vunpack.c.l.b16 %v1412
        %v4274 = vunpack.c.h.b16 %v1412
        %v4275 = vunpack.c.l.b16 %v1413
        %v4276 = vunpack.c.h.b16 %v1413
        %v4277 = vunpack.c.l.b16 %v1414
        %v4278 = vunpack.c.h.b16 %v1414
        %v4279 = vunpack.c.l.b16 %v1415
        %v4280 = vunpack.c.h.b16 %v1415
        %v4281 = vunpack.c.l.b16 %v1416
        %v4282 = vunpack.c.h.b16 %v1416
        %v4283 = vunpack.c.l.b16 %v1417
        %v4284 = vunpack.c.h.b16 %v1417
        %v4285 = vunpack.c.l.b16 %v1418
        %v4286 = vunpack.c.h.b16 %v1418
        %v4287 = vunpack.c.l.b16 %v1419
        %v4288 = vunpack.c.h.b16 %v1419
        %v4289 = vunpack.c.l.b16 %v1420
        %v4290 = vunpack.c.h.b16 %v1420
        %v4291 = vunpack.c.l.b16 %v1421
        %v4292 = vunpack.c.h.b16 %v1421
        %v4293 = vunpack.c.l.b16 %v1422
        %v4294 = vunpack.c.h.b16 %v1422
        %v4295 = vunpack.c.l.b16 %v1423
        %v4296 = vunpack.c.h.b16 %v1423
        %v4297 = vunpack.c.l.b16 %v1424
        %v4298 = vunpack.c.h.b16 %v1424
        %v4299 = vunpack.c.l.b16 %v1425
        %v4300 = vunpack.c.h.b16 %v1425
        %v4301 = vunpack.c.l.b16 %v1426
        %v4302 = vunpack.c.h.b16 %v1426
        %v4303 = vunpack.c.l.b16 %v1427
        %v4304 = vunpack.c.h.b16 %v1427
        %v4305 = vunpack.c.l.b16 %v1428
        %v4306 = vunpack.c.h.b16 %v1428
        %v4307 = vunpack.c.l.b16 %v1429
        %v4308 = vunpack.c.h.b16 %v1429
        %v4309 = vunpack.c.l.b16 %v1430
        %v4310 = vunpack.c.h.b16 %v1430
        %v4311 = vunpack.c.l.b16 %v1431
        %v4312 = vunpack.c.h.b16 %v1431
        %v4313 = vunpack.c.l.b16 %v1432
        %v4314 = vunpack.c.h.b16 %v1432
        %v4315 = vunpack.c.l.b16 %v1433
        %v4316 = vunpack.c.h.b16 %v1433
        %v4317 = vunpack.c.l.b16 %v1434
        %v4318 = vunpack.c.h.b16 %v1434
        %v4319 = vunpack.c.l.b16 %v1435
        %v4320 = vunpack.c.h.b16 %v1435
        %v4321 = vunpack.c.l.b16 %v1436
        %v4322 = vunpack.c.h.b16 %v1436
        %v4323 = vunpack.c.l.b16 %v1437
        %v4324 = vunpack.c.h.b16 %v1437
        %v4325 = vunpack.c.l.b16 %v1438
        %v4326 = vunpack.c.h.b16 %v1438
        %v4327 = vunpack.c.l.b16 %v1439
        %v4328 = vunpack.c.h.b16 %v1439
        %v4329 = vunpack.c.l.b16 %v1440
        %v4330 = vunpack.c.h.b16 %v1440
        %v4331 = vunpack.c.l.b16 %v1441
        %v4332 = vunpack.c.h.b16 %v1441
        %v4333 = vunpack.c.l.b16 %v1442
        %v4334 = vunpack.c.h.b16 %v1442
        %v4335 = vunpack.c.l.b16 %v1443
        %v4336 = vunpack.c.h.b16 %v1443
        %v4337 = vunpack.c.l.b16 %v1444
        %v4338 = vunpack.c.h.b16 %v1444
        %v4339 = vunpack.c.l.b16 %v1445
        %v4340 = vunpack.c.h.b16 %v1445
        %v4341 = vunpack.c.l.b16 %v1446
        %v4342 = vunpack.c.h.b16 %v1446
        %v4343 = vunpack.c.l.b16 %v1447
        %v4344 = vunpack.c.h.b16 %v1447
        %v4345 = vunpack.c.l.b16 %v1448
        %v4346 = vunpack.c.h.b16 %v1448
        %v4347 = vunpack.c.l.b16 %v1449
        %v4348 = vunpack.c.h.b16 %v1449
        %v4349 = vunpack.c.l.b16 %v1450
        %v4350 = vunpack.c.h.b16 %v1450
        %v4351 = vunpack.c.l.b16 %v1451
        %v4352 = vunpack.c.h.b16 %v1451
        %v4353 = vunpack.c.l.b16 %v1452
        %v4354 = vunpack.c.h.b16 %v1452
        %v4355 = vunpack.c.l.b16 %v1453
        %v4356 = vunpack.c.h.b16 %v1453
        %v4357 = vunpack.c.l.b16 %v1454
        %v4358 = vunpack.c.h.b16 %v1454
        %v4359 = vunpack.c.l.b16 %v1455
        %v4360 = vunpack.c.h.b16 %v1455
        %v4361 = vunpack.c.l.b16 %v1456
        %v4362 = vunpack.c.h.b16 %v1456
        %v4363 = vunpack.c.l.b16 %v1457
        %v4364 = vunpack.c.h.b16 %v1457
        %v4365 = vunpack.c.l.b16 %v1458
        %v4366 = vunpack.c.h.b16 %v1458
        %v4367 = vunpack.c.l.b16 %v1459
        %v4368 = vunpack.c.h.b16 %v1459
        %v4369 = vunpack.c.l.b16 %v1460
        %v4370 = vunpack.c.h.b16 %v1460
        %v4371 = vunpack.c.l.b16 %v1461
        %v4372 = vunpack.c.h.b16 %v1461
        %v4373 = vunpack.c.l.b16 %v1462
        %v4374 = vunpack.c.h.b16 %v1462
        %v4375 = vunpack.c.l.b16 %v1463
        %v4376 = vunpack.c.h.b16 %v1463
        %v4377 = vunpack.c.l.b16 %v1464
        %v4378 = vunpack.c.h.b16 %v1464
        %v4379 = vunpack.c.l.b16 %v1465
        %v4380 = vunpack.c.h.b16 %v1465
        %v4381 = vunpack.c.l.b16 %v1466
        %v4382 = vunpack.c.h.b16 %v1466
        %v4383 = vunpack.c.l.b16 %v1467
        %v4384 = vunpack.c.h.b16 %v1467
        %v4385 = vunpack.c.l.b16 %v1468
        %v4386 = vunpack.c.h.b16 %v1468
        %v4387 = vunpack.c.l.b16 %v1469
        %v4388 = vunpack.c.h.b16 %v1469
        %v4389 = vunpack.c.l.b16 %v1470
        %v4390 = vunpack.c.h.b16 %v1470
        %v4391 = vunpack.c.l.b16 %v1471
        %v4392 = vunpack.c.h.b16 %v1471
        %v4393 = vunpack.c.l.b16 %v1472
        %v4394 = vunpack.c.h.b16 %v1472
        %v4395 = vunpack.c.l.b16 %v1473
        %v4396 = vunpack.c.h.b16 %v1473
        %v4397 = vunpack.c.l.b16 %v1474
        %v4398 = vunpack.c.h.b16 %v1474
        %v4399 = vunpack.c.l.b16 %v1475
        %v4400 = vunpack.c.h.b16 %v1475
        %v4401 = vunpack.c.l.b16 %v1476
        %v4402 = vunpack.c.h.b16 %v1476
        %v4403 = vunpack.c.l.b16 %v1477
        %v4404 = vunpack.c.h.b16 %v1477
        %v4405 = vunpack.c.l.b16 %v1478
        %v4406 = vunpack.c.h.b16 %v1478
        %v4407 = vunpack.c.l.b16 %v1479
        %v4408 = vunpack.c.h.b16 %v1479
        %v4409 = vunpack.c.l.b16 %v1480
        %v4410 = vunpack.c.h.b16 %v1480
        %v4411 = vunpack.c.l.b16 %v1481
        %v4412 = vunpack.c.h.b16 %v1481
        %v4413 = vunpack.c.l.b16 %v1482
        %v4414 = vunpack.c.h.b16 %v1482
        %v4415 = vunpack.c.l.b16 %v1483
        %v4416 = vunpack.c.h.b16 %v1483
        %v4417 = vunpack.c.l.b16 %v1484
        %v4418 = vunpack.c.h.b16 %v1484
        %v4419 = vunpack.c.l.b16 %v1485
        %v4420 = vunpack.c.h.b16 %v1485
        %v4421 = vunpack.c.l.b16 %v1486
        %v4422 = vunpack.c.h.b16 %v1486
        %v4423 = vunpack.c.l.b16 %v1487
        %v4424 = vunpack.c.h.b16 %v1487
        %v4425 = vunpack.c.l.b16 %v1488
        %v4426 = vunpack.c.h.b16 %v1488
        %v4427 = vunpack.c.l.b16 %v1489
        %v4428 = vunpack.c.h.b16 %v1489
        %v4429 = vunpack.c.l.b16 %v1490
        %v4430 = vunpack.c.h.b16 %v1490
        %v4431 = vunpack.c.l.b16 %v1491
        %v4432 = vunpack.c.h.b16 %v1491
        %v4433 = vunpack.c.l.b16 %v1492
        %v4434 = vunpack.c.h.b16 %v1492
        %v4435 = vunpack.c.l.b16 %v1493
        %v4436 = vunpack.c.h.b16 %v1493
        %v4437 = vunpack.c.l.b16 %v1494
        %v4438 = vunpack.c.h.b16 %v1494
        %v4439 = vunpack.c.l.b16 %v1495
        %v4440 = vunpack.c.h.b16 %v1495
        %v4441 = vunpack.c.l.b16 %v1496
        %v4442 = vunpack.c.h.b16 %v1496
        %v4443 = vunpack.c.l.b16 %v1497
        %v4444 = vunpack.c.h.b16 %v1497
        %v4445 = vunpack.c.l.b16 %v1498
        %v4446 = vunpack.c.h.b16 %v1498
        %v4447 = vunpack.c.l.b16 %v1499
        %v4448 = vunpack.c.h.b16 %v1499
        %v4449 = vunpack.c.l.b16 %v1500
        %v4450 = vunpack.c.h.b16 %v1500
        %v4451 = vunpack.c.l.b16 %v1501
        %v4452 = vunpack.c.h.b16 %v1501
        %v4453 = vunpack.c.l.b16 %v1502
        %v4454 = vunpack.c.h.b16 %v1502
        %v4455 = vunpack.c.l.b16 %v1503
        %v4456 = vunpack.c.h.b16 %v1503
        %v4457 = vunpack.c.l.b16 %v1504
        %v4458 = vunpack.c.h.b16 %v1504
        %v4459 = vunpack.c.l.b16 %v1505
        %v4460 = vunpack.c.h.b16 %v1505
        %v4461 = vunpack.c.l.b16 %v1506
        %v4462 = vunpack.c.h.b16 %v1506
        %v4463 = vunpack.c.l.b16 %v1507
        %v4464 = vunpack.c.h.b16 %v1507
        %v4465 = vunpack.c.l.b16 %v1508
        %v4466 = vunpack.c.h.b16 %v1508
        %v4467 = vunpack.c.l.b16 %v1509
        %v4468 = vunpack.c.h.b16 %v1509
        %v4469 = vunpack.c.l.b16 %v1510
        %v4470 = vunpack.c.h.b16 %v1510
        %v4471 = vunpack.c.l.b16 %v1511
        %v4472 = vunpack.c.h.b16 %v1511
        %v4473 = vunpack.c.l.b16 %v1512
        %v4474 = vunpack.c.h.b16 %v1512
        %v4475 = vunpack.c.l.b16 %v1513
        %v4476 = vunpack.c.h.b16 %v1513
        %v4477 = vunpack.c.l.b16 %v1514
        %v4478 = vunpack.c.h.b16 %v1514
        %v4479 = vunpack.c.l.b16 %v1515
        %v4480 = vunpack.c.h.b16 %v1515
        %v4481 = vunpack.c.l.b16 %v1516
        %v4482 = vunpack.c.h.b16 %v1516
        %v4483 = vunpack.c.l.b16 %v1517
        %v4484 = vunpack.c.h.b16 %v1517
        %v4485 = vunpack.c.l.b16 %v1518
        %v4486 = vunpack.c.h.b16 %v1518
        %v4487 = vunpack.c.l.b16 %v1519
        %v4488 = vunpack.c.h.b16 %v1519
        %v4489 = vunpack.c.l.b16 %v1520
        %v4490 = vunpack.c.h.b16 %v1520
        %v4491 = vunpack.c.l.b16 %v1521
        %v4492 = vunpack.c.h.b16 %v1521
        %v4493 = vunpack.c.l.b16 %v1522
        %v4494 = vunpack.c.h.b16 %v1522
        %v4495 = vunpack.c.l.b16 %v1523
        %v4496 = vunpack.c.h.b16 %v1523
        %v4497 = vunpack.c.l.b16 %v1524
        %v4498 = vunpack.c.h.b16 %v1524
        %v4499 = vunpack.c.l.b16 %v1525
        %v4500 = vunpack.c.h.b16 %v1525
        %v4501 = vunpack.c.l.b16 %v1526
        %v4502 = vunpack.c.h.b16 %v1526
        %v4503 = vunpack.c.l.b16 %v1527
        %v4504 = vunpack.c.h.b16 %v1527
        %v4505 = vunpack.c.l.b16 %v1528
        %v4506 = vunpack.c.h.b16 %v1528
        %v4507 = vunpack.c.l.b16 %v1529
        %v4508 = vunpack.c.h.b16 %v1529
        %v4509 = vunpack.c.l.b16 %v1530
        %v4510 = vunpack.c.h.b16 %v1530
        %v4511 = vunpack.c.l.b16 %v1531
        %v4512 = vunpack.c.h.b16 %v1531
        %v4513 = vunpack.c.l.b16 %v1532
        %v4514 = vunpack.c.h.b16 %v1532
        %v4515 = vunpack.c.l.b16 %v1533
        %v4516 = vunpack.c.h.b16 %v1533
        %v4517 = vunpack.c.l.b16 %v1534
        %v4518 = vunpack.c.h.b16 %v1534
        %v4519 = vunpack.c.l.b16 %v1535
        %v4520 = vunpack.c.h.b16 %v1535
        %v4521 = vunpack.c.l.b16 %v1536
        %v4522 = vunpack.c.h.b16 %v1536
        %v4523 = vunpack.c.l.b16 %v1537
        %v4524 = vunpack.c.h.b16 %v1537
        %v4525 = vunpack.c.l.b16 %v1538
        %v4526 = vunpack.c.h.b16 %v1538
        %v4527 = vunpack.c.l.b16 %v1539
        %v4528 = vunpack.c.h.b16 %v1539
        %v4529 = vunpack.c.l.b16 %v1540
        %v4530 = vunpack.c.h.b16 %v1540
        %v4531 = vunpack.c.l.b16 %v1541
        %v4532 = vunpack.c.h.b16 %v1541
        %v4533 = vunpack.c.l.b16 %v1542
        %v4534 = vunpack.c.h.b16 %v1542
        %v4535 = vunpack.c.l.b16 %v1543
        %v4536 = vunpack.c.h.b16 %v1543
        %v4537 = vunpack.c.l.b16 %v1544
        %v4538 = vunpack.c.h.b16 %v1544
        %v4539 = vunpack.c.l.b16 %v1545
        %v4540 = vunpack.c.h.b16 %v1545
        %v4541 = vunpack.c.l.b16 %v1546
        %v4542 = vunpack.c.h.b16 %v1546
        %v4543 = vunpack.c.l.b16 %v1547
        %v4544 = vunpack.c.h.b16 %v1547
        %v4545 = vunpack.c.l.b16 %v1548
        %v4546 = vunpack.c.h.b16 %v1548
        %v4547 = vunpack.c.l.b16 %v1549
        %v4548 = vunpack.c.h.b16 %v1549
        %v4549 = vunpack.c.l.b16 %v1550
        %v4550 = vunpack.c.h.b16 %v1550
        %v4551 = vunpack.c.l.b16 %v1551
        %v4552 = vunpack.c.h.b16 %v1551
        %v4553 = vunpack.c.l.b16 %v1552
        %v4554 = vunpack.c.h.b16 %v1552
        %v4555 = vunpack.c.l.b16 %v1553
        %v4556 = vunpack.c.h.b16 %v1553
        %v4557 = vunpack.c.l.b16 %v1554
        %v4558 = vunpack.c.h.b16 %v1554
        %v4559 = vunpack.c.l.b16 %v1555
        %v4560 = vunpack.c.h.b16 %v1555
        %v4561 = vunpack.c.l.b16 %v1556
        %v4562 = vunpack.c.h.b16 %v1556
        %v4563 = vunpack.c.l.b16 %v1557
        %v4564 = vunpack.c.h.b16 %v1557
        %v4565 = vunpack.c.l.b16 %v1558
        %v4566 = vunpack.c.h.b16 %v1558
        %v4567 = vunpack.c.l.b16 %v1559
        %v4568 = vunpack.c.h.b16 %v1559
        %v4569 = vunpack.c.l.b16 %v1560
        %v4570 = vunpack.c.h.b16 %v1560
        %v4571 = vunpack.c.l.b16 %v1561
        %v4572 = vunpack.c.h.b16 %v1561
        %v4573 = vunpack.c.l.b16 %v1562
        %v4574 = vunpack.c.h.b16 %v1562
        %v4575 = vunpack.c.l.b16 %v1563
        %v4576 = vunpack.c.h.b16 %v1563
        %v4577 = vunpack.c.l.b16 %v1564
        %v4578 = vunpack.c.h.b16 %v1564
        %v4579 = vunpack.c.l.b16 %v1565
        %v4580 = vunpack.c.h.b16 %v1565
        %v4581 = vunpack.c.l.b16 %v1566
        %v4582 = vunpack.c.h.b16 %v1566
        %v4583 = vunpack.c.l.b16 %v1567
        %v4584 = vunpack.c.h.b16 %v1567
        %v4585 = vunpack.c.l.b16 %v1568
        %v4586 = vunpack.c.h.b16 %v1568
        %v4587 = vunpack.c.l.b16 %v1569
        %v4588 = vunpack.c.h.b16 %v1569
        %v4589 = vunpack.c.l.b16 %v1570
        %v4590 = vunpack.c.h.b16 %v1570
        %v4591 = vunpack.c.l.b16 %v1571
        %v4592 = vunpack.c.h.b16 %v1571
        %v4593 = vunpack.c.l.b16 %v1572
        %v4594 = vunpack.c.h.b16 %v1572
        %v4595 = vunpack.c.l.b16 %v1573
        %v4596 = vunpack.c.h.b16 %v1573
        %v4597 = vunpack.c.l.b16 %v1574
        %v4598 = vunpack.c.h.b16 %v1574
        %v4599 = vunpack.c.l.b16 %v1575
        %v4600 = vunpack.c.h.b16 %v1575
        %v4601 = vunpack.c.l.b16 %v1576
        %v4602 = vunpack.c.h.b16 %v1576
        %v4603 = vunpack.c.l.b16 %v1577
        %v4604 = vunpack.c.h.b16 %v1577
        %v4605 = vunpack.c.l.b16 %v1578
        %v4606 = vunpack.c.h.b16 %v1578
        %v4607 = vunpack.c.l.b16 %v1579
        %v4608 = vunpack.c.h.b16 %v1579
        %v4609 = vunpack.c.l.b16 %v1580
        %v4610 = vunpack.c.h.b16 %v1580
        %v4611 = vunpack.c.l.b16 %v1581
        %v4612 = vunpack.c.h.b16 %v1581
        %v4613 = vunpack.c.l.b16 %v1582
        %v4614 = vunpack.c.h.b16 %v1582
        %v4615 = vunpack.c.l.b16 %v1583
        %v4616 = vunpack.c.h.b16 %v1583
        %v4617 = vunpack.c.l.b16 %v1584
        %v4618 = vunpack.c.h.b16 %v1584
        %v4619 = vunpack.c.l.b16 %v1585
        %v4620 = vunpack.c.h.b16 %v1585
        %v4621 = vunpack.c.l.b16 %v1586
        %v4622 = vunpack.c.h.b16 %v1586
        %v4623 = vunpack.c.l.b16 %v1587
        %v4624 = vunpack.c.h.b16 %v1587
        %v4625 = vunpack.c.l.b16 %v1588
        %v4626 = vunpack.c.h.b16 %v1588
        %v4627 = vunpack.c.l.b16 %v1589
        %v4628 = vunpack.c.h.b16 %v1589
        %v4629 = vunpack.c.l.b16 %v1590
        %v4630 = vunpack.c.h.b16 %v1590
        %v4631 = vunpack.c.l.b16 %v1591
        %v4632 = vunpack.c.h.b16 %v1591
        %v4633 = vunpack.c.l.b16 %v1592
        %v4634 = vunpack.c.h.b16 %v1592
        %v4635 = vunpack.c.l.b16 %v1593
        %v4636 = vunpack.c.h.b16 %v1593
        %v4637 = vunpack.c.l.b16 %v1594
        %v4638 = vunpack.c.h.b16 %v1594
        %v4639 = vunpack.c.l.b16 %v1595
        %v4640 = vunpack.c.h.b16 %v1595
        %v4641 = vunpack.c.l.b16 %v1596
        %v4642 = vunpack.c.h.b16 %v1596
        %v4643 = vunpack.c.l.b16 %v1597
        %v4644 = vunpack.c.h.b16 %v1597
        %v4645 = vunpack.c.l.b16 %v1598
        %v4646 = vunpack.c.h.b16 %v1598
        %v4647 = vunpack.c.l.b16 %v1599
        %v4648 = vunpack.c.h.b16 %v1599
        %v4649 = vunpack.c.l.b16 %v1600
        %v4650 = vunpack.c.h.b16 %v1600
        %v4651 = vunpack.c.l.b16 %v1601
        %v4652 = vunpack.c.h.b16 %v1601
        %v4653 = vunpack.c.l.b16 %v1602
        %v4654 = vunpack.c.h.b16 %v1602
        %v4655 = vunpack.c.l.b16 %v1603
        %v4656 = vunpack.c.h.b16 %v1603
        %v4657 = vunpack.c.l.b16 %v1604
        %v4658 = vunpack.c.h.b16 %v1604
        %v4659 = vunpack.c.l.b16 %v1605
        %v4660 = vunpack.c.h.b16 %v1605
        %v4661 = vunpack.c.l.b16 %v1606
        %v4662 = vunpack.c.h.b16 %v1606
        %v4663 = vunpack.c.l.b16 %v1607
        %v4664 = vunpack.c.h.b16 %v1607
        %v4665 = vunpack.c.l.b16 %v1608
        %v4666 = vunpack.c.h.b16 %v1608
        %v4667 = vunpack.c.l.b16 %v1609
        %v4668 = vunpack.c.h.b16 %v1609
        %v4669 = vunpack.c.l.b16 %v1610
        %v4670 = vunpack.c.h.b16 %v1610
        %v4671 = vunpack.c.l.b16 %v1611
        %v4672 = vunpack.c.h.b16 %v1611
        %v4673 = vunpack.c.l.b16 %v1612
        %v4674 = vunpack.c.h.b16 %v1612
        %v4675 = vunpack.c.l.b16 %v1613
        %v4676 = vunpack.c.h.b16 %v1613
        %v4677 = vunpack.c.l.b16 %v1614
        %v4678 = vunpack.c.h.b16 %v1614
        %v4679 = vunpack.c.l.b16 %v1615
        %v4680 = vunpack.c.h.b16 %v1615
        %v4681 = vunpack.c.l.b16 %v1616
        %v4682 = vunpack.c.h.b16 %v1616
        %v4683 = vunpack.c.l.b16 %v1617
        %v4684 = vunpack.c.h.b16 %v1617
        %v4685 = vunpack.c.l.b16 %v1618
        %v4686 = vunpack.c.h.b16 %v1618
        %v4687 = vunpack.c.l.b16 %v1619
        %v4688 = vunpack.c.h.b16 %v1619
        %v4689 = vunpack.c.l.b16 %v1620
        %v4690 = vunpack.c.h.b16 %v1620
        %v4691 = vunpack.c.l.b16 %v1621
        %v4692 = vunpack.c.h.b16 %v1621
        %v4693 = vunpack.c.l.b16 %v1622
        %v4694 = vunpack.c.h.b16 %v1622
        %v4695 = vpack.c.b16 %v2663, %v2647
        %v4696 = vpack.c.b16 %v2664, %v2648
        %v4697 = vpack.c.b16 %v2665, %v2649
        %v4698 = vpack.c.b16 %v2666, %v2650
        %v4699 = vpack.c.b16 %v2667, %v2651
        %v4700 = vpack.c.b16 %v2668, %v2652
        %v4701 = vpack.c.b16 %v2669, %v2653
        %v4702 = vpack.c.b16 %v2670, %v2654
        %v4703 = vpack.c.b16 %v2671, %v2655
        %v4704 = vpack.c.b16 %v2672, %v2656
        %v4705 = vpack.c.b16 %v2673, %v2657
        %v4706 = vpack.c.b16 %v2674, %v2658
        %v4707 = vpack.c.b16 %v2675, %v2659
        %v4708 = vpack.c.b16 %v2676, %v2660
        %v4709 = vpack.c.b16 %v2677, %v2661
        %v4710 = vpack.c.b16 %v2678, %v2662
        %v4711 = vpack.c.b16 %v2695, %v2679
        %v4712 = vpack.c.b16 %v2696, %v2680
        %v4713 = vpack.c.b16 %v2697, %v2681
        %v4714 = vpack.c.b16 %v2698, %v2682
        %v4715 = vpack.c.b16 %v2699, %v2683
        %v4716 = vpack.c.b16 %v2700, %v2684
        %v4717 = vpack.c.b16 %v2701, %v2685
        %v4718 = vpack.c.b16 %v2702, %v2686
        %v4719 = vpack.c.b16 %v2703, %v2687
        %v4720 = vpack.c.b16 %v2704, %v2688
        %v4721 = vpack.c.b16 %v2705, %v2689
        %v4722 = vpack.c.b16 %v2706, %v2690
        %v4723 = vpack.c.b16 %v2707, %v2691
        %v4724 = vpack.c.b16 %v2708, %v2692
        %v4725 = vpack.c.b16 %v2709, %v2693
        %v4726 = vpack.c.b16 %v2710, %v2694
        %v4727 = vpack.c.b16 %v2727, %v2711
        %v4728 = vpack.c.b16 %v2728, %v2712
        %v4729 = vpack.c.b16 %v2729, %v2713
        %v4730 = vpack.c.b16 %v2730, %v2714
        %v4731 = vpack.c.b16 %v2731, %v2715
        %v4732 = vpack.c.b16 %v2732, %v2716
        %v4733 = vpack.c.b16 %v2733, %v2717
        %v4734 = vpack.c.b16 %v2734, %v2718
        %v4735 = vpack.c.b16 %v2735, %v2719
        %v4736 = vpack.c.b16 %v2736, %v2720
        %v4737 = vpack.c.b16 %v2737, %v2721
        %v4738 = vpack.c.b16 %v2738, %v2722
        %v4739 = vpack.c.b16 %v2739, %v2723
        %v4740 = vpack.c.b16 %v2740, %v2724
        %v4741 = vpack.c.b16 %v2741, %v2725
        %v4742 = vpack.c.b16 %v2742, %v2726
        %v4743 = vpack.c.b16 %v2759, %v2743
        %v4744 = vpack.c.b16 %v2760, %v2744
        %v4745 = vpack.c.b16 %v2761, %v2745
        %v4746 = vpack.c.b16 %v2762, %v2746
        %v4747 = vpack.c.b16 %v2763, %v2747
        %v4748 = vpack.c.b16 %v2764, %v2748
        %v4749 = vpack.c.b16 %v2765, %v2749
        %v4750 = vpack.c.b16 %v2766, %v2750
        %v4751 = vpack.c.b16 %v2767, %v2751
        %v4752 = vpack.c.b16 %v2768, %v2752
        %v4753 = vpack.c.b16 %v2769, %v2753
        %v4754 = vpack.c.b16 %v2770, %v2754
        %v4755 = vpack.c.b16 %v2771, %v2755
        %v4756 = vpack.c.b16 %v2772, %v2756
        %v4757 = vpack.c.b16 %v2773, %v2757
        %v4758 = vpack.c.b16 %v2774, %v2758
        %v4759 = vpack.c.b16 %v2791, %v2775
        %v4760 = vpack.c.b16 %v2792, %v2776
        %v4761 = vpack.c.b16 %v2793, %v2777
        %v4762 = vpack.c.b16 %v2794, %v2778
        %v4763 = vpack.c.b16 %v2795, %v2779
        %v4764 = vpack.c.b16 %v2796, %v2780
        %v4765 = vpack.c.b16 %v2797, %v2781
        %v4766 = vpack.c.b16 %v2798, %v2782
        %v4767 = vpack.c.b16 %v2799, %v2783
        %v4768 = vpack.c.b16 %v2800, %v2784
        %v4769 = vpack.c.b16 %v2801, %v2785
        %v4770 = vpack.c.b16 %v2802, %v2786
        %v4771 = vpack.c.b16 %v2803, %v2787
        %v4772 = vpack.c.b16 %v2804, %v2788
        %v4773 = vpack.c.b16 %v2805, %v2789
        %v4774 = vpack.c.b16 %v2806, %v2790
        %v4775 = vpack.c.b16 %v2823, %v2807
        %v4776 = vpack.c.b16 %v2824, %v2808
        %v4777 = vpack.c.b16 %v2825, %v2809
        %v4778 = vpack.c.b16 %v2826, %v2810
        %v4779 = vpack.c.b16 %v2827, %v2811
        %v4780 = vpack.c.b16 %v2828, %v2812
        %v4781 = vpack.c.b16 %v2829, %v2813
        %v4782 = vpack.c.b16 %v2830, %v2814
        %v4783 = vpack.c.b16 %v2831, %v2815
        %v4784 = vpack.c.b16 %v2832, %v2816
        %v4785 = vpack.c.b16 %v2833, %v2817
        %v4786 = vpack.c.b16 %v2834, %v2818
        %v4787 = vpack.c.b16 %v2835, %v2819
        %v4788 = vpack.c.b16 %v2836, %v2820
        %v4789 = vpack.c.b16 %v2837, %v2821
        %v4790 = vpack.c.b16 %v2838, %v2822
        %v4791 = vpack.c.b16 %v2855, %v2839
        %v4792 = vpack.c.b16 %v2856, %v2840
        %v4793 = vpack.c.b16 %v2857, %v2841
        %v4794 = vpack.c.b16 %v2858, %v2842
        %v4795 = vpack.c.b16 %v2859, %v2843
        %v4796 = vpack.c.b16 %v2860, %v2844
        %v4797 = vpack.c.b16 %v2861, %v2845
        %v4798 = vpack.c.b16 %v2862, %v2846
        %v4799 = vpack.c.b16 %v2863, %v2847
        %v4800 = vpack.c.b16 %v2864, %v2848
        %v4801 = vpack.c.b16 %v2865, %v2849
        %v4802 = vpack.c.b16 %v2866, %v2850
        %v4803 = vpack.c.b16 %v2867, %v2851
        %v4804 = vpack.c.b16 %v2868, %v2852
        %v4805 = vpack.c.b16 %v2869, %v2853
        %v4806 = vpack.c.b16 %v2870, %v2854
        %v4807 = vpack.c.b16 %v2887, %v2871
        %v4808 = vpack.c.b16 %v2888, %v2872
        %v4809 = vpack.c.b16 %v2889, %v2873
        %v4810 = vpack.c.b16 %v2890, %v2874
        %v4811 = vpack.c.b16 %v2891, %v2875
        %v4812 = vpack.c.b16 %v2892, %v2876
        %v4813 = vpack.c.b16 %v2893, %v2877
        %v4814 = vpack.c.b16 %v2894, %v2878
        %v4815 = vpack.c.b16 %v2895, %v2879
        %v4816 = vpack.c.b16 %v2896, %v2880
        %v4817 = vpack.c.b16 %v2897, %v2881
        %v4818 = vpack.c.b16 %v2898, %v2882
        %v4819 = vpack.c.b16 %v2899, %v2883
        %v4820 = vpack.c.b16 %v2900, %v2884
        %v4821 = vpack.c.b16 %v2901, %v2885
        %v4822 = vpack.c.b16 %v2902, %v2886
        %v4823 = vpack.c.b16 %v2919, %v2903
        %v4824 = vpack.c.b16 %v2920, %v2904
        %v4825 = vpack.c.b16 %v2921, %v2905
        %v4826 = vpack.c.b16 %v2922, %v2906
        %v4827 = vpack.c.b16 %v2923, %v2907
        %v4828 = vpack.c.b16 %v2924, %v2908
        %v4829 = vpack.c.b16 %v2925, %v2909
        %v4830 = vpack.c.b16 %v2926, %v2910
        %v4831 = vpack.c.b16 %v2927, %v2911
        %v4832 = vpack.c.b16 %v2928, %v2912
        %v4833 = vpack.c.b16 %v2929, %v2913
        %v4834 = vpack.c.b16 %v2930, %v2914
        %v4835 = vpack.c.b16 %v2931, %v2915
        %v4836 = vpack.c.b16 %v2932, %v2916
        %v4837 = vpack.c.b16 %v2933, %v2917
        %v4838 = vpack.c.b16 %v2934, %v2918
        %v4839 = vpack.c.b16 %v2951, %v2935
        %v4840 = vpack.c.b16 %v2952, %v2936
        %v4841 = vpack.c.b16 %v2953, %v2937
        %v4842 = vpack.c.b16 %v2954, %v2938
        %v4843 = vpack.c.b16 %v2955, %v2939
        %v4844 = vpack.c.b16 %v2956, %v2940
        %v4845 = vpack.c.b16 %v2957, %v2941
        %v4846 = vpack.c.b16 %v2958, %v2942
        %v4847 = vpack.c.b16 %v2959, %v2943
        %v4848 = vpack.c.b16 %v2960, %v2944
        %v4849 = vpack.c.b16 %v2961, %v2945
        %v4850 = vpack.c.b16 %v2962, %v2946
        %v4851 = vpack.c.b16 %v2963, %v2947
        %v4852 = vpack.c.b16 %v2964, %v2948
        %v4853 = vpack.c.b16 %v2965, %v2949
        %v4854 = vpack.c.b16 %v2966, %v2950
        %v4855 = vpack.c.b16 %v2983, %v2967
        %v4856 = vpack.c.b16 %v2984, %v2968
        %v4857 = vpack.c.b16 %v2985, %v2969
        %v4858 = vpack.c.b16 %v2986, %v2970
        %v4859 = vpack.c.b16 %v2987, %v2971
        %v4860 = vpack.c.b16 %v2988, %v2972
        %v4861 = vpack.c.b16 %v2989, %v2973
        %v4862 = vpack.c.b16 %v2990, %v2974
        %v4863 = vpack.c.b16 %v2991, %v2975
        %v4864 = vpack.c.b16 %v2992, %v2976
        %v4865 = vpack.c.b16 %v2993, %v2977
        %v4866 = vpack.c.b16 %v2994, %v2978
        %v4867 = vpack.c.b16 %v2995, %v2979
        %v4868 = vpack.c.b16 %v2996, %v2980
        %v4869 = vpack.c.b16 %v2997, %v2981
        %v4870 = vpack.c.b16 %v2998, %v2982
        %v4871 = vpack.c.b16 %v3015, %v2999
        %v4872 = vpack.c.b16 %v3016, %v3000
        %v4873 = vpack.c.b16 %v3017, %v3001
        %v4874 = vpack.c.b16 %v3018, %v3002
        %v4875 = vpack.c.b16 %v3019, %v3003
        %v4876 = vpack.c.b16 %v3020, %v3004
        %v4877 = vpack.c.b16 %v3021, %v3005
        %v4878 = vpack.c.b16 %v3022, %v3006
        %v4879 = vpack.c.b16 %v3023, %v3007
        %v4880 = vpack.c.b16 %v3024, %v3008
        %v4881 = vpack.c.b16 %v3025, %v3009
        %v4882 = vpack.c.b16 %v3026, %v3010
        %v4883 = vpack.c.b16 %v3027, %v3011
        %v4884 = vpack.c.b16 %v3028, %v3012
        %v4885 = vpack.c.b16 %v3029, %v3013
        %v4886 = vpack.c.b16 %v3030, %v3014
        %v4887 = vpack.c.b16 %v3047, %v3031
        %v4888 = vpack.c.b16 %v3048, %v3032
        %v4889 = vpack.c.b16 %v3049, %v3033
        %v4890 = vpack.c.b16 %v3050, %v3034
        %v4891 = vpack.c.b16 %v3051, %v3035
        %v4892 = vpack.c.b16 %v3052, %v3036
        %v4893 = vpack.c.b16 %v3053, %v3037
        %v4894 = vpack.c.b16 %v3054, %v3038
        %v4895 = vpack.c.b16 %v3055, %v3039
        %v4896 = vpack.c.b16 %v3056, %v3040
        %v4897 = vpack.c.b16 %v3057, %v3041
        %v4898 = vpack.c.b16 %v3058, %v3042
        %v4899 = vpack.c.b16 %v3059, %v3043
        %v4900 = vpack.c.b16 %v3060, %v3044
        %v4901 = vpack.c.b16 %v3061, %v3045
        %v4902 = vpack.c.b16 %v3062, %v3046
        %v4903 = vpack.c.b16 %v3079, %v3063
        %v4904 = vpack.c.b16 %v3080, %v3064
        %v4905 = vpack.c.b16 %v3081, %v3065
        %v4906 = vpack.c.b16 %v3082, %v3066
        %v4907 = vpack.c.b16 %v3083, %v3067
        %v4908 = vpack.c.b16 %v3084, %v3068
        %v4909 = vpack.c.b16 %v3085, %v3069
        %v4910 = vpack.c.b16 %v3086, %v3070
        %v4911 = vpack.c.b16 %v3087, %v3071
        %v4912 = vpack.c.b16 %v3088, %v3072
        %v4913 = vpack.c.b16 %v3089, %v3073
        %v4914 = vpack.c.b16 %v3090, %v3074
        %v4915 = vpack.c.b16 %v3091, %v3075
        %v4916 = vpack.c.b16 %v3092, %v3076
        %v4917 = vpack.c.b16 %v3093, %v3077
        %v4918 = vpack.c.b16 %v3094, %v3078
        %v4919 = vpack.c.b16 %v3111, %v3095
        %v4920 = vpack.c.b16 %v3112, %v3096
        %v4921 = vpack.c.b16 %v3113, %v3097
        %v4922 = vpack.c.b16 %v3114, %v3098
        %v4923 = vpack.c.b16 %v3115, %v3099
        %v4924 = vpack.c.b16 %v3116, %v3100
        %v4925 = vpack.c.b16 %v3117, %v3101
        %v4926 = vpack.c.b16 %v3118, %v3102
        %v4927 = vpack.c.b16 %v3119, %v3103
        %v4928 = vpack.c.b16 %v3120, %v3104
        %v4929 = vpack.c.b16 %v3121, %v3105
        %v4930 = vpack.c.b16 %v3122, %v3106
        %v4931 = vpack.c.b16 %v3123, %v3107
        %v4932 = vpack.c.b16 %v3124, %v3108
        %v4933 = vpack.c.b16 %v3125, %v3109
        %v4934 = vpack.c.b16 %v3126, %v3110
        %v4935 = vpack.c.b16 %v3143, %v3127
        %v4936 = vpack.c.b16 %v3144, %v3128
        %v4937 = vpack.c.b16 %v3145, %v3129
        %v4938 = vpack.c.b16 %v3146, %v3130
        %v4939 = vpack.c.b16 %v3147, %v3131
        %v4940 = vpack.c.b16 %v3148, %v3132
        %v4941 = vpack.c.b16 %v3149, %v3133
        %v4942 = vpack.c.b16 %v3150, %v3134
        %v4943 = vpack.c.b16 %v3151, %v3135
        %v4944 = vpack.c.b16 %v3152, %v3136
        %v4945 = vpack.c.b16 %v3153, %v3137
        %v4946 = vpack.c.b16 %v3154, %v3138
        %v4947 = vpack.c.b16 %v3155, %v3139
        %v4948 = vpack.c.b16 %v3156, %v3140
        %v4949 = vpack.c.b16 %v3157, %v3141
        %v4950 = vpack.c.b16 %v3158, %v3142
        %v4951 = vpack.c.b16 %v3175, %v3159
        %v4952 = vpack.c.b16 %v3176, %v3160
        %v4953 = vpack.c.b16 %v3177, %v3161
        %v4954 = vpack.c.b16 %v3178, %v3162
        %v4955 = vpack.c.b16 %v3179, %v3163
        %v4956 = vpack.c.b16 %v3180, %v3164
        %v4957 = vpack.c.b16 %v3181, %v3165
        %v4958 = vpack.c.b16 %v3182, %v3166
        %v4959 = vpack.c.b16 %v3183, %v3167
        %v4960 = vpack.c.b16 %v3184, %v3168
        %v4961 = vpack.c.b16 %v3185, %v3169
        %v4962 = vpack.c.b16 %v3186, %v3170
        %v4963 = vpack.c.b16 %v3187, %v3171
        %v4964 = vpack.c.b16 %v3188, %v3172
        %v4965 = vpack.c.b16 %v3189, %v3173
        %v4966 = vpack.c.b16 %v3190, %v3174
        %v4967 = vpack.c.b16 %v3207, %v3191
        %v4968 = vpack.c.b16 %v3208, %v3192
        %v4969 = vpack.c.b16 %v3209, %v3193
        %v4970 = vpack.c.b16 %v3210, %v3194
        %v4971 = vpack.c.b16 %v3211, %v3195
        %v4972 = vpack.c.b16 %v3212, %v3196
        %v4973 = vpack.c.b16 %v3213, %v3197
        %v4974 = vpack.c.b16 %v3214, %v3198
        %v4975 = vpack.c.b16 %v3215, %v3199
        %v4976 = vpack.c.b16 %v3216, %v3200
        %v4977 = vpack.c.b16 %v3217, %v3201
        %v4978 = vpack.c.b16 %v3218, %v3202
        %v4979 = vpack.c.b16 %v3219, %v3203
        %v4980 = vpack.c.b16 %v3220, %v3204
        %v4981 = vpack.c.b16 %v3221, %v3205
        %v4982 = vpack.c.b16 %v3222, %v3206
        %v4983 = vpack.c.b16 %v3239, %v3223
        %v4984 = vpack.c.b16 %v3240, %v3224
        %v4985 = vpack.c.b16 %v3241, %v3225
        %v4986 = vpack.c.b16 %v3242, %v3226
        %v4987 = vpack.c.b16 %v3243, %v3227
        %v4988 = vpack.c.b16 %v3244, %v3228
        %v4989 = vpack.c.b16 %v3245, %v3229
        %v4990 = vpack.c.b16 %v3246, %v3230
        %v4991 = vpack.c.b16 %v3247, %v3231
        %v4992 = vpack.c.b16 %v3248, %v3232
        %v4993 = vpack.c.b16 %v3249, %v3233
        %v4994 = vpack.c.b16 %v3250, %v3234
        %v4995 = vpack.c.b16 %v3251, %v3235
        %v4996 = vpack.c.b16 %v3252, %v3236
        %v4997 = vpack.c.b16 %v3253, %v3237
        %v4998 = vpack.c.b16 %v3254, %v3238
        %v4999 = vpack.c.b16 %v3271, %v3255
        %v5000 = vpack.c.b16 %v3272, %v3256
        %v5001 = vpack.c.b16 %v3273, %v3257
        %v5002 = vpack.c.b16 %v3274, %v3258
        %v5003 = vpack.c.b16 %v3275, %v3259
        %v5004 = vpack.c.b16 %v3276, %v3260
        %v5005 = vpack.c.b16 %v3277, %v3261
        %v5006 = vpack.c.b16 %v3278, %v3262
        %v5007 = vpack.c.b16 %v3279, %v3263
        %v5008 = vpack.c.b16 %v3280, %v3264
        %v5009 = vpack.c.b16 %v3281, %v3265
        %v5010 = vpack.c.b16 %v3282, %v3266
        %v5011 = vpack.c.b16 %v3283, %v3267
        %v5012 = vpack.c.b16 %v3284, %v3268
        %v5013 = vpack.c.b16 %v3285, %v3269
        %v5014 = vpack.c.b16 %v3286, %v3270
        %v5015 = vpack.c.b16 %v3303, %v3287
        %v5016 = vpack.c.b16 %v3304, %v3288
        %v5017 = vpack.c.b16 %v3305, %v3289
        %v5018 = vpack.c.b16 %v3306, %v3290
        %v5019 = vpack.c.b16 %v3307, %v3291
        %v5020 = vpack.c.b16 %v3308, %v3292
        %v5021 = vpack.c.b16 %v3309, %v3293
        %v5022 = vpack.c.b16 %v3310, %v3294
        %v5023 = vpack.c.b16 %v3311, %v3295
        %v5024 = vpack.c.b16 %v3312, %v3296
        %v5025 = vpack.c.b16 %v3313, %v3297
        %v5026 = vpack.c.b16 %v3314, %v3298
        %v5027 = vpack.c.b16 %v3315, %v3299
        %v5028 = vpack.c.b16 %v3316, %v3300
        %v5029 = vpack.c.b16 %v3317, %v3301
        %v5030 = vpack.c.b16 %v3318, %v3302
        %v5031 = vpack.c.b16 %v3335, %v3319
        %v5032 = vpack.c.b16 %v3336, %v3320
        %v5033 = vpack.c.b16 %v3337, %v3321
        %v5034 = vpack.c.b16 %v3338, %v3322
        %v5035 = vpack.c.b16 %v3339, %v3323
        %v5036 = vpack.c.b16 %v3340, %v3324
        %v5037 = vpack.c.b16 %v3341, %v3325
        %v5038 = vpack.c.b16 %v3342, %v3326
        %v5039 = vpack.c.b16 %v3343, %v3327
        %v5040 = vpack.c.b16 %v3344, %v3328
        %v5041 = vpack.c.b16 %v3345, %v3329
        %v5042 = vpack.c.b16 %v3346, %v3330
        %v5043 = vpack.c.b16 %v3347, %v3331
        %v5044 = vpack.c.b16 %v3348, %v3332
        %v5045 = vpack.c.b16 %v3349, %v3333
        %v5046 = vpack.c.b16 %v3350, %v3334
        %v5047 = vpack.c.b16 %v3367, %v3351
        %v5048 = vpack.c.b16 %v3368, %v3352
        %v5049 = vpack.c.b16 %v3369, %v3353
        %v5050 = vpack.c.b16 %v3370, %v3354
        %v5051 = vpack.c.b16 %v3371, %v3355
        %v5052 = vpack.c.b16 %v3372, %v3356
        %v5053 = vpack.c.b16 %v3373, %v3357
        %v5054 = vpack.c.b16 %v3374, %v3358
        %v5055 = vpack.c.b16 %v3375, %v3359
        %v5056 = vpack.c.b16 %v3376, %v3360
        %v5057 = vpack.c.b16 %v3377, %v3361
        %v5058 = vpack.c.b16 %v3378, %v3362
        %v5059 = vpack.c.b16 %v3379, %v3363
        %v5060 = vpack.c.b16 %v3380, %v3364
        %v5061 = vpack.c.b16 %v3381, %v3365
        %v5062 = vpack.c.b16 %v3382, %v3366
        %v5063 = vpack.c.b16 %v3399, %v3383
        %v5064 = vpack.c.b16 %v3400, %v3384
        %v5065 = vpack.c.b16 %v3401, %v3385
        %v5066 = vpack.c.b16 %v3402, %v3386
        %v5067 = vpack.c.b16 %v3403, %v3387
        %v5068 = vpack.c.b16 %v3404, %v3388
        %v5069 = vpack.c.b16 %v3405, %v3389
        %v5070 = vpack.c.b16 %v3406, %v3390
        %v5071 = vpack.c.b16 %v3407, %v3391
        %v5072 = vpack.c.b16 %v3408, %v3392
        %v5073 = vpack.c.b16 %v3409, %v3393
        %v5074 = vpack.c.b16 %v3410, %v3394
        %v5075 = vpack.c.b16 %v3411, %v3395
        %v5076 = vpack.c.b16 %v3412, %v3396
        %v5077 = vpack.c.b16 %v3413, %v3397
        %v5078 = vpack.c.b16 %v3414, %v3398
        %v5079 = vpack.c.b16 %v3431, %v3415
        %v5080 = vpack.c.b16 %v3432, %v3416
        %v5081 = vpack.c.b16 %v3433, %v3417
        %v5082 = vpack.c.b16 %v3434, %v3418
        %v5083 = vpack.c.b16 %v3435, %v3419
        %v5084 = vpack.c.b16 %v3436, %v3420
        %v5085 = vpack.c.b16 %v3437, %v3421
        %v5086 = vpack.c.b16 %v3438, %v3422
        %v5087 = vpack.c.b16 %v3439, %v3423
        %v5088 = vpack.c.b16 %v3440, %v3424
        %v5089 = vpack.c.b16 %v3441, %v3425
        %v5090 = vpack.c.b16 %v3442, %v3426
        %v5091 = vpack.c.b16 %v3443, %v3427
        %v5092 = vpack.c.b16 %v3444, %v3428
        %v5093 = vpack.c.b16 %v3445, %v3429
        %v5094 = vpack.c.b16 %v3446, %v3430
        %v5095 = vpack.c.b16 %v3463, %v3447
        %v5096 = vpack.c.b16 %v3464, %v3448
        %v5097 = vpack.c.b16 %v3465, %v3449
        %v5098 = vpack.c.b16 %v3466, %v3450
        %v5099 = vpack.c.b16 %v3467, %v3451
        %v5100 = vpack.c.b16 %v3468, %v3452
        %v5101 = vpack.c.b16 %v3469, %v3453
        %v5102 = vpack.c.b16 %v3470, %v3454
        %v5103 = vpack.c.b16 %v3471, %v3455
        %v5104 = vpack.c.b16 %v3472, %v3456
        %v5105 = vpack.c.b16 %v3473, %v3457
        %v5106 = vpack.c.b16 %v3474, %v3458
        %v5107 = vpack.c.b16 %v3475, %v3459
        %v5108 = vpack.c.b16 %v3476, %v3460
        %v5109 = vpack.c.b16 %v3477, %v3461
        %v5110 = vpack.c.b16 %v3478, %v3462
        %v5111 = vpack.c.b16 %v3495, %v3479
        %v5112 = vpack.c.b16 %v3496, %v3480
        %v5113 = vpack.c.b16 %v3497, %v3481
        %v5114 = vpack.c.b16 %v3498, %v3482
        %v5115 = vpack.c.b16 %v3499, %v3483
        %v5116 = vpack.c.b16 %v3500, %v3484
        %v5117 = vpack.c.b16 %v3501, %v3485
        %v5118 = vpack.c.b16 %v3502, %v3486
        %v5119 = vpack.c.b16 %v3503, %v3487
        %v5120 = vpack.c.b16 %v3504, %v3488
        %v5121 = vpack.c.b16 %v3505, %v3489
        %v5122 = vpack.c.b16 %v3506, %v3490
        %v5123 = vpack.c.b16 %v3507, %v3491
        %v5124 = vpack.c.b16 %v3508, %v3492
        %v5125 = vpack.c.b16 %v3509, %v3493
        %v5126 = vpack.c.b16 %v3510, %v3494
        %v5127 = vpack.c.b16 %v3527, %v3511
        %v5128 = vpack.c.b16 %v3528, %v3512
        %v5129 = vpack.c.b16 %v3529, %v3513
        %v5130 = vpack.c.b16 %v3530, %v3514
        %v5131 = vpack.c.b16 %v3531, %v3515
        %v5132 = vpack.c.b16 %v3532, %v3516
        %v5133 = vpack.c.b16 %v3533, %v3517
        %v5134 = vpack.c.b16 %v3534, %v3518
        %v5135 = vpack.c.b16 %v3535, %v3519
        %v5136 = vpack.c.b16 %v3536, %v3520
        %v5137 = vpack.c.b16 %v3537, %v3521
        %v5138 = vpack.c.b16 %v3538, %v3522
        %v5139 = vpack.c.b16 %v3539, %v3523
        %v5140 = vpack.c.b16 %v3540, %v3524
        %v5141 = vpack.c.b16 %v3541, %v3525
        %v5142 = vpack.c.b16 %v3542, %v3526
        %v5143 = vpack.c.b16 %v3559, %v3543
        %v5144 = vpack.c.b16 %v3560, %v3544
        %v5145 = vpack.c.b16 %v3561, %v3545
        %v5146 = vpack.c.b16 %v3562, %v3546
        %v5147 = vpack.c.b16 %v3563, %v3547
        %v5148 = vpack.c.b16 %v3564, %v3548
        %v5149 = vpack.c.b16 %v3565, %v3549
        %v5150 = vpack.c.b16 %v3566, %v3550
        %v5151 = vpack.c.b16 %v3567, %v3551
        %v5152 = vpack.c.b16 %v3568, %v3552
        %v5153 = vpack.c.b16 %v3569, %v3553
        %v5154 = vpack.c.b16 %v3570, %v3554
        %v5155 = vpack.c.b16 %v3571, %v3555
        %v5156 = vpack.c.b16 %v3572, %v3556
        %v5157 = vpack.c.b16 %v3573, %v3557
        %v5158 = vpack.c.b16 %v3574, %v3558
        %v5159 = vpack.c.b16 %v3591, %v3575
        %v5160 = vpack.c.b16 %v3592, %v3576
        %v5161 = vpack.c.b16 %v3593, %v3577
        %v5162 = vpack.c.b16 %v3594, %v3578
        %v5163 = vpack.c.b16 %v3595, %v3579
        %v5164 = vpack.c.b16 %v3596, %v3580
        %v5165 = vpack.c.b16 %v3597, %v3581
        %v5166 = vpack.c.b16 %v3598, %v3582
        %v5167 = vpack.c.b16 %v3599, %v3583
        %v5168 = vpack.c.b16 %v3600, %v3584
        %v5169 = vpack.c.b16 %v3601, %v3585
        %v5170 = vpack.c.b16 %v3602, %v3586
        %v5171 = vpack.c.b16 %v3603, %v3587
        %v5172 = vpack.c.b16 %v3604, %v3588
        %v5173 = vpack.c.b16 %v3605, %v3589
        %v5174 = vpack.c.b16 %v3606, %v3590
        %v5175 = vpack.c.b16 %v3623, %v3607
        %v5176 = vpack.c.b16 %v3624, %v3608
        %v5177 = vpack.c.b16 %v3625, %v3609
        %v5178 = vpack.c.b16 %v3626, %v3610
        %v5179 = vpack.c.b16 %v3627, %v3611
        %v5180 = vpack.c.b16 %v3628, %v3612
        %v5181 = vpack.c.b16 %v3629, %v3613
        %v5182 = vpack.c.b16 %v3630, %v3614
        %v5183 = vpack.c.b16 %v3631, %v3615
        %v5184 = vpack.c.b16 %v3632, %v3616
        %v5185 = vpack.c.b16 %v3633, %v3617
        %v5186 = vpack.c.b16 %v3634, %v3618
        %v5187 = vpack.c.b16 %v3635, %v3619
        %v5188 = vpack.c.b16 %v3636, %v3620
        %v5189 = vpack.c.b16 %v3637, %v3621
        %v5190 = vpack.c.b16 %v3638, %v3622
        %v5191 = vpack.c.b16 %v3655, %v3639
        %v5192 = vpack.c.b16 %v3656, %v3640
        %v5193 = vpack.c.b16 %v3657, %v3641
        %v5194 = vpack.c.b16 %v3658, %v3642
        %v5195 = vpack.c.b16 %v3659, %v3643
        %v5196 = vpack.c.b16 %v3660, %v3644
        %v5197 = vpack.c.b16 %v3661, %v3645
        %v5198 = vpack.c.b16 %v3662, %v3646
        %v5199 = vpack.c.b16 %v3663, %v3647
        %v5200 = vpack.c.b16 %v3664, %v3648
        %v5201 = vpack.c.b16 %v3665, %v3649
        %v5202 = vpack.c.b16 %v3666, %v3650
        %v5203 = vpack.c.b16 %v3667, %v3651
        %v5204 = vpack.c.b16 %v3668, %v3652
        %v5205 = vpack.c.b16 %v3669, %v3653
        %v5206 = vpack.c.b16 %v3670, %v3654
        %v5207 = vpack.c.b16 %v3687, %v3671
        %v5208 = vpack.c.b16 %v3688, %v3672
        %v5209 = vpack.c.b16 %v3689, %v3673
        %v5210 = vpack.c.b16 %v3690, %v3674
        %v5211 = vpack.c.b16 %v3691, %v3675
        %v5212 = vpack.c.b16 %v3692, %v3676
        %v5213 = vpack.c.b16 %v3693, %v3677
        %v5214 = vpack.c.b16 %v3694, %v3678
        %v5215 = vpack.c.b16 %v3695, %v3679
        %v5216 = vpack.c.b16 %v3696, %v3680
        %v5217 = vpack.c.b16 %v3697, %v3681
        %v5218 = vpack.c.b16 %v3698, %v3682
        %v5219 = vpack.c.b16 %v3699, %v3683
        %v5220 = vpack.c.b16 %v3700, %v3684
        %v5221 = vpack.c.b16 %v3701, %v3685
        %v5222 = vpack.c.b16 %v3702, %v3686
        %v5223 = vpack.c.b16 %v3719, %v3703
        %v5224 = vpack.c.b16 %v3720, %v3704
        %v5225 = vpack.c.b16 %v3721, %v3705
        %v5226 = vpack.c.b16 %v3722, %v3706
        %v5227 = vpack.c.b16 %v3723, %v3707
        %v5228 = vpack.c.b16 %v3724, %v3708
        %v5229 = vpack.c.b16 %v3725, %v3709
        %v5230 = vpack.c.b16 %v3726, %v3710
        %v5231 = vpack.c.b16 %v3727, %v3711
        %v5232 = vpack.c.b16 %v3728, %v3712
        %v5233 = vpack.c.b16 %v3729, %v3713
        %v5234 = vpack.c.b16 %v3730, %v3714
        %v5235 = vpack.c.b16 %v3731, %v3715
        %v5236 = vpack.c.b16 %v3732, %v3716
        %v5237 = vpack.c.b16 %v3733, %v3717
        %v5238 = vpack.c.b16 %v3734, %v3718
        %v5239 = vpack.c.b16 %v3751, %v3735
        %v5240 = vpack.c.b16 %v3752, %v3736
        %v5241 = vpack.c.b16 %v3753, %v3737
        %v5242 = vpack.c.b16 %v3754, %v3738
        %v5243 = vpack.c.b16 %v3755, %v3739
        %v5244 = vpack.c.b16 %v3756, %v3740
        %v5245 = vpack.c.b16 %v3757, %v3741
        %v5246 = vpack.c.b16 %v3758, %v3742
        %v5247 = vpack.c.b16 %v3759, %v3743
        %v5248 = vpack.c.b16 %v3760, %v3744
        %v5249 = vpack.c.b16 %v3761, %v3745
        %v5250 = vpack.c.b16 %v3762, %v3746
        %v5251 = vpack.c.b16 %v3763, %v3747
        %v5252 = vpack.c.b16 %v3764, %v3748
        %v5253 = vpack.c.b16 %v3765, %v3749
        %v5254 = vpack.c.b16 %v3766, %v3750
        %v5255 = vpack.c.b16 %v3783, %v3767
        %v5256 = vpack.c.b16 %v3784, %v3768
        %v5257 = vpack.c.b16 %v3785, %v3769
        %v5258 = vpack.c.b16 %v3786, %v3770
        %v5259 = vpack.c.b16 %v3787, %v3771
        %v5260 = vpack.c.b16 %v3788, %v3772
        %v5261 = vpack.c.b16 %v3789, %v3773
        %v5262 = vpack.c.b16 %v3790, %v3774
        %v5263 = vpack.c.b16 %v3791, %v3775
        %v5264 = vpack.c.b16 %v3792, %v3776
        %v5265 = vpack.c.b16 %v3793, %v3777
        %v5266 = vpack.c.b16 %v3794, %v3778
        %v5267 = vpack.c.b16 %v3795, %v3779
        %v5268 = vpack.c.b16 %v3796, %v3780
        %v5269 = vpack.c.b16 %v3797, %v3781
        %v5270 = vpack.c.b16 %v3798, %v3782
        %v5271 = vpack.c.b16 %v3815, %v3799
        %v5272 = vpack.c.b16 %v3816, %v3800
        %v5273 = vpack.c.b16 %v3817, %v3801
        %v5274 = vpack.c.b16 %v3818, %v3802
        %v5275 = vpack.c.b16 %v3819, %v3803
        %v5276 = vpack.c.b16 %v3820, %v3804
        %v5277 = vpack.c.b16 %v3821, %v3805
        %v5278 = vpack.c.b16 %v3822, %v3806
        %v5279 = vpack.c.b16 %v3823, %v3807
        %v5280 = vpack.c.b16 %v3824, %v3808
        %v5281 = vpack.c.b16 %v3825, %v3809
        %v5282 = vpack.c.b16 %v3826, %v3810
        %v5283 = vpack.c.b16 %v3827, %v3811
        %v5284 = vpack.c.b16 %v3828, %v3812
        %v5285 = vpack.c.b16 %v3829, %v3813
        %v5286 = vpack.c.b16 %v3830, %v3814
        %v5287 = vpack.c.b16 %v3847, %v3831
        %v5288 = vpack.c.b16 %v3848, %v3832
        %v5289 = vpack.c.b16 %v3849, %v3833
        %v5290 = vpack.c.b16 %v3850, %v3834
        %v5291 = vpack.c.b16 %v3851, %v3835
        %v5292 = vpack.c.b16 %v3852, %v3836
        %v5293 = vpack.c.b16 %v3853, %v3837
        %v5294 = vpack.c.b16 %v3854, %v3838
        %v5295 = vpack.c.b16 %v3855, %v3839
        %v5296 = vpack.c.b16 %v3856, %v3840
        %v5297 = vpack.c.b16 %v3857, %v3841
        %v5298 = vpack.c.b16 %v3858, %v3842
        %v5299 = vpack.c.b16 %v3859, %v3843
        %v5300 = vpack.c.b16 %v3860, %v3844
        %v5301 = vpack.c.b16 %v3861, %v3845
        %v5302 = vpack.c.b16 %v3862, %v3846
        %v5303 = vpack.c.b16 %v3879, %v3863
        %v5304 = vpack.c.b16 %v3880, %v3864
        %v5305 = vpack.c.b16 %v3881, %v3865
        %v5306 = vpack.c.b16 %v3882, %v3866
        %v5307 = vpack.c.b16 %v3883, %v3867
        %v5308 = vpack.c.b16 %v3884, %v3868
        %v5309 = vpack.c.b16 %v3885, %v3869
        %v5310 = vpack.c.b16 %v3886, %v3870
        %v5311 = vpack.c.b16 %v3887, %v3871
        %v5312 = vpack.c.b16 %v3888, %v3872
        %v5313 = vpack.c.b16 %v3889, %v3873
        %v5314 = vpack.c.b16 %v3890, %v3874
        %v5315 = vpack.c.b16 %v3891, %v3875
        %v5316 = vpack.c.b16 %v3892, %v3876
        %v5317 = vpack.c.b16 %v3893, %v3877
        %v5318 = vpack.c.b16 %v3894, %v3878
        %v5319 = vpack.c.b16 %v3911, %v3895
        %v5320 = vpack.c.b16 %v3912, %v3896
        %v5321 = vpack.c.b16 %v3913, %v3897
        %v5322 = vpack.c.b16 %v3914, %v3898
        %v5323 = vpack.c.b16 %v3915, %v3899
        %v5324 = vpack.c.b16 %v3916, %v3900
        %v5325 = vpack.c.b16 %v3917, %v3901
        %v5326 = vpack.c.b16 %v3918, %v3902
        %v5327 = vpack.c.b16 %v3919, %v3903
        %v5328 = vpack.c.b16 %v3920, %v3904
        %v5329 = vpack.c.b16 %v3921, %v3905
        %v5330 = vpack.c.b16 %v3922, %v3906
        %v5331 = vpack.c.b16 %v3923, %v3907
        %v5332 = vpack.c.b16 %v3924, %v3908
        %v5333 = vpack.c.b16 %v3925, %v3909
        %v5334 = vpack.c.b16 %v3926, %v3910
        %v5335 = vpack.c.b16 %v3943, %v3927
        %v5336 = vpack.c.b16 %v3944, %v3928
        %v5337 = vpack.c.b16 %v3945, %v3929
        %v5338 = vpack.c.b16 %v3946, %v3930
        %v5339 = vpack.c.b16 %v3947, %v3931
        %v5340 = vpack.c.b16 %v3948, %v3932
        %v5341 = vpack.c.b16 %v3949, %v3933
        %v5342 = vpack.c.b16 %v3950, %v3934
        %v5343 = vpack.c.b16 %v3951, %v3935
        %v5344 = vpack.c.b16 %v3952, %v3936
        %v5345 = vpack.c.b16 %v3953, %v3937
        %v5346 = vpack.c.b16 %v3954, %v3938
        %v5347 = vpack.c.b16 %v3955, %v3939
        %v5348 = vpack.c.b16 %v3956, %v3940
        %v5349 = vpack.c.b16 %v3957, %v3941
        %v5350 = vpack.c.b16 %v3958, %v3942
        %v5351 = vpack.c.b16 %v3975, %v3959
        %v5352 = vpack.c.b16 %v3976, %v3960
        %v5353 = vpack.c.b16 %v3977, %v3961
        %v5354 = vpack.c.b16 %v3978, %v3962
        %v5355 = vpack.c.b16 %v3979, %v3963
        %v5356 = vpack.c.b16 %v3980, %v3964
        %v5357 = vpack.c.b16 %v3981, %v3965
        %v5358 = vpack.c.b16 %v3982, %v3966
        %v5359 = vpack.c.b16 %v3983, %v3967
        %v5360 = vpack.c.b16 %v3984, %v3968
        %v5361 = vpack.c.b16 %v3985, %v3969
        %v5362 = vpack.c.b16 %v3986, %v3970
        %v5363 = vpack.c.b16 %v3987, %v3971
        %v5364 = vpack.c.b16 %v3988, %v3972
        %v5365 = vpack.c.b16 %v3989, %v3973
        %v5366 = vpack.c.b16 %v3990, %v3974
        %v5367 = vpack.c.b16 %v4007, %v3991
        %v5368 = vpack.c.b16 %v4008, %v3992
        %v5369 = vpack.c.b16 %v4009, %v3993
        %v5370 = vpack.c.b16 %v4010, %v3994
        %v5371 = vpack.c.b16 %v4011, %v3995
        %v5372 = vpack.c.b16 %v4012, %v3996
        %v5373 = vpack.c.b16 %v4013, %v3997
        %v5374 = vpack.c.b16 %v4014, %v3998
        %v5375 = vpack.c.b16 %v4015, %v3999
        %v5376 = vpack.c.b16 %v4016, %v4000
        %v5377 = vpack.c.b16 %v4017, %v4001
        %v5378 = vpack.c.b16 %v4018, %v4002
        %v5379 = vpack.c.b16 %v4019, %v4003
        %v5380 = vpack.c.b16 %v4020, %v4004
        %v5381 = vpack.c.b16 %v4021, %v4005
        %v5382 = vpack.c.b16 %v4022, %v4006
        %v5383 = vpack.c.b16 %v4039, %v4023
        %v5384 = vpack.c.b16 %v4040, %v4024
        %v5385 = vpack.c.b16 %v4041, %v4025
        %v5386 = vpack.c.b16 %v4042, %v4026
        %v5387 = vpack.c.b16 %v4043, %v4027
        %v5388 = vpack.c.b16 %v4044, %v4028
        %v5389 = vpack.c.b16 %v4045, %v4029
        %v5390 = vpack.c.b16 %v4046, %v4030
        %v5391 = vpack.c.b16 %v4047, %v4031
        %v5392 = vpack.c.b16 %v4048, %v4032
        %v5393 = vpack.c.b16 %v4049, %v4033
        %v5394 = vpack.c.b16 %v4050, %v4034
        %v5395 = vpack.c.b16 %v4051, %v4035
        %v5396 = vpack.c.b16 %v4052, %v4036
        %v5397 = vpack.c.b16 %v4053, %v4037
        %v5398 = vpack.c.b16 %v4054, %v4038
        %v5399 = vpack.c.b16 %v4071, %v4055
        %v5400 = vpack.c.b16 %v4072, %v4056
        %v5401 = vpack.c.b16 %v4073, %v4057
        %v5402 = vpack.c.b16 %v4074, %v4058
        %v5403 = vpack.c.b16 %v4075, %v4059
        %v5404 = vpack.c.b16 %v4076, %v4060
        %v5405 = vpack.c.b16 %v4077, %v4061
        %v5406 = vpack.c.b16 %v4078, %v4062
        %v5407 = vpack.c.b16 %v4079, %v4063
        %v5408 = vpack.c.b16 %v4080, %v4064
        %v5409 = vpack.c.b16 %v4081, %v4065
        %v5410 = vpack.c.b16 %v4082, %v4066
        %v5411 = vpack.c.b16 %v4083, %v4067
        %v5412 = vpack.c.b16 %v4084, %v4068
        %v5413 = vpack.c.b16 %v4085, %v4069
        %v5414 = vpack.c.b16 %v4086, %v4070
        %v5415 = vpack.c.b16 %v4103, %v4087
        %v5416 = vpack.c.b16 %v4104, %v4088
        %v5417 = vpack.c.b16 %v4105, %v4089
        %v5418 = vpack.c.b16 %v4106, %v4090
        %v5419 = vpack.c.b16 %v4107, %v4091
        %v5420 = vpack.c.b16 %v4108, %v4092
        %v5421 = vpack.c.b16 %v4109, %v4093
        %v5422 = vpack.c.b16 %v4110, %v4094
        %v5423 = vpack.c.b16 %v4111, %v4095
        %v5424 = vpack.c.b16 %v4112, %v4096
        %v5425 = vpack.c.b16 %v4113, %v4097
        %v5426 = vpack.c.b16 %v4114, %v4098
        %v5427 = vpack.c.b16 %v4115, %v4099
        %v5428 = vpack.c.b16 %v4116, %v4100
        %v5429 = vpack.c.b16 %v4117, %v4101
        %v5430 = vpack.c.b16 %v4118, %v4102
        %v5431 = vpack.c.b16 %v4135, %v4119
        %v5432 = vpack.c.b16 %v4136, %v4120
        %v5433 = vpack.c.b16 %v4137, %v4121
        %v5434 = vpack.c.b16 %v4138, %v4122
        %v5435 = vpack.c.b16 %v4139, %v4123
        %v5436 = vpack.c.b16 %v4140, %v4124
        %v5437 = vpack.c.b16 %v4141, %v4125
        %v5438 = vpack.c.b16 %v4142, %v4126
        %v5439 = vpack.c.b16 %v4143, %v4127
        %v5440 = vpack.c.b16 %v4144, %v4128
        %v5441 = vpack.c.b16 %v4145, %v4129
        %v5442 = vpack.c.b16 %v4146, %v4130
        %v5443 = vpack.c.b16 %v4147, %v4131
        %v5444 = vpack.c.b16 %v4148, %v4132
        %v5445 = vpack.c.b16 %v4149, %v4133
        %v5446 = vpack.c.b16 %v4150, %v4134
        %v5447 = vpack.c.b16 %v4167, %v4151
        %v5448 = vpack.c.b16 %v4168, %v4152
        %v5449 = vpack.c.b16 %v4169, %v4153
        %v5450 = vpack.c.b16 %v4170, %v4154
        %v5451 = vpack.c.b16 %v4171, %v4155
        %v5452 = vpack.c.b16 %v4172, %v4156
        %v5453 = vpack.c.b16 %v4173, %v4157
        %v5454 = vpack.c.b16 %v4174, %v4158
        %v5455 = vpack.c.b16 %v4175, %v4159
        %v5456 = vpack.c.b16 %v4176, %v4160
        %v5457 = vpack.c.b16 %v4177, %v4161
        %v5458 = vpack.c.b16 %v4178, %v4162
        %v5459 = vpack.c.b16 %v4179, %v4163
        %v5460 = vpack.c.b16 %v4180, %v4164
        %v5461 = vpack.c.b16 %v4181, %v4165
        %v5462 = vpack.c.b16 %v4182, %v4166
        %v5463 = vpack.c.b16 %v4199, %v4183
        %v5464 = vpack.c.b16 %v4200, %v4184
        %v5465 = vpack.c.b16 %v4201, %v4185
        %v5466 = vpack.c.b16 %v4202, %v4186
        %v5467 = vpack.c.b16 %v4203, %v4187
        %v5468 = vpack.c.b16 %v4204, %v4188
        %v5469 = vpack.c.b16 %v4205, %v4189
        %v5470 = vpack.c.b16 %v4206, %v4190
        %v5471 = vpack.c.b16 %v4207, %v4191
        %v5472 = vpack.c.b16 %v4208, %v4192
        %v5473 = vpack.c.b16 %v4209, %v4193
        %v5474 = vpack.c.b16 %v4210, %v4194
        %v5475 = vpack.c.b16 %v4211, %v4195
        %v5476 = vpack.c.b16 %v4212, %v4196
        %v5477 = vpack.c.b16 %v4213, %v4197
        %v5478 = vpack.c.b16 %v4214, %v4198
        %v5479 = vpack.c.b16 %v4231, %v4215
        %v5480 = vpack.c.b16 %v4232, %v4216
        %v5481 = vpack.c.b16 %v4233, %v4217
        %v5482 = vpack.c.b16 %v4234, %v4218
        %v5483 = vpack.c.b16 %v4235, %v4219
        %v5484 = vpack.c.b16 %v4236, %v4220
        %v5485 = vpack.c.b16 %v4237, %v4221
        %v5486 = vpack.c.b16 %v4238, %v4222
        %v5487 = vpack.c.b16 %v4239, %v4223
        %v5488 = vpack.c.b16 %v4240, %v4224
        %v5489 = vpack.c.b16 %v4241, %v4225
        %v5490 = vpack.c.b16 %v4242, %v4226
        %v5491 = vpack.c.b16 %v4243, %v4227
        %v5492 = vpack.c.b16 %v4244, %v4228
        %v5493 = vpack.c.b16 %v4245, %v4229
        %v5494 = vpack.c.b16 %v4246, %v4230
        %v5495 = vpack.c.b16 %v4263, %v4247
        %v5496 = vpack.c.b16 %v4264, %v4248
        %v5497 = vpack.c.b16 %v4265, %v4249
        %v5498 = vpack.c.b16 %v4266, %v4250
        %v5499 = vpack.c.b16 %v4267, %v4251
        %v5500 = vpack.c.b16 %v4268, %v4252
        %v5501 = vpack.c.b16 %v4269, %v4253
        %v5502 = vpack.c.b16 %v4270, %v4254
        %v5503 = vpack.c.b16 %v4271, %v4255
        %v5504 = vpack.c.b16 %v4272, %v4256
        %v5505 = vpack.c.b16 %v4273, %v4257
        %v5506 = vpack.c.b16 %v4274, %v4258
        %v5507 = vpack.c.b16 %v4275, %v4259
        %v5508 = vpack.c.b16 %v4276, %v4260
        %v5509 = vpack.c.b16 %v4277, %v4261
        %v5510 = vpack.c.b16 %v4278, %v4262
        %v5511 = vpack.c.b16 %v4295, %v4279
        %v5512 = vpack.c.b16 %v4296, %v4280
        %v5513 = vpack.c.b16 %v4297, %v4281
        %v5514 = vpack.c.b16 %v4298, %v4282
        %v5515 = vpack.c.b16 %v4299, %v4283
        %v5516 = vpack.c.b16 %v4300, %v4284
        %v5517 = vpack.c.b16 %v4301, %v4285
        %v5518 = vpack.c.b16 %v4302, %v4286
        %v5519 = vpack.c.b16 %v4303, %v4287
        %v5520 = vpack.c.b16 %v4304, %v4288
        %v5521 = vpack.c.b16 %v4305, %v4289
        %v5522 = vpack.c.b16 %v4306, %v4290
        %v5523 = vpack.c.b16 %v4307, %v4291
        %v5524 = vpack.c.b16 %v4308, %v4292
        %v5525 = vpack.c.b16 %v4309, %v4293
        %v5526 = vpack.c.b16 %v4310, %v4294
        %v5527 = vpack.c.b16 %v4327, %v4311
        %v5528 = vpack.c.b16 %v4328, %v4312
        %v5529 = vpack.c.b16 %v4329, %v4313
        %v5530 = vpack.c.b16 %v4330, %v4314
        %v5531 = vpack.c.b16 %v4331, %v4315
        %v5532 = vpack.c.b16 %v4332, %v4316
        %v5533 = vpack.c.b16 %v4333, %v4317
        %v5534 = vpack.c.b16 %v4334, %v4318
        %v5535 = vpack.c.b16 %v4335, %v4319
        %v5536 = vpack.c.b16 %v4336, %v4320
        %v5537 = vpack.c.b16 %v4337, %v4321
        %v5538 = vpack.c.b16 %v4338, %v4322
        %v5539 = vpack.c.b16 %v4339, %v4323
        %v5540 = vpack.c.b16 %v4340, %v4324
        %v5541 = vpack.c.b16 %v4341, %v4325
        %v5542 = vpack.c.b16 %v4342, %v4326
        %v5543 = vpack.c.b16 %v4359, %v4343
        %v5544 = vpack.c.b16 %v4360, %v4344
        %v5545 = vpack.c.b16 %v4361, %v4345
        %v5546 = vpack.c.b16 %v4362, %v4346
        %v5547 = vpack.c.b16 %v4363, %v4347
        %v5548 = vpack.c.b16 %v4364, %v4348
        %v5549 = vpack.c.b16 %v4365, %v4349
        %v5550 = vpack.c.b16 %v4366, %v4350
        %v5551 = vpack.c.b16 %v4367, %v4351
        %v5552 = vpack.c.b16 %v4368, %v4352
        %v5553 = vpack.c.b16 %v4369, %v4353
        %v5554 = vpack.c.b16 %v4370, %v4354
        %v5555 = vpack.c.b16 %v4371, %v4355
        %v5556 = vpack.c.b16 %v4372, %v4356
        %v5557 = vpack.c.b16 %v4373, %v4357
        %v5558 = vpack.c.b16 %v4374, %v4358
        %v5559 = vpack.c.b16 %v4391, %v4375
        %v5560 = vpack.c.b16 %v4392, %v4376
        %v5561 = vpack.c.b16 %v4393, %v4377
        %v5562 = vpack.c.b16 %v4394, %v4378
        %v5563 = vpack.c.b16 %v4395, %v4379
        %v5564 = vpack.c.b16 %v4396, %v4380
        %v5565 = vpack.c.b16 %v4397, %v4381
        %v5566 = vpack.c.b16 %v4398, %v4382
        %v5567 = vpack.c.b16 %v4399, %v4383
        %v5568 = vpack.c.b16 %v4400, %v4384
        %v5569 = vpack.c.b16 %v4401, %v4385
        %v5570 = vpack.c.b16 %v4402, %v4386
        %v5571 = vpack.c.b16 %v4403, %v4387
        %v5572 = vpack.c.b16 %v4404, %v4388
        %v5573 = vpack.c.b16 %v4405, %v4389
        %v5574 = vpack.c.b16 %v4406, %v4390
        %v5575 = vpack.c.b16 %v4423, %v4407
        %v5576 = vpack.c.b16 %v4424, %v4408
        %v5577 = vpack.c.b16 %v4425, %v4409
        %v5578 = vpack.c.b16 %v4426, %v4410
        %v5579 = vpack.c.b16 %v4427, %v4411
        %v5580 = vpack.c.b16 %v4428, %v4412
        %v5581 = vpack.c.b16 %v4429, %v4413
        %v5582 = vpack.c.b16 %v4430, %v4414
        %v5583 = vpack.c.b16 %v4431, %v4415
        %v5584 = vpack.c.b16 %v4432, %v4416
        %v5585 = vpack.c.b16 %v4433, %v4417
        %v5586 = vpack.c.b16 %v4434, %v4418
        %v5587 = vpack.c.b16 %v4435, %v4419
        %v5588 = vpack.c.b16 %v4436, %v4420
        %v5589 = vpack.c.b16 %v4437, %v4421
        %v5590 = vpack.c.b16 %v4438, %v4422
        %v5591 = vpack.c.b16 %v4455, %v4439
        %v5592 = vpack.c.b16 %v4456, %v4440
        %v5593 = vpack.c.b16 %v4457, %v4441
        %v5594 = vpack.c.b16 %v4458, %v4442
        %v5595 = vpack.c.b16 %v4459, %v4443
        %v5596 = vpack.c.b16 %v4460, %v4444
        %v5597 = vpack.c.b16 %v4461, %v4445
        %v5598 = vpack.c.b16 %v4462, %v4446
        %v5599 = vpack.c.b16 %v4463, %v4447
        %v5600 = vpack.c.b16 %v4464, %v4448
        %v5601 = vpack.c.b16 %v4465, %v4449
        %v5602 = vpack.c.b16 %v4466, %v4450
        %v5603 = vpack.c.b16 %v4467, %v4451
        %v5604 = vpack.c.b16 %v4468, %v4452
        %v5605 = vpack.c.b16 %v4469, %v4453
        %v5606 = vpack.c.b16 %v4470, %v4454
        %v5607 = vpack.c.b16 %v4487, %v4471
        %v5608 = vpack.c.b16 %v4488, %v4472
        %v5609 = vpack.c.b16 %v4489, %v4473
        %v5610 = vpack.c.b16 %v4490, %v4474
        %v5611 = vpack.c.b16 %v4491, %v4475
        %v5612 = vpack.c.b16 %v4492, %v4476
        %v5613 = vpack.c.b16 %v4493, %v4477
        %v5614 = vpack.c.b16 %v4494, %v4478
        %v5615 = vpack.c.b16 %v4495, %v4479
        %v5616 = vpack.c.b16 %v4496, %v4480
        %v5617 = vpack.c.b16 %v4497, %v4481
        %v5618 = vpack.c.b16 %v4498, %v4482
        %v5619 = vpack.c.b16 %v4499, %v4483
        %v5620 = vpack.c.b16 %v4500, %v4484
        %v5621 = vpack.c.b16 %v4501, %v4485
        %v5622 = vpack.c.b16 %v4502, %v4486
        %v5623 = vpack.c.b16 %v4519, %v4503
        %v5624 = vpack.c.b16 %v4520, %v4504
        %v5625 = vpack.c.b16 %v4521, %v4505
        %v5626 = vpack.c.b16 %v4522, %v4506
        %v5627 = vpack.c.b16 %v4523, %v4507
        %v5628 = vpack.c.b16 %v4524, %v4508
        %v5629 = vpack.c.b16 %v4525, %v4509
        %v5630 = vpack.c.b16 %v4526, %v4510
        %v5631 = vpack.c.b16 %v4527, %v4511
        %v5632 = vpack.c.b16 %v4528, %v4512
        %v5633 = vpack.c.b16 %v4529, %v4513
        %v5634 = vpack.c.b16 %v4530, %v4514
        %v5635 = vpack.c.b16 %v4531, %v4515
        %v5636 = vpack.c.b16 %v4532, %v4516
        %v5637 = vpack.c.b16 %v4533, %v4517
        %v5638 = vpack.c.b16 %v4534, %v4518
        %v5639 = vpack.c.b16 %v4551, %v4535
        %v5640 = vpack.c.b16 %v4552, %v4536
        %v5641 = vpack.c.b16 %v4553, %v4537
        %v5642 = vpack.c.b16 %v4554, %v4538
        %v5643 = vpack.c.b16 %v4555, %v4539
        %v5644 = vpack.c.b16 %v4556, %v4540
        %v5645 = vpack.c.b16 %v4557, %v4541
        %v5646 = vpack.c.b16 %v4558, %v4542
        %v5647 = vpack.c.b16 %v4559, %v4543
        %v5648 = vpack.c.b16 %v4560, %v4544
        %v5649 = vpack.c.b16 %v4561, %v4545
        %v5650 = vpack.c.b16 %v4562, %v4546
        %v5651 = vpack.c.b16 %v4563, %v4547
        %v5652 = vpack.c.b16 %v4564, %v4548
        %v5653 = vpack.c.b16 %v4565, %v4549
        %v5654 = vpack.c.b16 %v4566, %v4550
        %v5655 = vpack.c.b16 %v4583, %v4567
        %v5656 = vpack.c.b16 %v4584, %v4568
        %v5657 = vpack.c.b16 %v4585, %v4569
        %v5658 = vpack.c.b16 %v4586, %v4570
        %v5659 = vpack.c.b16 %v4587, %v4571
        %v5660 = vpack.c.b16 %v4588, %v4572
        %v5661 = vpack.c.b16 %v4589, %v4573
        %v5662 = vpack.c.b16 %v4590, %v4574
        %v5663 = vpack.c.b16 %v4591, %v4575
        %v5664 = vpack.c.b16 %v4592, %v4576
        %v5665 = vpack.c.b16 %v4593, %v4577
        %v5666 = vpack.c.b16 %v4594, %v4578
        %v5667 = vpack.c.b16 %v4595, %v4579
        %v5668 = vpack.c.b16 %v4596, %v4580
        %v5669 = vpack.c.b16 %v4597, %v4581
        %v5670 = vpack.c.b16 %v4598, %v4582
        %v5671 = vpack.c.b16 %v4615, %v4599
        %v5672 = vpack.c.b16 %v4616, %v4600
        %v5673 = vpack.c.b16 %v4617, %v4601
        %v5674 = vpack.c.b16 %v4618, %v4602
        %v5675 = vpack.c.b16 %v4619, %v4603
        %v5676 = vpack.c.b16 %v4620, %v4604
        %v5677 = vpack.c.b16 %v4621, %v4605
        %v5678 = vpack.c.b16 %v4622, %v4606
        %v5679 = vpack.c.b16 %v4623, %v4607
        %v5680 = vpack.c.b16 %v4624, %v4608
        %v5681 = vpack.c.b16 %v4625, %v4609
        %v5682 = vpack.c.b16 %v4626, %v4610
        %v5683 = vpack.c.b16 %v4627, %v4611
        %v5684 = vpack.c.b16 %v4628, %v4612
        %v5685 = vpack.c.b16 %v4629, %v4613
        %v5686 = vpack.c.b16 %v4630, %v4614
        %v5687 = vpack.c.b16 %v4647, %v4631
        %v5688 = vpack.c.b16 %v4648, %v4632
        %v5689 = vpack.c.b16 %v4649, %v4633
        %v5690 = vpack.c.b16 %v4650, %v4634
        %v5691 = vpack.c.b16 %v4651, %v4635
        %v5692 = vpack.c.b16 %v4652, %v4636
        %v5693 = vpack.c.b16 %v4653, %v4637
        %v5694 = vpack.c.b16 %v4654, %v4638
        %v5695 = vpack.c.b16 %v4655, %v4639
        %v5696 = vpack.c.b16 %v4656, %v4640
        %v5697 = vpack.c.b16 %v4657, %v4641
        %v5698 = vpack.c.b16 %v4658, %v4642
        %v5699 = vpack.c.b16 %v4659, %v4643
        %v5700 = vpack.c.b16 %v4660, %v4644
        %v5701 = vpack.c.b16 %v4661, %v4645
        %v5702 = vpack.c.b16 %v4662, %v4646
        %v5703 = vpack.c.b16 %v4679, %v4663
        %v5704 = vpack.c.b16 %v4680, %v4664
        %v5705 = vpack.c.b16 %v4681, %v4665
        %v5706 = vpack.c.b16 %v4682, %v4666
        %v5707 = vpack.c.b16 %v4683, %v4667
        %v5708 = vpack.c.b16 %v4684, %v4668
        %v5709 = vpack.c.b16 %v4685, %v4669
        %v5710 = vpack.c.b16 %v4686, %v4670
        %v5711 = vpack.c.b16 %v4687, %v4671
        %v5712 = vpack.c.b16 %v4688, %v4672
        %v5713 = vpack.c.b16 %v4689, %v4673
        %v5714 = vpack.c.b16 %v4690, %v4674
        %v5715 = vpack.c.b16 %v4691, %v4675
        %v5716 = vpack.c.b16 %v4692, %v4676
        %v5717 = vpack.c.b16 %v4693, %v4677
        %v5718 = vpack.c.b16 %v4694, %v4678
        %6743 = vmatprep.subr.bf16.mxu0 %v4696
        %6744 = vmatpush1.bf16.msra.mxu0 %v4695
        %6745 = vmatprep.subr.bf16.mxu0 %v4712
        %6746 = vmatpush1.bf16.msra.mxu0 %v4711
        %6747 = vmatprep.subr.bf16.mxu0 %v4728
        %6748 = vmatpush1.bf16.msra.mxu0 %v4727
        %6749 = vmatprep.subr.bf16.mxu0 %v4744
        %6750 = vmatpush1.bf16.msra.mxu0 %v4743
        %6751 = vmatprep.subr.bf16.mxu0 %v4760
        %6752 = vmatpush1.bf16.msra.mxu0 %v4759
        %6753 = vmatprep.subr.bf16.mxu0 %v4776
        %6754 = vmatpush1.bf16.msra.mxu0 %v4775
        %6755 = vmatprep.subr.bf16.mxu0 %v4792
        %6756 = vmatpush1.bf16.msra.mxu0 %v4791
        %6757 = vmatprep.subr.bf16.mxu0 %v4808
        %6758 = vmatpush1.bf16.msra.mxu0 %v4807
        %6759 = vmatprep.subr.bf16.mxu0 %v4824
        %6760 = vmatpush1.bf16.msra.mxu0 %v4823
        %6761 = vmatprep.subr.bf16.mxu0 %v4840
        %6762 = vmatpush1.bf16.msra.mxu0 %v4839
        %6763 = vmatprep.subr.bf16.mxu0 %v4856
        %6764 = vmatpush1.bf16.msra.mxu0 %v4855
        %6765 = vmatprep.subr.bf16.mxu0 %v4872
        %6766 = vmatpush1.bf16.msra.mxu0 %v4871
        %6767 = vmatprep.subr.bf16.mxu0 %v4888
        %6768 = vmatpush1.bf16.msra.mxu0 %v4887
        %6769 = vmatprep.subr.bf16.mxu0 %v4904
        %6770 = vmatpush1.bf16.msra.mxu0 %v4903
        %6771 = vmatprep.subr.bf16.mxu0 %v4920
        %6772 = vmatpush1.bf16.msra.mxu0 %v4919
        %6773 = vmatprep.subr.bf16.mxu0 %v4936
        %6774 = vmatpush1.bf16.msra.mxu0 %v4935
        %6775 = vmatprep.mubr.f32.mxu0 %v592
        %6776 = vmatmul.mubr.f32.gmra.mrb[0].mxu0 %v591
        %v6777 = vpop.f32.mrb[0].mxu0
        %v6778 = vadd.f32 0.0, %v6777
        %v6779 = vpop.f32.mrb[0].mxu0
        %v6780 = vadd.f32 0.0, %v6779
        %6781 = vdwg.mxu0
        %6782 = vmatprep.subr.bf16.mxu0 %v4952
        %6783 = vmatpush1.bf16.msra.mxu0 %v4951
        %6784 = vmatprep.subr.bf16.mxu0 %v4968
        %6785 = vmatpush1.bf16.msra.mxu0 %v4967
        %6786 = vmatprep.subr.bf16.mxu0 %v4984
        %6787 = vmatpush1.bf16.msra.mxu0 %v4983
        %6788 = vmatprep.subr.bf16.mxu0 %v5000
        %6789 = vmatpush1.bf16.msra.mxu0 %v4999
        %6790 = vmatprep.subr.bf16.mxu0 %v5016
        %6791 = vmatpush1.bf16.msra.mxu0 %v5015
        %6792 = vmatprep.subr.bf16.mxu0 %v5032
        %6793 = vmatpush1.bf16.msra.mxu0 %v5031
        %6794 = vmatprep.subr.bf16.mxu0 %v5048
        %6795 = vmatpush1.bf16.msra.mxu0 %v5047
        %6796 = vmatprep.subr.bf16.mxu0 %v5064
        %6797 = vmatpush1.bf16.msra.mxu0 %v5063
        %6798 = vmatprep.subr.bf16.mxu0 %v5080
        %6799 = vmatpush1.bf16.msra.mxu0 %v5079
        %6800 = vmatprep.subr.bf16.mxu0 %v5096
        %6801 = vmatpush1.bf16.msra.mxu0 %v5095
        %6802 = vmatprep.subr.bf16.mxu0 %v5112
        %6803 = vmatpush1.bf16.msra.mxu0 %v5111
        %6804 = vmatprep.subr.bf16.mxu0 %v5128
        %6805 = vmatpush1.bf16.msra.mxu0 %v5127
        %6806 = vmatprep.subr.bf16.mxu0 %v5144
        %6807 = vmatpush1.bf16.msra.mxu0 %v5143
        %6808 = vmatprep.subr.bf16.mxu0 %v5160
        %6809 = vmatpush1.bf16.msra.mxu0 %v5159
        %6810 = vmatprep.subr.bf16.mxu0 %v5176
        %6811 = vmatpush1.bf16.msra.mxu0 %v5175
        %6812 = vmatprep.subr.bf16.mxu0 %v5192
        %6813 = vmatpush1.bf16.msra.mxu0 %v5191
        %6814 = vmatprep.mubr.f32.mxu0 %v594
        %6815 = vmatmul.mubr.f32.gmra.mrb[0].mxu0 %v593
        %v6816 = vpop.f32.mrb[0].mxu0
        %v6817 = vadd.f32 %v6778, %v6816
        %v6818 = vpop.f32.mrb[0].mxu0
        %v6819 = vadd.f32 %v6780, %v6818
        %6820 = vdwg.mxu0
        %6821 = vmatprep.subr.bf16.mxu0 %v5208
        %6822 = vmatpush1.bf16.msra.mxu0 %v5207
        %6823 = vmatprep.subr.bf16.mxu0 %v5224
        %6824 = vmatpush1.bf16.msra.mxu0 %v5223
        %6825 = vmatprep.subr.bf16.mxu0 %v5240
        %6826 = vmatpush1.bf16.msra.mxu0 %v5239
        %6827 = vmatprep.subr.bf16.mxu0 %v5256
        %6828 = vmatpush1.bf16.msra.mxu0 %v5255
        %6829 = vmatprep.subr.bf16.mxu0 %v5272
        %6830 = vmatpush1.bf16.msra.mxu0 %v5271
        %6831 = vmatprep.subr.bf16.mxu0 %v5288
        %6832 = vmatpush1.bf16.msra.mxu0 %v5287
        %6833 = vmatprep.subr.bf16.mxu0 %v5304
        %6834 = vmatpush1.bf16.msra.mxu0 %v5303
        %6835 = vmatprep.subr.bf16.mxu0 %v5320
        %6836 = vmatpush1.bf16.msra.mxu0 %v5319
        %6837 = vmatprep.subr.bf16.mxu0 %v5336
        %6838 = vmatpush1.bf16.msra.mxu0 %v5335
        %6839 = vmatprep.subr.bf16.mxu0 %v5352
        %6840 = vmatpush1.bf16.msra.mxu0 %v5351
        %6841 = vmatprep.subr.bf16.mxu0 %v5368
        %6842 = vmatpush1.bf16.msra.mxu0 %v5367
        %6843 = vmatprep.subr.bf16.mxu0 %v5384
        %6844 = vmatpush1.bf16.msra.mxu0 %v5383
        %6845 = vmatprep.subr.bf16.mxu0 %v5400
        %6846 = vmatpush1.bf16.msra.mxu0 %v5399
        %6847 = vmatprep.subr.bf16.mxu0 %v5416
        %6848 = vmatpush1.bf16.msra.mxu0 %v5415
        %6849 = vmatprep.subr.bf16.mxu0 %v5432
        %6850 = vmatpush1.bf16.msra.mxu0 %v5431
        %6851 = vmatprep.subr.bf16.mxu0 %v5448
        %6852 = vmatpush1.bf16.msra.mxu0 %v5447
        %6853 = vmatprep.mubr.f32.mxu0 %v596
        %6854 = vmatmul.mubr.f32.gmra.mrb[0].mxu0 %v595
        %v6855 = vpop.f32.mrb[0].mxu0
        %v6856 = vadd.f32 %v6817, %v6855
        %v6857 = vpop.f32.mrb[0].mxu0
        %v6858 = vadd.f32 %v6819, %v6857
        %6859 = vdwg.mxu0
        %6860 = vmatprep.subr.bf16.mxu0 %v5464
        %6861 = vmatpush1.bf16.msra.mxu0 %v5463
        %6862 = vmatprep.subr.bf16.mxu0 %v5480
        %6863 = vmatpush1.bf16.msra.mxu0 %v5479
        %6864 = vmatprep.subr.bf16.mxu0 %v5496
        %6865 = vmatpush1.bf16.msra.mxu0 %v5495
        %6866 = vmatprep.subr.bf16.mxu0 %v5512
        %6867 = vmatpush1.bf16.msra.mxu0 %v5511
        %6868 = vmatprep.subr.bf16.mxu0 %v5528
        %6869 = vmatpush1.bf16.msra.mxu0 %v5527
        %6870 = vmatprep.subr.bf16.mxu0 %v5544
        %6871 = vmatpush1.bf16.msra.mxu0 %v5543
        %6872 = vmatprep.subr.bf16.mxu0 %v5560
        %6873 = vmatpush1.bf16.msra.mxu0 %v5559
        %6874 = vmatprep.subr.bf16.mxu0 %v5576
        %6875 = vmatpush1.bf16.msra.mxu0 %v5575
        %6876 = vmatprep.subr.bf16.mxu0 %v5592
        %6877 = vmatpush1.bf16.msra.mxu0 %v5591
        %6878 = vmatprep.subr.bf16.mxu0 %v5608
        %6879 = vmatpush1.bf16.msra.mxu0 %v5607
        %6880 = vmatprep.subr.bf16.mxu0 %v5624
        %6881 = vmatpush1.bf16.msra.mxu0 %v5623
        %6882 = vmatprep.subr.bf16.mxu0 %v5640
        %6883 = vmatpush1.bf16.msra.mxu0 %v5639
        %6884 = vmatprep.subr.bf16.mxu0 %v5656
        %6885 = vmatpush1.bf16.msra.mxu0 %v5655
        %6886 = vmatprep.subr.bf16.mxu0 %v5672
        %6887 = vmatpush1.bf16.msra.mxu0 %v5671
        %6888 = vmatprep.subr.bf16.mxu0 %v5688
        %6889 = vmatpush1.bf16.msra.mxu0 %v5687
        %6890 = vmatprep.subr.bf16.mxu0 %v5704
        %6891 = vmatpush1.bf16.msra.mxu0 %v5703
        %6892 = vmatprep.mubr.f32.mxu0 %v598
        %6893 = vmatmul.mubr.f32.gmra.mrb[0].mxu0 %v597
        %v6894 = vpop.f32.mrb[0].mxu0
        %v6895 = vadd.f32 %v6856, %v6894
        %v6896 = vpop.f32.mrb[0].mxu0
        %v6897 = vadd.f32 %v6858, %v6896
        %6898 = vdwg.mxu0
        %6899 = vmatprep.subr.bf16.mxu0 %v4698
        %6900 = vmatpush1.bf16.msra.mxu0 %v4697
        %6901 = vmatprep.subr.bf16.mxu0 %v4714
        %6902 = vmatpush1.bf16.msra.mxu0 %v4713
        %6903 = vmatprep.subr.bf16.mxu0 %v4730
        %6904 = vmatpush1.bf16.msra.mxu0 %v4729
        %6905 = vmatprep.subr.bf16.mxu0 %v4746
        %6906 = vmatpush1.bf16.msra.mxu0 %v4745
        %6907 = vmatprep.subr.bf16.mxu0 %v4762
        %6908 = vmatpush1.bf16.msra.mxu0 %v4761
        %6909 = vmatprep.subr.bf16.mxu0 %v4778
        %6910 = vmatpush1.bf16.msra.mxu0 %v4777
        %6911 = vmatprep.subr.bf16.mxu0 %v4794
        %6912 = vmatpush1.bf16.msra.mxu0 %v4793
        %6913 = vmatprep.subr.bf16.mxu0 %v4810
        %6914 = vmatpush1.bf16.msra.mxu0 %v4809
        %6915 = vmatprep.subr.bf16.mxu0 %v4826
        %6916 = vmatpush1.bf16.msra.mxu0 %v4825
        %6917 = vmatprep.subr.bf16.mxu0 %v4842
        %6918 = vmatpush1.bf16.msra.mxu0 %v4841
        %6919 = vmatprep.subr.bf16.mxu0 %v4858
        %6920 = vmatpush1.bf16.msra.mxu0 %v4857
        %6921 = vmatprep.subr.bf16.mxu0 %v4874
        %6922 = vmatpush1.bf16.msra.mxu0 %v4873
        %6923 = vmatprep.subr.bf16.mxu0 %v4890
        %6924 = vmatpush1.bf16.msra.mxu0 %v4889
        %6925 = vmatprep.subr.bf16.mxu0 %v4906
        %6926 = vmatpush1.bf16.msra.mxu0 %v4905
        %6927 = vmatprep.subr.bf16.mxu0 %v4922
        %6928 = vmatpush1.bf16.msra.mxu0 %v4921
        %6929 = vmatprep.subr.bf16.mxu0 %v4938
        %6930 = vmatpush1.bf16.msra.mxu0 %v4937
        %6931 = vmatprep.mubr.f32.mxu0 %v592
        %6932 = vmatmul.mubr.f32.gmra.mrb[0].mxu0 %v591
        %v6933 = vpop.f32.mrb[0].mxu0
        %v6934 = vadd.f32 0.0, %v6933
        %v6935 = vpop.f32.mrb[0].mxu0
        %v6936 = vadd.f32 0.0, %v6935
        %6937 = vdwg.mxu0
        %6938 = vmatprep.subr.bf16.mxu0 %v4954
        %6939 = vmatpush1.bf16.msra.mxu0 %v4953
        %6940 = vmatprep.subr.bf16.mxu0 %v4970
        %6941 = vmatpush1.bf16.msra.mxu0 %v4969
        %6942 = vmatprep.subr.bf16.mxu0 %v4986
        %6943 = vmatpush1.bf16.msra.mxu0 %v4985
        %6944 = vmatprep.subr.bf16.mxu0 %v5002
        %6945 = vmatpush1.bf16.msra.mxu0 %v5001
        %6946 = vmatprep.subr.bf16.mxu0 %v5018
        %6947 = vmatpush1.bf16.msra.mxu0 %v5017
        %6948 = vmatprep.subr.bf16.mxu0 %v5034
        %6949 = vmatpush1.bf16.msra.mxu0 %v5033
        %6950 = vmatprep.subr.bf16.mxu0 %v5050
        %6951 = vmatpush1.bf16.msra.mxu0 %v5049
        %6952 = vmatprep.subr.bf16.mxu0 %v5066
        %6953 = vmatpush1.bf16.msra.mxu0 %v5065
        %6954 = vmatprep.subr.bf16.mxu0 %v5082
        %6955 = vmatpush1.bf16.msra.mxu0 %v5081
        %6956 = vmatprep.subr.bf16.mxu0 %v5098
        %6957 = vmatpush1.bf16.msra.mxu0 %v5097
        %6958 = vmatprep.subr.bf16.mxu0 %v5114
        %6959 = vmatpush1.bf16.msra.mxu0 %v5113
        %6960 = vmatprep.subr.bf16.mxu0 %v5130
        %6961 = vmatpush1.bf16.msra.mxu0 %v5129
        %6962 = vmatprep.subr.bf16.mxu0 %v5146
        %6963 = vmatpush1.bf16.msra.mxu0 %v5145
        %6964 = vmatprep.subr.bf16.mxu0 %v5162
        %6965 = vmatpush1.bf16.msra.mxu0 %v5161
        %6966 = vmatprep.subr.bf16.mxu0 %v5178
        %6967 = vmatpush1.bf16.msra.mxu0 %v5177
        %6968 = vmatprep.subr.bf16.mxu0 %v5194
        %6969 = vmatpush1.bf16.msra.mxu0 %v5193
        %6970 = vmatprep.mubr.f32.mxu0 %v594
        %6971 = vmatmul.mubr.f32.gmra.mrb[0].mxu0 %v593
        %v6972 = vpop.f32.mrb[0].mxu0
        %v6973 = vadd.f32 %v6934, %v6972
        %v6974 = vpop.f32.mrb[0].mxu0
        %v6975 = vadd.f32 %v6936, %v6974
        %6976 = vdwg.mxu0
        %6977 = vmatprep.subr.bf16.mxu0 %v5210
        %6978 = vmatpush1.bf16.msra.mxu0 %v5209
        %6979 = vmatprep.subr.bf16.mxu0 %v5226
        %6980 = vmatpush1.bf16.msra.mxu0 %v5225
        %6981 = vmatprep.subr.bf16.mxu0 %v5242
        %6982 = vmatpush1.bf16.msra.mxu0 %v5241
        %6983 = vmatprep.subr.bf16.mxu0 %v5258
        %6984 = vmatpush1.bf16.msra.mxu0 %v5257
        %6985 = vmatprep.subr.bf16.mxu0 %v5274
        %6986 = vmatpush1.bf16.msra.mxu0 %v5273
        %6987 = vmatprep.subr.bf16.mxu0 %v5290
        %6988 = vmatpush1.bf16.msra.mxu0 %v5289
        %6989 = vmatprep.subr.bf16.mxu0 %v5306
        %6990 = vmatpush1.bf16.msra.mxu0 %v5305
        %6991 = vmatprep.subr.bf16.mxu0 %v5322
        %6992 = vmatpush1.bf16.msra.mxu0 %v5321
        %6993 = vmatprep.subr.bf16.mxu0 %v5338
        %6994 = vmatpush1.bf16.msra.mxu0 %v5337
        %6995 = vmatprep.subr.bf16.mxu0 %v5354
        %6996 = vmatpush1.bf16.msra.mxu0 %v5353
        %6997 = vmatprep.subr.bf16.mxu0 %v5370
        %6998 = vmatpush1.bf16.msra.mxu0 %v5369
        %6999 = vmatprep.subr.bf16.mxu0 %v5386
        %7000 = vmatpush1.bf16.msra.mxu0 %v5385
        %7001 = vmatprep.subr.bf16.mxu0 %v5402
        %7002 = vmatpush1.bf16.msra.mxu0 %v5401
        %7003 = vmatprep.subr.bf16.mxu0 %v5418
        %7004 = vmatpush1.bf16.msra.mxu0 %v5417
        %7005 = vmatprep.subr.bf16.mxu0 %v5434
        %7006 = vmatpush1.bf16.msra.mxu0 %v5433
        %7007 = vmatprep.subr.bf16.mxu0 %v5450
        %7008 = vmatpush1.bf16.msra.mxu0 %v5449
        %7009 = vmatprep.mubr.f32.mxu0 %v596
        %7010 = vmatmul.mubr.f32.gmra.mrb[0].mxu0 %v595
        %v7011 = vpop.f32.mrb[0].mxu0
        %v7012 = vadd.f32 %v6973, %v7011
        %v7013 = vpop.f32.mrb[0].mxu0
        %v7014 = vadd.f32 %v6975, %v7013
        %7015 = vdwg.mxu0
        %7016 = vmatprep.subr.bf16.mxu0 %v5466
        %7017 = vmatpush1.bf16.msra.mxu0 %v5465
        %7018 = vmatprep.subr.bf16.mxu0 %v5482
        %7019 = vmatpush1.bf16.msra.mxu0 %v5481
        %7020 = vmatprep.subr.bf16.mxu0 %v5498
        %7021 = vmatpush1.bf16.msra.mxu0 %v5497
        %7022 = vmatprep.subr.bf16.mxu0 %v5514
        %7023 = vmatpush1.bf16.msra.mxu0 %v5513
        %7024 = vmatprep.subr.bf16.mxu0 %v5530
        %7025 = vmatpush1.bf16.msra.mxu0 %v5529
        %7026 = vmatprep.subr.bf16.mxu0 %v5546
        %7027 = vmatpush1.bf16.msra.mxu0 %v5545
        %7028 = vmatprep.subr.bf16.mxu0 %v5562
        %7029 = vmatpush1.bf16.msra.mxu0 %v5561
        %7030 = vmatprep.subr.bf16.mxu0 %v5578
        %7031 = vmatpush1.bf16.msra.mxu0 %v5577
        %7032 = vmatprep.subr.bf16.mxu0 %v5594
        %7033 = vmatpush1.bf16.msra.mxu0 %v5593
        %7034 = vmatprep.subr.bf16.mxu0 %v5610
        %7035 = vmatpush1.bf16.msra.mxu0 %v5609
        %7036 = vmatprep.subr.bf16.mxu0 %v5626
        %7037 = vmatpush1.bf16.msra.mxu0 %v5625
        %7038 = vmatprep.subr.bf16.mxu0 %v5642
        %7039 = vmatpush1.bf16.msra.mxu0 %v5641
        %7040 = vmatprep.subr.bf16.mxu0 %v5658
        %7041 = vmatpush1.bf16.msra.mxu0 %v5657
        %7042 = vmatprep.subr.bf16.mxu0 %v5674
        %7043 = vmatpush1.bf16.msra.mxu0 %v5673
        %7044 = vmatprep.subr.bf16.mxu0 %v5690
        %7045 = vmatpush1.bf16.msra.mxu0 %v5689
        %7046 = vmatprep.subr.bf16.mxu0 %v5706
        %7047 = vmatpush1.bf16.msra.mxu0 %v5705
        %7048 = vmatprep.mubr.f32.mxu0 %v598
        %7049 = vmatmul.mubr.f32.gmra.mrb[0].mxu0 %v597
        %v7050 = vpop.f32.mrb[0].mxu0
        %v7051 = vadd.f32 %v7012, %v7050
        %v7052 = vpop.f32.mrb[0].mxu0
        %v7053 = vadd.f32 %v7014, %v7052
        %7054 = vdwg.mxu0
        %7055 = vmatprep.subr.bf16.mxu0 %v4700
        %7056 = vmatpush1.bf16.msra.mxu0 %v4699
        %7057 = vmatprep.subr.bf16.mxu0 %v4716
        %7058 = vmatpush1.bf16.msra.mxu0 %v4715
        %7059 = vmatprep.subr.bf16.mxu0 %v4732
        %7060 = vmatpush1.bf16.msra.mxu0 %v4731
        %7061 = vmatprep.subr.bf16.mxu0 %v4748
        %7062 = vmatpush1.bf16.msra.mxu0 %v4747
        %7063 = vmatprep.subr.bf16.mxu0 %v4764
        %7064 = vmatpush1.bf16.msra.mxu0 %v4763
        %7065 = vmatprep.subr.bf16.mxu0 %v4780
        %7066 = vmatpush1.bf16.msra.mxu0 %v4779
        %7067 = vmatprep.subr.bf16.mxu0 %v4796
        %7068 = vmatpush1.bf16.msra.mxu0 %v4795
        %7069 = vmatprep.subr.bf16.mxu0 %v4812
        %7070 = vmatpush1.bf16.msra.mxu0 %v4811
        %7071 = vmatprep.subr.bf16.mxu0 %v4828
        %7072 = vmatpush1.bf16.msra.mxu0 %v4827
        %7073 = vmatprep.subr.bf16.mxu0 %v4844
        %7074 = vmatpush1.bf16.msra.mxu0 %v4843
        %7075 = vmatprep.subr.bf16.mxu0 %v4860
        %7076 = vmatpush1.bf16.msra.mxu0 %v4859
        %7077 = vmatprep.subr.bf16.mxu0 %v4876
        %7078 = vmatpush1.bf16.msra.mxu0 %v4875
        %7079 = vmatprep.subr.bf16.mxu0 %v4892
        %7080 = vmatpush1.bf16.msra.mxu0 %v4891
        %7081 = vmatprep.subr.bf16.mxu0 %v4908
        %7082 = vmatpush1.bf16.msra.mxu0 %v4907
        %7083 = vmatprep.subr.bf16.mxu0 %v4924
        %7084 = vmatpush1.bf16.msra.mxu0 %v4923
        %7085 = vmatprep.subr.bf16.mxu0 %v4940
        %7086 = vmatpush1.bf16.msra.mxu0 %v4939
        %7087 = vmatprep.mubr.f32.mxu0 %v592
        %7088 = vmatmul.mubr.f32.gmra.mrb[0].mxu0 %v591
        %v7089 = vpop.f32.mrb[0].mxu0
        %v7090 = vadd.f32 0.0, %v7089
        %v7091 = vpop.f32.mrb[0].mxu0
        %v7092 = vadd.f32 0.0, %v7091
        %7093 = vdwg.mxu0
        %7094 = vmatprep.subr.bf16.mxu0 %v4956
        %7095 = vmatpush1.bf16.msra.mxu0 %v4955
        %7096 = vmatprep.subr.bf16.mxu0 %v4972
        %7097 = vmatpush1.bf16.msra.mxu0 %v4971
        %7098 = vmatprep.subr.bf16.mxu0 %v4988
        %7099 = vmatpush1.bf16.msra.mxu0 %v4987
        %7100 = vmatprep.subr.bf16.mxu0 %v5004
        %7101 = vmatpush1.bf16.msra.mxu0 %v5003
        %7102 = vmatprep.subr.bf16.mxu0 %v5020
        %7103 = vmatpush1.bf16.msra.mxu0 %v5019
        %7104 = vmatprep.subr.bf16.mxu0 %v5036
        %7105 = vmatpush1.bf16.msra.mxu0 %v5035
        %7106 = vmatprep.subr.bf16.mxu0 %v5052
        %7107 = vmatpush1.bf16.msra.mxu0 %v5051
        %7108 = vmatprep.subr.bf16.mxu0 %v5068
        %7109 = vmatpush1.bf16.msra.mxu0 %v5067
        %7110 = vmatprep.subr.bf16.mxu0 %v5084
        %7111 = vmatpush1.bf16.msra.mxu0 %v5083
        %7112 = vmatprep.subr.bf16.mxu0 %v5100
        %7113 = vmatpush1.bf16.msra.mxu0 %v5099
        %7114 = vmatprep.subr.bf16.mxu0 %v5116
        %7115 = vmatpush1.bf16.msra.mxu0 %v5115
        %7116 = vmatprep.subr.bf16.mxu0 %v5132
        %7117 = vmatpush1.bf16.msra.mxu0 %v5131
        %7118 = vmatprep.subr.bf16.mxu0 %v5148
        %7119 = vmatpush1.bf16.msra.mxu0 %v5147
        %7120 = vmatprep.subr.bf16.mxu0 %v5164
        %7121 = vmatpush1.bf16.msra.mxu0 %v5163
        %7122 = vmatprep.subr.bf16.mxu0 %v5180
        %7123 = vmatpush1.bf16.msra.mxu0 %v5179
        %7124 = vmatprep.subr.bf16.mxu0 %v5196
        %7125 = vmatpush1.bf16.msra.mxu0 %v5195
        %7126 = vmatprep.mubr.f32.mxu0 %v594
        %7127 = vmatmul.mubr.f32.gmra.mrb[0].mxu0 %v593
        %v7128 = vpop.f32.mrb[0].mxu0
        %v7129 = vadd.f32 %v7090, %v7128
        %v7130 = vpop.f32.mrb[0].mxu0
        %v7131 = vadd.f32 %v7092, %v7130
        %7132 = vdwg.mxu0
        %7133 = vmatprep.subr.bf16.mxu0 %v5212
        %7134 = vmatpush1.bf16.msra.mxu0 %v5211
        %7135 = vmatprep.subr.bf16.mxu0 %v5228
        %7136 = vmatpush1.bf16.msra.mxu0 %v5227
        %7137 = vmatprep.subr.bf16.mxu0 %v5244
        %7138 = vmatpush1.bf16.msra.mxu0 %v5243
        %7139 = vmatprep.subr.bf16.mxu0 %v5260
        %7140 = vmatpush1.bf16.msra.mxu0 %v5259
        %7141 = vmatprep.subr.bf16.mxu0 %v5276
        %7142 = vmatpush1.bf16.msra.mxu0 %v5275
        %7143 = vmatprep.subr.bf16.mxu0 %v5292
        %7144 = vmatpush1.bf16.msra.mxu0 %v5291
        %7145 = vmatprep.subr.bf16.mxu0 %v5308
        %7146 = vmatpush1.bf16.msra.mxu0 %v5307
        %7147 = vmatprep.subr.bf16.mxu0 %v5324
        %7148 = vmatpush1.bf16.msra.mxu0 %v5323
        %7149 = vmatprep.subr.bf16.mxu0 %v5340
        %7150 = vmatpush1.bf16.msra.mxu0 %v5339
        %7151 = vmatprep.subr.bf16.mxu0 %v5356
        %7152 = vmatpush1.bf16.msra.mxu0 %v5355
        %7153 = vmatprep.subr.bf16.mxu0 %v5372
        %7154 = vmatpush1.bf16.msra.mxu0 %v5371
        %7155 = vmatprep.subr.bf16.mxu0 %v5388
        %7156 = vmatpush1.bf16.msra.mxu0 %v5387
        %7157 = vmatprep.subr.bf16.mxu0 %v5404
        %7158 = vmatpush1.bf16.msra.mxu0 %v5403
        %7159 = vmatprep.subr.bf16.mxu0 %v5420
        %7160 = vmatpush1.bf16.msra.mxu0 %v5419
        %7161 = vmatprep.subr.bf16.mxu0 %v5436
        %7162 = vmatpush1.bf16.msra.mxu0 %v5435
        %7163 = vmatprep.subr.bf16.mxu0 %v5452
        %7164 = vmatpush1.bf16.msra.mxu0 %v5451
        %7165 = vmatprep.mubr.f32.mxu0 %v596
        %7166 = vmatmul.mubr.f32.gmra.mrb[0].mxu0 %v595
        %v7167 = vpop.f32.mrb[0].mxu0
        %v7168 = vadd.f32 %v7129, %v7167
        %v7169 = vpop.f32.mrb[0].mxu0
        %v7170 = vadd.f32 %v7131, %v7169
        %7171 = vdwg.mxu0
        %7172 = vmatprep.subr.bf16.mxu0 %v5468
        %7173 = vmatpush1.bf16.msra.mxu0 %v5467
        %7174 = vmatprep.subr.bf16.mxu0 %v5484
        %7175 = vmatpush1.bf16.msra.mxu0 %v5483
        %7176 = vmatprep.subr.bf16.mxu0 %v5500
        %7177 = vmatpush1.bf16.msra.mxu0 %v5499
        %7178 = vmatprep.subr.bf16.mxu0 %v5516
        %7179 = vmatpush1.bf16.msra.mxu0 %v5515
        %7180 = vmatprep.subr.bf16.mxu0 %v5532
        %7181 = vmatpush1.bf16.msra.mxu0 %v5531
        %7182 = vmatprep.subr.bf16.mxu0 %v5548
        %7183 = vmatpush1.bf16.msra.mxu0 %v5547
        %7184 = vmatprep.subr.bf16.mxu0 %v5564
        %7185 = vmatpush1.bf16.msra.mxu0 %v5563
        %7186 = vmatprep.subr.bf16.mxu0 %v5580
        %7187 = vmatpush1.bf16.msra.mxu0 %v5579
        %7188 = vmatprep.subr.bf16.mxu0 %v5596
        %7189 = vmatpush1.bf16.msra.mxu0 %v5595
        %7190 = vmatprep.subr.bf16.mxu0 %v5612
        %7191 = vmatpush1.bf16.msra.mxu0 %v5611
        %7192 = vmatprep.subr.bf16.mxu0 %v5628
        %7193 = vmatpush1.bf16.msra.mxu0 %v5627
        %7194 = vmatprep.subr.bf16.mxu0 %v5644
        %7195 = vmatpush1.bf16.msra.mxu0 %v5643
        %7196 = vmatprep.subr.bf16.mxu0 %v5660
        %7197 = vmatpush1.bf16.msra.mxu0 %v5659
        %7198 = vmatprep.subr.bf16.mxu0 %v5676
        %7199 = vmatpush1.bf16.msra.mxu0 %v5675
        %7200 = vmatprep.subr.bf16.mxu0 %v5692
        %7201 = vmatpush1.bf16.msra.mxu0 %v5691
        %7202 = vmatprep.subr.bf16.mxu0 %v5708
        %7203 = vmatpush1.bf16.msra.mxu0 %v5707
        %7204 = vmatprep.mubr.f32.mxu0 %v598
        %7205 = vmatmul.mubr.f32.gmra.mrb[0].mxu0 %v597
        %v7206 = vpop.f32.mrb[0].mxu0
        %v7207 = vadd.f32 %v7168, %v7206
        %v7208 = vpop.f32.mrb[0].mxu0
        %v7209 = vadd.f32 %v7170, %v7208
        %7210 = vdwg.mxu0
        %7211 = vmatprep.subr.bf16.mxu0 %v4702
        %7212 = vmatpush1.bf16.msra.mxu0 %v4701
        %7213 = vmatprep.subr.bf16.mxu0 %v4718
        %7214 = vmatpush1.bf16.msra.mxu0 %v4717
        %7215 = vmatprep.subr.bf16.mxu0 %v4734
        %7216 = vmatpush1.bf16.msra.mxu0 %v4733
        %7217 = vmatprep.subr.bf16.mxu0 %v4750
        %7218 = vmatpush1.bf16.msra.mxu0 %v4749
        %7219 = vmatprep.subr.bf16.mxu0 %v4766
        %7220 = vmatpush1.bf16.msra.mxu0 %v4765
        %7221 = vmatprep.subr.bf16.mxu0 %v4782
        %7222 = vmatpush1.bf16.msra.mxu0 %v4781
        %7223 = vmatprep.subr.bf16.mxu0 %v4798
        %7224 = vmatpush1.bf16.msra.mxu0 %v4797
        %7225 = vmatprep.subr.bf16.mxu0 %v4814
        %7226 = vmatpush1.bf16.msra.mxu0 %v4813
        %7227 = vmatprep.subr.bf16.mxu0 %v4830
        %7228 = vmatpush1.bf16.msra.mxu0 %v4829
        %7229 = vmatprep.subr.bf16.mxu0 %v4846
        %7230 = vmatpush1.bf16.msra.mxu0 %v4845
        %7231 = vmatprep.subr.bf16.mxu0 %v4862
        %7232 = vmatpush1.bf16.msra.mxu0 %v4861
        %7233 = vmatprep.subr.bf16.mxu0 %v4878
        %7234 = vmatpush1.bf16.msra.mxu0 %v4877
        %7235 = vmatprep.subr.bf16.mxu0 %v4894
        %7236 = vmatpush1.bf16.msra.mxu0 %v4893
        %7237 = vmatprep.subr.bf16.mxu0 %v4910
        %7238 = vmatpush1.bf16.msra.mxu0 %v4909
        %7239 = vmatprep.subr.bf16.mxu0 %v4926
        %7240 = vmatpush1.bf16.msra.mxu0 %v4925
        %7241 = vmatprep.subr.bf16.mxu0 %v4942
        %7242 = vmatpush1.bf16.msra.mxu0 %v4941
        %7243 = vmatprep.mubr.f32.mxu0 %v592
        %7244 = vmatmul.mubr.f32.gmra.mrb[0].mxu0 %v591
        %v7245 = vpop.f32.mrb[0].mxu0
        %v7246 = vadd.f32 0.0, %v7245
        %v7247 = vpop.f32.mrb[0].mxu0
        %v7248 = vadd.f32 0.0, %v7247
        %7249 = vdwg.mxu0
        %7250 = vmatprep.subr.bf16.mxu0 %v4958
        %7251 = vmatpush1.bf16.msra.mxu0 %v4957
        %7252 = vmatprep.subr.bf16.mxu0 %v4974
        %7253 = vmatpush1.bf16.msra.mxu0 %v4973
        %7254 = vmatprep.subr.bf16.mxu0 %v4990
        %7255 = vmatpush1.bf16.msra.mxu0 %v4989
        %7256 = vmatprep.subr.bf16.mxu0 %v5006
        %7257 = vmatpush1.bf16.msra.mxu0 %v5005
        %7258 = vmatprep.subr.bf16.mxu0 %v5022
        %7259 = vmatpush1.bf16.msra.mxu0 %v5021
        %7260 = vmatprep.subr.bf16.mxu0 %v5038
        %7261 = vmatpush1.bf16.msra.mxu0 %v5037
        %7262 = vmatprep.subr.bf16.mxu0 %v5054
        %7263 = vmatpush1.bf16.msra.mxu0 %v5053
        %7264 = vmatprep.subr.bf16.mxu0 %v5070
        %7265 = vmatpush1.bf16.msra.mxu0 %v5069
        %7266 = vmatprep.subr.bf16.mxu0 %v5086
        %7267 = vmatpush1.bf16.msra.mxu0 %v5085
        %7268 = vmatprep.subr.bf16.mxu0 %v5102
        %7269 = vmatpush1.bf16.msra.mxu0 %v5101
        %7270 = vmatprep.subr.bf16.mxu0 %v5118
        %7271 = vmatpush1.bf16.msra.mxu0 %v5117
        %7272 = vmatprep.subr.bf16.mxu0 %v5134
        %7273 = vmatpush1.bf16.msra.mxu0 %v5133
        %7274 = vmatprep.subr.bf16.mxu0 %v5150
        %7275 = vmatpush1.bf16.msra.mxu0 %v5149
        %7276 = vmatprep.subr.bf16.mxu0 %v5166
        %7277 = vmatpush1.bf16.msra.mxu0 %v5165
        %7278 = vmatprep.subr.bf16.mxu0 %v5182
        %7279 = vmatpush1.bf16.msra.mxu0 %v5181
        %7280 = vmatprep.subr.bf16.mxu0 %v5198
        %7281 = vmatpush1.bf16.msra.mxu0 %v5197
        %7282 = vmatprep.mubr.f32.mxu0 %v594
        %7283 = vmatmul.mubr.f32.gmra.mrb[0].mxu0 %v593
        %v7284 = vpop.f32.mrb[0].mxu0
        %v7285 = vadd.f32 %v7246, %v7284
        %v7286 = vpop.f32.mrb[0].mxu0
        %v7287 = vadd.f32 %v7248, %v7286
        %7288 = vdwg.mxu0
        %7289 = vmatprep.subr.bf16.mxu0 %v5214
        %7290 = vmatpush1.bf16.msra.mxu0 %v5213
        %7291 = vmatprep.subr.bf16.mxu0 %v5230
        %7292 = vmatpush1.bf16.msra.mxu0 %v5229
        %7293 = vmatprep.subr.bf16.mxu0 %v5246
        %7294 = vmatpush1.bf16.msra.mxu0 %v5245
        %7295 = vmatprep.subr.bf16.mxu0 %v5262
        %7296 = vmatpush1.bf16.msra.mxu0 %v5261
        %7297 = vmatprep.subr.bf16.mxu0 %v5278
        %7298 = vmatpush1.bf16.msra.mxu0 %v5277
        %7299 = vmatprep.subr.bf16.mxu0 %v5294
        %7300 = vmatpush1.bf16.msra.mxu0 %v5293
        %7301 = vmatprep.subr.bf16.mxu0 %v5310
        %7302 = vmatpush1.bf16.msra.mxu0 %v5309
        %7303 = vmatprep.subr.bf16.mxu0 %v5326
        %7304 = vmatpush1.bf16.msra.mxu0 %v5325
        %7305 = vmatprep.subr.bf16.mxu0 %v5342
        %7306 = vmatpush1.bf16.msra.mxu0 %v5341
        %7307 = vmatprep.subr.bf16.mxu0 %v5358
        %7308 = vmatpush1.bf16.msra.mxu0 %v5357
        %7309 = vmatprep.subr.bf16.mxu0 %v5374
        %7310 = vmatpush1.bf16.msra.mxu0 %v5373
        %7311 = vmatprep.subr.bf16.mxu0 %v5390
        %7312 = vmatpush1.bf16.msra.mxu0 %v5389
        %7313 = vmatprep.subr.bf16.mxu0 %v5406
        %7314 = vmatpush1.bf16.msra.mxu0 %v5405
        %7315 = vmatprep.subr.bf16.mxu0 %v5422
        %7316 = vmatpush1.bf16.msra.mxu0 %v5421
        %7317 = vmatprep.subr.bf16.mxu0 %v5438
        %7318 = vmatpush1.bf16.msra.mxu0 %v5437
        %7319 = vmatprep.subr.bf16.mxu0 %v5454
        %7320 = vmatpush1.bf16.msra.mxu0 %v5453
        %7321 = vmatprep.mubr.f32.mxu0 %v596
        %7322 = vmatmul.mubr.f32.gmra.mrb[0].mxu0 %v595
        %v7323 = vpop.f32.mrb[0].mxu0
        %v7324 = vadd.f32 %v7285, %v7323
        %v7325 = vpop.f32.mrb[0].mxu0
        %v7326 = vadd.f32 %v7287, %v7325
        %7327 = vdwg.mxu0
        %7328 = vmatprep.subr.bf16.mxu0 %v5470
        %7329 = vmatpush1.bf16.msra.mxu0 %v5469
        %7330 = vmatprep.subr.bf16.mxu0 %v5486
        %7331 = vmatpush1.bf16.msra.mxu0 %v5485
        %7332 = vmatprep.subr.bf16.mxu0 %v5502
        %7333 = vmatpush1.bf16.msra.mxu0 %v5501
        %7334 = vmatprep.subr.bf16.mxu0 %v5518
        %7335 = vmatpush1.bf16.msra.mxu0 %v5517
        %7336 = vmatprep.subr.bf16.mxu0 %v5534
        %7337 = vmatpush1.bf16.msra.mxu0 %v5533
        %7338 = vmatprep.subr.bf16.mxu0 %v5550
        %7339 = vmatpush1.bf16.msra.mxu0 %v5549
        %7340 = vmatprep.subr.bf16.mxu0 %v5566
        %7341 = vmatpush1.bf16.msra.mxu0 %v5565
        %7342 = vmatprep.subr.bf16.mxu0 %v5582
        %7343 = vmatpush1.bf16.msra.mxu0 %v5581
        %7344 = vmatprep.subr.bf16.mxu0 %v5598
        %7345 = vmatpush1.bf16.msra.mxu0 %v5597
        %7346 = vmatprep.subr.bf16.mxu0 %v5614
        %7347 = vmatpush1.bf16.msra.mxu0 %v5613
        %7348 = vmatprep.subr.bf16.mxu0 %v5630
        %7349 = vmatpush1.bf16.msra.mxu0 %v5629
        %7350 = vmatprep.subr.bf16.mxu0 %v5646
        %7351 = vmatpush1.bf16.msra.mxu0 %v5645
        %7352 = vmatprep.subr.bf16.mxu0 %v5662
        %7353 = vmatpush1.bf16.msra.mxu0 %v5661
        %7354 = vmatprep.subr.bf16.mxu0 %v5678
        %7355 = vmatpush1.bf16.msra.mxu0 %v5677
        %7356 = vmatprep.subr.bf16.mxu0 %v5694
        %7357 = vmatpush1.bf16.msra.mxu0 %v5693
        %7358 = vmatprep.subr.bf16.mxu0 %v5710
        %7359 = vmatpush1.bf16.msra.mxu0 %v5709
        %7360 = vmatprep.mubr.f32.mxu0 %v598
        %7361 = vmatmul.mubr.f32.gmra.mrb[0].mxu0 %v597
        %v7362 = vpop.f32.mrb[0].mxu0
        %v7363 = vadd.f32 %v7324, %v7362
        %v7364 = vpop.f32.mrb[0].mxu0
        %v7365 = vadd.f32 %v7326, %v7364
        %7366 = vdwg.mxu0
        %7367 = vmatprep.subr.bf16.mxu0 %v4704
        %7368 = vmatpush1.bf16.msra.mxu0 %v4703
        %7369 = vmatprep.subr.bf16.mxu0 %v4720
        %7370 = vmatpush1.bf16.msra.mxu0 %v4719
        %7371 = vmatprep.subr.bf16.mxu0 %v4736
        %7372 = vmatpush1.bf16.msra.mxu0 %v4735
        %7373 = vmatprep.subr.bf16.mxu0 %v4752
        %7374 = vmatpush1.bf16.msra.mxu0 %v4751
        %7375 = vmatprep.subr.bf16.mxu0 %v4768
        %7376 = vmatpush1.bf16.msra.mxu0 %v4767
        %7377 = vmatprep.subr.bf16.mxu0 %v4784
        %7378 = vmatpush1.bf16.msra.mxu0 %v4783
        %7379 = vmatprep.subr.bf16.mxu0 %v4800
        %7380 = vmatpush1.bf16.msra.mxu0 %v4799
        %7381 = vmatprep.subr.bf16.mxu0 %v4816
        %7382 = vmatpush1.bf16.msra.mxu0 %v4815
        %7383 = vmatprep.subr.bf16.mxu0 %v4832
        %7384 = vmatpush1.bf16.msra.mxu0 %v4831
        %7385 = vmatprep.subr.bf16.mxu0 %v4848
        %7386 = vmatpush1.bf16.msra.mxu0 %v4847
        %7387 = vmatprep.subr.bf16.mxu0 %v4864
        %7388 = vmatpush1.bf16.msra.mxu0 %v4863
        %7389 = vmatprep.subr.bf16.mxu0 %v4880
        %7390 = vmatpush1.bf16.msra.mxu0 %v4879
        %7391 = vmatprep.subr.bf16.mxu0 %v4896
        %7392 = vmatpush1.bf16.msra.mxu0 %v4895
        %7393 = vmatprep.subr.bf16.mxu0 %v4912
        %7394 = vmatpush1.bf16.msra.mxu0 %v4911
        %7395 = vmatprep.subr.bf16.mxu0 %v4928
        %7396 = vmatpush1.bf16.msra.mxu0 %v4927
        %7397 = vmatprep.subr.bf16.mxu0 %v4944
        %7398 = vmatpush1.bf16.msra.mxu0 %v4943
        %7399 = vmatprep.mubr.f32.mxu0 %v592
        %7400 = vmatmul.mubr.f32.gmra.mrb[0].mxu0 %v591
        %v7401 = vpop.f32.mrb[0].mxu0
        %v7402 = vadd.f32 0.0, %v7401
        %v7403 = vpop.f32.mrb[0].mxu0
        %v7404 = vadd.f32 0.0, %v7403
        %7405 = vdwg.mxu0
        %7406 = vmatprep.subr.bf16.mxu0 %v4960
        %7407 = vmatpush1.bf16.msra.mxu0 %v4959
        %7408 = vmatprep.subr.bf16.mxu0 %v4976
        %7409 = vmatpush1.bf16.msra.mxu0 %v4975
        %7410 = vmatprep.subr.bf16.mxu0 %v4992
        %7411 = vmatpush1.bf16.msra.mxu0 %v4991
        %7412 = vmatprep.subr.bf16.mxu0 %v5008
        %7413 = vmatpush1.bf16.msra.mxu0 %v5007
        %7414 = vmatprep.subr.bf16.mxu0 %v5024
        %7415 = vmatpush1.bf16.msra.mxu0 %v5023
        %7416 = vmatprep.subr.bf16.mxu0 %v5040
        %7417 = vmatpush1.bf16.msra.mxu0 %v5039
        %7418 = vmatprep.subr.bf16.mxu0 %v5056
        %7419 = vmatpush1.bf16.msra.mxu0 %v5055
        %7420 = vmatprep.subr.bf16.mxu0 %v5072
        %7421 = vmatpush1.bf16.msra.mxu0 %v5071
        %7422 = vmatprep.subr.bf16.mxu0 %v5088
        %7423 = vmatpush1.bf16.msra.mxu0 %v5087
        %7424 = vmatprep.subr.bf16.mxu0 %v5104
        %7425 = vmatpush1.bf16.msra.mxu0 %v5103
        %7426 = vmatprep.subr.bf16.mxu0 %v5120
        %7427 = vmatpush1.bf16.msra.mxu0 %v5119
        %7428 = vmatprep.subr.bf16.mxu0 %v5136
        %7429 = vmatpush1.bf16.msra.mxu0 %v5135
        %7430 = vmatprep.subr.bf16.mxu0 %v5152
        %7431 = vmatpush1.bf16.msra.mxu0 %v5151
        %7432 = vmatprep.subr.bf16.mxu0 %v5168
        %7433 = vmatpush1.bf16.msra.mxu0 %v5167
        %7434 = vmatprep.subr.bf16.mxu0 %v5184
        %7435 = vmatpush1.bf16.msra.mxu0 %v5183
        %7436 = vmatprep.subr.bf16.mxu0 %v5200
        %7437 = vmatpush1.bf16.msra.mxu0 %v5199
        %7438 = vmatprep.mubr.f32.mxu0 %v594
        %7439 = vmatmul.mubr.f32.gmra.mrb[0].mxu0 %v593
        %v7440 = vpop.f32.mrb[0].mxu0
        %v7441 = vadd.f32 %v7402, %v7440
        %v7442 = vpop.f32.mrb[0].mxu0
        %v7443 = vadd.f32 %v7404, %v7442
        %7444 = vdwg.mxu0
        %7445 = vmatprep.subr.bf16.mxu0 %v5216
        %7446 = vmatpush1.bf16.msra.mxu0 %v5215
        %7447 = vmatprep.subr.bf16.mxu0 %v5232
        %7448 = vmatpush1.bf16.msra.mxu0 %v5231
        %7449 = vmatprep.subr.bf16.mxu0 %v5248
        %7450 = vmatpush1.bf16.msra.mxu0 %v5247
        %7451 = vmatprep.subr.bf16.mxu0 %v5264
        %7452 = vmatpush1.bf16.msra.mxu0 %v5263
        %7453 = vmatprep.subr.bf16.mxu0 %v5280
        %7454 = vmatpush1.bf16.msra.mxu0 %v5279
        %7455 = vmatprep.subr.bf16.mxu0 %v5296
        %7456 = vmatpush1.bf16.msra.mxu0 %v5295
        %7457 = vmatprep.subr.bf16.mxu0 %v5312
        %7458 = vmatpush1.bf16.msra.mxu0 %v5311
        %7459 = vmatprep.subr.bf16.mxu0 %v5328
        %7460 = vmatpush1.bf16.msra.mxu0 %v5327
        %7461 = vmatprep.subr.bf16.mxu0 %v5344
        %7462 = vmatpush1.bf16.msra.mxu0 %v5343
        %7463 = vmatprep.subr.bf16.mxu0 %v5360
        %7464 = vmatpush1.bf16.msra.mxu0 %v5359
        %7465 = vmatprep.subr.bf16.mxu0 %v5376
        %7466 = vmatpush1.bf16.msra.mxu0 %v5375
        %7467 = vmatprep.subr.bf16.mxu0 %v5392
        %7468 = vmatpush1.bf16.msra.mxu0 %v5391
        %7469 = vmatprep.subr.bf16.mxu0 %v5408
        %7470 = vmatpush1.bf16.msra.mxu0 %v5407
        %7471 = vmatprep.subr.bf16.mxu0 %v5424
        %7472 = vmatpush1.bf16.msra.mxu0 %v5423
        %7473 = vmatprep.subr.bf16.mxu0 %v5440
        %7474 = vmatpush1.bf16.msra.mxu0 %v5439
        %7475 = vmatprep.subr.bf16.mxu0 %v5456
        %7476 = vmatpush1.bf16.msra.mxu0 %v5455
        %7477 = vmatprep.mubr.f32.mxu0 %v596
        %7478 = vmatmul.mubr.f32.gmra.mrb[0].mxu0 %v595
        %v7479 = vpop.f32.mrb[0].mxu0
        %v7480 = vadd.f32 %v7441, %v7479
        %v7481 = vpop.f32.mrb[0].mxu0
        %v7482 = vadd.f32 %v7443, %v7481
        %7483 = vdwg.mxu0
        %7484 = vmatprep.subr.bf16.mxu0 %v5472
        %7485 = vmatpush1.bf16.msra.mxu0 %v5471
        %7486 = vmatprep.subr.bf16.mxu0 %v5488
        %7487 = vmatpush1.bf16.msra.mxu0 %v5487
        %7488 = vmatprep.subr.bf16.mxu0 %v5504
        %7489 = vmatpush1.bf16.msra.mxu0 %v5503
        %7490 = vmatprep.subr.bf16.mxu0 %v5520
        %7491 = vmatpush1.bf16.msra.mxu0 %v5519
        %7492 = vmatprep.subr.bf16.mxu0 %v5536
        %7493 = vmatpush1.bf16.msra.mxu0 %v5535
        %7494 = vmatprep.subr.bf16.mxu0 %v5552
        %7495 = vmatpush1.bf16.msra.mxu0 %v5551
        %7496 = vmatprep.subr.bf16.mxu0 %v5568
        %7497 = vmatpush1.bf16.msra.mxu0 %v5567
        %7498 = vmatprep.subr.bf16.mxu0 %v5584
        %7499 = vmatpush1.bf16.msra.mxu0 %v5583
        %7500 = vmatprep.subr.bf16.mxu0 %v5600
        %7501 = vmatpush1.bf16.msra.mxu0 %v5599
        %7502 = vmatprep.subr.bf16.mxu0 %v5616
        %7503 = vmatpush1.bf16.msra.mxu0 %v5615
        %7504 = vmatprep.subr.bf16.mxu0 %v5632
        %7505 = vmatpush1.bf16.msra.mxu0 %v5631
        %7506 = vmatprep.subr.bf16.mxu0 %v5648
        %7507 = vmatpush1.bf16.msra.mxu0 %v5647
        %7508 = vmatprep.subr.bf16.mxu0 %v5664
        %7509 = vmatpush1.bf16.msra.mxu0 %v5663
        %7510 = vmatprep.subr.bf16.mxu0 %v5680
        %7511 = vmatpush1.bf16.msra.mxu0 %v5679
        %7512 = vmatprep.subr.bf16.mxu0 %v5696
        %7513 = vmatpush1.bf16.msra.mxu0 %v5695
        %7514 = vmatprep.subr.bf16.mxu0 %v5712
        %7515 = vmatpush1.bf16.msra.mxu0 %v5711
        %7516 = vmatprep.mubr.f32.mxu0 %v598
        %7517 = vmatmul.mubr.f32.gmra.mrb[0].mxu0 %v597
        %v7518 = vpop.f32.mrb[0].mxu0
        %v7519 = vadd.f32 %v7480, %v7518
        %v7520 = vpop.f32.mrb[0].mxu0
        %v7521 = vadd.f32 %v7482, %v7520
        %7522 = vdwg.mxu0
        %7523 = vmatprep.subr.bf16.mxu0 %v4706
        %7524 = vmatpush1.bf16.msra.mxu0 %v4705
        %7525 = vmatprep.subr.bf16.mxu0 %v4722
        %7526 = vmatpush1.bf16.msra.mxu0 %v4721
        %7527 = vmatprep.subr.bf16.mxu0 %v4738
        %7528 = vmatpush1.bf16.msra.mxu0 %v4737
        %7529 = vmatprep.subr.bf16.mxu0 %v4754
        %7530 = vmatpush1.bf16.msra.mxu0 %v4753
        %7531 = vmatprep.subr.bf16.mxu0 %v4770
        %7532 = vmatpush1.bf16.msra.mxu0 %v4769
        %7533 = vmatprep.subr.bf16.mxu0 %v4786
        %7534 = vmatpush1.bf16.msra.mxu0 %v4785
        %7535 = vmatprep.subr.bf16.mxu0 %v4802
        %7536 = vmatpush1.bf16.msra.mxu0 %v4801
        %7537 = vmatprep.subr.bf16.mxu0 %v4818
        %7538 = vmatpush1.bf16.msra.mxu0 %v4817
        %7539 = vmatprep.subr.bf16.mxu0 %v4834
        %7540 = vmatpush1.bf16.msra.mxu0 %v4833
        %7541 = vmatprep.subr.bf16.mxu0 %v4850
        %7542 = vmatpush1.bf16.msra.mxu0 %v4849
        %7543 = vmatprep.subr.bf16.mxu0 %v4866
        %7544 = vmatpush1.bf16.msra.mxu0 %v4865
        %7545 = vmatprep.subr.bf16.mxu0 %v4882
        %7546 = vmatpush1.bf16.msra.mxu0 %v4881
        %7547 = vmatprep.subr.bf16.mxu0 %v4898
        %7548 = vmatpush1.bf16.msra.mxu0 %v4897
        %7549 = vmatprep.subr.bf16.mxu0 %v4914
        %7550 = vmatpush1.bf16.msra.mxu0 %v4913
        %7551 = vmatprep.subr.bf16.mxu0 %v4930
        %7552 = vmatpush1.bf16.msra.mxu0 %v4929
        %7553 = vmatprep.subr.bf16.mxu0 %v4946
        %7554 = vmatpush1.bf16.msra.mxu0 %v4945
        %7555 = vmatprep.mubr.f32.mxu0 %v592
        %7556 = vmatmul.mubr.f32.gmra.mrb[0].mxu0 %v591
        %v7557 = vpop.f32.mrb[0].mxu0
        %v7558 = vadd.f32 0.0, %v7557
        %v7559 = vpop.f32.mrb[0].mxu0
        %v7560 = vadd.f32 0.0, %v7559
        %7561 = vdwg.mxu0
        %7562 = vmatprep.subr.bf16.mxu0 %v4962
        %7563 = vmatpush1.bf16.msra.mxu0 %v4961
        %7564 = vmatprep.subr.bf16.mxu0 %v4978
        %7565 = vmatpush1.bf16.msra.mxu0 %v4977
        %7566 = vmatprep.subr.bf16.mxu0 %v4994
        %7567 = vmatpush1.bf16.msra.mxu0 %v4993
        %7568 = vmatprep.subr.bf16.mxu0 %v5010
        %7569 = vmatpush1.bf16.msra.mxu0 %v5009
        %7570 = vmatprep.subr.bf16.mxu0 %v5026
        %7571 = vmatpush1.bf16.msra.mxu0 %v5025
        %7572 = vmatprep.subr.bf16.mxu0 %v5042
        %7573 = vmatpush1.bf16.msra.mxu0 %v5041
        %7574 = vmatprep.subr.bf16.mxu0 %v5058
        %7575 = vmatpush1.bf16.msra.mxu0 %v5057
        %7576 = vmatprep.subr.bf16.mxu0 %v5074
        %7577 = vmatpush1.bf16.msra.mxu0 %v5073
        %7578 = vmatprep.subr.bf16.mxu0 %v5090
        %7579 = vmatpush1.bf16.msra.mxu0 %v5089
        %7580 = vmatprep.subr.bf16.mxu0 %v5106
        %7581 = vmatpush1.bf16.msra.mxu0 %v5105
        %7582 = vmatprep.subr.bf16.mxu0 %v5122
        %7583 = vmatpush1.bf16.msra.mxu0 %v5121
        %7584 = vmatprep.subr.bf16.mxu0 %v5138
        %7585 = vmatpush1.bf16.msra.mxu0 %v5137
        %7586 = vmatprep.subr.bf16.mxu0 %v5154
        %7587 = vmatpush1.bf16.msra.mxu0 %v5153
        %7588 = vmatprep.subr.bf16.mxu0 %v5170
        %7589 = vmatpush1.bf16.msra.mxu0 %v5169
        %7590 = vmatprep.subr.bf16.mxu0 %v5186
        %7591 = vmatpush1.bf16.msra.mxu0 %v5185
        %7592 = vmatprep.subr.bf16.mxu0 %v5202
        %7593 = vmatpush1.bf16.msra.mxu0 %v5201
        %7594 = vmatprep.mubr.f32.mxu0 %v594
        %7595 = vmatmul.mubr.f32.gmra.mrb[0].mxu0 %v593
        %v7596 = vpop.f32.mrb[0].mxu0
        %v7597 = vadd.f32 %v7558, %v7596
        %v7598 = vpop.f32.mrb[0].mxu0
        %v7599 = vadd.f32 %v7560, %v7598
        %7600 = vdwg.mxu0
        %7601 = vmatprep.subr.bf16.mxu0 %v5218
        %7602 = vmatpush1.bf16.msra.mxu0 %v5217
        %7603 = vmatprep.subr.bf16.mxu0 %v5234
        %7604 = vmatpush1.bf16.msra.mxu0 %v5233
        %7605 = vmatprep.subr.bf16.mxu0 %v5250
        %7606 = vmatpush1.bf16.msra.mxu0 %v5249
        %7607 = vmatprep.subr.bf16.mxu0 %v5266
        %7608 = vmatpush1.bf16.msra.mxu0 %v5265
        %7609 = vmatprep.subr.bf16.mxu0 %v5282
        %7610 = vmatpush1.bf16.msra.mxu0 %v5281
        %7611 = vmatprep.subr.bf16.mxu0 %v5298
        %7612 = vmatpush1.bf16.msra.mxu0 %v5297
        %7613 = vmatprep.subr.bf16.mxu0 %v5314
        %7614 = vmatpush1.bf16.msra.mxu0 %v5313
        %7615 = vmatprep.subr.bf16.mxu0 %v5330
        %7616 = vmatpush1.bf16.msra.mxu0 %v5329
        %7617 = vmatprep.subr.bf16.mxu0 %v5346
        %7618 = vmatpush1.bf16.msra.mxu0 %v5345
        %7619 = vmatprep.subr.bf16.mxu0 %v5362
        %7620 = vmatpush1.bf16.msra.mxu0 %v5361
        %7621 = vmatprep.subr.bf16.mxu0 %v5378
        %7622 = vmatpush1.bf16.msra.mxu0 %v5377
        %7623 = vmatprep.subr.bf16.mxu0 %v5394
        %7624 = vmatpush1.bf16.msra.mxu0 %v5393
        %7625 = vmatprep.subr.bf16.mxu0 %v5410
        %7626 = vmatpush1.bf16.msra.mxu0 %v5409
        %7627 = vmatprep.subr.bf16.mxu0 %v5426
        %7628 = vmatpush1.bf16.msra.mxu0 %v5425
        %7629 = vmatprep.subr.bf16.mxu0 %v5442
        %7630 = vmatpush1.bf16.msra.mxu0 %v5441
        %7631 = vmatprep.subr.bf16.mxu0 %v5458
        %7632 = vmatpush1.bf16.msra.mxu0 %v5457
        %7633 = vmatprep.mubr.f32.mxu0 %v596
        %7634 = vmatmul.mubr.f32.gmra.mrb[0].mxu0 %v595
        %v7635 = vpop.f32.mrb[0].mxu0
        %v7636 = vadd.f32 %v7597, %v7635
        %v7637 = vpop.f32.mrb[0].mxu0
        %v7638 = vadd.f32 %v7599, %v7637
        %7639 = vdwg.mxu0
        %7640 = vmatprep.subr.bf16.mxu0 %v5474
        %7641 = vmatpush1.bf16.msra.mxu0 %v5473
        %7642 = vmatprep.subr.bf16.mxu0 %v5490
        %7643 = vmatpush1.bf16.msra.mxu0 %v5489
        %7644 = vmatprep.subr.bf16.mxu0 %v5506
        %7645 = vmatpush1.bf16.msra.mxu0 %v5505
        %7646 = vmatprep.subr.bf16.mxu0 %v5522
        %7647 = vmatpush1.bf16.msra.mxu0 %v5521
        %7648 = vmatprep.subr.bf16.mxu0 %v5538
        %7649 = vmatpush1.bf16.msra.mxu0 %v5537
        %7650 = vmatprep.subr.bf16.mxu0 %v5554
        %7651 = vmatpush1.bf16.msra.mxu0 %v5553
        %7652 = vmatprep.subr.bf16.mxu0 %v5570
        %7653 = vmatpush1.bf16.msra.mxu0 %v5569
        %7654 = vmatprep.subr.bf16.mxu0 %v5586
        %7655 = vmatpush1.bf16.msra.mxu0 %v5585
        %7656 = vmatprep.subr.bf16.mxu0 %v5602
        %7657 = vmatpush1.bf16.msra.mxu0 %v5601
        %7658 = vmatprep.subr.bf16.mxu0 %v5618
        %7659 = vmatpush1.bf16.msra.mxu0 %v5617
        %7660 = vmatprep.subr.bf16.mxu0 %v5634
        %7661 = vmatpush1.bf16.msra.mxu0 %v5633
        %7662 = vmatprep.subr.bf16.mxu0 %v5650
        %7663 = vmatpush1.bf16.msra.mxu0 %v5649
        %7664 = vmatprep.subr.bf16.mxu0 %v5666
        %7665 = vmatpush1.bf16.msra.mxu0 %v5665
        %7666 = vmatprep.subr.bf16.mxu0 %v5682
        %7667 = vmatpush1.bf16.msra.mxu0 %v5681
        %7668 = vmatprep.subr.bf16.mxu0 %v5698
        %7669 = vmatpush1.bf16.msra.mxu0 %v5697
        %7670 = vmatprep.subr.bf16.mxu0 %v5714
        %7671 = vmatpush1.bf16.msra.mxu0 %v5713
        %7672 = vmatprep.mubr.f32.mxu0 %v598
        %7673 = vmatmul.mubr.f32.gmra.mrb[0].mxu0 %v597
        %v7674 = vpop.f32.mrb[0].mxu0
        %v7675 = vadd.f32 %v7636, %v7674
        %v7676 = vpop.f32.mrb[0].mxu0
        %v7677 = vadd.f32 %v7638, %v7676
        %7678 = vdwg.mxu0
        %7679 = vmatprep.subr.bf16.mxu0 %v4708
        %7680 = vmatpush1.bf16.msra.mxu0 %v4707
        %7681 = vmatprep.subr.bf16.mxu0 %v4724
        %7682 = vmatpush1.bf16.msra.mxu0 %v4723
        %7683 = vmatprep.subr.bf16.mxu0 %v4740
        %7684 = vmatpush1.bf16.msra.mxu0 %v4739
        %7685 = vmatprep.subr.bf16.mxu0 %v4756
        %7686 = vmatpush1.bf16.msra.mxu0 %v4755
        %7687 = vmatprep.subr.bf16.mxu0 %v4772
        %7688 = vmatpush1.bf16.msra.mxu0 %v4771
        %7689 = vmatprep.subr.bf16.mxu0 %v4788
        %7690 = vmatpush1.bf16.msra.mxu0 %v4787
        %7691 = vmatprep.subr.bf16.mxu0 %v4804
        %7692 = vmatpush1.bf16.msra.mxu0 %v4803
        %7693 = vmatprep.subr.bf16.mxu0 %v4820
        %7694 = vmatpush1.bf16.msra.mxu0 %v4819
        %7695 = vmatprep.subr.bf16.mxu0 %v4836
        %7696 = vmatpush1.bf16.msra.mxu0 %v4835
        %7697 = vmatprep.subr.bf16.mxu0 %v4852
        %7698 = vmatpush1.bf16.msra.mxu0 %v4851
        %7699 = vmatprep.subr.bf16.mxu0 %v4868
        %7700 = vmatpush1.bf16.msra.mxu0 %v4867
        %7701 = vmatprep.subr.bf16.mxu0 %v4884
        %7702 = vmatpush1.bf16.msra.mxu0 %v4883
        %7703 = vmatprep.subr.bf16.mxu0 %v4900
        %7704 = vmatpush1.bf16.msra.mxu0 %v4899
        %7705 = vmatprep.subr.bf16.mxu0 %v4916
        %7706 = vmatpush1.bf16.msra.mxu0 %v4915
        %7707 = vmatprep.subr.bf16.mxu0 %v4932
        %7708 = vmatpush1.bf16.msra.mxu0 %v4931
        %7709 = vmatprep.subr.bf16.mxu0 %v4948
        %7710 = vmatpush1.bf16.msra.mxu0 %v4947
        %7711 = vmatprep.mubr.f32.mxu0 %v592
        %7712 = vmatmul.mubr.f32.gmra.mrb[0].mxu0 %v591
        %v7713 = vpop.f32.mrb[0].mxu0
        %v7714 = vadd.f32 0.0, %v7713
        %v7715 = vpop.f32.mrb[0].mxu0
        %v7716 = vadd.f32 0.0, %v7715
        %7717 = vdwg.mxu0
        %7718 = vmatprep.subr.bf16.mxu0 %v4964
        %7719 = vmatpush1.bf16.msra.mxu0 %v4963
        %7720 = vmatprep.subr.bf16.mxu0 %v4980
        %7721 = vmatpush1.bf16.msra.mxu0 %v4979
        %7722 = vmatprep.subr.bf16.mxu0 %v4996
        %7723 = vmatpush1.bf16.msra.mxu0 %v4995
        %7724 = vmatprep.subr.bf16.mxu0 %v5012
        %7725 = vmatpush1.bf16.msra.mxu0 %v5011
        %7726 = vmatprep.subr.bf16.mxu0 %v5028
        %7727 = vmatpush1.bf16.msra.mxu0 %v5027
        %7728 = vmatprep.subr.bf16.mxu0 %v5044
        %7729 = vmatpush1.bf16.msra.mxu0 %v5043
        %7730 = vmatprep.subr.bf16.mxu0 %v5060
        %7731 = vmatpush1.bf16.msra.mxu0 %v5059
        %7732 = vmatprep.subr.bf16.mxu0 %v5076
        %7733 = vmatpush1.bf16.msra.mxu0 %v5075
        %7734 = vmatprep.subr.bf16.mxu0 %v5092
        %7735 = vmatpush1.bf16.msra.mxu0 %v5091
        %7736 = vmatprep.subr.bf16.mxu0 %v5108
        %7737 = vmatpush1.bf16.msra.mxu0 %v5107
        %7738 = vmatprep.subr.bf16.mxu0 %v5124
        %7739 = vmatpush1.bf16.msra.mxu0 %v5123
        %7740 = vmatprep.subr.bf16.mxu0 %v5140
        %7741 = vmatpush1.bf16.msra.mxu0 %v5139
        %7742 = vmatprep.subr.bf16.mxu0 %v5156
        %7743 = vmatpush1.bf16.msra.mxu0 %v5155
        %7744 = vmatprep.subr.bf16.mxu0 %v5172
        %7745 = vmatpush1.bf16.msra.mxu0 %v5171
        %7746 = vmatprep.subr.bf16.mxu0 %v5188
        %7747 = vmatpush1.bf16.msra.mxu0 %v5187
        %7748 = vmatprep.subr.bf16.mxu0 %v5204
        %7749 = vmatpush1.bf16.msra.mxu0 %v5203
        %7750 = vmatprep.mubr.f32.mxu0 %v594
        %7751 = vmatmul.mubr.f32.gmra.mrb[0].mxu0 %v593
        %v7752 = vpop.f32.mrb[0].mxu0
        %v7753 = vadd.f32 %v7714, %v7752
        %v7754 = vpop.f32.mrb[0].mxu0
        %v7755 = vadd.f32 %v7716, %v7754
        %7756 = vdwg.mxu0
        %7757 = vmatprep.subr.bf16.mxu0 %v5220
        %7758 = vmatpush1.bf16.msra.mxu0 %v5219
        %7759 = vmatprep.subr.bf16.mxu0 %v5236
        %7760 = vmatpush1.bf16.msra.mxu0 %v5235
        %7761 = vmatprep.subr.bf16.mxu0 %v5252
        %7762 = vmatpush1.bf16.msra.mxu0 %v5251
        %7763 = vmatprep.subr.bf16.mxu0 %v5268
        %7764 = vmatpush1.bf16.msra.mxu0 %v5267
        %7765 = vmatprep.subr.bf16.mxu0 %v5284
        %7766 = vmatpush1.bf16.msra.mxu0 %v5283
        %7767 = vmatprep.subr.bf16.mxu0 %v5300
        %7768 = vmatpush1.bf16.msra.mxu0 %v5299
        %7769 = vmatprep.subr.bf16.mxu0 %v5316
        %7770 = vmatpush1.bf16.msra.mxu0 %v5315
        %7771 = vmatprep.subr.bf16.mxu0 %v5332
        %7772 = vmatpush1.bf16.msra.mxu0 %v5331
        %7773 = vmatprep.subr.bf16.mxu0 %v5348
        %7774 = vmatpush1.bf16.msra.mxu0 %v5347
        %7775 = vmatprep.subr.bf16.mxu0 %v5364
        %7776 = vmatpush1.bf16.msra.mxu0 %v5363
        %7777 = vmatprep.subr.bf16.mxu0 %v5380
        %7778 = vmatpush1.bf16.msra.mxu0 %v5379
        %7779 = vmatprep.subr.bf16.mxu0 %v5396
        %7780 = vmatpush1.bf16.msra.mxu0 %v5395
        %7781 = vmatprep.subr.bf16.mxu0 %v5412
        %7782 = vmatpush1.bf16.msra.mxu0 %v5411
        %7783 = vmatprep.subr.bf16.mxu0 %v5428
        %7784 = vmatpush1.bf16.msra.mxu0 %v5427
        %7785 = vmatprep.subr.bf16.mxu0 %v5444
        %7786 = vmatpush1.bf16.msra.mxu0 %v5443
        %7787 = vmatprep.subr.bf16.mxu0 %v5460
        %7788 = vmatpush1.bf16.msra.mxu0 %v5459
        %7789 = vmatprep.mubr.f32.mxu0 %v596
        %7790 = vmatmul.mubr.f32.gmra.mrb[0].mxu0 %v595
        %v7791 = vpop.f32.mrb[0].mxu0
        %v7792 = vadd.f32 %v7753, %v7791
        %v7793 = vpop.f32.mrb[0].mxu0
        %v7794 = vadd.f32 %v7755, %v7793
        %7795 = vdwg.mxu0
        %7796 = vmatprep.subr.bf16.mxu0 %v5476
        %7797 = vmatpush1.bf16.msra.mxu0 %v5475
        %7798 = vmatprep.subr.bf16.mxu0 %v5492
        %7799 = vmatpush1.bf16.msra.mxu0 %v5491
        %7800 = vmatprep.subr.bf16.mxu0 %v5508
        %7801 = vmatpush1.bf16.msra.mxu0 %v5507
        %7802 = vmatprep.subr.bf16.mxu0 %v5524
        %7803 = vmatpush1.bf16.msra.mxu0 %v5523
        %7804 = vmatprep.subr.bf16.mxu0 %v5540
        %7805 = vmatpush1.bf16.msra.mxu0 %v5539
        %7806 = vmatprep.subr.bf16.mxu0 %v5556
        %7807 = vmatpush1.bf16.msra.mxu0 %v5555
        %7808 = vmatprep.subr.bf16.mxu0 %v5572
        %7809 = vmatpush1.bf16.msra.mxu0 %v5571
        %7810 = vmatprep.subr.bf16.mxu0 %v5588
        %7811 = vmatpush1.bf16.msra.mxu0 %v5587
        %7812 = vmatprep.subr.bf16.mxu0 %v5604
        %7813 = vmatpush1.bf16.msra.mxu0 %v5603
        %7814 = vmatprep.subr.bf16.mxu0 %v5620
        %7815 = vmatpush1.bf16.msra.mxu0 %v5619
        %7816 = vmatprep.subr.bf16.mxu0 %v5636
        %7817 = vmatpush1.bf16.msra.mxu0 %v5635
        %7818 = vmatprep.subr.bf16.mxu0 %v5652
        %7819 = vmatpush1.bf16.msra.mxu0 %v5651
        %7820 = vmatprep.subr.bf16.mxu0 %v5668
        %7821 = vmatpush1.bf16.msra.mxu0 %v5667
        %7822 = vmatprep.subr.bf16.mxu0 %v5684
        %7823 = vmatpush1.bf16.msra.mxu0 %v5683
        %7824 = vmatprep.subr.bf16.mxu0 %v5700
        %7825 = vmatpush1.bf16.msra.mxu0 %v5699
        %7826 = vmatprep.subr.bf16.mxu0 %v5716
        %7827 = vmatpush1.bf16.msra.mxu0 %v5715
        %7828 = vmatprep.mubr.f32.mxu0 %v598
        %7829 = vmatmul.mubr.f32.gmra.mrb[0].mxu0 %v597
        %v7830 = vpop.f32.mrb[0].mxu0
        %v7831 = vadd.f32 %v7792, %v7830
        %v7832 = vpop.f32.mrb[0].mxu0
        %v7833 = vadd.f32 %v7794, %v7832
        %7834 = vdwg.mxu0
        %7835 = vmatprep.subr.bf16.mxu0 %v4710
        %7836 = vmatpush1.bf16.msra.mxu0 %v4709
        %7837 = vmatprep.subr.bf16.mxu0 %v4726
        %7838 = vmatpush1.bf16.msra.mxu0 %v4725
        %7839 = vmatprep.subr.bf16.mxu0 %v4742
        %7840 = vmatpush1.bf16.msra.mxu0 %v4741
        %7841 = vmatprep.subr.bf16.mxu0 %v4758
        %7842 = vmatpush1.bf16.msra.mxu0 %v4757
        %7843 = vmatprep.subr.bf16.mxu0 %v4774
        %7844 = vmatpush1.bf16.msra.mxu0 %v4773
        %7845 = vmatprep.subr.bf16.mxu0 %v4790
        %7846 = vmatpush1.bf16.msra.mxu0 %v4789
        %7847 = vmatprep.subr.bf16.mxu0 %v4806
        %7848 = vmatpush1.bf16.msra.mxu0 %v4805
        %7849 = vmatprep.subr.bf16.mxu0 %v4822
        %7850 = vmatpush1.bf16.msra.mxu0 %v4821
        %7851 = vmatprep.subr.bf16.mxu0 %v4838
        %7852 = vmatpush1.bf16.msra.mxu0 %v4837
        %7853 = vmatprep.subr.bf16.mxu0 %v4854
        %7854 = vmatpush1.bf16.msra.mxu0 %v4853
        %7855 = vmatprep.subr.bf16.mxu0 %v4870
        %7856 = vmatpush1.bf16.msra.mxu0 %v4869
        %7857 = vmatprep.subr.bf16.mxu0 %v4886
        %7858 = vmatpush1.bf16.msra.mxu0 %v4885
        %7859 = vmatprep.subr.bf16.mxu0 %v4902
        %7860 = vmatpush1.bf16.msra.mxu0 %v4901
        %7861 = vmatprep.subr.bf16.mxu0 %v4918
        %7862 = vmatpush1.bf16.msra.mxu0 %v4917
        %7863 = vmatprep.subr.bf16.mxu0 %v4934
        %7864 = vmatpush1.bf16.msra.mxu0 %v4933
        %7865 = vmatprep.subr.bf16.mxu0 %v4950
        %7866 = vmatpush1.bf16.msra.mxu0 %v4949
        %7867 = vmatprep.mubr.f32.mxu0 %v592
        %7868 = vmatmul.mubr.f32.gmra.mrb[0].mxu0 %v591
        %v7869 = vpop.f32.mrb[0].mxu0
        %v7870 = vadd.f32 0.0, %v7869
        %v7871 = vpop.f32.mrb[0].mxu0
        %v7872 = vadd.f32 0.0, %v7871
        %7873 = vdwg.mxu0
        %7874 = vmatprep.subr.bf16.mxu0 %v4966
        %7875 = vmatpush1.bf16.msra.mxu0 %v4965
        %7876 = vmatprep.subr.bf16.mxu0 %v4982
        %7877 = vmatpush1.bf16.msra.mxu0 %v4981
        %7878 = vmatprep.subr.bf16.mxu0 %v4998
        %7879 = vmatpush1.bf16.msra.mxu0 %v4997
        %7880 = vmatprep.subr.bf16.mxu0 %v5014
        %7881 = vmatpush1.bf16.msra.mxu0 %v5013
        %7882 = vmatprep.subr.bf16.mxu0 %v5030
        %7883 = vmatpush1.bf16.msra.mxu0 %v5029
        %7884 = vmatprep.subr.bf16.mxu0 %v5046
        %7885 = vmatpush1.bf16.msra.mxu0 %v5045
        %7886 = vmatprep.subr.bf16.mxu0 %v5062
        %7887 = vmatpush1.bf16.msra.mxu0 %v5061
        %7888 = vmatprep.subr.bf16.mxu0 %v5078
        %7889 = vmatpush1.bf16.msra.mxu0 %v5077
        %7890 = vmatprep.subr.bf16.mxu0 %v5094
        %7891 = vmatpush1.bf16.msra.mxu0 %v5093
        %7892 = vmatprep.subr.bf16.mxu0 %v5110
        %7893 = vmatpush1.bf16.msra.mxu0 %v5109
        %7894 = vmatprep.subr.bf16.mxu0 %v5126
        %7895 = vmatpush1.bf16.msra.mxu0 %v5125
        %7896 = vmatprep.subr.bf16.mxu0 %v5142
        %7897 = vmatpush1.bf16.msra.mxu0 %v5141
        %7898 = vmatprep.subr.bf16.mxu0 %v5158
        %7899 = vmatpush1.bf16.msra.mxu0 %v5157
        %7900 = vmatprep.subr.bf16.mxu0 %v5174
        %7901 = vmatpush1.bf16.msra.mxu0 %v5173
        %7902 = vmatprep.subr.bf16.mxu0 %v5190
        %7903 = vmatpush1.bf16.msra.mxu0 %v5189
        %7904 = vmatprep.subr.bf16.mxu0 %v5206
        %7905 = vmatpush1.bf16.msra.mxu0 %v5205
        %7906 = vmatprep.mubr.f32.mxu0 %v594
        %7907 = vmatmul.mubr.f32.gmra.mrb[0].mxu0 %v593
        %v7908 = vpop.f32.mrb[0].mxu0
        %v7909 = vadd.f32 %v7870, %v7908
        %v7910 = vpop.f32.mrb[0].mxu0
        %v7911 = vadd.f32 %v7872, %v7910
        %7912 = vdwg.mxu0
        %7913 = vmatprep.subr.bf16.mxu0 %v5222
        %7914 = vmatpush1.bf16.msra.mxu0 %v5221
        %7915 = vmatprep.subr.bf16.mxu0 %v5238
        %7916 = vmatpush1.bf16.msra.mxu0 %v5237
        %7917 = vmatprep.subr.bf16.mxu0 %v5254
        %7918 = vmatpush1.bf16.msra.mxu0 %v5253
        %7919 = vmatprep.subr.bf16.mxu0 %v5270
        %7920 = vmatpush1.bf16.msra.mxu0 %v5269
        %7921 = vmatprep.subr.bf16.mxu0 %v5286
        %7922 = vmatpush1.bf16.msra.mxu0 %v5285
        %7923 = vmatprep.subr.bf16.mxu0 %v5302
        %7924 = vmatpush1.bf16.msra.mxu0 %v5301
        %7925 = vmatprep.subr.bf16.mxu0 %v5318
        %7926 = vmatpush1.bf16.msra.mxu0 %v5317
        %7927 = vmatprep.subr.bf16.mxu0 %v5334
        %7928 = vmatpush1.bf16.msra.mxu0 %v5333
        %7929 = vmatprep.subr.bf16.mxu0 %v5350
        %7930 = vmatpush1.bf16.msra.mxu0 %v5349
        %7931 = vmatprep.subr.bf16.mxu0 %v5366
        %7932 = vmatpush1.bf16.msra.mxu0 %v5365
        %7933 = vmatprep.subr.bf16.mxu0 %v5382
        %7934 = vmatpush1.bf16.msra.mxu0 %v5381
        %7935 = vmatprep.subr.bf16.mxu0 %v5398
        %7936 = vmatpush1.bf16.msra.mxu0 %v5397
        %7937 = vmatprep.subr.bf16.mxu0 %v5414
        %7938 = vmatpush1.bf16.msra.mxu0 %v5413
        %7939 = vmatprep.subr.bf16.mxu0 %v5430
        %7940 = vmatpush1.bf16.msra.mxu0 %v5429
        %7941 = vmatprep.subr.bf16.mxu0 %v5446
        %7942 = vmatpush1.bf16.msra.mxu0 %v5445
        %7943 = vmatprep.subr.bf16.mxu0 %v5462
        %7944 = vmatpush1.bf16.msra.mxu0 %v5461
        %7945 = vmatprep.mubr.f32.mxu0 %v596
        %7946 = vmatmul.mubr.f32.gmra.mrb[0].mxu0 %v595
        %v7947 = vpop.f32.mrb[0].mxu0
        %v7948 = vadd.f32 %v7909, %v7947
        %v7949 = vpop.f32.mrb[0].mxu0
        %v7950 = vadd.f32 %v7911, %v7949
        %7951 = vdwg.mxu0
        %7952 = vmatprep.subr.bf16.mxu0 %v5478
        %7953 = vmatpush1.bf16.msra.mxu0 %v5477
        %7954 = vmatprep.subr.bf16.mxu0 %v5494
        %7955 = vmatpush1.bf16.msra.mxu0 %v5493
        %7956 = vmatprep.subr.bf16.mxu0 %v5510
        %7957 = vmatpush1.bf16.msra.mxu0 %v5509
        %7958 = vmatprep.subr.bf16.mxu0 %v5526
        %7959 = vmatpush1.bf16.msra.mxu0 %v5525
        %7960 = vmatprep.subr.bf16.mxu0 %v5542
        %7961 = vmatpush1.bf16.msra.mxu0 %v5541
        %7962 = vmatprep.subr.bf16.mxu0 %v5558
        %7963 = vmatpush1.bf16.msra.mxu0 %v5557
        %7964 = vmatprep.subr.bf16.mxu0 %v5574
        %7965 = vmatpush1.bf16.msra.mxu0 %v5573
        %7966 = vmatprep.subr.bf16.mxu0 %v5590
        %7967 = vmatpush1.bf16.msra.mxu0 %v5589
        %7968 = vmatprep.subr.bf16.mxu0 %v5606
        %7969 = vmatpush1.bf16.msra.mxu0 %v5605
        %7970 = vmatprep.subr.bf16.mxu0 %v5622
        %7971 = vmatpush1.bf16.msra.mxu0 %v5621
        %7972 = vmatprep.subr.bf16.mxu0 %v5638
        %7973 = vmatpush1.bf16.msra.mxu0 %v5637
        %7974 = vmatprep.subr.bf16.mxu0 %v5654
        %7975 = vmatpush1.bf16.msra.mxu0 %v5653
        %7976 = vmatprep.subr.bf16.mxu0 %v5670
        %7977 = vmatpush1.bf16.msra.mxu0 %v5669
        %7978 = vmatprep.subr.bf16.mxu0 %v5686
        %7979 = vmatpush1.bf16.msra.mxu0 %v5685
        %7980 = vmatprep.subr.bf16.mxu0 %v5702
        %7981 = vmatpush1.bf16.msra.mxu0 %v5701
        %7982 = vmatprep.subr.bf16.mxu0 %v5718
        %7983 = vmatpush1.bf16.msra.mxu0 %v5717
        %7984 = vmatprep.mubr.f32.mxu0 %v598
        %7985 = vmatmul.mubr.f32.gmra.mrb[0].mxu0 %v597
        %v7986 = vpop.f32.mrb[0].mxu0
        %v7987 = vadd.f32 %v7948, %v7986
        %v7988 = vpop.f32.mrb[0].mxu0
        %v7989 = vadd.f32 %v7950, %v7988
        %7990 = vdwg.mxu0
        %v7991 = vadd.f32 %v575, %v6895
        %v7992 = vadd.f32 %v576, %v6897
        %v7993 = vadd.f32 %v577, %v7051
        %v7994 = vadd.f32 %v578, %v7053
        %v7995 = vadd.f32 %v579, %v7207
        %v7996 = vadd.f32 %v580, %v7209
        %v7997 = vadd.f32 %v581, %v7363
        %v7998 = vadd.f32 %v582, %v7365
        %v7999 = vadd.f32 %v583, %v7519
        %v8000 = vadd.f32 %v584, %v7521
        %v8001 = vadd.f32 %v585, %v7675
        %v8002 = vadd.f32 %v586, %v7677
        %v8003 = vadd.f32 %v587, %v7831
        %v8004 = vadd.f32 %v588, %v7833
        %v8005 = vadd.f32 %v589, %v7987
        %v8006 = vadd.f32 %v590, %v7989
        %8007 = vst [vmem:[#allocation2] sm:$0xff] %v7991
        %8008 = vst [vmem:[#allocation2 + $0x8] sm:$0xff] %v7992
        %8009 = vst [vmem:[#allocation2 + $0x10] sm:$0xff] %v7993
        %8010 = vst [vmem:[#allocation2 + $0x18] sm:$0xff] %v7994
        %8011 = vst [vmem:[#allocation2 + $0x20] sm:$0xff] %v7995
        %8012 = vst [vmem:[#allocation2 + $0x28] sm:$0xff] %v7996
        %8013 = vst [vmem:[#allocation2 + $0x30] sm:$0xff] %v7997
        %8014 = vst [vmem:[#allocation2 + $0x38] sm:$0xff] %v7998
        %8015 = vst [vmem:[#allocation2 + $0x40] sm:$0xff] %v7999
        %8016 = vst [vmem:[#allocation2 + $0x48] sm:$0xff] %v8000
        %8017 = vst [vmem:[#allocation2 + $0x50] sm:$0xff] %v8001
        %8018 = vst [vmem:[#allocation2 + $0x58] sm:$0xff] %v8002
        %8019 = vst [vmem:[#allocation2 + $0x60] sm:$0xff] %v8003
        %8020 = vst [vmem:[#allocation2 + $0x68] sm:$0xff] %v8004
        %8021 = vst [vmem:[#allocation2 + $0x70] sm:$0xff] %v8005
        %8022 = vst [vmem:[#allocation2 + $0x78] sm:$0xff] %v8006
        %p8023 = scmp.eq.s32.totalorder %s33, 4
        // Predicated region
        $region113: #{tpu_custom_call.1} parent=63 // pred_check
          %p8024 = pneg %p8023
        $region114: #{tpu_custom_call.1} parent=63 // pred_check_branch
          %8026 = sbr.rel (%p8024) target = $region116
        $region115: #{tpu_custom_call.1} parent=63 // pred_region
          %v8027 = vld [vmem:[#allocation2] sm:$0xff]
          %v8028 = vld [vmem:[#allocation2 + $0x8] sm:$0xff]
          %v8029 = vld [vmem:[#allocation2 + $0x10] sm:$0xff]
          %v8030 = vld [vmem:[#allocation2 + $0x18] sm:$0xff]
          %v8031 = vld [vmem:[#allocation2 + $0x20] sm:$0xff]
          %v8032 = vld [vmem:[#allocation2 + $0x28] sm:$0xff]
          %v8033 = vld [vmem:[#allocation2 + $0x30] sm:$0xff]
          %v8034 = vld [vmem:[#allocation2 + $0x38] sm:$0xff]
          %v8035 = vld [vmem:[#allocation2 + $0x40] sm:$0xff]
          %v8036 = vld [vmem:[#allocation2 + $0x48] sm:$0xff]
          %v8037 = vld [vmem:[#allocation2 + $0x50] sm:$0xff]
          %v8038 = vld [vmem:[#allocation2 + $0x58] sm:$0xff]
          %v8039 = vld [vmem:[#allocation2 + $0x60] sm:$0xff]
          %v8040 = vld [vmem:[#allocation2 + $0x68] sm:$0xff]
          %v8041 = vld [vmem:[#allocation2 + $0x70] sm:$0xff]
          %v8042 = vld [vmem:[#allocation2 + $0x78] sm:$0xff]
          %v8043 = vld [vmem:[#allocation8] sm:$0xff]
          %v8044 = vld [vmem:[#allocation8 + $0x8] sm:$0xff]
          %v8047 = vlaneseq
          %v8048 = vshrl.u32 %v8047, 7
          %v8049 = vsub.s32 0, %v8048
          %v8050 = vrot.slane %v8043, %v8049
          %v8051 = vlaneseq
          %v8052 = vshrl.u32 %v8051, 7
          %v8053 = vsub.s32 1, %v8052
          %v8054 = vrot.slane %v8043, %v8053
          %v8055 = vlaneseq
          %v8056 = vshrl.u32 %v8055, 7
          %v8057 = vsub.s32 2, %v8056
          %v8058 = vrot.slane %v8043, %v8057
          %v8059 = vlaneseq
          %v8060 = vshrl.u32 %v8059, 7
          %v8061 = vsub.s32 3, %v8060
          %v8062 = vrot.slane %v8043, %v8061
          %v8063 = vlaneseq
          %v8064 = vshrl.u32 %v8063, 7
          %v8065 = vsub.s32 4, %v8064
          %v8066 = vrot.slane %v8043, %v8065
          %v8067 = vlaneseq
          %v8068 = vshrl.u32 %v8067, 7
          %v8069 = vsub.s32 5, %v8068
          %v8070 = vrot.slane %v8043, %v8069
          %v8071 = vlaneseq
          %v8072 = vshrl.u32 %v8071, 7
          %v8073 = vsub.s32 6, %v8072
          %v8074 = vrot.slane %v8043, %v8073
          %v8075 = vlaneseq
          %v8076 = vshrl.u32 %v8075, 7
          %v8077 = vsub.s32 7, %v8076
          %v8078 = vrot.slane %v8043, %v8077
          %v8079 = vlaneseq
          %v8080 = vshrl.u32 %v8079, 7
          %v8081 = vsub.s32 0, %v8080
          %v8082 = vrot.slane %v8044, %v8081
          %v8083 = vlaneseq
          %v8084 = vshrl.u32 %v8083, 7
          %v8085 = vsub.s32 1, %v8084
          %v8086 = vrot.slane %v8044, %v8085
          %v8087 = vlaneseq
          %v8088 = vshrl.u32 %v8087, 7
          %v8089 = vsub.s32 2, %v8088
          %v8090 = vrot.slane %v8044, %v8089
          %v8091 = vlaneseq
          %v8092 = vshrl.u32 %v8091, 7
          %v8093 = vsub.s32 3, %v8092
          %v8094 = vrot.slane %v8044, %v8093
          %v8095 = vlaneseq
          %v8096 = vshrl.u32 %v8095, 7
          %v8097 = vsub.s32 4, %v8096
          %v8098 = vrot.slane %v8044, %v8097
          %v8099 = vlaneseq
          %v8100 = vshrl.u32 %v8099, 7
          %v8101 = vsub.s32 5, %v8100
          %v8102 = vrot.slane %v8044, %v8101
          %v8103 = vlaneseq
          %v8104 = vshrl.u32 %v8103, 7
          %v8105 = vsub.s32 6, %v8104
          %v8106 = vrot.slane %v8044, %v8105
          %v8107 = vlaneseq
          %v8108 = vshrl.u32 %v8107, 7
          %v8109 = vsub.s32 7, %v8108
          %v8110 = vrot.slane %v8044, %v8109
          %v8127 = vadd.f32 %v8027, %v8050
          %v8128 = vadd.f32 %v8028, %v8054
          %v8129 = vadd.f32 %v8029, %v8058
          %v8130 = vadd.f32 %v8030, %v8062
          %v8131 = vadd.f32 %v8031, %v8066
          %v8132 = vadd.f32 %v8032, %v8070
          %v8133 = vadd.f32 %v8033, %v8074
          %v8134 = vadd.f32 %v8034, %v8078
          %v8135 = vadd.f32 %v8035, %v8082
          %v8136 = vadd.f32 %v8036, %v8086
          %v8137 = vadd.f32 %v8037, %v8090
          %v8138 = vadd.f32 %v8038, %v8094
          %v8139 = vadd.f32 %v8039, %v8098
          %v8140 = vadd.f32 %v8040, %v8102
          %v8141 = vadd.f32 %v8041, %v8106
          %v8142 = vadd.f32 %v8042, %v8110
          %v8143 = vmax.f32 %v8127, 0.0
          %v8144 = vmax.f32 %v8128, 0.0
          %v8145 = vmax.f32 %v8129, 0.0
          %v8146 = vmax.f32 %v8130, 0.0
          %v8147 = vmax.f32 %v8131, 0.0
          %v8148 = vmax.f32 %v8132, 0.0
          %v8149 = vmax.f32 %v8133, 0.0
          %v8150 = vmax.f32 %v8134, 0.0
          %v8151 = vmax.f32 %v8135, 0.0
          %v8152 = vmax.f32 %v8136, 0.0
          %v8153 = vmax.f32 %v8137, 0.0
          %v8154 = vmax.f32 %v8138, 0.0
          %v8155 = vmax.f32 %v8139, 0.0
          %v8156 = vmax.f32 %v8140, 0.0
          %v8157 = vmax.f32 %v8141, 0.0
          %v8158 = vmax.f32 %v8142, 0.0
          %v8159 = vld [vmem:[#allocation9] sm:$0xff]
          %v8160 = vld [vmem:[#allocation9 + $0x8] sm:$0xff]
          %v8161 = vld [vmem:[#allocation9 + $0x10] sm:$0xff]
          %v8162 = vld [vmem:[#allocation9 + $0x18] sm:$0xff]
          %v8163 = vld [vmem:[#allocation9 + $0x20] sm:$0xff]
          %v8164 = vld [vmem:[#allocation9 + $0x28] sm:$0xff]
          %v8165 = vld [vmem:[#allocation9 + $0x30] sm:$0xff]
          %v8166 = vld [vmem:[#allocation9 + $0x38] sm:$0xff]
          %v8167 = vld [vmem:[#allocation9 + $0x40] sm:$0xff]
          %v8168 = vld [vmem:[#allocation9 + $0x48] sm:$0xff]
          %v8169 = vld [vmem:[#allocation9 + $0x50] sm:$0xff]
          %v8170 = vld [vmem:[#allocation9 + $0x58] sm:$0xff]
          %v8171 = vld [vmem:[#allocation9 + $0x60] sm:$0xff]
          %v8172 = vld [vmem:[#allocation9 + $0x68] sm:$0xff]
          %v8173 = vld [vmem:[#allocation9 + $0x70] sm:$0xff]
          %v8174 = vld [vmem:[#allocation9 + $0x78] sm:$0xff]
          %v8175 = vld [vmem:[#allocation9 + $0x80] sm:$0xff]
          %v8176 = vld [vmem:[#allocation9 + $0x88] sm:$0xff]
          %v8177 = vld [vmem:[#allocation9 + $0x90] sm:$0xff]
          %v8178 = vld [vmem:[#allocation9 + $0x98] sm:$0xff]
          %v8179 = vld [vmem:[#allocation9 + $0xa0] sm:$0xff]
          %v8180 = vld [vmem:[#allocation9 + $0xa8] sm:$0xff]
          %v8181 = vld [vmem:[#allocation9 + $0xb0] sm:$0xff]
          %v8182 = vld [vmem:[#allocation9 + $0xb8] sm:$0xff]
          %v8183 = vld [vmem:[#allocation9 + $0xc0] sm:$0xff]
          %v8184 = vld [vmem:[#allocation9 + $0xc8] sm:$0xff]
          %v8185 = vld [vmem:[#allocation9 + $0xd0] sm:$0xff]
          %v8186 = vld [vmem:[#allocation9 + $0xd8] sm:$0xff]
          %v8187 = vld [vmem:[#allocation9 + $0xe0] sm:$0xff]
          %v8188 = vld [vmem:[#allocation9 + $0xe8] sm:$0xff]
          %v8189 = vld [vmem:[#allocation9 + $0xf0] sm:$0xff]
          %v8190 = vld [vmem:[#allocation9 + $0xf8] sm:$0xff]
          %v8191 = vld [vmem:[#allocation9 + $0x100] sm:$0xff]
          %v8192 = vld [vmem:[#allocation9 + $0x108] sm:$0xff]
          %v8193 = vld [vmem:[#allocation9 + $0x110] sm:$0xff]
          %v8194 = vld [vmem:[#allocation9 + $0x118] sm:$0xff]
          %v8195 = vld [vmem:[#allocation9 + $0x120] sm:$0xff]
          %v8196 = vld [vmem:[#allocation9 + $0x128] sm:$0xff]
          %v8197 = vld [vmem:[#allocation9 + $0x130] sm:$0xff]
          %v8198 = vld [vmem:[#allocation9 + $0x138] sm:$0xff]
          %v8199 = vld [vmem:[#allocation9 + $0x140] sm:$0xff]
          %v8200 = vld [vmem:[#allocation9 + $0x148] sm:$0xff]
          %v8201 = vld [vmem:[#allocation9 + $0x150] sm:$0xff]
          %v8202 = vld [vmem:[#allocation9 + $0x158] sm:$0xff]
          %v8203 = vld [vmem:[#allocation9 + $0x160] sm:$0xff]
          %v8204 = vld [vmem:[#allocation9 + $0x168] sm:$0xff]
          %v8205 = vld [vmem:[#allocation9 + $0x170] sm:$0xff]
          %v8206 = vld [vmem:[#allocation9 + $0x178] sm:$0xff]
          %v8207 = vld [vmem:[#allocation9 + $0x180] sm:$0xff]
          %v8208 = vld [vmem:[#allocation9 + $0x188] sm:$0xff]
          %v8209 = vld [vmem:[#allocation9 + $0x190] sm:$0xff]
          %v8210 = vld [vmem:[#allocation9 + $0x198] sm:$0xff]
          %v8211 = vld [vmem:[#allocation9 + $0x1a0] sm:$0xff]
          %v8212 = vld [vmem:[#allocation9 + $0x1a8] sm:$0xff]
          %v8213 = vld [vmem:[#allocation9 + $0x1b0] sm:$0xff]
          %v8214 = vld [vmem:[#allocation9 + $0x1b8] sm:$0xff]
          %v8215 = vld [vmem:[#allocation9 + $0x1c0] sm:$0xff]
          %v8216 = vld [vmem:[#allocation9 + $0x1c8] sm:$0xff]
          %v8217 = vld [vmem:[#allocation9 + $0x1d0] sm:$0xff]
          %v8218 = vld [vmem:[#allocation9 + $0x1d8] sm:$0xff]
          %v8219 = vld [vmem:[#allocation9 + $0x1e0] sm:$0xff]
          %v8220 = vld [vmem:[#allocation9 + $0x1e8] sm:$0xff]
          %v8221 = vld [vmem:[#allocation9 + $0x1f0] sm:$0xff]
          %v8222 = vld [vmem:[#allocation9 + $0x1f8] sm:$0xff]
          %v8223 = vld [vmem:[#allocation9 + $0x200] sm:$0xff]
          %v8224 = vld [vmem:[#allocation9 + $0x208] sm:$0xff]
          %v8225 = vld [vmem:[#allocation9 + $0x210] sm:$0xff]
          %v8226 = vld [vmem:[#allocation9 + $0x218] sm:$0xff]
          %v8227 = vld [vmem:[#allocation9 + $0x220] sm:$0xff]
          %v8228 = vld [vmem:[#allocation9 + $0x228] sm:$0xff]
          %v8229 = vld [vmem:[#allocation9 + $0x230] sm:$0xff]
          %v8230 = vld [vmem:[#allocation9 + $0x238] sm:$0xff]
          %v8231 = vld [vmem:[#allocation9 + $0x240] sm:$0xff]
          %v8232 = vld [vmem:[#allocation9 + $0x248] sm:$0xff]
          %v8233 = vld [vmem:[#allocation9 + $0x250] sm:$0xff]
          %v8234 = vld [vmem:[#allocation9 + $0x258] sm:$0xff]
          %v8235 = vld [vmem:[#allocation9 + $0x260] sm:$0xff]
          %v8236 = vld [vmem:[#allocation9 + $0x268] sm:$0xff]
          %v8237 = vld [vmem:[#allocation9 + $0x270] sm:$0xff]
          %v8238 = vld [vmem:[#allocation9 + $0x278] sm:$0xff]
          %v8239 = vld [vmem:[#allocation9 + $0x280] sm:$0xff]
          %v8240 = vld [vmem:[#allocation9 + $0x288] sm:$0xff]
          %v8241 = vld [vmem:[#allocation9 + $0x290] sm:$0xff]
          %v8242 = vld [vmem:[#allocation9 + $0x298] sm:$0xff]
          %v8243 = vld [vmem:[#allocation9 + $0x2a0] sm:$0xff]
          %v8244 = vld [vmem:[#allocation9 + $0x2a8] sm:$0xff]
          %v8245 = vld [vmem:[#allocation9 + $0x2b0] sm:$0xff]
          %v8246 = vld [vmem:[#allocation9 + $0x2b8] sm:$0xff]
          %v8247 = vld [vmem:[#allocation9 + $0x2c0] sm:$0xff]
          %v8248 = vld [vmem:[#allocation9 + $0x2c8] sm:$0xff]
          %v8249 = vld [vmem:[#allocation9 + $0x2d0] sm:$0xff]
          %v8250 = vld [vmem:[#allocation9 + $0x2d8] sm:$0xff]
          %v8251 = vld [vmem:[#allocation9 + $0x2e0] sm:$0xff]
          %v8252 = vld [vmem:[#allocation9 + $0x2e8] sm:$0xff]
          %v8253 = vld [vmem:[#allocation9 + $0x2f0] sm:$0xff]
          %v8254 = vld [vmem:[#allocation9 + $0x2f8] sm:$0xff]
          %v8255 = vld [vmem:[#allocation9 + $0x300] sm:$0xff]
          %v8256 = vld [vmem:[#allocation9 + $0x308] sm:$0xff]
          %v8257 = vld [vmem:[#allocation9 + $0x310] sm:$0xff]
          %v8258 = vld [vmem:[#allocation9 + $0x318] sm:$0xff]
          %v8259 = vld [vmem:[#allocation9 + $0x320] sm:$0xff]
          %v8260 = vld [vmem:[#allocation9 + $0x328] sm:$0xff]
          %v8261 = vld [vmem:[#allocation9 + $0x330] sm:$0xff]
          %v8262 = vld [vmem:[#allocation9 + $0x338] sm:$0xff]
          %v8263 = vld [vmem:[#allocation9 + $0x340] sm:$0xff]
          %v8264 = vld [vmem:[#allocation9 + $0x348] sm:$0xff]
          %v8265 = vld [vmem:[#allocation9 + $0x350] sm:$0xff]
          %v8266 = vld [vmem:[#allocation9 + $0x358] sm:$0xff]
          %v8267 = vld [vmem:[#allocation9 + $0x360] sm:$0xff]
          %v8268 = vld [vmem:[#allocation9 + $0x368] sm:$0xff]
          %v8269 = vld [vmem:[#allocation9 + $0x370] sm:$0xff]
          %v8270 = vld [vmem:[#allocation9 + $0x378] sm:$0xff]
          %v8271 = vld [vmem:[#allocation9 + $0x380] sm:$0xff]
          %v8272 = vld [vmem:[#allocation9 + $0x388] sm:$0xff]
          %v8273 = vld [vmem:[#allocation9 + $0x390] sm:$0xff]
          %v8274 = vld [vmem:[#allocation9 + $0x398] sm:$0xff]
          %v8275 = vld [vmem:[#allocation9 + $0x3a0] sm:$0xff]
          %v8276 = vld [vmem:[#allocation9 + $0x3a8] sm:$0xff]
          %v8277 = vld [vmem:[#allocation9 + $0x3b0] sm:$0xff]
          %v8278 = vld [vmem:[#allocation9 + $0x3b8] sm:$0xff]
          %v8279 = vld [vmem:[#allocation9 + $0x3c0] sm:$0xff]
          %v8280 = vld [vmem:[#allocation9 + $0x3c8] sm:$0xff]
          %v8281 = vld [vmem:[#allocation9 + $0x3d0] sm:$0xff]
          %v8282 = vld [vmem:[#allocation9 + $0x3d8] sm:$0xff]
          %v8283 = vld [vmem:[#allocation9 + $0x3e0] sm:$0xff]
          %v8284 = vld [vmem:[#allocation9 + $0x3e8] sm:$0xff]
          %v8285 = vld [vmem:[#allocation9 + $0x3f0] sm:$0xff]
          %v8286 = vld [vmem:[#allocation9 + $0x3f8] sm:$0xff]
          %v8287 = vld [vmem:[#allocation9 + $0x400] sm:$0xff]
          %v8288 = vld [vmem:[#allocation9 + $0x408] sm:$0xff]
          %v8289 = vld [vmem:[#allocation9 + $0x410] sm:$0xff]
          %v8290 = vld [vmem:[#allocation9 + $0x418] sm:$0xff]
          %v8291 = vld [vmem:[#allocation9 + $0x420] sm:$0xff]
          %v8292 = vld [vmem:[#allocation9 + $0x428] sm:$0xff]
          %v8293 = vld [vmem:[#allocation9 + $0x430] sm:$0xff]
          %v8294 = vld [vmem:[#allocation9 + $0x438] sm:$0xff]
          %v8295 = vld [vmem:[#allocation9 + $0x440] sm:$0xff]
          %v8296 = vld [vmem:[#allocation9 + $0x448] sm:$0xff]
          %v8297 = vld [vmem:[#allocation9 + $0x450] sm:$0xff]
          %v8298 = vld [vmem:[#allocation9 + $0x458] sm:$0xff]
          %v8299 = vld [vmem:[#allocation9 + $0x460] sm:$0xff]
          %v8300 = vld [vmem:[#allocation9 + $0x468] sm:$0xff]
          %v8301 = vld [vmem:[#allocation9 + $0x470] sm:$0xff]
          %v8302 = vld [vmem:[#allocation9 + $0x478] sm:$0xff]
          %v8303 = vld [vmem:[#allocation9 + $0x480] sm:$0xff]
          %v8304 = vld [vmem:[#allocation9 + $0x488] sm:$0xff]
          %v8305 = vld [vmem:[#allocation9 + $0x490] sm:$0xff]
          %v8306 = vld [vmem:[#allocation9 + $0x498] sm:$0xff]
          %v8307 = vld [vmem:[#allocation9 + $0x4a0] sm:$0xff]
          %v8308 = vld [vmem:[#allocation9 + $0x4a8] sm:$0xff]
          %v8309 = vld [vmem:[#allocation9 + $0x4b0] sm:$0xff]
          %v8310 = vld [vmem:[#allocation9 + $0x4b8] sm:$0xff]
          %v8311 = vld [vmem:[#allocation9 + $0x4c0] sm:$0xff]
          %v8312 = vld [vmem:[#allocation9 + $0x4c8] sm:$0xff]
          %v8313 = vld [vmem:[#allocation9 + $0x4d0] sm:$0xff]
          %v8314 = vld [vmem:[#allocation9 + $0x4d8] sm:$0xff]
          %v8315 = vld [vmem:[#allocation9 + $0x4e0] sm:$0xff]
          %v8316 = vld [vmem:[#allocation9 + $0x4e8] sm:$0xff]
          %v8317 = vld [vmem:[#allocation9 + $0x4f0] sm:$0xff]
          %v8318 = vld [vmem:[#allocation9 + $0x4f8] sm:$0xff]
          %v8319 = vld [vmem:[#allocation9 + $0x500] sm:$0xff]
          %v8320 = vld [vmem:[#allocation9 + $0x508] sm:$0xff]
          %v8321 = vld [vmem:[#allocation9 + $0x510] sm:$0xff]
          %v8322 = vld [vmem:[#allocation9 + $0x518] sm:$0xff]
          %v8323 = vld [vmem:[#allocation9 + $0x520] sm:$0xff]
          %v8324 = vld [vmem:[#allocation9 + $0x528] sm:$0xff]
          %v8325 = vld [vmem:[#allocation9 + $0x530] sm:$0xff]
          %v8326 = vld [vmem:[#allocation9 + $0x538] sm:$0xff]
          %v8327 = vld [vmem:[#allocation9 + $0x540] sm:$0xff]
          %v8328 = vld [vmem:[#allocation9 + $0x548] sm:$0xff]
          %v8329 = vld [vmem:[#allocation9 + $0x550] sm:$0xff]
          %v8330 = vld [vmem:[#allocation9 + $0x558] sm:$0xff]
          %v8331 = vld [vmem:[#allocation9 + $0x560] sm:$0xff]
          %v8332 = vld [vmem:[#allocation9 + $0x568] sm:$0xff]
          %v8333 = vld [vmem:[#allocation9 + $0x570] sm:$0xff]
          %v8334 = vld [vmem:[#allocation9 + $0x578] sm:$0xff]
          %v8335 = vld [vmem:[#allocation9 + $0x580] sm:$0xff]
          %v8336 = vld [vmem:[#allocation9 + $0x588] sm:$0xff]
          %v8337 = vld [vmem:[#allocation9 + $0x590] sm:$0xff]
          %v8338 = vld [vmem:[#allocation9 + $0x598] sm:$0xff]
          %v8339 = vld [vmem:[#allocation9 + $0x5a0] sm:$0xff]
          %v8340 = vld [vmem:[#allocation9 + $0x5a8] sm:$0xff]
          %v8341 = vld [vmem:[#allocation9 + $0x5b0] sm:$0xff]
          %v8342 = vld [vmem:[#allocation9 + $0x5b8] sm:$0xff]
          %v8343 = vld [vmem:[#allocation9 + $0x5c0] sm:$0xff]
          %v8344 = vld [vmem:[#allocation9 + $0x5c8] sm:$0xff]
          %v8345 = vld [vmem:[#allocation9 + $0x5d0] sm:$0xff]
          %v8346 = vld [vmem:[#allocation9 + $0x5d8] sm:$0xff]
          %v8347 = vld [vmem:[#allocation9 + $0x5e0] sm:$0xff]
          %v8348 = vld [vmem:[#allocation9 + $0x5e8] sm:$0xff]
          %v8349 = vld [vmem:[#allocation9 + $0x5f0] sm:$0xff]
          %v8350 = vld [vmem:[#allocation9 + $0x5f8] sm:$0xff]
          %v8351 = vld [vmem:[#allocation9 + $0x600] sm:$0xff]
          %v8352 = vld [vmem:[#allocation9 + $0x608] sm:$0xff]
          %v8353 = vld [vmem:[#allocation9 + $0x610] sm:$0xff]
          %v8354 = vld [vmem:[#allocation9 + $0x618] sm:$0xff]
          %v8355 = vld [vmem:[#allocation9 + $0x620] sm:$0xff]
          %v8356 = vld [vmem:[#allocation9 + $0x628] sm:$0xff]
          %v8357 = vld [vmem:[#allocation9 + $0x630] sm:$0xff]
          %v8358 = vld [vmem:[#allocation9 + $0x638] sm:$0xff]
          %v8359 = vld [vmem:[#allocation9 + $0x640] sm:$0xff]
          %v8360 = vld [vmem:[#allocation9 + $0x648] sm:$0xff]
          %v8361 = vld [vmem:[#allocation9 + $0x650] sm:$0xff]
          %v8362 = vld [vmem:[#allocation9 + $0x658] sm:$0xff]
          %v8363 = vld [vmem:[#allocation9 + $0x660] sm:$0xff]
          %v8364 = vld [vmem:[#allocation9 + $0x668] sm:$0xff]
          %v8365 = vld [vmem:[#allocation9 + $0x670] sm:$0xff]
          %v8366 = vld [vmem:[#allocation9 + $0x678] sm:$0xff]
          %v8367 = vld [vmem:[#allocation9 + $0x680] sm:$0xff]
          %v8368 = vld [vmem:[#allocation9 + $0x688] sm:$0xff]
          %v8369 = vld [vmem:[#allocation9 + $0x690] sm:$0xff]
          %v8370 = vld [vmem:[#allocation9 + $0x698] sm:$0xff]
          %v8371 = vld [vmem:[#allocation9 + $0x6a0] sm:$0xff]
          %v8372 = vld [vmem:[#allocation9 + $0x6a8] sm:$0xff]
          %v8373 = vld [vmem:[#allocation9 + $0x6b0] sm:$0xff]
          %v8374 = vld [vmem:[#allocation9 + $0x6b8] sm:$0xff]
          %v8375 = vld [vmem:[#allocation9 + $0x6c0] sm:$0xff]
          %v8376 = vld [vmem:[#allocation9 + $0x6c8] sm:$0xff]
          %v8377 = vld [vmem:[#allocation9 + $0x6d0] sm:$0xff]
          %v8378 = vld [vmem:[#allocation9 + $0x6d8] sm:$0xff]
          %v8379 = vld [vmem:[#allocation9 + $0x6e0] sm:$0xff]
          %v8380 = vld [vmem:[#allocation9 + $0x6e8] sm:$0xff]
          %v8381 = vld [vmem:[#allocation9 + $0x6f0] sm:$0xff]
          %v8382 = vld [vmem:[#allocation9 + $0x6f8] sm:$0xff]
          %v8383 = vld [vmem:[#allocation9 + $0x700] sm:$0xff]
          %v8384 = vld [vmem:[#allocation9 + $0x708] sm:$0xff]
          %v8385 = vld [vmem:[#allocation9 + $0x710] sm:$0xff]
          %v8386 = vld [vmem:[#allocation9 + $0x718] sm:$0xff]
          %v8387 = vld [vmem:[#allocation9 + $0x720] sm:$0xff]
          %v8388 = vld [vmem:[#allocation9 + $0x728] sm:$0xff]
          %v8389 = vld [vmem:[#allocation9 + $0x730] sm:$0xff]
          %v8390 = vld [vmem:[#allocation9 + $0x738] sm:$0xff]
          %v8391 = vld [vmem:[#allocation9 + $0x740] sm:$0xff]
          %v8392 = vld [vmem:[#allocation9 + $0x748] sm:$0xff]
          %v8393 = vld [vmem:[#allocation9 + $0x750] sm:$0xff]
          %v8394 = vld [vmem:[#allocation9 + $0x758] sm:$0xff]
          %v8395 = vld [vmem:[#allocation9 + $0x760] sm:$0xff]
          %v8396 = vld [vmem:[#allocation9 + $0x768] sm:$0xff]
          %v8397 = vld [vmem:[#allocation9 + $0x770] sm:$0xff]
          %v8398 = vld [vmem:[#allocation9 + $0x778] sm:$0xff]
          %v8399 = vld [vmem:[#allocation9 + $0x780] sm:$0xff]
          %v8400 = vld [vmem:[#allocation9 + $0x788] sm:$0xff]
          %v8401 = vld [vmem:[#allocation9 + $0x790] sm:$0xff]
          %v8402 = vld [vmem:[#allocation9 + $0x798] sm:$0xff]
          %v8403 = vld [vmem:[#allocation9 + $0x7a0] sm:$0xff]
          %v8404 = vld [vmem:[#allocation9 + $0x7a8] sm:$0xff]
          %v8405 = vld [vmem:[#allocation9 + $0x7b0] sm:$0xff]
          %v8406 = vld [vmem:[#allocation9 + $0x7b8] sm:$0xff]
          %v8407 = vld [vmem:[#allocation9 + $0x7c0] sm:$0xff]
          %v8408 = vld [vmem:[#allocation9 + $0x7c8] sm:$0xff]
          %v8409 = vld [vmem:[#allocation9 + $0x7d0] sm:$0xff]
          %v8410 = vld [vmem:[#allocation9 + $0x7d8] sm:$0xff]
          %v8411 = vld [vmem:[#allocation9 + $0x7e0] sm:$0xff]
          %v8412 = vld [vmem:[#allocation9 + $0x7e8] sm:$0xff]
          %v8413 = vld [vmem:[#allocation9 + $0x7f0] sm:$0xff]
          %v8414 = vld [vmem:[#allocation9 + $0x7f8] sm:$0xff]
          %v8415 = vld [vmem:[#allocation9 + $0x800] sm:$0xff]
          %v8416 = vld [vmem:[#allocation9 + $0x808] sm:$0xff]
          %v8417 = vld [vmem:[#allocation9 + $0x810] sm:$0xff]
          %v8418 = vld [vmem:[#allocation9 + $0x818] sm:$0xff]
          %v8419 = vld [vmem:[#allocation9 + $0x820] sm:$0xff]
          %v8420 = vld [vmem:[#allocation9 + $0x828] sm:$0xff]
          %v8421 = vld [vmem:[#allocation9 + $0x830] sm:$0xff]
          %v8422 = vld [vmem:[#allocation9 + $0x838] sm:$0xff]
          %v8423 = vld [vmem:[#allocation9 + $0x840] sm:$0xff]
          %v8424 = vld [vmem:[#allocation9 + $0x848] sm:$0xff]
          %v8425 = vld [vmem:[#allocation9 + $0x850] sm:$0xff]
          %v8426 = vld [vmem:[#allocation9 + $0x858] sm:$0xff]
          %v8427 = vld [vmem:[#allocation9 + $0x860] sm:$0xff]
          %v8428 = vld [vmem:[#allocation9 + $0x868] sm:$0xff]
          %v8429 = vld [vmem:[#allocation9 + $0x870] sm:$0xff]
          %v8430 = vld [vmem:[#allocation9 + $0x878] sm:$0xff]
          %v8431 = vld [vmem:[#allocation9 + $0x880] sm:$0xff]
          %v8432 = vld [vmem:[#allocation9 + $0x888] sm:$0xff]
          %v8433 = vld [vmem:[#allocation9 + $0x890] sm:$0xff]
          %v8434 = vld [vmem:[#allocation9 + $0x898] sm:$0xff]
          %v8435 = vld [vmem:[#allocation9 + $0x8a0] sm:$0xff]
          %v8436 = vld [vmem:[#allocation9 + $0x8a8] sm:$0xff]
          %v8437 = vld [vmem:[#allocation9 + $0x8b0] sm:$0xff]
          %v8438 = vld [vmem:[#allocation9 + $0x8b8] sm:$0xff]
          %v8439 = vld [vmem:[#allocation9 + $0x8c0] sm:$0xff]
          %v8440 = vld [vmem:[#allocation9 + $0x8c8] sm:$0xff]
          %v8441 = vld [vmem:[#allocation9 + $0x8d0] sm:$0xff]
          %v8442 = vld [vmem:[#allocation9 + $0x8d8] sm:$0xff]
          %v8443 = vld [vmem:[#allocation9 + $0x8e0] sm:$0xff]
          %v8444 = vld [vmem:[#allocation9 + $0x8e8] sm:$0xff]
          %v8445 = vld [vmem:[#allocation9 + $0x8f0] sm:$0xff]
          %v8446 = vld [vmem:[#allocation9 + $0x8f8] sm:$0xff]
          %v8447 = vld [vmem:[#allocation9 + $0x900] sm:$0xff]
          %v8448 = vld [vmem:[#allocation9 + $0x908] sm:$0xff]
          %v8449 = vld [vmem:[#allocation9 + $0x910] sm:$0xff]
          %v8450 = vld [vmem:[#allocation9 + $0x918] sm:$0xff]
          %v8451 = vld [vmem:[#allocation9 + $0x920] sm:$0xff]
          %v8452 = vld [vmem:[#allocation9 + $0x928] sm:$0xff]
          %v8453 = vld [vmem:[#allocation9 + $0x930] sm:$0xff]
          %v8454 = vld [vmem:[#allocation9 + $0x938] sm:$0xff]
          %v8455 = vld [vmem:[#allocation9 + $0x940] sm:$0xff]
          %v8456 = vld [vmem:[#allocation9 + $0x948] sm:$0xff]
          %v8457 = vld [vmem:[#allocation9 + $0x950] sm:$0xff]
          %v8458 = vld [vmem:[#allocation9 + $0x958] sm:$0xff]
          %v8459 = vld [vmem:[#allocation9 + $0x960] sm:$0xff]
          %v8460 = vld [vmem:[#allocation9 + $0x968] sm:$0xff]
          %v8461 = vld [vmem:[#allocation9 + $0x970] sm:$0xff]
          %v8462 = vld [vmem:[#allocation9 + $0x978] sm:$0xff]
          %v8463 = vld [vmem:[#allocation9 + $0x980] sm:$0xff]
          %v8464 = vld [vmem:[#allocation9 + $0x988] sm:$0xff]
          %v8465 = vld [vmem:[#allocation9 + $0x990] sm:$0xff]
          %v8466 = vld [vmem:[#allocation9 + $0x998] sm:$0xff]
          %v8467 = vld [vmem:[#allocation9 + $0x9a0] sm:$0xff]
          %v8468 = vld [vmem:[#allocation9 + $0x9a8] sm:$0xff]
          %v8469 = vld [vmem:[#allocation9 + $0x9b0] sm:$0xff]
          %v8470 = vld [vmem:[#allocation9 + $0x9b8] sm:$0xff]
          %v8471 = vld [vmem:[#allocation9 + $0x9c0] sm:$0xff]
          %v8472 = vld [vmem:[#allocation9 + $0x9c8] sm:$0xff]
          %v8473 = vld [vmem:[#allocation9 + $0x9d0] sm:$0xff]
          %v8474 = vld [vmem:[#allocation9 + $0x9d8] sm:$0xff]
          %v8475 = vld [vmem:[#allocation9 + $0x9e0] sm:$0xff]
          %v8476 = vld [vmem:[#allocation9 + $0x9e8] sm:$0xff]
          %v8477 = vld [vmem:[#allocation9 + $0x9f0] sm:$0xff]
          %v8478 = vld [vmem:[#allocation9 + $0x9f8] sm:$0xff]
          %v8479 = vld [vmem:[#allocation9 + $0xa00] sm:$0xff]
          %v8480 = vld [vmem:[#allocation9 + $0xa08] sm:$0xff]
          %v8481 = vld [vmem:[#allocation9 + $0xa10] sm:$0xff]
          %v8482 = vld [vmem:[#allocation9 + $0xa18] sm:$0xff]
          %v8483 = vld [vmem:[#allocation9 + $0xa20] sm:$0xff]
          %v8484 = vld [vmem:[#allocation9 + $0xa28] sm:$0xff]
          %v8485 = vld [vmem:[#allocation9 + $0xa30] sm:$0xff]
          %v8486 = vld [vmem:[#allocation9 + $0xa38] sm:$0xff]
          %v8487 = vld [vmem:[#allocation9 + $0xa40] sm:$0xff]
          %v8488 = vld [vmem:[#allocation9 + $0xa48] sm:$0xff]
          %v8489 = vld [vmem:[#allocation9 + $0xa50] sm:$0xff]
          %v8490 = vld [vmem:[#allocation9 + $0xa58] sm:$0xff]
          %v8491 = vld [vmem:[#allocation9 + $0xa60] sm:$0xff]
          %v8492 = vld [vmem:[#allocation9 + $0xa68] sm:$0xff]
          %v8493 = vld [vmem:[#allocation9 + $0xa70] sm:$0xff]
          %v8494 = vld [vmem:[#allocation9 + $0xa78] sm:$0xff]
          %v8495 = vld [vmem:[#allocation9 + $0xa80] sm:$0xff]
          %v8496 = vld [vmem:[#allocation9 + $0xa88] sm:$0xff]
          %v8497 = vld [vmem:[#allocation9 + $0xa90] sm:$0xff]
          %v8498 = vld [vmem:[#allocation9 + $0xa98] sm:$0xff]
          %v8499 = vld [vmem:[#allocation9 + $0xaa0] sm:$0xff]
          %v8500 = vld [vmem:[#allocation9 + $0xaa8] sm:$0xff]
          %v8501 = vld [vmem:[#allocation9 + $0xab0] sm:$0xff]
          %v8502 = vld [vmem:[#allocation9 + $0xab8] sm:$0xff]
          %v8503 = vld [vmem:[#allocation9 + $0xac0] sm:$0xff]
          %v8504 = vld [vmem:[#allocation9 + $0xac8] sm:$0xff]
          %v8505 = vld [vmem:[#allocation9 + $0xad0] sm:$0xff]
          %v8506 = vld [vmem:[#allocation9 + $0xad8] sm:$0xff]
          %v8507 = vld [vmem:[#allocation9 + $0xae0] sm:$0xff]
          %v8508 = vld [vmem:[#allocation9 + $0xae8] sm:$0xff]
          %v8509 = vld [vmem:[#allocation9 + $0xaf0] sm:$0xff]
          %v8510 = vld [vmem:[#allocation9 + $0xaf8] sm:$0xff]
          %v8511 = vld [vmem:[#allocation9 + $0xb00] sm:$0xff]
          %v8512 = vld [vmem:[#allocation9 + $0xb08] sm:$0xff]
          %v8513 = vld [vmem:[#allocation9 + $0xb10] sm:$0xff]
          %v8514 = vld [vmem:[#allocation9 + $0xb18] sm:$0xff]
          %v8515 = vld [vmem:[#allocation9 + $0xb20] sm:$0xff]
          %v8516 = vld [vmem:[#allocation9 + $0xb28] sm:$0xff]
          %v8517 = vld [vmem:[#allocation9 + $0xb30] sm:$0xff]
          %v8518 = vld [vmem:[#allocation9 + $0xb38] sm:$0xff]
          %v8519 = vld [vmem:[#allocation9 + $0xb40] sm:$0xff]
          %v8520 = vld [vmem:[#allocation9 + $0xb48] sm:$0xff]
          %v8521 = vld [vmem:[#allocation9 + $0xb50] sm:$0xff]
          %v8522 = vld [vmem:[#allocation9 + $0xb58] sm:$0xff]
          %v8523 = vld [vmem:[#allocation9 + $0xb60] sm:$0xff]
          %v8524 = vld [vmem:[#allocation9 + $0xb68] sm:$0xff]
          %v8525 = vld [vmem:[#allocation9 + $0xb70] sm:$0xff]
          %v8526 = vld [vmem:[#allocation9 + $0xb78] sm:$0xff]
          %v8527 = vld [vmem:[#allocation9 + $0xb80] sm:$0xff]
          %v8528 = vld [vmem:[#allocation9 + $0xb88] sm:$0xff]
          %v8529 = vld [vmem:[#allocation9 + $0xb90] sm:$0xff]
          %v8530 = vld [vmem:[#allocation9 + $0xb98] sm:$0xff]
          %v8531 = vld [vmem:[#allocation9 + $0xba0] sm:$0xff]
          %v8532 = vld [vmem:[#allocation9 + $0xba8] sm:$0xff]
          %v8533 = vld [vmem:[#allocation9 + $0xbb0] sm:$0xff]
          %v8534 = vld [vmem:[#allocation9 + $0xbb8] sm:$0xff]
          %v8535 = vld [vmem:[#allocation9 + $0xbc0] sm:$0xff]
          %v8536 = vld [vmem:[#allocation9 + $0xbc8] sm:$0xff]
          %v8537 = vld [vmem:[#allocation9 + $0xbd0] sm:$0xff]
          %v8538 = vld [vmem:[#allocation9 + $0xbd8] sm:$0xff]
          %v8539 = vld [vmem:[#allocation9 + $0xbe0] sm:$0xff]
          %v8540 = vld [vmem:[#allocation9 + $0xbe8] sm:$0xff]
          %v8541 = vld [vmem:[#allocation9 + $0xbf0] sm:$0xff]
          %v8542 = vld [vmem:[#allocation9 + $0xbf8] sm:$0xff]
          %v8543 = vld [vmem:[#allocation9 + $0xc00] sm:$0xff]
          %v8544 = vld [vmem:[#allocation9 + $0xc08] sm:$0xff]
          %v8545 = vld [vmem:[#allocation9 + $0xc10] sm:$0xff]
          %v8546 = vld [vmem:[#allocation9 + $0xc18] sm:$0xff]
          %v8547 = vld [vmem:[#allocation9 + $0xc20] sm:$0xff]
          %v8548 = vld [vmem:[#allocation9 + $0xc28] sm:$0xff]
          %v8549 = vld [vmem:[#allocation9 + $0xc30] sm:$0xff]
          %v8550 = vld [vmem:[#allocation9 + $0xc38] sm:$0xff]
          %v8551 = vld [vmem:[#allocation9 + $0xc40] sm:$0xff]
          %v8552 = vld [vmem:[#allocation9 + $0xc48] sm:$0xff]
          %v8553 = vld [vmem:[#allocation9 + $0xc50] sm:$0xff]
          %v8554 = vld [vmem:[#allocation9 + $0xc58] sm:$0xff]
          %v8555 = vld [vmem:[#allocation9 + $0xc60] sm:$0xff]
          %v8556 = vld [vmem:[#allocation9 + $0xc68] sm:$0xff]
          %v8557 = vld [vmem:[#allocation9 + $0xc70] sm:$0xff]
          %v8558 = vld [vmem:[#allocation9 + $0xc78] sm:$0xff]
          %v8559 = vld [vmem:[#allocation9 + $0xc80] sm:$0xff]
          %v8560 = vld [vmem:[#allocation9 + $0xc88] sm:$0xff]
          %v8561 = vld [vmem:[#allocation9 + $0xc90] sm:$0xff]
          %v8562 = vld [vmem:[#allocation9 + $0xc98] sm:$0xff]
          %v8563 = vld [vmem:[#allocation9 + $0xca0] sm:$0xff]
          %v8564 = vld [vmem:[#allocation9 + $0xca8] sm:$0xff]
          %v8565 = vld [vmem:[#allocation9 + $0xcb0] sm:$0xff]
          %v8566 = vld [vmem:[#allocation9 + $0xcb8] sm:$0xff]
          %v8567 = vld [vmem:[#allocation9 + $0xcc0] sm:$0xff]
          %v8568 = vld [vmem:[#allocation9 + $0xcc8] sm:$0xff]
          %v8569 = vld [vmem:[#allocation9 + $0xcd0] sm:$0xff]
          %v8570 = vld [vmem:[#allocation9 + $0xcd8] sm:$0xff]
          %v8571 = vld [vmem:[#allocation9 + $0xce0] sm:$0xff]
          %v8572 = vld [vmem:[#allocation9 + $0xce8] sm:$0xff]
          %v8573 = vld [vmem:[#allocation9 + $0xcf0] sm:$0xff]
          %v8574 = vld [vmem:[#allocation9 + $0xcf8] sm:$0xff]
          %v8575 = vld [vmem:[#allocation9 + $0xd00] sm:$0xff]
          %v8576 = vld [vmem:[#allocation9 + $0xd08] sm:$0xff]
          %v8577 = vld [vmem:[#allocation9 + $0xd10] sm:$0xff]
          %v8578 = vld [vmem:[#allocation9 + $0xd18] sm:$0xff]
          %v8579 = vld [vmem:[#allocation9 + $0xd20] sm:$0xff]
          %v8580 = vld [vmem:[#allocation9 + $0xd28] sm:$0xff]
          %v8581 = vld [vmem:[#allocation9 + $0xd30] sm:$0xff]
          %v8582 = vld [vmem:[#allocation9 + $0xd38] sm:$0xff]
          %v8583 = vld [vmem:[#allocation9 + $0xd40] sm:$0xff]
          %v8584 = vld [vmem:[#allocation9 + $0xd48] sm:$0xff]
          %v8585 = vld [vmem:[#allocation9 + $0xd50] sm:$0xff]
          %v8586 = vld [vmem:[#allocation9 + $0xd58] sm:$0xff]
          %v8587 = vld [vmem:[#allocation9 + $0xd60] sm:$0xff]
          %v8588 = vld [vmem:[#allocation9 + $0xd68] sm:$0xff]
          %v8589 = vld [vmem:[#allocation9 + $0xd70] sm:$0xff]
          %v8590 = vld [vmem:[#allocation9 + $0xd78] sm:$0xff]
          %v8591 = vld [vmem:[#allocation9 + $0xd80] sm:$0xff]
          %v8592 = vld [vmem:[#allocation9 + $0xd88] sm:$0xff]
          %v8593 = vld [vmem:[#allocation9 + $0xd90] sm:$0xff]
          %v8594 = vld [vmem:[#allocation9 + $0xd98] sm:$0xff]
          %v8595 = vld [vmem:[#allocation9 + $0xda0] sm:$0xff]
          %v8596 = vld [vmem:[#allocation9 + $0xda8] sm:$0xff]
          %v8597 = vld [vmem:[#allocation9 + $0xdb0] sm:$0xff]
          %v8598 = vld [vmem:[#allocation9 + $0xdb8] sm:$0xff]
          %v8599 = vld [vmem:[#allocation9 + $0xdc0] sm:$0xff]
          %v8600 = vld [vmem:[#allocation9 + $0xdc8] sm:$0xff]
          %v8601 = vld [vmem:[#allocation9 + $0xdd0] sm:$0xff]
          %v8602 = vld [vmem:[#allocation9 + $0xdd8] sm:$0xff]
          %v8603 = vld [vmem:[#allocation9 + $0xde0] sm:$0xff]
          %v8604 = vld [vmem:[#allocation9 + $0xde8] sm:$0xff]
          %v8605 = vld [vmem:[#allocation9 + $0xdf0] sm:$0xff]
          %v8606 = vld [vmem:[#allocation9 + $0xdf8] sm:$0xff]
          %v8607 = vld [vmem:[#allocation9 + $0xe00] sm:$0xff]
          %v8608 = vld [vmem:[#allocation9 + $0xe08] sm:$0xff]
          %v8609 = vld [vmem:[#allocation9 + $0xe10] sm:$0xff]
          %v8610 = vld [vmem:[#allocation9 + $0xe18] sm:$0xff]
          %v8611 = vld [vmem:[#allocation9 + $0xe20] sm:$0xff]
          %v8612 = vld [vmem:[#allocation9 + $0xe28] sm:$0xff]
          %v8613 = vld [vmem:[#allocation9 + $0xe30] sm:$0xff]
          %v8614 = vld [vmem:[#allocation9 + $0xe38] sm:$0xff]
          %v8615 = vld [vmem:[#allocation9 + $0xe40] sm:$0xff]
          %v8616 = vld [vmem:[#allocation9 + $0xe48] sm:$0xff]
          %v8617 = vld [vmem:[#allocation9 + $0xe50] sm:$0xff]
          %v8618 = vld [vmem:[#allocation9 + $0xe58] sm:$0xff]
          %v8619 = vld [vmem:[#allocation9 + $0xe60] sm:$0xff]
          %v8620 = vld [vmem:[#allocation9 + $0xe68] sm:$0xff]
          %v8621 = vld [vmem:[#allocation9 + $0xe70] sm:$0xff]
          %v8622 = vld [vmem:[#allocation9 + $0xe78] sm:$0xff]
          %v8623 = vld [vmem:[#allocation9 + $0xe80] sm:$0xff]
          %v8624 = vld [vmem:[#allocation9 + $0xe88] sm:$0xff]
          %v8625 = vld [vmem:[#allocation9 + $0xe90] sm:$0xff]
          %v8626 = vld [vmem:[#allocation9 + $0xe98] sm:$0xff]
          %v8627 = vld [vmem:[#allocation9 + $0xea0] sm:$0xff]
          %v8628 = vld [vmem:[#allocation9 + $0xea8] sm:$0xff]
          %v8629 = vld [vmem:[#allocation9 + $0xeb0] sm:$0xff]
          %v8630 = vld [vmem:[#allocation9 + $0xeb8] sm:$0xff]
          %v8631 = vld [vmem:[#allocation9 + $0xec0] sm:$0xff]
          %v8632 = vld [vmem:[#allocation9 + $0xec8] sm:$0xff]
          %v8633 = vld [vmem:[#allocation9 + $0xed0] sm:$0xff]
          %v8634 = vld [vmem:[#allocation9 + $0xed8] sm:$0xff]
          %v8635 = vld [vmem:[#allocation9 + $0xee0] sm:$0xff]
          %v8636 = vld [vmem:[#allocation9 + $0xee8] sm:$0xff]
          %v8637 = vld [vmem:[#allocation9 + $0xef0] sm:$0xff]
          %v8638 = vld [vmem:[#allocation9 + $0xef8] sm:$0xff]
          %v8639 = vld [vmem:[#allocation9 + $0xf00] sm:$0xff]
          %v8640 = vld [vmem:[#allocation9 + $0xf08] sm:$0xff]
          %v8641 = vld [vmem:[#allocation9 + $0xf10] sm:$0xff]
          %v8642 = vld [vmem:[#allocation9 + $0xf18] sm:$0xff]
          %v8643 = vld [vmem:[#allocation9 + $0xf20] sm:$0xff]
          %v8644 = vld [vmem:[#allocation9 + $0xf28] sm:$0xff]
          %v8645 = vld [vmem:[#allocation9 + $0xf30] sm:$0xff]
          %v8646 = vld [vmem:[#allocation9 + $0xf38] sm:$0xff]
          %v8647 = vld [vmem:[#allocation9 + $0xf40] sm:$0xff]
          %v8648 = vld [vmem:[#allocation9 + $0xf48] sm:$0xff]
          %v8649 = vld [vmem:[#allocation9 + $0xf50] sm:$0xff]
          %v8650 = vld [vmem:[#allocation9 + $0xf58] sm:$0xff]
          %v8651 = vld [vmem:[#allocation9 + $0xf60] sm:$0xff]
          %v8652 = vld [vmem:[#allocation9 + $0xf68] sm:$0xff]
          %v8653 = vld [vmem:[#allocation9 + $0xf70] sm:$0xff]
          %v8654 = vld [vmem:[#allocation9 + $0xf78] sm:$0xff]
          %v8655 = vld [vmem:[#allocation9 + $0xf80] sm:$0xff]
          %v8656 = vld [vmem:[#allocation9 + $0xf88] sm:$0xff]
          %v8657 = vld [vmem:[#allocation9 + $0xf90] sm:$0xff]
          %v8658 = vld [vmem:[#allocation9 + $0xf98] sm:$0xff]
          %v8659 = vld [vmem:[#allocation9 + $0xfa0] sm:$0xff]
          %v8660 = vld [vmem:[#allocation9 + $0xfa8] sm:$0xff]
          %v8661 = vld [vmem:[#allocation9 + $0xfb0] sm:$0xff]
          %v8662 = vld [vmem:[#allocation9 + $0xfb8] sm:$0xff]
          %v8663 = vld [vmem:[#allocation9 + $0xfc0] sm:$0xff]
          %v8664 = vld [vmem:[#allocation9 + $0xfc8] sm:$0xff]
          %v8665 = vld [vmem:[#allocation9 + $0xfd0] sm:$0xff]
          %v8666 = vld [vmem:[#allocation9 + $0xfd8] sm:$0xff]
          %v8667 = vld [vmem:[#allocation9 + $0xfe0] sm:$0xff]
          %v8668 = vld [vmem:[#allocation9 + $0xfe8] sm:$0xff]
          %v8669 = vld [vmem:[#allocation9 + $0xff0] sm:$0xff]
          %v8670 = vld [vmem:[#allocation9 + $0xff8] sm:$0xff]
          %v8671 = vld [vmem:[#allocation11] sm:$0xf]
          %v8673 = vlaneseq
          %v8674 = vshrl.u32 %v8673, 7
          %v8675 = vsub.s32 0, %v8674
          %v8676 = vrot.slane %v8671, %v8675
          %v8677 = vlaneseq
          %v8678 = vshrl.u32 %v8677, 7
          %v8679 = vsub.s32 1, %v8678
          %v8680 = vrot.slane %v8671, %v8679
          %v8681 = vlaneseq
          %v8682 = vshrl.u32 %v8681, 7
          %v8683 = vsub.s32 2, %v8682
          %v8684 = vrot.slane %v8671, %v8683
          %v8685 = vlaneseq
          %v8686 = vshrl.u32 %v8685, 7
          %v8687 = vsub.s32 3, %v8686
          %v8688 = vrot.slane %v8671, %v8687
          %v9205 = vunpack.c.l.b16 %v8159
          %v9206 = vunpack.c.h.b16 %v8159
          %v9207 = vunpack.c.l.b16 %v8160
          %v9208 = vunpack.c.h.b16 %v8160
          %v9209 = vunpack.c.l.b16 %v8161
          %v9210 = vunpack.c.h.b16 %v8161
          %v9211 = vunpack.c.l.b16 %v8162
          %v9212 = vunpack.c.h.b16 %v8162
          %v9213 = vunpack.c.l.b16 %v8163
          %v9214 = vunpack.c.h.b16 %v8163
          %v9215 = vunpack.c.l.b16 %v8164
          %v9216 = vunpack.c.h.b16 %v8164
          %v9217 = vunpack.c.l.b16 %v8165
          %v9218 = vunpack.c.h.b16 %v8165
          %v9219 = vunpack.c.l.b16 %v8166
          %v9220 = vunpack.c.h.b16 %v8166
          %v9221 = vunpack.c.l.b16 %v8167
          %v9222 = vunpack.c.h.b16 %v8167
          %v9223 = vunpack.c.l.b16 %v8168
          %v9224 = vunpack.c.h.b16 %v8168
          %v9225 = vunpack.c.l.b16 %v8169
          %v9226 = vunpack.c.h.b16 %v8169
          %v9227 = vunpack.c.l.b16 %v8170
          %v9228 = vunpack.c.h.b16 %v8170
          %v9229 = vunpack.c.l.b16 %v8171
          %v9230 = vunpack.c.h.b16 %v8171
          %v9231 = vunpack.c.l.b16 %v8172
          %v9232 = vunpack.c.h.b16 %v8172
          %v9233 = vunpack.c.l.b16 %v8173
          %v9234 = vunpack.c.h.b16 %v8173
          %v9235 = vunpack.c.l.b16 %v8174
          %v9236 = vunpack.c.h.b16 %v8174
          %v9237 = vunpack.c.l.b16 %v8175
          %v9238 = vunpack.c.h.b16 %v8175
          %v9239 = vunpack.c.l.b16 %v8176
          %v9240 = vunpack.c.h.b16 %v8176
          %v9241 = vunpack.c.l.b16 %v8177
          %v9242 = vunpack.c.h.b16 %v8177
          %v9243 = vunpack.c.l.b16 %v8178
          %v9244 = vunpack.c.h.b16 %v8178
          %v9245 = vunpack.c.l.b16 %v8179
          %v9246 = vunpack.c.h.b16 %v8179
          %v9247 = vunpack.c.l.b16 %v8180
          %v9248 = vunpack.c.h.b16 %v8180
          %v9249 = vunpack.c.l.b16 %v8181
          %v9250 = vunpack.c.h.b16 %v8181
          %v9251 = vunpack.c.l.b16 %v8182
          %v9252 = vunpack.c.h.b16 %v8182
          %v9253 = vunpack.c.l.b16 %v8183
          %v9254 = vunpack.c.h.b16 %v8183
          %v9255 = vunpack.c.l.b16 %v8184
          %v9256 = vunpack.c.h.b16 %v8184
          %v9257 = vunpack.c.l.b16 %v8185
          %v9258 = vunpack.c.h.b16 %v8185
          %v9259 = vunpack.c.l.b16 %v8186
          %v9260 = vunpack.c.h.b16 %v8186
          %v9261 = vunpack.c.l.b16 %v8187
          %v9262 = vunpack.c.h.b16 %v8187
          %v9263 = vunpack.c.l.b16 %v8188
          %v9264 = vunpack.c.h.b16 %v8188
          %v9265 = vunpack.c.l.b16 %v8189
          %v9266 = vunpack.c.h.b16 %v8189
          %v9267 = vunpack.c.l.b16 %v8190
          %v9268 = vunpack.c.h.b16 %v8190
          %v9269 = vunpack.c.l.b16 %v8191
          %v9270 = vunpack.c.h.b16 %v8191
          %v9271 = vunpack.c.l.b16 %v8192
          %v9272 = vunpack.c.h.b16 %v8192
          %v9273 = vunpack.c.l.b16 %v8193
          %v9274 = vunpack.c.h.b16 %v8193
          %v9275 = vunpack.c.l.b16 %v8194
          %v9276 = vunpack.c.h.b16 %v8194
          %v9277 = vunpack.c.l.b16 %v8195
          %v9278 = vunpack.c.h.b16 %v8195
          %v9279 = vunpack.c.l.b16 %v8196
          %v9280 = vunpack.c.h.b16 %v8196
          %v9281 = vunpack.c.l.b16 %v8197
          %v9282 = vunpack.c.h.b16 %v8197
          %v9283 = vunpack.c.l.b16 %v8198
          %v9284 = vunpack.c.h.b16 %v8198
          %v9285 = vunpack.c.l.b16 %v8199
          %v9286 = vunpack.c.h.b16 %v8199
          %v9287 = vunpack.c.l.b16 %v8200
          %v9288 = vunpack.c.h.b16 %v8200
          %v9289 = vunpack.c.l.b16 %v8201
          %v9290 = vunpack.c.h.b16 %v8201
          %v9291 = vunpack.c.l.b16 %v8202
          %v9292 = vunpack.c.h.b16 %v8202
          %v9293 = vunpack.c.l.b16 %v8203
          %v9294 = vunpack.c.h.b16 %v8203
          %v9295 = vunpack.c.l.b16 %v8204
          %v9296 = vunpack.c.h.b16 %v8204
          %v9297 = vunpack.c.l.b16 %v8205
          %v9298 = vunpack.c.h.b16 %v8205
          %v9299 = vunpack.c.l.b16 %v8206
          %v9300 = vunpack.c.h.b16 %v8206
          %v9301 = vunpack.c.l.b16 %v8207
          %v9302 = vunpack.c.h.b16 %v8207
          %v9303 = vunpack.c.l.b16 %v8208
          %v9304 = vunpack.c.h.b16 %v8208
          %v9305 = vunpack.c.l.b16 %v8209
          %v9306 = vunpack.c.h.b16 %v8209
          %v9307 = vunpack.c.l.b16 %v8210
          %v9308 = vunpack.c.h.b16 %v8210
          %v9309 = vunpack.c.l.b16 %v8211
          %v9310 = vunpack.c.h.b16 %v8211
          %v9311 = vunpack.c.l.b16 %v8212
          %v9312 = vunpack.c.h.b16 %v8212
          %v9313 = vunpack.c.l.b16 %v8213
          %v9314 = vunpack.c.h.b16 %v8213
          %v9315 = vunpack.c.l.b16 %v8214
          %v9316 = vunpack.c.h.b16 %v8214
          %v9317 = vunpack.c.l.b16 %v8215
          %v9318 = vunpack.c.h.b16 %v8215
          %v9319 = vunpack.c.l.b16 %v8216
          %v9320 = vunpack.c.h.b16 %v8216
          %v9321 = vunpack.c.l.b16 %v8217
          %v9322 = vunpack.c.h.b16 %v8217
          %v9323 = vunpack.c.l.b16 %v8218
          %v9324 = vunpack.c.h.b16 %v8218
          %v9325 = vunpack.c.l.b16 %v8219
          %v9326 = vunpack.c.h.b16 %v8219
          %v9327 = vunpack.c.l.b16 %v8220
          %v9328 = vunpack.c.h.b16 %v8220
          %v9329 = vunpack.c.l.b16 %v8221
          %v9330 = vunpack.c.h.b16 %v8221
          %v9331 = vunpack.c.l.b16 %v8222
          %v9332 = vunpack.c.h.b16 %v8222
          %v9333 = vunpack.c.l.b16 %v8223
          %v9334 = vunpack.c.h.b16 %v8223
          %v9335 = vunpack.c.l.b16 %v8224
          %v9336 = vunpack.c.h.b16 %v8224
          %v9337 = vunpack.c.l.b16 %v8225
          %v9338 = vunpack.c.h.b16 %v8225
          %v9339 = vunpack.c.l.b16 %v8226
          %v9340 = vunpack.c.h.b16 %v8226
          %v9341 = vunpack.c.l.b16 %v8227
          %v9342 = vunpack.c.h.b16 %v8227
          %v9343 = vunpack.c.l.b16 %v8228
          %v9344 = vunpack.c.h.b16 %v8228
          %v9345 = vunpack.c.l.b16 %v8229
          %v9346 = vunpack.c.h.b16 %v8229
          %v9347 = vunpack.c.l.b16 %v8230
          %v9348 = vunpack.c.h.b16 %v8230
          %v9349 = vunpack.c.l.b16 %v8231
          %v9350 = vunpack.c.h.b16 %v8231
          %v9351 = vunpack.c.l.b16 %v8232
          %v9352 = vunpack.c.h.b16 %v8232
          %v9353 = vunpack.c.l.b16 %v8233
          %v9354 = vunpack.c.h.b16 %v8233
          %v9355 = vunpack.c.l.b16 %v8234
          %v9356 = vunpack.c.h.b16 %v8234
          %v9357 = vunpack.c.l.b16 %v8235
          %v9358 = vunpack.c.h.b16 %v8235
          %v9359 = vunpack.c.l.b16 %v8236
          %v9360 = vunpack.c.h.b16 %v8236
          %v9361 = vunpack.c.l.b16 %v8237
          %v9362 = vunpack.c.h.b16 %v8237
          %v9363 = vunpack.c.l.b16 %v8238
          %v9364 = vunpack.c.h.b16 %v8238
          %v9365 = vunpack.c.l.b16 %v8239
          %v9366 = vunpack.c.h.b16 %v8239
          %v9367 = vunpack.c.l.b16 %v8240
          %v9368 = vunpack.c.h.b16 %v8240
          %v9369 = vunpack.c.l.b16 %v8241
          %v9370 = vunpack.c.h.b16 %v8241
          %v9371 = vunpack.c.l.b16 %v8242
          %v9372 = vunpack.c.h.b16 %v8242
          %v9373 = vunpack.c.l.b16 %v8243
          %v9374 = vunpack.c.h.b16 %v8243
          %v9375 = vunpack.c.l.b16 %v8244
          %v9376 = vunpack.c.h.b16 %v8244
          %v9377 = vunpack.c.l.b16 %v8245
          %v9378 = vunpack.c.h.b16 %v8245
          %v9379 = vunpack.c.l.b16 %v8246
          %v9380 = vunpack.c.h.b16 %v8246
          %v9381 = vunpack.c.l.b16 %v8247
          %v9382 = vunpack.c.h.b16 %v8247
          %v9383 = vunpack.c.l.b16 %v8248
          %v9384 = vunpack.c.h.b16 %v8248
          %v9385 = vunpack.c.l.b16 %v8249
          %v9386 = vunpack.c.h.b16 %v8249
          %v9387 = vunpack.c.l.b16 %v8250
          %v9388 = vunpack.c.h.b16 %v8250
          %v9389 = vunpack.c.l.b16 %v8251
          %v9390 = vunpack.c.h.b16 %v8251
          %v9391 = vunpack.c.l.b16 %v8252
          %v9392 = vunpack.c.h.b16 %v8252
          %v9393 = vunpack.c.l.b16 %v8253
          %v9394 = vunpack.c.h.b16 %v8253
          %v9395 = vunpack.c.l.b16 %v8254
          %v9396 = vunpack.c.h.b16 %v8254
          %v9397 = vunpack.c.l.b16 %v8255
          %v9398 = vunpack.c.h.b16 %v8255
          %v9399 = vunpack.c.l.b16 %v8256
          %v9400 = vunpack.c.h.b16 %v8256
          %v9401 = vunpack.c.l.b16 %v8257
          %v9402 = vunpack.c.h.b16 %v8257
          %v9403 = vunpack.c.l.b16 %v8258
          %v9404 = vunpack.c.h.b16 %v8258
          %v9405 = vunpack.c.l.b16 %v8259
          %v9406 = vunpack.c.h.b16 %v8259
          %v9407 = vunpack.c.l.b16 %v8260
          %v9408 = vunpack.c.h.b16 %v8260
          %v9409 = vunpack.c.l.b16 %v8261
          %v9410 = vunpack.c.h.b16 %v8261
          %v9411 = vunpack.c.l.b16 %v8262
          %v9412 = vunpack.c.h.b16 %v8262
          %v9413 = vunpack.c.l.b16 %v8263
          %v9414 = vunpack.c.h.b16 %v8263
          %v9415 = vunpack.c.l.b16 %v8264
          %v9416 = vunpack.c.h.b16 %v8264
          %v9417 = vunpack.c.l.b16 %v8265
          %v9418 = vunpack.c.h.b16 %v8265
          %v9419 = vunpack.c.l.b16 %v8266
          %v9420 = vunpack.c.h.b16 %v8266
          %v9421 = vunpack.c.l.b16 %v8267
          %v9422 = vunpack.c.h.b16 %v8267
          %v9423 = vunpack.c.l.b16 %v8268
          %v9424 = vunpack.c.h.b16 %v8268
          %v9425 = vunpack.c.l.b16 %v8269
          %v9426 = vunpack.c.h.b16 %v8269
          %v9427 = vunpack.c.l.b16 %v8270
          %v9428 = vunpack.c.h.b16 %v8270
          %v9429 = vunpack.c.l.b16 %v8271
          %v9430 = vunpack.c.h.b16 %v8271
          %v9431 = vunpack.c.l.b16 %v8272
          %v9432 = vunpack.c.h.b16 %v8272
          %v9433 = vunpack.c.l.b16 %v8273
          %v9434 = vunpack.c.h.b16 %v8273
          %v9435 = vunpack.c.l.b16 %v8274
          %v9436 = vunpack.c.h.b16 %v8274
          %v9437 = vunpack.c.l.b16 %v8275
          %v9438 = vunpack.c.h.b16 %v8275
          %v9439 = vunpack.c.l.b16 %v8276
          %v9440 = vunpack.c.h.b16 %v8276
          %v9441 = vunpack.c.l.b16 %v8277
          %v9442 = vunpack.c.h.b16 %v8277
          %v9443 = vunpack.c.l.b16 %v8278
          %v9444 = vunpack.c.h.b16 %v8278
          %v9445 = vunpack.c.l.b16 %v8279
          %v9446 = vunpack.c.h.b16 %v8279
          %v9447 = vunpack.c.l.b16 %v8280
          %v9448 = vunpack.c.h.b16 %v8280
          %v9449 = vunpack.c.l.b16 %v8281
          %v9450 = vunpack.c.h.b16 %v8281
          %v9451 = vunpack.c.l.b16 %v8282
          %v9452 = vunpack.c.h.b16 %v8282
          %v9453 = vunpack.c.l.b16 %v8283
          %v9454 = vunpack.c.h.b16 %v8283
          %v9455 = vunpack.c.l.b16 %v8284
          %v9456 = vunpack.c.h.b16 %v8284
          %v9457 = vunpack.c.l.b16 %v8285
          %v9458 = vunpack.c.h.b16 %v8285
          %v9459 = vunpack.c.l.b16 %v8286
          %v9460 = vunpack.c.h.b16 %v8286
          %v9461 = vunpack.c.l.b16 %v8287
          %v9462 = vunpack.c.h.b16 %v8287
          %v9463 = vunpack.c.l.b16 %v8288
          %v9464 = vunpack.c.h.b16 %v8288
          %v9465 = vunpack.c.l.b16 %v8289
          %v9466 = vunpack.c.h.b16 %v8289
          %v9467 = vunpack.c.l.b16 %v8290
          %v9468 = vunpack.c.h.b16 %v8290
          %v9469 = vunpack.c.l.b16 %v8291
          %v9470 = vunpack.c.h.b16 %v8291
          %v9471 = vunpack.c.l.b16 %v8292
          %v9472 = vunpack.c.h.b16 %v8292
          %v9473 = vunpack.c.l.b16 %v8293
          %v9474 = vunpack.c.h.b16 %v8293
          %v9475 = vunpack.c.l.b16 %v8294
          %v9476 = vunpack.c.h.b16 %v8294
          %v9477 = vunpack.c.l.b16 %v8295
          %v9478 = vunpack.c.h.b16 %v8295
          %v9479 = vunpack.c.l.b16 %v8296
          %v9480 = vunpack.c.h.b16 %v8296
          %v9481 = vunpack.c.l.b16 %v8297
          %v9482 = vunpack.c.h.b16 %v8297
          %v9483 = vunpack.c.l.b16 %v8298
          %v9484 = vunpack.c.h.b16 %v8298
          %v9485 = vunpack.c.l.b16 %v8299
          %v9486 = vunpack.c.h.b16 %v8299
          %v9487 = vunpack.c.l.b16 %v8300
          %v9488 = vunpack.c.h.b16 %v8300
          %v9489 = vunpack.c.l.b16 %v8301
          %v9490 = vunpack.c.h.b16 %v8301
          %v9491 = vunpack.c.l.b16 %v8302
          %v9492 = vunpack.c.h.b16 %v8302
          %v9493 = vunpack.c.l.b16 %v8303
          %v9494 = vunpack.c.h.b16 %v8303
          %v9495 = vunpack.c.l.b16 %v8304
          %v9496 = vunpack.c.h.b16 %v8304
          %v9497 = vunpack.c.l.b16 %v8305
          %v9498 = vunpack.c.h.b16 %v8305
          %v9499 = vunpack.c.l.b16 %v8306
          %v9500 = vunpack.c.h.b16 %v8306
          %v9501 = vunpack.c.l.b16 %v8307
          %v9502 = vunpack.c.h.b16 %v8307
          %v9503 = vunpack.c.l.b16 %v8308
          %v9504 = vunpack.c.h.b16 %v8308
          %v9505 = vunpack.c.l.b16 %v8309
          %v9506 = vunpack.c.h.b16 %v8309
          %v9507 = vunpack.c.l.b16 %v8310
          %v9508 = vunpack.c.h.b16 %v8310
          %v9509 = vunpack.c.l.b16 %v8311
          %v9510 = vunpack.c.h.b16 %v8311
          %v9511 = vunpack.c.l.b16 %v8312
          %v9512 = vunpack.c.h.b16 %v8312
          %v9513 = vunpack.c.l.b16 %v8313
          %v9514 = vunpack.c.h.b16 %v8313
          %v9515 = vunpack.c.l.b16 %v8314
          %v9516 = vunpack.c.h.b16 %v8314
          %v9517 = vunpack.c.l.b16 %v8315
          %v9518 = vunpack.c.h.b16 %v8315
          %v9519 = vunpack.c.l.b16 %v8316
          %v9520 = vunpack.c.h.b16 %v8316
          %v9521 = vunpack.c.l.b16 %v8317
          %v9522 = vunpack.c.h.b16 %v8317
          %v9523 = vunpack.c.l.b16 %v8318
          %v9524 = vunpack.c.h.b16 %v8318
          %v9525 = vunpack.c.l.b16 %v8319
          %v9526 = vunpack.c.h.b16 %v8319
          %v9527 = vunpack.c.l.b16 %v8320
          %v9528 = vunpack.c.h.b16 %v8320
          %v9529 = vunpack.c.l.b16 %v8321
          %v9530 = vunpack.c.h.b16 %v8321
          %v9531 = vunpack.c.l.b16 %v8322
          %v9532 = vunpack.c.h.b16 %v8322
          %v9533 = vunpack.c.l.b16 %v8323
          %v9534 = vunpack.c.h.b16 %v8323
          %v9535 = vunpack.c.l.b16 %v8324
          %v9536 = vunpack.c.h.b16 %v8324
          %v9537 = vunpack.c.l.b16 %v8325
          %v9538 = vunpack.c.h.b16 %v8325
          %v9539 = vunpack.c.l.b16 %v8326
          %v9540 = vunpack.c.h.b16 %v8326
          %v9541 = vunpack.c.l.b16 %v8327
          %v9542 = vunpack.c.h.b16 %v8327
          %v9543 = vunpack.c.l.b16 %v8328
          %v9544 = vunpack.c.h.b16 %v8328
          %v9545 = vunpack.c.l.b16 %v8329
          %v9546 = vunpack.c.h.b16 %v8329
          %v9547 = vunpack.c.l.b16 %v8330
          %v9548 = vunpack.c.h.b16 %v8330
          %v9549 = vunpack.c.l.b16 %v8331
          %v9550 = vunpack.c.h.b16 %v8331
          %v9551 = vunpack.c.l.b16 %v8332
          %v9552 = vunpack.c.h.b16 %v8332
          %v9553 = vunpack.c.l.b16 %v8333
          %v9554 = vunpack.c.h.b16 %v8333
          %v9555 = vunpack.c.l.b16 %v8334
          %v9556 = vunpack.c.h.b16 %v8334
          %v9557 = vunpack.c.l.b16 %v8335
          %v9558 = vunpack.c.h.b16 %v8335
          %v9559 = vunpack.c.l.b16 %v8336
          %v9560 = vunpack.c.h.b16 %v8336
          %v9561 = vunpack.c.l.b16 %v8337
          %v9562 = vunpack.c.h.b16 %v8337
          %v9563 = vunpack.c.l.b16 %v8338
          %v9564 = vunpack.c.h.b16 %v8338
          %v9565 = vunpack.c.l.b16 %v8339
          %v9566 = vunpack.c.h.b16 %v8339
          %v9567 = vunpack.c.l.b16 %v8340
          %v9568 = vunpack.c.h.b16 %v8340
          %v9569 = vunpack.c.l.b16 %v8341
          %v9570 = vunpack.c.h.b16 %v8341
          %v9571 = vunpack.c.l.b16 %v8342
          %v9572 = vunpack.c.h.b16 %v8342
          %v9573 = vunpack.c.l.b16 %v8343
          %v9574 = vunpack.c.h.b16 %v8343
          %v9575 = vunpack.c.l.b16 %v8344
          %v9576 = vunpack.c.h.b16 %v8344
          %v9577 = vunpack.c.l.b16 %v8345
          %v9578 = vunpack.c.h.b16 %v8345
          %v9579 = vunpack.c.l.b16 %v8346
          %v9580 = vunpack.c.h.b16 %v8346
          %v9581 = vunpack.c.l.b16 %v8347
          %v9582 = vunpack.c.h.b16 %v8347
          %v9583 = vunpack.c.l.b16 %v8348
          %v9584 = vunpack.c.h.b16 %v8348
          %v9585 = vunpack.c.l.b16 %v8349
          %v9586 = vunpack.c.h.b16 %v8349
          %v9587 = vunpack.c.l.b16 %v8350
          %v9588 = vunpack.c.h.b16 %v8350
          %v9589 = vunpack.c.l.b16 %v8351
          %v9590 = vunpack.c.h.b16 %v8351
          %v9591 = vunpack.c.l.b16 %v8352
          %v9592 = vunpack.c.h.b16 %v8352
          %v9593 = vunpack.c.l.b16 %v8353
          %v9594 = vunpack.c.h.b16 %v8353
          %v9595 = vunpack.c.l.b16 %v8354
          %v9596 = vunpack.c.h.b16 %v8354
          %v9597 = vunpack.c.l.b16 %v8355
          %v9598 = vunpack.c.h.b16 %v8355
          %v9599 = vunpack.c.l.b16 %v8356
          %v9600 = vunpack.c.h.b16 %v8356
          %v9601 = vunpack.c.l.b16 %v8357
          %v9602 = vunpack.c.h.b16 %v8357
          %v9603 = vunpack.c.l.b16 %v8358
          %v9604 = vunpack.c.h.b16 %v8358
          %v9605 = vunpack.c.l.b16 %v8359
          %v9606 = vunpack.c.h.b16 %v8359
          %v9607 = vunpack.c.l.b16 %v8360
          %v9608 = vunpack.c.h.b16 %v8360
          %v9609 = vunpack.c.l.b16 %v8361
          %v9610 = vunpack.c.h.b16 %v8361
          %v9611 = vunpack.c.l.b16 %v8362
          %v9612 = vunpack.c.h.b16 %v8362
          %v9613 = vunpack.c.l.b16 %v8363
          %v9614 = vunpack.c.h.b16 %v8363
          %v9615 = vunpack.c.l.b16 %v8364
          %v9616 = vunpack.c.h.b16 %v8364
          %v9617 = vunpack.c.l.b16 %v8365
          %v9618 = vunpack.c.h.b16 %v8365
          %v9619 = vunpack.c.l.b16 %v8366
          %v9620 = vunpack.c.h.b16 %v8366
          %v9621 = vunpack.c.l.b16 %v8367
          %v9622 = vunpack.c.h.b16 %v8367
          %v9623 = vunpack.c.l.b16 %v8368
          %v9624 = vunpack.c.h.b16 %v8368
          %v9625 = vunpack.c.l.b16 %v8369
          %v9626 = vunpack.c.h.b16 %v8369
          %v9627 = vunpack.c.l.b16 %v8370
          %v9628 = vunpack.c.h.b16 %v8370
          %v9629 = vunpack.c.l.b16 %v8371
          %v9630 = vunpack.c.h.b16 %v8371
          %v9631 = vunpack.c.l.b16 %v8372
          %v9632 = vunpack.c.h.b16 %v8372
          %v9633 = vunpack.c.l.b16 %v8373
          %v9634 = vunpack.c.h.b16 %v8373
          %v9635 = vunpack.c.l.b16 %v8374
          %v9636 = vunpack.c.h.b16 %v8374
          %v9637 = vunpack.c.l.b16 %v8375
          %v9638 = vunpack.c.h.b16 %v8375
          %v9639 = vunpack.c.l.b16 %v8376
          %v9640 = vunpack.c.h.b16 %v8376
          %v9641 = vunpack.c.l.b16 %v8377
          %v9642 = vunpack.c.h.b16 %v8377
          %v9643 = vunpack.c.l.b16 %v8378
          %v9644 = vunpack.c.h.b16 %v8378
          %v9645 = vunpack.c.l.b16 %v8379
          %v9646 = vunpack.c.h.b16 %v8379
          %v9647 = vunpack.c.l.b16 %v8380
          %v9648 = vunpack.c.h.b16 %v8380
          %v9649 = vunpack.c.l.b16 %v8381
          %v9650 = vunpack.c.h.b16 %v8381
          %v9651 = vunpack.c.l.b16 %v8382
          %v9652 = vunpack.c.h.b16 %v8382
          %v9653 = vunpack.c.l.b16 %v8383
          %v9654 = vunpack.c.h.b16 %v8383
          %v9655 = vunpack.c.l.b16 %v8384
          %v9656 = vunpack.c.h.b16 %v8384
          %v9657 = vunpack.c.l.b16 %v8385
          %v9658 = vunpack.c.h.b16 %v8385
          %v9659 = vunpack.c.l.b16 %v8386
          %v9660 = vunpack.c.h.b16 %v8386
          %v9661 = vunpack.c.l.b16 %v8387
          %v9662 = vunpack.c.h.b16 %v8387
          %v9663 = vunpack.c.l.b16 %v8388
          %v9664 = vunpack.c.h.b16 %v8388
          %v9665 = vunpack.c.l.b16 %v8389
          %v9666 = vunpack.c.h.b16 %v8389
          %v9667 = vunpack.c.l.b16 %v8390
          %v9668 = vunpack.c.h.b16 %v8390
          %v9669 = vunpack.c.l.b16 %v8391
          %v9670 = vunpack.c.h.b16 %v8391
          %v9671 = vunpack.c.l.b16 %v8392
          %v9672 = vunpack.c.h.b16 %v8392
          %v9673 = vunpack.c.l.b16 %v8393
          %v9674 = vunpack.c.h.b16 %v8393
          %v9675 = vunpack.c.l.b16 %v8394
          %v9676 = vunpack.c.h.b16 %v8394
          %v9677 = vunpack.c.l.b16 %v8395
          %v9678 = vunpack.c.h.b16 %v8395
          %v9679 = vunpack.c.l.b16 %v8396
          %v9680 = vunpack.c.h.b16 %v8396
          %v9681 = vunpack.c.l.b16 %v8397
          %v9682 = vunpack.c.h.b16 %v8397
          %v9683 = vunpack.c.l.b16 %v8398
          %v9684 = vunpack.c.h.b16 %v8398
          %v9685 = vunpack.c.l.b16 %v8399
          %v9686 = vunpack.c.h.b16 %v8399
          %v9687 = vunpack.c.l.b16 %v8400
          %v9688 = vunpack.c.h.b16 %v8400
          %v9689 = vunpack.c.l.b16 %v8401
          %v9690 = vunpack.c.h.b16 %v8401
          %v9691 = vunpack.c.l.b16 %v8402
          %v9692 = vunpack.c.h.b16 %v8402
          %v9693 = vunpack.c.l.b16 %v8403
          %v9694 = vunpack.c.h.b16 %v8403
          %v9695 = vunpack.c.l.b16 %v8404
          %v9696 = vunpack.c.h.b16 %v8404
          %v9697 = vunpack.c.l.b16 %v8405
          %v9698 = vunpack.c.h.b16 %v8405
          %v9699 = vunpack.c.l.b16 %v8406
          %v9700 = vunpack.c.h.b16 %v8406
          %v9701 = vunpack.c.l.b16 %v8407
          %v9702 = vunpack.c.h.b16 %v8407
          %v9703 = vunpack.c.l.b16 %v8408
          %v9704 = vunpack.c.h.b16 %v8408
          %v9705 = vunpack.c.l.b16 %v8409
          %v9706 = vunpack.c.h.b16 %v8409
          %v9707 = vunpack.c.l.b16 %v8410
          %v9708 = vunpack.c.h.b16 %v8410
          %v9709 = vunpack.c.l.b16 %v8411
          %v9710 = vunpack.c.h.b16 %v8411
          %v9711 = vunpack.c.l.b16 %v8412
          %v9712 = vunpack.c.h.b16 %v8412
          %v9713 = vunpack.c.l.b16 %v8413
          %v9714 = vunpack.c.h.b16 %v8413
          %v9715 = vunpack.c.l.b16 %v8414
          %v9716 = vunpack.c.h.b16 %v8414
          %v9717 = vunpack.c.l.b16 %v8415
          %v9718 = vunpack.c.h.b16 %v8415
          %v9719 = vunpack.c.l.b16 %v8416
          %v9720 = vunpack.c.h.b16 %v8416
          %v9721 = vunpack.c.l.b16 %v8417
          %v9722 = vunpack.c.h.b16 %v8417
          %v9723 = vunpack.c.l.b16 %v8418
          %v9724 = vunpack.c.h.b16 %v8418
          %v9725 = vunpack.c.l.b16 %v8419
          %v9726 = vunpack.c.h.b16 %v8419
          %v9727 = vunpack.c.l.b16 %v8420
          %v9728 = vunpack.c.h.b16 %v8420
          %v9729 = vunpack.c.l.b16 %v8421
          %v9730 = vunpack.c.h.b16 %v8421
          %v9731 = vunpack.c.l.b16 %v8422
          %v9732 = vunpack.c.h.b16 %v8422
          %v9733 = vunpack.c.l.b16 %v8423
          %v9734 = vunpack.c.h.b16 %v8423
          %v9735 = vunpack.c.l.b16 %v8424
          %v9736 = vunpack.c.h.b16 %v8424
          %v9737 = vunpack.c.l.b16 %v8425
          %v9738 = vunpack.c.h.b16 %v8425
          %v9739 = vunpack.c.l.b16 %v8426
          %v9740 = vunpack.c.h.b16 %v8426
          %v9741 = vunpack.c.l.b16 %v8427
          %v9742 = vunpack.c.h.b16 %v8427
          %v9743 = vunpack.c.l.b16 %v8428
          %v9744 = vunpack.c.h.b16 %v8428
          %v9745 = vunpack.c.l.b16 %v8429
          %v9746 = vunpack.c.h.b16 %v8429
          %v9747 = vunpack.c.l.b16 %v8430
          %v9748 = vunpack.c.h.b16 %v8430
          %v9749 = vunpack.c.l.b16 %v8431
          %v9750 = vunpack.c.h.b16 %v8431
          %v9751 = vunpack.c.l.b16 %v8432
          %v9752 = vunpack.c.h.b16 %v8432
          %v9753 = vunpack.c.l.b16 %v8433
          %v9754 = vunpack.c.h.b16 %v8433
          %v9755 = vunpack.c.l.b16 %v8434
          %v9756 = vunpack.c.h.b16 %v8434
          %v9757 = vunpack.c.l.b16 %v8435
          %v9758 = vunpack.c.h.b16 %v8435
          %v9759 = vunpack.c.l.b16 %v8436
          %v9760 = vunpack.c.h.b16 %v8436
          %v9761 = vunpack.c.l.b16 %v8437
          %v9762 = vunpack.c.h.b16 %v8437
          %v9763 = vunpack.c.l.b16 %v8438
          %v9764 = vunpack.c.h.b16 %v8438
          %v9765 = vunpack.c.l.b16 %v8439
          %v9766 = vunpack.c.h.b16 %v8439
          %v9767 = vunpack.c.l.b16 %v8440
          %v9768 = vunpack.c.h.b16 %v8440
          %v9769 = vunpack.c.l.b16 %v8441
          %v9770 = vunpack.c.h.b16 %v8441
          %v9771 = vunpack.c.l.b16 %v8442
          %v9772 = vunpack.c.h.b16 %v8442
          %v9773 = vunpack.c.l.b16 %v8443
          %v9774 = vunpack.c.h.b16 %v8443
          %v9775 = vunpack.c.l.b16 %v8444
          %v9776 = vunpack.c.h.b16 %v8444
          %v9777 = vunpack.c.l.b16 %v8445
          %v9778 = vunpack.c.h.b16 %v8445
          %v9779 = vunpack.c.l.b16 %v8446
          %v9780 = vunpack.c.h.b16 %v8446
          %v9781 = vunpack.c.l.b16 %v8447
          %v9782 = vunpack.c.h.b16 %v8447
          %v9783 = vunpack.c.l.b16 %v8448
          %v9784 = vunpack.c.h.b16 %v8448
          %v9785 = vunpack.c.l.b16 %v8449
          %v9786 = vunpack.c.h.b16 %v8449
          %v9787 = vunpack.c.l.b16 %v8450
          %v9788 = vunpack.c.h.b16 %v8450
          %v9789 = vunpack.c.l.b16 %v8451
          %v9790 = vunpack.c.h.b16 %v8451
          %v9791 = vunpack.c.l.b16 %v8452
          %v9792 = vunpack.c.h.b16 %v8452
          %v9793 = vunpack.c.l.b16 %v8453
          %v9794 = vunpack.c.h.b16 %v8453
          %v9795 = vunpack.c.l.b16 %v8454
          %v9796 = vunpack.c.h.b16 %v8454
          %v9797 = vunpack.c.l.b16 %v8455
          %v9798 = vunpack.c.h.b16 %v8455
          %v9799 = vunpack.c.l.b16 %v8456
          %v9800 = vunpack.c.h.b16 %v8456
          %v9801 = vunpack.c.l.b16 %v8457
          %v9802 = vunpack.c.h.b16 %v8457
          %v9803 = vunpack.c.l.b16 %v8458
          %v9804 = vunpack.c.h.b16 %v8458
          %v9805 = vunpack.c.l.b16 %v8459
          %v9806 = vunpack.c.h.b16 %v8459
          %v9807 = vunpack.c.l.b16 %v8460
          %v9808 = vunpack.c.h.b16 %v8460
          %v9809 = vunpack.c.l.b16 %v8461
          %v9810 = vunpack.c.h.b16 %v8461
          %v9811 = vunpack.c.l.b16 %v8462
          %v9812 = vunpack.c.h.b16 %v8462
          %v9813 = vunpack.c.l.b16 %v8463
          %v9814 = vunpack.c.h.b16 %v8463
          %v9815 = vunpack.c.l.b16 %v8464
          %v9816 = vunpack.c.h.b16 %v8464
          %v9817 = vunpack.c.l.b16 %v8465
          %v9818 = vunpack.c.h.b16 %v8465
          %v9819 = vunpack.c.l.b16 %v8466
          %v9820 = vunpack.c.h.b16 %v8466
          %v9821 = vunpack.c.l.b16 %v8467
          %v9822 = vunpack.c.h.b16 %v8467
          %v9823 = vunpack.c.l.b16 %v8468
          %v9824 = vunpack.c.h.b16 %v8468
          %v9825 = vunpack.c.l.b16 %v8469
          %v9826 = vunpack.c.h.b16 %v8469
          %v9827 = vunpack.c.l.b16 %v8470
          %v9828 = vunpack.c.h.b16 %v8470
          %v9829 = vunpack.c.l.b16 %v8471
          %v9830 = vunpack.c.h.b16 %v8471
          %v9831 = vunpack.c.l.b16 %v8472
          %v9832 = vunpack.c.h.b16 %v8472
          %v9833 = vunpack.c.l.b16 %v8473
          %v9834 = vunpack.c.h.b16 %v8473
          %v9835 = vunpack.c.l.b16 %v8474
          %v9836 = vunpack.c.h.b16 %v8474
          %v9837 = vunpack.c.l.b16 %v8475
          %v9838 = vunpack.c.h.b16 %v8475
          %v9839 = vunpack.c.l.b16 %v8476
          %v9840 = vunpack.c.h.b16 %v8476
          %v9841 = vunpack.c.l.b16 %v8477
          %v9842 = vunpack.c.h.b16 %v8477
          %v9843 = vunpack.c.l.b16 %v8478
          %v9844 = vunpack.c.h.b16 %v8478
          %v9845 = vunpack.c.l.b16 %v8479
          %v9846 = vunpack.c.h.b16 %v8479
          %v9847 = vunpack.c.l.b16 %v8480
          %v9848 = vunpack.c.h.b16 %v8480
          %v9849 = vunpack.c.l.b16 %v8481
          %v9850 = vunpack.c.h.b16 %v8481
          %v9851 = vunpack.c.l.b16 %v8482
          %v9852 = vunpack.c.h.b16 %v8482
          %v9853 = vunpack.c.l.b16 %v8483
          %v9854 = vunpack.c.h.b16 %v8483
          %v9855 = vunpack.c.l.b16 %v8484
          %v9856 = vunpack.c.h.b16 %v8484
          %v9857 = vunpack.c.l.b16 %v8485
          %v9858 = vunpack.c.h.b16 %v8485
          %v9859 = vunpack.c.l.b16 %v8486
          %v9860 = vunpack.c.h.b16 %v8486
          %v9861 = vunpack.c.l.b16 %v8487
          %v9862 = vunpack.c.h.b16 %v8487
          %v9863 = vunpack.c.l.b16 %v8488
          %v9864 = vunpack.c.h.b16 %v8488
          %v9865 = vunpack.c.l.b16 %v8489
          %v9866 = vunpack.c.h.b16 %v8489
          %v9867 = vunpack.c.l.b16 %v8490
          %v9868 = vunpack.c.h.b16 %v8490
          %v9869 = vunpack.c.l.b16 %v8491
          %v9870 = vunpack.c.h.b16 %v8491
          %v9871 = vunpack.c.l.b16 %v8492
          %v9872 = vunpack.c.h.b16 %v8492
          %v9873 = vunpack.c.l.b16 %v8493
          %v9874 = vunpack.c.h.b16 %v8493
          %v9875 = vunpack.c.l.b16 %v8494
          %v9876 = vunpack.c.h.b16 %v8494
          %v9877 = vunpack.c.l.b16 %v8495
          %v9878 = vunpack.c.h.b16 %v8495
          %v9879 = vunpack.c.l.b16 %v8496
          %v9880 = vunpack.c.h.b16 %v8496
          %v9881 = vunpack.c.l.b16 %v8497
          %v9882 = vunpack.c.h.b16 %v8497
          %v9883 = vunpack.c.l.b16 %v8498
          %v9884 = vunpack.c.h.b16 %v8498
          %v9885 = vunpack.c.l.b16 %v8499
          %v9886 = vunpack.c.h.b16 %v8499
          %v9887 = vunpack.c.l.b16 %v8500
          %v9888 = vunpack.c.h.b16 %v8500
          %v9889 = vunpack.c.l.b16 %v8501
          %v9890 = vunpack.c.h.b16 %v8501
          %v9891 = vunpack.c.l.b16 %v8502
          %v9892 = vunpack.c.h.b16 %v8502
          %v9893 = vunpack.c.l.b16 %v8503
          %v9894 = vunpack.c.h.b16 %v8503
          %v9895 = vunpack.c.l.b16 %v8504
          %v9896 = vunpack.c.h.b16 %v8504
          %v9897 = vunpack.c.l.b16 %v8505
          %v9898 = vunpack.c.h.b16 %v8505
          %v9899 = vunpack.c.l.b16 %v8506
          %v9900 = vunpack.c.h.b16 %v8506
          %v9901 = vunpack.c.l.b16 %v8507
          %v9902 = vunpack.c.h.b16 %v8507
          %v9903 = vunpack.c.l.b16 %v8508
          %v9904 = vunpack.c.h.b16 %v8508
          %v9905 = vunpack.c.l.b16 %v8509
          %v9906 = vunpack.c.h.b16 %v8509
          %v9907 = vunpack.c.l.b16 %v8510
          %v9908 = vunpack.c.h.b16 %v8510
          %v9909 = vunpack.c.l.b16 %v8511
          %v9910 = vunpack.c.h.b16 %v8511
          %v9911 = vunpack.c.l.b16 %v8512
          %v9912 = vunpack.c.h.b16 %v8512
          %v9913 = vunpack.c.l.b16 %v8513
          %v9914 = vunpack.c.h.b16 %v8513
          %v9915 = vunpack.c.l.b16 %v8514
          %v9916 = vunpack.c.h.b16 %v8514
          %v9917 = vunpack.c.l.b16 %v8515
          %v9918 = vunpack.c.h.b16 %v8515
          %v9919 = vunpack.c.l.b16 %v8516
          %v9920 = vunpack.c.h.b16 %v8516
          %v9921 = vunpack.c.l.b16 %v8517
          %v9922 = vunpack.c.h.b16 %v8517
          %v9923 = vunpack.c.l.b16 %v8518
          %v9924 = vunpack.c.h.b16 %v8518
          %v9925 = vunpack.c.l.b16 %v8519
          %v9926 = vunpack.c.h.b16 %v8519
          %v9927 = vunpack.c.l.b16 %v8520
          %v9928 = vunpack.c.h.b16 %v8520
          %v9929 = vunpack.c.l.b16 %v8521
          %v9930 = vunpack.c.h.b16 %v8521
          %v9931 = vunpack.c.l.b16 %v8522
          %v9932 = vunpack.c.h.b16 %v8522
          %v9933 = vunpack.c.l.b16 %v8523
          %v9934 = vunpack.c.h.b16 %v8523
          %v9935 = vunpack.c.l.b16 %v8524
          %v9936 = vunpack.c.h.b16 %v8524
          %v9937 = vunpack.c.l.b16 %v8525
          %v9938 = vunpack.c.h.b16 %v8525
          %v9939 = vunpack.c.l.b16 %v8526
          %v9940 = vunpack.c.h.b16 %v8526
          %v9941 = vunpack.c.l.b16 %v8527
          %v9942 = vunpack.c.h.b16 %v8527
          %v9943 = vunpack.c.l.b16 %v8528
          %v9944 = vunpack.c.h.b16 %v8528
          %v9945 = vunpack.c.l.b16 %v8529
          %v9946 = vunpack.c.h.b16 %v8529
          %v9947 = vunpack.c.l.b16 %v8530
          %v9948 = vunpack.c.h.b16 %v8530
          %v9949 = vunpack.c.l.b16 %v8531
          %v9950 = vunpack.c.h.b16 %v8531
          %v9951 = vunpack.c.l.b16 %v8532
          %v9952 = vunpack.c.h.b16 %v8532
          %v9953 = vunpack.c.l.b16 %v8533
          %v9954 = vunpack.c.h.b16 %v8533
          %v9955 = vunpack.c.l.b16 %v8534
          %v9956 = vunpack.c.h.b16 %v8534
          %v9957 = vunpack.c.l.b16 %v8535
          %v9958 = vunpack.c.h.b16 %v8535
          %v9959 = vunpack.c.l.b16 %v8536
          %v9960 = vunpack.c.h.b16 %v8536
          %v9961 = vunpack.c.l.b16 %v8537
          %v9962 = vunpack.c.h.b16 %v8537
          %v9963 = vunpack.c.l.b16 %v8538
          %v9964 = vunpack.c.h.b16 %v8538
          %v9965 = vunpack.c.l.b16 %v8539
          %v9966 = vunpack.c.h.b16 %v8539
          %v9967 = vunpack.c.l.b16 %v8540
          %v9968 = vunpack.c.h.b16 %v8540
          %v9969 = vunpack.c.l.b16 %v8541
          %v9970 = vunpack.c.h.b16 %v8541
          %v9971 = vunpack.c.l.b16 %v8542
          %v9972 = vunpack.c.h.b16 %v8542
          %v9973 = vunpack.c.l.b16 %v8543
          %v9974 = vunpack.c.h.b16 %v8543
          %v9975 = vunpack.c.l.b16 %v8544
          %v9976 = vunpack.c.h.b16 %v8544
          %v9977 = vunpack.c.l.b16 %v8545
          %v9978 = vunpack.c.h.b16 %v8545
          %v9979 = vunpack.c.l.b16 %v8546
          %v9980 = vunpack.c.h.b16 %v8546
          %v9981 = vunpack.c.l.b16 %v8547
          %v9982 = vunpack.c.h.b16 %v8547
          %v9983 = vunpack.c.l.b16 %v8548
          %v9984 = vunpack.c.h.b16 %v8548
          %v9985 = vunpack.c.l.b16 %v8549
          %v9986 = vunpack.c.h.b16 %v8549
          %v9987 = vunpack.c.l.b16 %v8550
          %v9988 = vunpack.c.h.b16 %v8550
          %v9989 = vunpack.c.l.b16 %v8551
          %v9990 = vunpack.c.h.b16 %v8551
          %v9991 = vunpack.c.l.b16 %v8552
          %v9992 = vunpack.c.h.b16 %v8552
          %v9993 = vunpack.c.l.b16 %v8553
          %v9994 = vunpack.c.h.b16 %v8553
          %v9995 = vunpack.c.l.b16 %v8554
          %v9996 = vunpack.c.h.b16 %v8554
          %v9997 = vunpack.c.l.b16 %v8555
          %v9998 = vunpack.c.h.b16 %v8555
          %v9999 = vunpack.c.l.b16 %v8556
          %v10000 = vunpack.c.h.b16 %v8556
          %v10001 = vunpack.c.l.b16 %v8557
          %v10002 = vunpack.c.h.b16 %v8557
          %v10003 = vunpack.c.l.b16 %v8558
          %v10004 = vunpack.c.h.b16 %v8558
          %v10005 = vunpack.c.l.b16 %v8559
          %v10006 = vunpack.c.h.b16 %v8559
          %v10007 = vunpack.c.l.b16 %v8560
          %v10008 = vunpack.c.h.b16 %v8560
          %v10009 = vunpack.c.l.b16 %v8561
          %v10010 = vunpack.c.h.b16 %v8561
          %v10011 = vunpack.c.l.b16 %v8562
          %v10012 = vunpack.c.h.b16 %v8562
          %v10013 = vunpack.c.l.b16 %v8563
          %v10014 = vunpack.c.h.b16 %v8563
          %v10015 = vunpack.c.l.b16 %v8564
          %v10016 = vunpack.c.h.b16 %v8564
          %v10017 = vunpack.c.l.b16 %v8565
          %v10018 = vunpack.c.h.b16 %v8565
          %v10019 = vunpack.c.l.b16 %v8566
          %v10020 = vunpack.c.h.b16 %v8566
          %v10021 = vunpack.c.l.b16 %v8567
          %v10022 = vunpack.c.h.b16 %v8567
          %v10023 = vunpack.c.l.b16 %v8568
          %v10024 = vunpack.c.h.b16 %v8568
          %v10025 = vunpack.c.l.b16 %v8569
          %v10026 = vunpack.c.h.b16 %v8569
          %v10027 = vunpack.c.l.b16 %v8570
          %v10028 = vunpack.c.h.b16 %v8570
          %v10029 = vunpack.c.l.b16 %v8571
          %v10030 = vunpack.c.h.b16 %v8571
          %v10031 = vunpack.c.l.b16 %v8572
          %v10032 = vunpack.c.h.b16 %v8572
          %v10033 = vunpack.c.l.b16 %v8573
          %v10034 = vunpack.c.h.b16 %v8573
          %v10035 = vunpack.c.l.b16 %v8574
          %v10036 = vunpack.c.h.b16 %v8574
          %v10037 = vunpack.c.l.b16 %v8575
          %v10038 = vunpack.c.h.b16 %v8575
          %v10039 = vunpack.c.l.b16 %v8576
          %v10040 = vunpack.c.h.b16 %v8576
          %v10041 = vunpack.c.l.b16 %v8577
          %v10042 = vunpack.c.h.b16 %v8577
          %v10043 = vunpack.c.l.b16 %v8578
          %v10044 = vunpack.c.h.b16 %v8578
          %v10045 = vunpack.c.l.b16 %v8579
          %v10046 = vunpack.c.h.b16 %v8579
          %v10047 = vunpack.c.l.b16 %v8580
          %v10048 = vunpack.c.h.b16 %v8580
          %v10049 = vunpack.c.l.b16 %v8581
          %v10050 = vunpack.c.h.b16 %v8581
          %v10051 = vunpack.c.l.b16 %v8582
          %v10052 = vunpack.c.h.b16 %v8582
          %v10053 = vunpack.c.l.b16 %v8583
          %v10054 = vunpack.c.h.b16 %v8583
          %v10055 = vunpack.c.l.b16 %v8584
          %v10056 = vunpack.c.h.b16 %v8584
          %v10057 = vunpack.c.l.b16 %v8585
          %v10058 = vunpack.c.h.b16 %v8585
          %v10059 = vunpack.c.l.b16 %v8586
          %v10060 = vunpack.c.h.b16 %v8586
          %v10061 = vunpack.c.l.b16 %v8587
          %v10062 = vunpack.c.h.b16 %v8587
          %v10063 = vunpack.c.l.b16 %v8588
          %v10064 = vunpack.c.h.b16 %v8588
          %v10065 = vunpack.c.l.b16 %v8589
          %v10066 = vunpack.c.h.b16 %v8589
          %v10067 = vunpack.c.l.b16 %v8590
          %v10068 = vunpack.c.h.b16 %v8590
          %v10069 = vunpack.c.l.b16 %v8591
          %v10070 = vunpack.c.h.b16 %v8591
          %v10071 = vunpack.c.l.b16 %v8592
          %v10072 = vunpack.c.h.b16 %v8592
          %v10073 = vunpack.c.l.b16 %v8593
          %v10074 = vunpack.c.h.b16 %v8593
          %v10075 = vunpack.c.l.b16 %v8594
          %v10076 = vunpack.c.h.b16 %v8594
          %v10077 = vunpack.c.l.b16 %v8595
          %v10078 = vunpack.c.h.b16 %v8595
          %v10079 = vunpack.c.l.b16 %v8596
          %v10080 = vunpack.c.h.b16 %v8596
          %v10081 = vunpack.c.l.b16 %v8597
          %v10082 = vunpack.c.h.b16 %v8597
          %v10083 = vunpack.c.l.b16 %v8598
          %v10084 = vunpack.c.h.b16 %v8598
          %v10085 = vunpack.c.l.b16 %v8599
          %v10086 = vunpack.c.h.b16 %v8599
          %v10087 = vunpack.c.l.b16 %v8600
          %v10088 = vunpack.c.h.b16 %v8600
          %v10089 = vunpack.c.l.b16 %v8601
          %v10090 = vunpack.c.h.b16 %v8601
          %v10091 = vunpack.c.l.b16 %v8602
          %v10092 = vunpack.c.h.b16 %v8602
          %v10093 = vunpack.c.l.b16 %v8603
          %v10094 = vunpack.c.h.b16 %v8603
          %v10095 = vunpack.c.l.b16 %v8604
          %v10096 = vunpack.c.h.b16 %v8604
          %v10097 = vunpack.c.l.b16 %v8605
          %v10098 = vunpack.c.h.b16 %v8605
          %v10099 = vunpack.c.l.b16 %v8606
          %v10100 = vunpack.c.h.b16 %v8606
          %v10101 = vunpack.c.l.b16 %v8607
          %v10102 = vunpack.c.h.b16 %v8607
          %v10103 = vunpack.c.l.b16 %v8608
          %v10104 = vunpack.c.h.b16 %v8608
          %v10105 = vunpack.c.l.b16 %v8609
          %v10106 = vunpack.c.h.b16 %v8609
          %v10107 = vunpack.c.l.b16 %v8610
          %v10108 = vunpack.c.h.b16 %v8610
          %v10109 = vunpack.c.l.b16 %v8611
          %v10110 = vunpack.c.h.b16 %v8611
          %v10111 = vunpack.c.l.b16 %v8612
          %v10112 = vunpack.c.h.b16 %v8612
          %v10113 = vunpack.c.l.b16 %v8613
          %v10114 = vunpack.c.h.b16 %v8613
          %v10115 = vunpack.c.l.b16 %v8614
          %v10116 = vunpack.c.h.b16 %v8614
          %v10117 = vunpack.c.l.b16 %v8615
          %v10118 = vunpack.c.h.b16 %v8615
          %v10119 = vunpack.c.l.b16 %v8616
          %v10120 = vunpack.c.h.b16 %v8616
          %v10121 = vunpack.c.l.b16 %v8617
          %v10122 = vunpack.c.h.b16 %v8617
          %v10123 = vunpack.c.l.b16 %v8618
          %v10124 = vunpack.c.h.b16 %v8618
          %v10125 = vunpack.c.l.b16 %v8619
          %v10126 = vunpack.c.h.b16 %v8619
          %v10127 = vunpack.c.l.b16 %v8620
          %v10128 = vunpack.c.h.b16 %v8620
          %v10129 = vunpack.c.l.b16 %v8621
          %v10130 = vunpack.c.h.b16 %v8621
          %v10131 = vunpack.c.l.b16 %v8622
          %v10132 = vunpack.c.h.b16 %v8622
          %v10133 = vunpack.c.l.b16 %v8623
          %v10134 = vunpack.c.h.b16 %v8623
          %v10135 = vunpack.c.l.b16 %v8624
          %v10136 = vunpack.c.h.b16 %v8624
          %v10137 = vunpack.c.l.b16 %v8625
          %v10138 = vunpack.c.h.b16 %v8625
          %v10139 = vunpack.c.l.b16 %v8626
          %v10140 = vunpack.c.h.b16 %v8626
          %v10141 = vunpack.c.l.b16 %v8627
          %v10142 = vunpack.c.h.b16 %v8627
          %v10143 = vunpack.c.l.b16 %v8628
          %v10144 = vunpack.c.h.b16 %v8628
          %v10145 = vunpack.c.l.b16 %v8629
          %v10146 = vunpack.c.h.b16 %v8629
          %v10147 = vunpack.c.l.b16 %v8630
          %v10148 = vunpack.c.h.b16 %v8630
          %v10149 = vunpack.c.l.b16 %v8631
          %v10150 = vunpack.c.h.b16 %v8631
          %v10151 = vunpack.c.l.b16 %v8632
          %v10152 = vunpack.c.h.b16 %v8632
          %v10153 = vunpack.c.l.b16 %v8633
          %v10154 = vunpack.c.h.b16 %v8633
          %v10155 = vunpack.c.l.b16 %v8634
          %v10156 = vunpack.c.h.b16 %v8634
          %v10157 = vunpack.c.l.b16 %v8635
          %v10158 = vunpack.c.h.b16 %v8635
          %v10159 = vunpack.c.l.b16 %v8636
          %v10160 = vunpack.c.h.b16 %v8636
          %v10161 = vunpack.c.l.b16 %v8637
          %v10162 = vunpack.c.h.b16 %v8637
          %v10163 = vunpack.c.l.b16 %v8638
          %v10164 = vunpack.c.h.b16 %v8638
          %v10165 = vunpack.c.l.b16 %v8639
          %v10166 = vunpack.c.h.b16 %v8639
          %v10167 = vunpack.c.l.b16 %v8640
          %v10168 = vunpack.c.h.b16 %v8640
          %v10169 = vunpack.c.l.b16 %v8641
          %v10170 = vunpack.c.h.b16 %v8641
          %v10171 = vunpack.c.l.b16 %v8642
          %v10172 = vunpack.c.h.b16 %v8642
          %v10173 = vunpack.c.l.b16 %v8643
          %v10174 = vunpack.c.h.b16 %v8643
          %v10175 = vunpack.c.l.b16 %v8644
          %v10176 = vunpack.c.h.b16 %v8644
          %v10177 = vunpack.c.l.b16 %v8645
          %v10178 = vunpack.c.h.b16 %v8645
          %v10179 = vunpack.c.l.b16 %v8646
          %v10180 = vunpack.c.h.b16 %v8646
          %v10181 = vunpack.c.l.b16 %v8647
          %v10182 = vunpack.c.h.b16 %v8647
          %v10183 = vunpack.c.l.b16 %v8648
          %v10184 = vunpack.c.h.b16 %v8648
          %v10185 = vunpack.c.l.b16 %v8649
          %v10186 = vunpack.c.h.b16 %v8649
          %v10187 = vunpack.c.l.b16 %v8650
          %v10188 = vunpack.c.h.b16 %v8650
          %v10189 = vunpack.c.l.b16 %v8651
          %v10190 = vunpack.c.h.b16 %v8651
          %v10191 = vunpack.c.l.b16 %v8652
          %v10192 = vunpack.c.h.b16 %v8652
          %v10193 = vunpack.c.l.b16 %v8653
          %v10194 = vunpack.c.h.b16 %v8653
          %v10195 = vunpack.c.l.b16 %v8654
          %v10196 = vunpack.c.h.b16 %v8654
          %v10197 = vunpack.c.l.b16 %v8655
          %v10198 = vunpack.c.h.b16 %v8655
          %v10199 = vunpack.c.l.b16 %v8656
          %v10200 = vunpack.c.h.b16 %v8656
          %v10201 = vunpack.c.l.b16 %v8657
          %v10202 = vunpack.c.h.b16 %v8657
          %v10203 = vunpack.c.l.b16 %v8658
          %v10204 = vunpack.c.h.b16 %v8658
          %v10205 = vunpack.c.l.b16 %v8659
          %v10206 = vunpack.c.h.b16 %v8659
          %v10207 = vunpack.c.l.b16 %v8660
          %v10208 = vunpack.c.h.b16 %v8660
          %v10209 = vunpack.c.l.b16 %v8661
          %v10210 = vunpack.c.h.b16 %v8661
          %v10211 = vunpack.c.l.b16 %v8662
          %v10212 = vunpack.c.h.b16 %v8662
          %v10213 = vunpack.c.l.b16 %v8663
          %v10214 = vunpack.c.h.b16 %v8663
          %v10215 = vunpack.c.l.b16 %v8664
          %v10216 = vunpack.c.h.b16 %v8664
          %v10217 = vunpack.c.l.b16 %v8665
          %v10218 = vunpack.c.h.b16 %v8665
          %v10219 = vunpack.c.l.b16 %v8666
          %v10220 = vunpack.c.h.b16 %v8666
          %v10221 = vunpack.c.l.b16 %v8667
          %v10222 = vunpack.c.h.b16 %v8667
          %v10223 = vunpack.c.l.b16 %v8668
          %v10224 = vunpack.c.h.b16 %v8668
          %v10225 = vunpack.c.l.b16 %v8669
          %v10226 = vunpack.c.h.b16 %v8669
          %v10227 = vunpack.c.l.b16 %v8670
          %v10228 = vunpack.c.h.b16 %v8670
          %v10229 = vpack.c.b16 %v9209, %v9205
          %v10230 = vpack.c.b16 %v9210, %v9206
          %v10231 = vpack.c.b16 %v9211, %v9207
          %v10232 = vpack.c.b16 %v9212, %v9208
          %v10233 = vpack.c.b16 %v9217, %v9213
          %v10234 = vpack.c.b16 %v9218, %v9214
          %v10235 = vpack.c.b16 %v9219, %v9215
          %v10236 = vpack.c.b16 %v9220, %v9216
          %v10237 = vpack.c.b16 %v9225, %v9221
          %v10238 = vpack.c.b16 %v9226, %v9222
          %v10239 = vpack.c.b16 %v9227, %v9223
          %v10240 = vpack.c.b16 %v9228, %v9224
          %v10241 = vpack.c.b16 %v9233, %v9229
          %v10242 = vpack.c.b16 %v9234, %v9230
          %v10243 = vpack.c.b16 %v9235, %v9231
          %v10244 = vpack.c.b16 %v9236, %v9232
          %v10245 = vpack.c.b16 %v9241, %v9237
          %v10246 = vpack.c.b16 %v9242, %v9238
          %v10247 = vpack.c.b16 %v9243, %v9239
          %v10248 = vpack.c.b16 %v9244, %v9240
          %v10249 = vpack.c.b16 %v9249, %v9245
          %v10250 = vpack.c.b16 %v9250, %v9246
          %v10251 = vpack.c.b16 %v9251, %v9247
          %v10252 = vpack.c.b16 %v9252, %v9248
          %v10253 = vpack.c.b16 %v9257, %v9253
          %v10254 = vpack.c.b16 %v9258, %v9254
          %v10255 = vpack.c.b16 %v9259, %v9255
          %v10256 = vpack.c.b16 %v9260, %v9256
          %v10257 = vpack.c.b16 %v9265, %v9261
          %v10258 = vpack.c.b16 %v9266, %v9262
          %v10259 = vpack.c.b16 %v9267, %v9263
          %v10260 = vpack.c.b16 %v9268, %v9264
          %v10261 = vpack.c.b16 %v9273, %v9269
          %v10262 = vpack.c.b16 %v9274, %v9270
          %v10263 = vpack.c.b16 %v9275, %v9271
          %v10264 = vpack.c.b16 %v9276, %v9272
          %v10265 = vpack.c.b16 %v9281, %v9277
          %v10266 = vpack.c.b16 %v9282, %v9278
          %v10267 = vpack.c.b16 %v9283, %v9279
          %v10268 = vpack.c.b16 %v9284, %v9280
          %v10269 = vpack.c.b16 %v9289, %v9285
          %v10270 = vpack.c.b16 %v9290, %v9286
          %v10271 = vpack.c.b16 %v9291, %v9287
          %v10272 = vpack.c.b16 %v9292, %v9288
          %v10273 = vpack.c.b16 %v9297, %v9293
          %v10274 = vpack.c.b16 %v9298, %v9294
          %v10275 = vpack.c.b16 %v9299, %v9295
          %v10276 = vpack.c.b16 %v9300, %v9296
          %v10277 = vpack.c.b16 %v9305, %v9301
          %v10278 = vpack.c.b16 %v9306, %v9302
          %v10279 = vpack.c.b16 %v9307, %v9303
          %v10280 = vpack.c.b16 %v9308, %v9304
          %v10281 = vpack.c.b16 %v9313, %v9309
          %v10282 = vpack.c.b16 %v9314, %v9310
          %v10283 = vpack.c.b16 %v9315, %v9311
          %v10284 = vpack.c.b16 %v9316, %v9312
          %v10285 = vpack.c.b16 %v9321, %v9317
          %v10286 = vpack.c.b16 %v9322, %v9318
          %v10287 = vpack.c.b16 %v9323, %v9319
          %v10288 = vpack.c.b16 %v9324, %v9320
          %v10289 = vpack.c.b16 %v9329, %v9325
          %v10290 = vpack.c.b16 %v9330, %v9326
          %v10291 = vpack.c.b16 %v9331, %v9327
          %v10292 = vpack.c.b16 %v9332, %v9328
          %v10293 = vpack.c.b16 %v9337, %v9333
          %v10294 = vpack.c.b16 %v9338, %v9334
          %v10295 = vpack.c.b16 %v9339, %v9335
          %v10296 = vpack.c.b16 %v9340, %v9336
          %v10297 = vpack.c.b16 %v9345, %v9341
          %v10298 = vpack.c.b16 %v9346, %v9342
          %v10299 = vpack.c.b16 %v9347, %v9343
          %v10300 = vpack.c.b16 %v9348, %v9344
          %v10301 = vpack.c.b16 %v9353, %v9349
          %v10302 = vpack.c.b16 %v9354, %v9350
          %v10303 = vpack.c.b16 %v9355, %v9351
          %v10304 = vpack.c.b16 %v9356, %v9352
          %v10305 = vpack.c.b16 %v9361, %v9357
          %v10306 = vpack.c.b16 %v9362, %v9358
          %v10307 = vpack.c.b16 %v9363, %v9359
          %v10308 = vpack.c.b16 %v9364, %v9360
          %v10309 = vpack.c.b16 %v9369, %v9365
          %v10310 = vpack.c.b16 %v9370, %v9366
          %v10311 = vpack.c.b16 %v9371, %v9367
          %v10312 = vpack.c.b16 %v9372, %v9368
          %v10313 = vpack.c.b16 %v9377, %v9373
          %v10314 = vpack.c.b16 %v9378, %v9374
          %v10315 = vpack.c.b16 %v9379, %v9375
          %v10316 = vpack.c.b16 %v9380, %v9376
          %v10317 = vpack.c.b16 %v9385, %v9381
          %v10318 = vpack.c.b16 %v9386, %v9382
          %v10319 = vpack.c.b16 %v9387, %v9383
          %v10320 = vpack.c.b16 %v9388, %v9384
          %v10321 = vpack.c.b16 %v9393, %v9389
          %v10322 = vpack.c.b16 %v9394, %v9390
          %v10323 = vpack.c.b16 %v9395, %v9391
          %v10324 = vpack.c.b16 %v9396, %v9392
          %v10325 = vpack.c.b16 %v9401, %v9397
          %v10326 = vpack.c.b16 %v9402, %v9398
          %v10327 = vpack.c.b16 %v9403, %v9399
          %v10328 = vpack.c.b16 %v9404, %v9400
          %v10329 = vpack.c.b16 %v9409, %v9405
          %v10330 = vpack.c.b16 %v9410, %v9406
          %v10331 = vpack.c.b16 %v9411, %v9407
          %v10332 = vpack.c.b16 %v9412, %v9408
          %v10333 = vpack.c.b16 %v9417, %v9413
          %v10334 = vpack.c.b16 %v9418, %v9414
          %v10335 = vpack.c.b16 %v9419, %v9415
          %v10336 = vpack.c.b16 %v9420, %v9416
          %v10337 = vpack.c.b16 %v9425, %v9421
          %v10338 = vpack.c.b16 %v9426, %v9422
          %v10339 = vpack.c.b16 %v9427, %v9423
          %v10340 = vpack.c.b16 %v9428, %v9424
          %v10341 = vpack.c.b16 %v9433, %v9429
          %v10342 = vpack.c.b16 %v9434, %v9430
          %v10343 = vpack.c.b16 %v9435, %v9431
          %v10344 = vpack.c.b16 %v9436, %v9432
          %v10345 = vpack.c.b16 %v9441, %v9437
          %v10346 = vpack.c.b16 %v9442, %v9438
          %v10347 = vpack.c.b16 %v9443, %v9439
          %v10348 = vpack.c.b16 %v9444, %v9440
          %v10349 = vpack.c.b16 %v9449, %v9445
          %v10350 = vpack.c.b16 %v9450, %v9446
          %v10351 = vpack.c.b16 %v9451, %v9447
          %v10352 = vpack.c.b16 %v9452, %v9448
          %v10353 = vpack.c.b16 %v9457, %v9453
          %v10354 = vpack.c.b16 %v9458, %v9454
          %v10355 = vpack.c.b16 %v9459, %v9455
          %v10356 = vpack.c.b16 %v9460, %v9456
          %v10357 = vpack.c.b16 %v9465, %v9461
          %v10358 = vpack.c.b16 %v9466, %v9462
          %v10359 = vpack.c.b16 %v9467, %v9463
          %v10360 = vpack.c.b16 %v9468, %v9464
          %v10361 = vpack.c.b16 %v9473, %v9469
          %v10362 = vpack.c.b16 %v9474, %v9470
          %v10363 = vpack.c.b16 %v9475, %v9471
          %v10364 = vpack.c.b16 %v9476, %v9472
          %v10365 = vpack.c.b16 %v9481, %v9477
          %v10366 = vpack.c.b16 %v9482, %v9478
          %v10367 = vpack.c.b16 %v9483, %v9479
          %v10368 = vpack.c.b16 %v9484, %v9480
          %v10369 = vpack.c.b16 %v9489, %v9485
          %v10370 = vpack.c.b16 %v9490, %v9486
          %v10371 = vpack.c.b16 %v9491, %v9487
          %v10372 = vpack.c.b16 %v9492, %v9488
          %v10373 = vpack.c.b16 %v9497, %v9493
          %v10374 = vpack.c.b16 %v9498, %v9494
          %v10375 = vpack.c.b16 %v9499, %v9495
          %v10376 = vpack.c.b16 %v9500, %v9496
          %v10377 = vpack.c.b16 %v9505, %v9501
          %v10378 = vpack.c.b16 %v9506, %v9502
          %v10379 = vpack.c.b16 %v9507, %v9503
          %v10380 = vpack.c.b16 %v9508, %v9504
          %v10381 = vpack.c.b16 %v9513, %v9509
          %v10382 = vpack.c.b16 %v9514, %v9510
          %v10383 = vpack.c.b16 %v9515, %v9511
          %v10384 = vpack.c.b16 %v9516, %v9512
          %v10385 = vpack.c.b16 %v9521, %v9517
          %v10386 = vpack.c.b16 %v9522, %v9518
          %v10387 = vpack.c.b16 %v9523, %v9519
          %v10388 = vpack.c.b16 %v9524, %v9520
          %v10389 = vpack.c.b16 %v9529, %v9525
          %v10390 = vpack.c.b16 %v9530, %v9526
          %v10391 = vpack.c.b16 %v9531, %v9527
          %v10392 = vpack.c.b16 %v9532, %v9528
          %v10393 = vpack.c.b16 %v9537, %v9533
          %v10394 = vpack.c.b16 %v9538, %v9534
          %v10395 = vpack.c.b16 %v9539, %v9535
          %v10396 = vpack.c.b16 %v9540, %v9536
          %v10397 = vpack.c.b16 %v9545, %v9541
          %v10398 = vpack.c.b16 %v9546, %v9542
          %v10399 = vpack.c.b16 %v9547, %v9543
          %v10400 = vpack.c.b16 %v9548, %v9544
          %v10401 = vpack.c.b16 %v9553, %v9549
          %v10402 = vpack.c.b16 %v9554, %v9550
          %v10403 = vpack.c.b16 %v9555, %v9551
          %v10404 = vpack.c.b16 %v9556, %v9552
          %v10405 = vpack.c.b16 %v9561, %v9557
          %v10406 = vpack.c.b16 %v9562, %v9558
          %v10407 = vpack.c.b16 %v9563, %v9559
          %v10408 = vpack.c.b16 %v9564, %v9560
          %v10409 = vpack.c.b16 %v9569, %v9565
          %v10410 = vpack.c.b16 %v9570, %v9566
          %v10411 = vpack.c.b16 %v9571, %v9567
          %v10412 = vpack.c.b16 %v9572, %v9568
          %v10413 = vpack.c.b16 %v9577, %v9573
          %v10414 = vpack.c.b16 %v9578, %v9574
          %v10415 = vpack.c.b16 %v9579, %v9575
          %v10416 = vpack.c.b16 %v9580, %v9576
          %v10417 = vpack.c.b16 %v9585, %v9581
          %v10418 = vpack.c.b16 %v9586, %v9582
          %v10419 = vpack.c.b16 %v9587, %v9583
          %v10420 = vpack.c.b16 %v9588, %v9584
          %v10421 = vpack.c.b16 %v9593, %v9589
          %v10422 = vpack.c.b16 %v9594, %v9590
          %v10423 = vpack.c.b16 %v9595, %v9591
          %v10424 = vpack.c.b16 %v9596, %v9592
          %v10425 = vpack.c.b16 %v9601, %v9597
          %v10426 = vpack.c.b16 %v9602, %v9598
          %v10427 = vpack.c.b16 %v9603, %v9599
          %v10428 = vpack.c.b16 %v9604, %v9600
          %v10429 = vpack.c.b16 %v9609, %v9605
          %v10430 = vpack.c.b16 %v9610, %v9606
          %v10431 = vpack.c.b16 %v9611, %v9607
          %v10432 = vpack.c.b16 %v9612, %v9608
          %v10433 = vpack.c.b16 %v9617, %v9613
          %v10434 = vpack.c.b16 %v9618, %v9614
          %v10435 = vpack.c.b16 %v9619, %v9615
          %v10436 = vpack.c.b16 %v9620, %v9616
          %v10437 = vpack.c.b16 %v9625, %v9621
          %v10438 = vpack.c.b16 %v9626, %v9622
          %v10439 = vpack.c.b16 %v9627, %v9623
          %v10440 = vpack.c.b16 %v9628, %v9624
          %v10441 = vpack.c.b16 %v9633, %v9629
          %v10442 = vpack.c.b16 %v9634, %v9630
          %v10443 = vpack.c.b16 %v9635, %v9631
          %v10444 = vpack.c.b16 %v9636, %v9632
          %v10445 = vpack.c.b16 %v9641, %v9637
          %v10446 = vpack.c.b16 %v9642, %v9638
          %v10447 = vpack.c.b16 %v9643, %v9639
          %v10448 = vpack.c.b16 %v9644, %v9640
          %v10449 = vpack.c.b16 %v9649, %v9645
          %v10450 = vpack.c.b16 %v9650, %v9646
          %v10451 = vpack.c.b16 %v9651, %v9647
          %v10452 = vpack.c.b16 %v9652, %v9648
          %v10453 = vpack.c.b16 %v9657, %v9653
          %v10454 = vpack.c.b16 %v9658, %v9654
          %v10455 = vpack.c.b16 %v9659, %v9655
          %v10456 = vpack.c.b16 %v9660, %v9656
          %v10457 = vpack.c.b16 %v9665, %v9661
          %v10458 = vpack.c.b16 %v9666, %v9662
          %v10459 = vpack.c.b16 %v9667, %v9663
          %v10460 = vpack.c.b16 %v9668, %v9664
          %v10461 = vpack.c.b16 %v9673, %v9669
          %v10462 = vpack.c.b16 %v9674, %v9670
          %v10463 = vpack.c.b16 %v9675, %v9671
          %v10464 = vpack.c.b16 %v9676, %v9672
          %v10465 = vpack.c.b16 %v9681, %v9677
          %v10466 = vpack.c.b16 %v9682, %v9678
          %v10467 = vpack.c.b16 %v9683, %v9679
          %v10468 = vpack.c.b16 %v9684, %v9680
          %v10469 = vpack.c.b16 %v9689, %v9685
          %v10470 = vpack.c.b16 %v9690, %v9686
          %v10471 = vpack.c.b16 %v9691, %v9687
          %v10472 = vpack.c.b16 %v9692, %v9688
          %v10473 = vpack.c.b16 %v9697, %v9693
          %v10474 = vpack.c.b16 %v9698, %v9694
          %v10475 = vpack.c.b16 %v9699, %v9695
          %v10476 = vpack.c.b16 %v9700, %v9696
          %v10477 = vpack.c.b16 %v9705, %v9701
          %v10478 = vpack.c.b16 %v9706, %v9702
          %v10479 = vpack.c.b16 %v9707, %v9703
          %v10480 = vpack.c.b16 %v9708, %v9704
          %v10481 = vpack.c.b16 %v9713, %v9709
          %v10482 = vpack.c.b16 %v9714, %v9710
          %v10483 = vpack.c.b16 %v9715, %v9711
          %v10484 = vpack.c.b16 %v9716, %v9712
          %v10485 = vpack.c.b16 %v9721, %v9717
          %v10486 = vpack.c.b16 %v9722, %v9718
          %v10487 = vpack.c.b16 %v9723, %v9719
          %v10488 = vpack.c.b16 %v9724, %v9720
          %v10489 = vpack.c.b16 %v9729, %v9725
          %v10490 = vpack.c.b16 %v9730, %v9726
          %v10491 = vpack.c.b16 %v9731, %v9727
          %v10492 = vpack.c.b16 %v9732, %v9728
          %v10493 = vpack.c.b16 %v9737, %v9733
          %v10494 = vpack.c.b16 %v9738, %v9734
          %v10495 = vpack.c.b16 %v9739, %v9735
          %v10496 = vpack.c.b16 %v9740, %v9736
          %v10497 = vpack.c.b16 %v9745, %v9741
          %v10498 = vpack.c.b16 %v9746, %v9742
          %v10499 = vpack.c.b16 %v9747, %v9743
          %v10500 = vpack.c.b16 %v9748, %v9744
          %v10501 = vpack.c.b16 %v9753, %v9749
          %v10502 = vpack.c.b16 %v9754, %v9750
          %v10503 = vpack.c.b16 %v9755, %v9751
          %v10504 = vpack.c.b16 %v9756, %v9752
          %v10505 = vpack.c.b16 %v9761, %v9757
          %v10506 = vpack.c.b16 %v9762, %v9758
          %v10507 = vpack.c.b16 %v9763, %v9759
          %v10508 = vpack.c.b16 %v9764, %v9760
          %v10509 = vpack.c.b16 %v9769, %v9765
          %v10510 = vpack.c.b16 %v9770, %v9766
          %v10511 = vpack.c.b16 %v9771, %v9767
          %v10512 = vpack.c.b16 %v9772, %v9768
          %v10513 = vpack.c.b16 %v9777, %v9773
          %v10514 = vpack.c.b16 %v9778, %v9774
          %v10515 = vpack.c.b16 %v9779, %v9775
          %v10516 = vpack.c.b16 %v9780, %v9776
          %v10517 = vpack.c.b16 %v9785, %v9781
          %v10518 = vpack.c.b16 %v9786, %v9782
          %v10519 = vpack.c.b16 %v9787, %v9783
          %v10520 = vpack.c.b16 %v9788, %v9784
          %v10521 = vpack.c.b16 %v9793, %v9789
          %v10522 = vpack.c.b16 %v9794, %v9790
          %v10523 = vpack.c.b16 %v9795, %v9791
          %v10524 = vpack.c.b16 %v9796, %v9792
          %v10525 = vpack.c.b16 %v9801, %v9797
          %v10526 = vpack.c.b16 %v9802, %v9798
          %v10527 = vpack.c.b16 %v9803, %v9799
          %v10528 = vpack.c.b16 %v9804, %v9800
          %v10529 = vpack.c.b16 %v9809, %v9805
          %v10530 = vpack.c.b16 %v9810, %v9806
          %v10531 = vpack.c.b16 %v9811, %v9807
          %v10532 = vpack.c.b16 %v9812, %v9808
          %v10533 = vpack.c.b16 %v9817, %v9813
          %v10534 = vpack.c.b16 %v9818, %v9814
          %v10535 = vpack.c.b16 %v9819, %v9815
          %v10536 = vpack.c.b16 %v9820, %v9816
          %v10537 = vpack.c.b16 %v9825, %v9821
          %v10538 = vpack.c.b16 %v9826, %v9822
          %v10539 = vpack.c.b16 %v9827, %v9823
          %v10540 = vpack.c.b16 %v9828, %v9824
          %v10541 = vpack.c.b16 %v9833, %v9829
          %v10542 = vpack.c.b16 %v9834, %v9830
          %v10543 = vpack.c.b16 %v9835, %v9831
          %v10544 = vpack.c.b16 %v9836, %v9832
          %v10545 = vpack.c.b16 %v9841, %v9837
          %v10546 = vpack.c.b16 %v9842, %v9838
          %v10547 = vpack.c.b16 %v9843, %v9839
          %v10548 = vpack.c.b16 %v9844, %v9840
          %v10549 = vpack.c.b16 %v9849, %v9845
          %v10550 = vpack.c.b16 %v9850, %v9846
          %v10551 = vpack.c.b16 %v9851, %v9847
          %v10552 = vpack.c.b16 %v9852, %v9848
          %v10553 = vpack.c.b16 %v9857, %v9853
          %v10554 = vpack.c.b16 %v9858, %v9854
          %v10555 = vpack.c.b16 %v9859, %v9855
          %v10556 = vpack.c.b16 %v9860, %v9856
          %v10557 = vpack.c.b16 %v9865, %v9861
          %v10558 = vpack.c.b16 %v9866, %v9862
          %v10559 = vpack.c.b16 %v9867, %v9863
          %v10560 = vpack.c.b16 %v9868, %v9864
          %v10561 = vpack.c.b16 %v9873, %v9869
          %v10562 = vpack.c.b16 %v9874, %v9870
          %v10563 = vpack.c.b16 %v9875, %v9871
          %v10564 = vpack.c.b16 %v9876, %v9872
          %v10565 = vpack.c.b16 %v9881, %v9877
          %v10566 = vpack.c.b16 %v9882, %v9878
          %v10567 = vpack.c.b16 %v9883, %v9879
          %v10568 = vpack.c.b16 %v9884, %v9880
          %v10569 = vpack.c.b16 %v9889, %v9885
          %v10570 = vpack.c.b16 %v9890, %v9886
          %v10571 = vpack.c.b16 %v9891, %v9887
          %v10572 = vpack.c.b16 %v9892, %v9888
          %v10573 = vpack.c.b16 %v9897, %v9893
          %v10574 = vpack.c.b16 %v9898, %v9894
          %v10575 = vpack.c.b16 %v9899, %v9895
          %v10576 = vpack.c.b16 %v9900, %v9896
          %v10577 = vpack.c.b16 %v9905, %v9901
          %v10578 = vpack.c.b16 %v9906, %v9902
          %v10579 = vpack.c.b16 %v9907, %v9903
          %v10580 = vpack.c.b16 %v9908, %v9904
          %v10581 = vpack.c.b16 %v9913, %v9909
          %v10582 = vpack.c.b16 %v9914, %v9910
          %v10583 = vpack.c.b16 %v9915, %v9911
          %v10584 = vpack.c.b16 %v9916, %v9912
          %v10585 = vpack.c.b16 %v9921, %v9917
          %v10586 = vpack.c.b16 %v9922, %v9918
          %v10587 = vpack.c.b16 %v9923, %v9919
          %v10588 = vpack.c.b16 %v9924, %v9920
          %v10589 = vpack.c.b16 %v9929, %v9925
          %v10590 = vpack.c.b16 %v9930, %v9926
          %v10591 = vpack.c.b16 %v9931, %v9927
          %v10592 = vpack.c.b16 %v9932, %v9928
          %v10593 = vpack.c.b16 %v9937, %v9933
          %v10594 = vpack.c.b16 %v9938, %v9934
          %v10595 = vpack.c.b16 %v9939, %v9935
          %v10596 = vpack.c.b16 %v9940, %v9936
          %v10597 = vpack.c.b16 %v9945, %v9941
          %v10598 = vpack.c.b16 %v9946, %v9942
          %v10599 = vpack.c.b16 %v9947, %v9943
          %v10600 = vpack.c.b16 %v9948, %v9944
          %v10601 = vpack.c.b16 %v9953, %v9949
          %v10602 = vpack.c.b16 %v9954, %v9950
          %v10603 = vpack.c.b16 %v9955, %v9951
          %v10604 = vpack.c.b16 %v9956, %v9952
          %v10605 = vpack.c.b16 %v9961, %v9957
          %v10606 = vpack.c.b16 %v9962, %v9958
          %v10607 = vpack.c.b16 %v9963, %v9959
          %v10608 = vpack.c.b16 %v9964, %v9960
          %v10609 = vpack.c.b16 %v9969, %v9965
          %v10610 = vpack.c.b16 %v9970, %v9966
          %v10611 = vpack.c.b16 %v9971, %v9967
          %v10612 = vpack.c.b16 %v9972, %v9968
          %v10613 = vpack.c.b16 %v9977, %v9973
          %v10614 = vpack.c.b16 %v9978, %v9974
          %v10615 = vpack.c.b16 %v9979, %v9975
          %v10616 = vpack.c.b16 %v9980, %v9976
          %v10617 = vpack.c.b16 %v9985, %v9981
          %v10618 = vpack.c.b16 %v9986, %v9982
          %v10619 = vpack.c.b16 %v9987, %v9983
          %v10620 = vpack.c.b16 %v9988, %v9984
          %v10621 = vpack.c.b16 %v9993, %v9989
          %v10622 = vpack.c.b16 %v9994, %v9990
          %v10623 = vpack.c.b16 %v9995, %v9991
          %v10624 = vpack.c.b16 %v9996, %v9992
          %v10625 = vpack.c.b16 %v10001, %v9997
          %v10626 = vpack.c.b16 %v10002, %v9998
          %v10627 = vpack.c.b16 %v10003, %v9999
          %v10628 = vpack.c.b16 %v10004, %v10000
          %v10629 = vpack.c.b16 %v10009, %v10005
          %v10630 = vpack.c.b16 %v10010, %v10006
          %v10631 = vpack.c.b16 %v10011, %v10007
          %v10632 = vpack.c.b16 %v10012, %v10008
          %v10633 = vpack.c.b16 %v10017, %v10013
          %v10634 = vpack.c.b16 %v10018, %v10014
          %v10635 = vpack.c.b16 %v10019, %v10015
          %v10636 = vpack.c.b16 %v10020, %v10016
          %v10637 = vpack.c.b16 %v10025, %v10021
          %v10638 = vpack.c.b16 %v10026, %v10022
          %v10639 = vpack.c.b16 %v10027, %v10023
          %v10640 = vpack.c.b16 %v10028, %v10024
          %v10641 = vpack.c.b16 %v10033, %v10029
          %v10642 = vpack.c.b16 %v10034, %v10030
          %v10643 = vpack.c.b16 %v10035, %v10031
          %v10644 = vpack.c.b16 %v10036, %v10032
          %v10645 = vpack.c.b16 %v10041, %v10037
          %v10646 = vpack.c.b16 %v10042, %v10038
          %v10647 = vpack.c.b16 %v10043, %v10039
          %v10648 = vpack.c.b16 %v10044, %v10040
          %v10649 = vpack.c.b16 %v10049, %v10045
          %v10650 = vpack.c.b16 %v10050, %v10046
          %v10651 = vpack.c.b16 %v10051, %v10047
          %v10652 = vpack.c.b16 %v10052, %v10048
          %v10653 = vpack.c.b16 %v10057, %v10053
          %v10654 = vpack.c.b16 %v10058, %v10054
          %v10655 = vpack.c.b16 %v10059, %v10055
          %v10656 = vpack.c.b16 %v10060, %v10056
          %v10657 = vpack.c.b16 %v10065, %v10061
          %v10658 = vpack.c.b16 %v10066, %v10062
          %v10659 = vpack.c.b16 %v10067, %v10063
          %v10660 = vpack.c.b16 %v10068, %v10064
          %v10661 = vpack.c.b16 %v10073, %v10069
          %v10662 = vpack.c.b16 %v10074, %v10070
          %v10663 = vpack.c.b16 %v10075, %v10071
          %v10664 = vpack.c.b16 %v10076, %v10072
          %v10665 = vpack.c.b16 %v10081, %v10077
          %v10666 = vpack.c.b16 %v10082, %v10078
          %v10667 = vpack.c.b16 %v10083, %v10079
          %v10668 = vpack.c.b16 %v10084, %v10080
          %v10669 = vpack.c.b16 %v10089, %v10085
          %v10670 = vpack.c.b16 %v10090, %v10086
          %v10671 = vpack.c.b16 %v10091, %v10087
          %v10672 = vpack.c.b16 %v10092, %v10088
          %v10673 = vpack.c.b16 %v10097, %v10093
          %v10674 = vpack.c.b16 %v10098, %v10094
          %v10675 = vpack.c.b16 %v10099, %v10095
          %v10676 = vpack.c.b16 %v10100, %v10096
          %v10677 = vpack.c.b16 %v10105, %v10101
          %v10678 = vpack.c.b16 %v10106, %v10102
          %v10679 = vpack.c.b16 %v10107, %v10103
          %v10680 = vpack.c.b16 %v10108, %v10104
          %v10681 = vpack.c.b16 %v10113, %v10109
          %v10682 = vpack.c.b16 %v10114, %v10110
          %v10683 = vpack.c.b16 %v10115, %v10111
          %v10684 = vpack.c.b16 %v10116, %v10112
          %v10685 = vpack.c.b16 %v10121, %v10117
          %v10686 = vpack.c.b16 %v10122, %v10118
          %v10687 = vpack.c.b16 %v10123, %v10119
          %v10688 = vpack.c.b16 %v10124, %v10120
          %v10689 = vpack.c.b16 %v10129, %v10125
          %v10690 = vpack.c.b16 %v10130, %v10126
          %v10691 = vpack.c.b16 %v10131, %v10127
          %v10692 = vpack.c.b16 %v10132, %v10128
          %v10693 = vpack.c.b16 %v10137, %v10133
          %v10694 = vpack.c.b16 %v10138, %v10134
          %v10695 = vpack.c.b16 %v10139, %v10135
          %v10696 = vpack.c.b16 %v10140, %v10136
          %v10697 = vpack.c.b16 %v10145, %v10141
          %v10698 = vpack.c.b16 %v10146, %v10142
          %v10699 = vpack.c.b16 %v10147, %v10143
          %v10700 = vpack.c.b16 %v10148, %v10144
          %v10701 = vpack.c.b16 %v10153, %v10149
          %v10702 = vpack.c.b16 %v10154, %v10150
          %v10703 = vpack.c.b16 %v10155, %v10151
          %v10704 = vpack.c.b16 %v10156, %v10152
          %v10705 = vpack.c.b16 %v10161, %v10157
          %v10706 = vpack.c.b16 %v10162, %v10158
          %v10707 = vpack.c.b16 %v10163, %v10159
          %v10708 = vpack.c.b16 %v10164, %v10160
          %v10709 = vpack.c.b16 %v10169, %v10165
          %v10710 = vpack.c.b16 %v10170, %v10166
          %v10711 = vpack.c.b16 %v10171, %v10167
          %v10712 = vpack.c.b16 %v10172, %v10168
          %v10713 = vpack.c.b16 %v10177, %v10173
          %v10714 = vpack.c.b16 %v10178, %v10174
          %v10715 = vpack.c.b16 %v10179, %v10175
          %v10716 = vpack.c.b16 %v10180, %v10176
          %v10717 = vpack.c.b16 %v10185, %v10181
          %v10718 = vpack.c.b16 %v10186, %v10182
          %v10719 = vpack.c.b16 %v10187, %v10183
          %v10720 = vpack.c.b16 %v10188, %v10184
          %v10721 = vpack.c.b16 %v10193, %v10189
          %v10722 = vpack.c.b16 %v10194, %v10190
          %v10723 = vpack.c.b16 %v10195, %v10191
          %v10724 = vpack.c.b16 %v10196, %v10192
          %v10725 = vpack.c.b16 %v10201, %v10197
          %v10726 = vpack.c.b16 %v10202, %v10198
          %v10727 = vpack.c.b16 %v10203, %v10199
          %v10728 = vpack.c.b16 %v10204, %v10200
          %v10729 = vpack.c.b16 %v10209, %v10205
          %v10730 = vpack.c.b16 %v10210, %v10206
          %v10731 = vpack.c.b16 %v10211, %v10207
          %v10732 = vpack.c.b16 %v10212, %v10208
          %v10733 = vpack.c.b16 %v10217, %v10213
          %v10734 = vpack.c.b16 %v10218, %v10214
          %v10735 = vpack.c.b16 %v10219, %v10215
          %v10736 = vpack.c.b16 %v10220, %v10216
          %v10737 = vpack.c.b16 %v10225, %v10221
          %v10738 = vpack.c.b16 %v10226, %v10222
          %v10739 = vpack.c.b16 %v10227, %v10223
          %v10740 = vpack.c.b16 %v10228, %v10224
          %11253 = vmatprep.subr.bf16.mxu0 %v10230
          %11254 = vmatpush1.bf16.msra.mxu0 %v10229
          %11255 = vmatprep.subr.bf16.mxu0 %v10234
          %11256 = vmatpush1.bf16.msra.mxu0 %v10233
          %11257 = vmatprep.subr.bf16.mxu0 %v10238
          %11258 = vmatpush1.bf16.msra.mxu0 %v10237
          %11259 = vmatprep.subr.bf16.mxu0 %v10242
          %11260 = vmatpush1.bf16.msra.mxu0 %v10241
          %11261 = vmatprep.subr.bf16.mxu0 %v10246
          %11262 = vmatpush1.bf16.msra.mxu0 %v10245
          %11263 = vmatprep.subr.bf16.mxu0 %v10250
          %11264 = vmatpush1.bf16.msra.mxu0 %v10249
          %11265 = vmatprep.subr.bf16.mxu0 %v10254
          %11266 = vmatpush1.bf16.msra.mxu0 %v10253
          %11267 = vmatprep.subr.bf16.mxu0 %v10258
          %11268 = vmatpush1.bf16.msra.mxu0 %v10257
          %11269 = vmatprep.subr.bf16.mxu0 %v10262
          %11270 = vmatpush1.bf16.msra.mxu0 %v10261
          %11271 = vmatprep.subr.bf16.mxu0 %v10266
          %11272 = vmatpush1.bf16.msra.mxu0 %v10265
          %11273 = vmatprep.subr.bf16.mxu0 %v10270
          %11274 = vmatpush1.bf16.msra.mxu0 %v10269
          %11275 = vmatprep.subr.bf16.mxu0 %v10274
          %11276 = vmatpush1.bf16.msra.mxu0 %v10273
          %11277 = vmatprep.subr.bf16.mxu0 %v10278
          %11278 = vmatpush1.bf16.msra.mxu0 %v10277
          %11279 = vmatprep.subr.bf16.mxu0 %v10282
          %11280 = vmatpush1.bf16.msra.mxu0 %v10281
          %11281 = vmatprep.subr.bf16.mxu0 %v10286
          %11282 = vmatpush1.bf16.msra.mxu0 %v10285
          %11283 = vmatprep.subr.bf16.mxu0 %v10290
          %11284 = vmatpush1.bf16.msra.mxu0 %v10289
          %11285 = vmatprep.mubr.f32.mxu0 %v8144
          %11286 = vmatmul.mubr.f32.gmra.mrb[0].mxu0 %v8143
          %v11287 = vpop.f32.mrb[0].mxu0
          %v11288 = vadd.f32 %v8676, %v11287
          %v11289 = vpop.f32.mrb[0].mxu0
          %v11290 = vadd.f32 %v8680, %v11289
          %11291 = vdwg.mxu0
          %11292 = vmatprep.subr.bf16.mxu0 %v10294
          %11293 = vmatpush1.bf16.msra.mxu0 %v10293
          %11294 = vmatprep.subr.bf16.mxu0 %v10298
          %11295 = vmatpush1.bf16.msra.mxu0 %v10297
          %11296 = vmatprep.subr.bf16.mxu0 %v10302
          %11297 = vmatpush1.bf16.msra.mxu0 %v10301
          %11298 = vmatprep.subr.bf16.mxu0 %v10306
          %11299 = vmatpush1.bf16.msra.mxu0 %v10305
          %11300 = vmatprep.subr.bf16.mxu0 %v10310
          %11301 = vmatpush1.bf16.msra.mxu0 %v10309
          %11302 = vmatprep.subr.bf16.mxu0 %v10314
          %11303 = vmatpush1.bf16.msra.mxu0 %v10313
          %11304 = vmatprep.subr.bf16.mxu0 %v10318
          %11305 = vmatpush1.bf16.msra.mxu0 %v10317
          %11306 = vmatprep.subr.bf16.mxu0 %v10322
          %11307 = vmatpush1.bf16.msra.mxu0 %v10321
          %11308 = vmatprep.subr.bf16.mxu0 %v10326
          %11309 = vmatpush1.bf16.msra.mxu0 %v10325
          %11310 = vmatprep.subr.bf16.mxu0 %v10330
          %11311 = vmatpush1.bf16.msra.mxu0 %v10329
          %11312 = vmatprep.subr.bf16.mxu0 %v10334
          %11313 = vmatpush1.bf16.msra.mxu0 %v10333
          %11314 = vmatprep.subr.bf16.mxu0 %v10338
          %11315 = vmatpush1.bf16.msra.mxu0 %v10337
          %11316 = vmatprep.subr.bf16.mxu0 %v10342
          %11317 = vmatpush1.bf16.msra.mxu0 %v10341
          %11318 = vmatprep.subr.bf16.mxu0 %v10346
          %11319 = vmatpush1.bf16.msra.mxu0 %v10345
          %11320 = vmatprep.subr.bf16.mxu0 %v10350
          %11321 = vmatpush1.bf16.msra.mxu0 %v10349
          %11322 = vmatprep.subr.bf16.mxu0 %v10354
          %11323 = vmatpush1.bf16.msra.mxu0 %v10353
          %11324 = vmatprep.mubr.f32.mxu0 %v8146
          %11325 = vmatmul.mubr.f32.gmra.mrb[0].mxu0 %v8145
          %v11326 = vpop.f32.mrb[0].mxu0
          %v11327 = vadd.f32 %v11288, %v11326
          %v11328 = vpop.f32.mrb[0].mxu0
          %v11329 = vadd.f32 %v11290, %v11328
          %11330 = vdwg.mxu0
          %11331 = vmatprep.subr.bf16.mxu0 %v10358
          %11332 = vmatpush1.bf16.msra.mxu0 %v10357
          %11333 = vmatprep.subr.bf16.mxu0 %v10362
          %11334 = vmatpush1.bf16.msra.mxu0 %v10361
          %11335 = vmatprep.subr.bf16.mxu0 %v10366
          %11336 = vmatpush1.bf16.msra.mxu0 %v10365
          %11337 = vmatprep.subr.bf16.mxu0 %v10370
          %11338 = vmatpush1.bf16.msra.mxu0 %v10369
          %11339 = vmatprep.subr.bf16.mxu0 %v10374
          %11340 = vmatpush1.bf16.msra.mxu0 %v10373
          %11341 = vmatprep.subr.bf16.mxu0 %v10378
          %11342 = vmatpush1.bf16.msra.mxu0 %v10377
          %11343 = vmatprep.subr.bf16.mxu0 %v10382
          %11344 = vmatpush1.bf16.msra.mxu0 %v10381
          %11345 = vmatprep.subr.bf16.mxu0 %v10386
          %11346 = vmatpush1.bf16.msra.mxu0 %v10385
          %11347 = vmatprep.subr.bf16.mxu0 %v10390
          %11348 = vmatpush1.bf16.msra.mxu0 %v10389
          %11349 = vmatprep.subr.bf16.mxu0 %v10394
          %11350 = vmatpush1.bf16.msra.mxu0 %v10393
          %11351 = vmatprep.subr.bf16.mxu0 %v10398
          %11352 = vmatpush1.bf16.msra.mxu0 %v10397
          %11353 = vmatprep.subr.bf16.mxu0 %v10402
          %11354 = vmatpush1.bf16.msra.mxu0 %v10401
          %11355 = vmatprep.subr.bf16.mxu0 %v10406
          %11356 = vmatpush1.bf16.msra.mxu0 %v10405
          %11357 = vmatprep.subr.bf16.mxu0 %v10410
          %11358 = vmatpush1.bf16.msra.mxu0 %v10409
          %11359 = vmatprep.subr.bf16.mxu0 %v10414
          %11360 = vmatpush1.bf16.msra.mxu0 %v10413
          %11361 = vmatprep.subr.bf16.mxu0 %v10418
          %11362 = vmatpush1.bf16.msra.mxu0 %v10417
          %11363 = vmatprep.mubr.f32.mxu0 %v8148
          %11364 = vmatmul.mubr.f32.gmra.mrb[0].mxu0 %v8147
          %v11365 = vpop.f32.mrb[0].mxu0
          %v11366 = vadd.f32 %v11327, %v11365
          %v11367 = vpop.f32.mrb[0].mxu0
          %v11368 = vadd.f32 %v11329, %v11367
          %11369 = vdwg.mxu0
          %11370 = vmatprep.subr.bf16.mxu0 %v10422
          %11371 = vmatpush1.bf16.msra.mxu0 %v10421
          %11372 = vmatprep.subr.bf16.mxu0 %v10426
          %11373 = vmatpush1.bf16.msra.mxu0 %v10425
          %11374 = vmatprep.subr.bf16.mxu0 %v10430
          %11375 = vmatpush1.bf16.msra.mxu0 %v10429
          %11376 = vmatprep.subr.bf16.mxu0 %v10434
          %11377 = vmatpush1.bf16.msra.mxu0 %v10433
          %11378 = vmatprep.subr.bf16.mxu0 %v10438
          %11379 = vmatpush1.bf16.msra.mxu0 %v10437
          %11380 = vmatprep.subr.bf16.mxu0 %v10442
          %11381 = vmatpush1.bf16.msra.mxu0 %v10441
          %11382 = vmatprep.subr.bf16.mxu0 %v10446
          %11383 = vmatpush1.bf16.msra.mxu0 %v10445
          %11384 = vmatprep.subr.bf16.mxu0 %v10450
          %11385 = vmatpush1.bf16.msra.mxu0 %v10449
          %11386 = vmatprep.subr.bf16.mxu0 %v10454
          %11387 = vmatpush1.bf16.msra.mxu0 %v10453
          %11388 = vmatprep.subr.bf16.mxu0 %v10458
          %11389 = vmatpush1.bf16.msra.mxu0 %v10457
          %11390 = vmatprep.subr.bf16.mxu0 %v10462
          %11391 = vmatpush1.bf16.msra.mxu0 %v10461
          %11392 = vmatprep.subr.bf16.mxu0 %v10466
          %11393 = vmatpush1.bf16.msra.mxu0 %v10465
          %11394 = vmatprep.subr.bf16.mxu0 %v10470
          %11395 = vmatpush1.bf16.msra.mxu0 %v10469
          %11396 = vmatprep.subr.bf16.mxu0 %v10474
          %11397 = vmatpush1.bf16.msra.mxu0 %v10473
          %11398 = vmatprep.subr.bf16.mxu0 %v10478
          %11399 = vmatpush1.bf16.msra.mxu0 %v10477
          %11400 = vmatprep.subr.bf16.mxu0 %v10482
          %11401 = vmatpush1.bf16.msra.mxu0 %v10481
          %11402 = vmatprep.mubr.f32.mxu0 %v8150
          %11403 = vmatmul.mubr.f32.gmra.mrb[0].mxu0 %v8149
          %v11404 = vpop.f32.mrb[0].mxu0
          %v11405 = vadd.f32 %v11366, %v11404
          %v11406 = vpop.f32.mrb[0].mxu0
          %v11407 = vadd.f32 %v11368, %v11406
          %11408 = vdwg.mxu0
          %11409 = vmatprep.subr.bf16.mxu0 %v10486
          %11410 = vmatpush1.bf16.msra.mxu0 %v10485
          %11411 = vmatprep.subr.bf16.mxu0 %v10490
          %11412 = vmatpush1.bf16.msra.mxu0 %v10489
          %11413 = vmatprep.subr.bf16.mxu0 %v10494
          %11414 = vmatpush1.bf16.msra.mxu0 %v10493
          %11415 = vmatprep.subr.bf16.mxu0 %v10498
          %11416 = vmatpush1.bf16.msra.mxu0 %v10497
          %11417 = vmatprep.subr.bf16.mxu0 %v10502
          %11418 = vmatpush1.bf16.msra.mxu0 %v10501
          %11419 = vmatprep.subr.bf16.mxu0 %v10506
          %11420 = vmatpush1.bf16.msra.mxu0 %v10505
          %11421 = vmatprep.subr.bf16.mxu0 %v10510
          %11422 = vmatpush1.bf16.msra.mxu0 %v10509
          %11423 = vmatprep.subr.bf16.mxu0 %v10514
          %11424 = vmatpush1.bf16.msra.mxu0 %v10513
          %11425 = vmatprep.subr.bf16.mxu0 %v10518
          %11426 = vmatpush1.bf16.msra.mxu0 %v10517
          %11427 = vmatprep.subr.bf16.mxu0 %v10522
          %11428 = vmatpush1.bf16.msra.mxu0 %v10521
          %11429 = vmatprep.subr.bf16.mxu0 %v10526
          %11430 = vmatpush1.bf16.msra.mxu0 %v10525
          %11431 = vmatprep.subr.bf16.mxu0 %v10530
          %11432 = vmatpush1.bf16.msra.mxu0 %v10529
          %11433 = vmatprep.subr.bf16.mxu0 %v10534
          %11434 = vmatpush1.bf16.msra.mxu0 %v10533
          %11435 = vmatprep.subr.bf16.mxu0 %v10538
          %11436 = vmatpush1.bf16.msra.mxu0 %v10537
          %11437 = vmatprep.subr.bf16.mxu0 %v10542
          %11438 = vmatpush1.bf16.msra.mxu0 %v10541
          %11439 = vmatprep.subr.bf16.mxu0 %v10546
          %11440 = vmatpush1.bf16.msra.mxu0 %v10545
          %11441 = vmatprep.mubr.f32.mxu0 %v8152
          %11442 = vmatmul.mubr.f32.gmra.mrb[0].mxu0 %v8151
          %v11443 = vpop.f32.mrb[0].mxu0
          %v11444 = vadd.f32 %v11405, %v11443
          %v11445 = vpop.f32.mrb[0].mxu0
          %v11446 = vadd.f32 %v11407, %v11445
          %11447 = vdwg.mxu0
          %11448 = vmatprep.subr.bf16.mxu0 %v10550
          %11449 = vmatpush1.bf16.msra.mxu0 %v10549
          %11450 = vmatprep.subr.bf16.mxu0 %v10554
          %11451 = vmatpush1.bf16.msra.mxu0 %v10553
          %11452 = vmatprep.subr.bf16.mxu0 %v10558
          %11453 = vmatpush1.bf16.msra.mxu0 %v10557
          %11454 = vmatprep.subr.bf16.mxu0 %v10562
          %11455 = vmatpush1.bf16.msra.mxu0 %v10561
          %11456 = vmatprep.subr.bf16.mxu0 %v10566
          %11457 = vmatpush1.bf16.msra.mxu0 %v10565
          %11458 = vmatprep.subr.bf16.mxu0 %v10570
          %11459 = vmatpush1.bf16.msra.mxu0 %v10569
          %11460 = vmatprep.subr.bf16.mxu0 %v10574
          %11461 = vmatpush1.bf16.msra.mxu0 %v10573
          %11462 = vmatprep.subr.bf16.mxu0 %v10578
          %11463 = vmatpush1.bf16.msra.mxu0 %v10577
          %11464 = vmatprep.subr.bf16.mxu0 %v10582
          %11465 = vmatpush1.bf16.msra.mxu0 %v10581
          %11466 = vmatprep.subr.bf16.mxu0 %v10586
          %11467 = vmatpush1.bf16.msra.mxu0 %v10585
          %11468 = vmatprep.subr.bf16.mxu0 %v10590
          %11469 = vmatpush1.bf16.msra.mxu0 %v10589
          %11470 = vmatprep.subr.bf16.mxu0 %v10594
          %11471 = vmatpush1.bf16.msra.mxu0 %v10593
          %11472 = vmatprep.subr.bf16.mxu0 %v10598
          %11473 = vmatpush1.bf16.msra.mxu0 %v10597
          %11474 = vmatprep.subr.bf16.mxu0 %v10602
          %11475 = vmatpush1.bf16.msra.mxu0 %v10601
          %11476 = vmatprep.subr.bf16.mxu0 %v10606
          %11477 = vmatpush1.bf16.msra.mxu0 %v10605
          %11478 = vmatprep.subr.bf16.mxu0 %v10610
          %11479 = vmatpush1.bf16.msra.mxu0 %v10609
          %11480 = vmatprep.mubr.f32.mxu0 %v8154
          %11481 = vmatmul.mubr.f32.gmra.mrb[0].mxu0 %v8153
          %v11482 = vpop.f32.mrb[0].mxu0
          %v11483 = vadd.f32 %v11444, %v11482
          %v11484 = vpop.f32.mrb[0].mxu0
          %v11485 = vadd.f32 %v11446, %v11484
          %11486 = vdwg.mxu0
          %11487 = vmatprep.subr.bf16.mxu0 %v10614
          %11488 = vmatpush1.bf16.msra.mxu0 %v10613
          %11489 = vmatprep.subr.bf16.mxu0 %v10618
          %11490 = vmatpush1.bf16.msra.mxu0 %v10617
          %11491 = vmatprep.subr.bf16.mxu0 %v10622
          %11492 = vmatpush1.bf16.msra.mxu0 %v10621
          %11493 = vmatprep.subr.bf16.mxu0 %v10626
          %11494 = vmatpush1.bf16.msra.mxu0 %v10625
          %11495 = vmatprep.subr.bf16.mxu0 %v10630
          %11496 = vmatpush1.bf16.msra.mxu0 %v10629
          %11497 = vmatprep.subr.bf16.mxu0 %v10634
          %11498 = vmatpush1.bf16.msra.mxu0 %v10633
          %11499 = vmatprep.subr.bf16.mxu0 %v10638
          %11500 = vmatpush1.bf16.msra.mxu0 %v10637
          %11501 = vmatprep.subr.bf16.mxu0 %v10642
          %11502 = vmatpush1.bf16.msra.mxu0 %v10641
          %11503 = vmatprep.subr.bf16.mxu0 %v10646
          %11504 = vmatpush1.bf16.msra.mxu0 %v10645
          %11505 = vmatprep.subr.bf16.mxu0 %v10650
          %11506 = vmatpush1.bf16.msra.mxu0 %v10649
          %11507 = vmatprep.subr.bf16.mxu0 %v10654
          %11508 = vmatpush1.bf16.msra.mxu0 %v10653
          %11509 = vmatprep.subr.bf16.mxu0 %v10658
          %11510 = vmatpush1.bf16.msra.mxu0 %v10657
          %11511 = vmatprep.subr.bf16.mxu0 %v10662
          %11512 = vmatpush1.bf16.msra.mxu0 %v10661
          %11513 = vmatprep.subr.bf16.mxu0 %v10666
          %11514 = vmatpush1.bf16.msra.mxu0 %v10665
          %11515 = vmatprep.subr.bf16.mxu0 %v10670
          %11516 = vmatpush1.bf16.msra.mxu0 %v10669
          %11517 = vmatprep.subr.bf16.mxu0 %v10674
          %11518 = vmatpush1.bf16.msra.mxu0 %v10673
          %11519 = vmatprep.mubr.f32.mxu0 %v8156
          %11520 = vmatmul.mubr.f32.gmra.mrb[0].mxu0 %v8155
          %v11521 = vpop.f32.mrb[0].mxu0
          %v11522 = vadd.f32 %v11483, %v11521
          %v11523 = vpop.f32.mrb[0].mxu0
          %v11524 = vadd.f32 %v11485, %v11523
          %11525 = vdwg.mxu0
          %11526 = vmatprep.subr.bf16.mxu0 %v10678
          %11527 = vmatpush1.bf16.msra.mxu0 %v10677
          %11528 = vmatprep.subr.bf16.mxu0 %v10682
          %11529 = vmatpush1.bf16.msra.mxu0 %v10681
          %11530 = vmatprep.subr.bf16.mxu0 %v10686
          %11531 = vmatpush1.bf16.msra.mxu0 %v10685
          %11532 = vmatprep.subr.bf16.mxu0 %v10690
          %11533 = vmatpush1.bf16.msra.mxu0 %v10689
          %11534 = vmatprep.subr.bf16.mxu0 %v10694
          %11535 = vmatpush1.bf16.msra.mxu0 %v10693
          %11536 = vmatprep.subr.bf16.mxu0 %v10698
          %11537 = vmatpush1.bf16.msra.mxu0 %v10697
          %11538 = vmatprep.subr.bf16.mxu0 %v10702
          %11539 = vmatpush1.bf16.msra.mxu0 %v10701
          %11540 = vmatprep.subr.bf16.mxu0 %v10706
          %11541 = vmatpush1.bf16.msra.mxu0 %v10705
          %11542 = vmatprep.subr.bf16.mxu0 %v10710
          %11543 = vmatpush1.bf16.msra.mxu0 %v10709
          %11544 = vmatprep.subr.bf16.mxu0 %v10714
          %11545 = vmatpush1.bf16.msra.mxu0 %v10713
          %11546 = vmatprep.subr.bf16.mxu0 %v10718
          %11547 = vmatpush1.bf16.msra.mxu0 %v10717
          %11548 = vmatprep.subr.bf16.mxu0 %v10722
          %11549 = vmatpush1.bf16.msra.mxu0 %v10721
          %11550 = vmatprep.subr.bf16.mxu0 %v10726
          %11551 = vmatpush1.bf16.msra.mxu0 %v10725
          %11552 = vmatprep.subr.bf16.mxu0 %v10730
          %11553 = vmatpush1.bf16.msra.mxu0 %v10729
          %11554 = vmatprep.subr.bf16.mxu0 %v10734
          %11555 = vmatpush1.bf16.msra.mxu0 %v10733
          %11556 = vmatprep.subr.bf16.mxu0 %v10738
          %11557 = vmatpush1.bf16.msra.mxu0 %v10737
          %11558 = vmatprep.mubr.f32.mxu0 %v8158
          %11559 = vmatmul.mubr.f32.gmra.mrb[0].mxu0 %v8157
          %v11560 = vpop.f32.mrb[0].mxu0
          %v11561 = vadd.f32 %v11522, %v11560
          %v11562 = vpop.f32.mrb[0].mxu0
          %v11563 = vadd.f32 %v11524, %v11562
          %11564 = vdwg.mxu0
          %11565 = vmatprep.subr.bf16.mxu0 %v10232
          %11566 = vmatpush1.bf16.msra.mxu0 %v10231
          %11567 = vmatprep.subr.bf16.mxu0 %v10236
          %11568 = vmatpush1.bf16.msra.mxu0 %v10235
          %11569 = vmatprep.subr.bf16.mxu0 %v10240
          %11570 = vmatpush1.bf16.msra.mxu0 %v10239
          %11571 = vmatprep.subr.bf16.mxu0 %v10244
          %11572 = vmatpush1.bf16.msra.mxu0 %v10243
          %11573 = vmatprep.subr.bf16.mxu0 %v10248
          %11574 = vmatpush1.bf16.msra.mxu0 %v10247
          %11575 = vmatprep.subr.bf16.mxu0 %v10252
          %11576 = vmatpush1.bf16.msra.mxu0 %v10251
          %11577 = vmatprep.subr.bf16.mxu0 %v10256
          %11578 = vmatpush1.bf16.msra.mxu0 %v10255
          %11579 = vmatprep.subr.bf16.mxu0 %v10260
          %11580 = vmatpush1.bf16.msra.mxu0 %v10259
          %11581 = vmatprep.subr.bf16.mxu0 %v10264
          %11582 = vmatpush1.bf16.msra.mxu0 %v10263
          %11583 = vmatprep.subr.bf16.mxu0 %v10268
          %11584 = vmatpush1.bf16.msra.mxu0 %v10267
          %11585 = vmatprep.subr.bf16.mxu0 %v10272
          %11586 = vmatpush1.bf16.msra.mxu0 %v10271
          %11587 = vmatprep.subr.bf16.mxu0 %v10276
          %11588 = vmatpush1.bf16.msra.mxu0 %v10275
          %11589 = vmatprep.subr.bf16.mxu0 %v10280
          %11590 = vmatpush1.bf16.msra.mxu0 %v10279
          %11591 = vmatprep.subr.bf16.mxu0 %v10284
          %11592 = vmatpush1.bf16.msra.mxu0 %v10283
          %11593 = vmatprep.subr.bf16.mxu0 %v10288
          %11594 = vmatpush1.bf16.msra.mxu0 %v10287
          %11595 = vmatprep.subr.bf16.mxu0 %v10292
          %11596 = vmatpush1.bf16.msra.mxu0 %v10291
          %11597 = vmatprep.mubr.f32.mxu0 %v8144
          %11598 = vmatmul.mubr.f32.gmra.mrb[0].mxu0 %v8143
          %v11599 = vpop.f32.mrb[0].mxu0
          %v11600 = vadd.f32 %v8684, %v11599
          %v11601 = vpop.f32.mrb[0].mxu0
          %v11602 = vadd.f32 %v8688, %v11601
          %11603 = vdwg.mxu0
          %11604 = vmatprep.subr.bf16.mxu0 %v10296
          %11605 = vmatpush1.bf16.msra.mxu0 %v10295
          %11606 = vmatprep.subr.bf16.mxu0 %v10300
          %11607 = vmatpush1.bf16.msra.mxu0 %v10299
          %11608 = vmatprep.subr.bf16.mxu0 %v10304
          %11609 = vmatpush1.bf16.msra.mxu0 %v10303
          %11610 = vmatprep.subr.bf16.mxu0 %v10308
          %11611 = vmatpush1.bf16.msra.mxu0 %v10307
          %11612 = vmatprep.subr.bf16.mxu0 %v10312
          %11613 = vmatpush1.bf16.msra.mxu0 %v10311
          %11614 = vmatprep.subr.bf16.mxu0 %v10316
          %11615 = vmatpush1.bf16.msra.mxu0 %v10315
          %11616 = vmatprep.subr.bf16.mxu0 %v10320
          %11617 = vmatpush1.bf16.msra.mxu0 %v10319
          %11618 = vmatprep.subr.bf16.mxu0 %v10324
          %11619 = vmatpush1.bf16.msra.mxu0 %v10323
          %11620 = vmatprep.subr.bf16.mxu0 %v10328
          %11621 = vmatpush1.bf16.msra.mxu0 %v10327
          %11622 = vmatprep.subr.bf16.mxu0 %v10332
          %11623 = vmatpush1.bf16.msra.mxu0 %v10331
          %11624 = vmatprep.subr.bf16.mxu0 %v10336
          %11625 = vmatpush1.bf16.msra.mxu0 %v10335
          %11626 = vmatprep.subr.bf16.mxu0 %v10340
          %11627 = vmatpush1.bf16.msra.mxu0 %v10339
          %11628 = vmatprep.subr.bf16.mxu0 %v10344
          %11629 = vmatpush1.bf16.msra.mxu0 %v10343
          %11630 = vmatprep.subr.bf16.mxu0 %v10348
          %11631 = vmatpush1.bf16.msra.mxu0 %v10347
          %11632 = vmatprep.subr.bf16.mxu0 %v10352
          %11633 = vmatpush1.bf16.msra.mxu0 %v10351
          %11634 = vmatprep.subr.bf16.mxu0 %v10356
          %11635 = vmatpush1.bf16.msra.mxu0 %v10355
          %11636 = vmatprep.mubr.f32.mxu0 %v8146
          %11637 = vmatmul.mubr.f32.gmra.mrb[0].mxu0 %v8145
          %v11638 = vpop.f32.mrb[0].mxu0
          %v11639 = vadd.f32 %v11600, %v11638
          %v11640 = vpop.f32.mrb[0].mxu0
          %v11641 = vadd.f32 %v11602, %v11640
          %11642 = vdwg.mxu0
          %11643 = vmatprep.subr.bf16.mxu0 %v10360
          %11644 = vmatpush1.bf16.msra.mxu0 %v10359
          %11645 = vmatprep.subr.bf16.mxu0 %v10364
          %11646 = vmatpush1.bf16.msra.mxu0 %v10363
          %11647 = vmatprep.subr.bf16.mxu0 %v10368
          %11648 = vmatpush1.bf16.msra.mxu0 %v10367
          %11649 = vmatprep.subr.bf16.mxu0 %v10372
          %11650 = vmatpush1.bf16.msra.mxu0 %v10371
          %11651 = vmatprep.subr.bf16.mxu0 %v10376
          %11652 = vmatpush1.bf16.msra.mxu0 %v10375
          %11653 = vmatprep.subr.bf16.mxu0 %v10380
          %11654 = vmatpush1.bf16.msra.mxu0 %v10379
          %11655 = vmatprep.subr.bf16.mxu0 %v10384
          %11656 = vmatpush1.bf16.msra.mxu0 %v10383
          %11657 = vmatprep.subr.bf16.mxu0 %v10388
          %11658 = vmatpush1.bf16.msra.mxu0 %v10387
          %11659 = vmatprep.subr.bf16.mxu0 %v10392
          %11660 = vmatpush1.bf16.msra.mxu0 %v10391
          %11661 = vmatprep.subr.bf16.mxu0 %v10396
          %11662 = vmatpush1.bf16.msra.mxu0 %v10395
          %11663 = vmatprep.subr.bf16.mxu0 %v10400
          %11664 = vmatpush1.bf16.msra.mxu0 %v10399
          %11665 = vmatprep.subr.bf16.mxu0 %v10404
          %11666 = vmatpush1.bf16.msra.mxu0 %v10403
          %11667 = vmatprep.subr.bf16.mxu0 %v10408
          %11668 = vmatpush1.bf16.msra.mxu0 %v10407
          %11669 = vmatprep.subr.bf16.mxu0 %v10412
          %11670 = vmatpush1.bf16.msra.mxu0 %v10411
          %11671 = vmatprep.subr.bf16.mxu0 %v10416
          %11672 = vmatpush1.bf16.msra.mxu0 %v10415
          %11673 = vmatprep.subr.bf16.mxu0 %v10420
          %11674 = vmatpush1.bf16.msra.mxu0 %v10419
          %11675 = vmatprep.mubr.f32.mxu0 %v8148
          %11676 = vmatmul.mubr.f32.gmra.mrb[0].mxu0 %v8147
          %v11677 = vpop.f32.mrb[0].mxu0
          %v11678 = vadd.f32 %v11639, %v11677
          %v11679 = vpop.f32.mrb[0].mxu0
          %v11680 = vadd.f32 %v11641, %v11679
          %11681 = vdwg.mxu0
          %11682 = vmatprep.subr.bf16.mxu0 %v10424
          %11683 = vmatpush1.bf16.msra.mxu0 %v10423
          %11684 = vmatprep.subr.bf16.mxu0 %v10428
          %11685 = vmatpush1.bf16.msra.mxu0 %v10427
          %11686 = vmatprep.subr.bf16.mxu0 %v10432
          %11687 = vmatpush1.bf16.msra.mxu0 %v10431
          %11688 = vmatprep.subr.bf16.mxu0 %v10436
          %11689 = vmatpush1.bf16.msra.mxu0 %v10435
          %11690 = vmatprep.subr.bf16.mxu0 %v10440
          %11691 = vmatpush1.bf16.msra.mxu0 %v10439
          %11692 = vmatprep.subr.bf16.mxu0 %v10444
          %11693 = vmatpush1.bf16.msra.mxu0 %v10443
          %11694 = vmatprep.subr.bf16.mxu0 %v10448
          %11695 = vmatpush1.bf16.msra.mxu0 %v10447
          %11696 = vmatprep.subr.bf16.mxu0 %v10452
          %11697 = vmatpush1.bf16.msra.mxu0 %v10451
          %11698 = vmatprep.subr.bf16.mxu0 %v10456
          %11699 = vmatpush1.bf16.msra.mxu0 %v10455
          %11700 = vmatprep.subr.bf16.mxu0 %v10460
          %11701 = vmatpush1.bf16.msra.mxu0 %v10459
          %11702 = vmatprep.subr.bf16.mxu0 %v10464
          %11703 = vmatpush1.bf16.msra.mxu0 %v10463
          %11704 = vmatprep.subr.bf16.mxu0 %v10468
          %11705 = vmatpush1.bf16.msra.mxu0 %v10467
          %11706 = vmatprep.subr.bf16.mxu0 %v10472
          %11707 = vmatpush1.bf16.msra.mxu0 %v10471
          %11708 = vmatprep.subr.bf16.mxu0 %v10476
          %11709 = vmatpush1.bf16.msra.mxu0 %v10475
          %11710 = vmatprep.subr.bf16.mxu0 %v10480
          %11711 = vmatpush1.bf16.msra.mxu0 %v10479
          %11712 = vmatprep.subr.bf16.mxu0 %v10484
          %11713 = vmatpush1.bf16.msra.mxu0 %v10483
          %11714 = vmatprep.mubr.f32.mxu0 %v8150
          %11715 = vmatmul.mubr.f32.gmra.mrb[0].mxu0 %v8149
          %v11716 = vpop.f32.mrb[0].mxu0
          %v11717 = vadd.f32 %v11678, %v11716
          %v11718 = vpop.f32.mrb[0].mxu0
          %v11719 = vadd.f32 %v11680, %v11718
          %11720 = vdwg.mxu0
          %11721 = vmatprep.subr.bf16.mxu0 %v10488
          %11722 = vmatpush1.bf16.msra.mxu0 %v10487
          %11723 = vmatprep.subr.bf16.mxu0 %v10492
          %11724 = vmatpush1.bf16.msra.mxu0 %v10491
          %11725 = vmatprep.subr.bf16.mxu0 %v10496
          %11726 = vmatpush1.bf16.msra.mxu0 %v10495
          %11727 = vmatprep.subr.bf16.mxu0 %v10500
          %11728 = vmatpush1.bf16.msra.mxu0 %v10499
          %11729 = vmatprep.subr.bf16.mxu0 %v10504
          %11730 = vmatpush1.bf16.msra.mxu0 %v10503
          %11731 = vmatprep.subr.bf16.mxu0 %v10508
          %11732 = vmatpush1.bf16.msra.mxu0 %v10507
          %11733 = vmatprep.subr.bf16.mxu0 %v10512
          %11734 = vmatpush1.bf16.msra.mxu0 %v10511
          %11735 = vmatprep.subr.bf16.mxu0 %v10516
          %11736 = vmatpush1.bf16.msra.mxu0 %v10515
          %11737 = vmatprep.subr.bf16.mxu0 %v10520
          %11738 = vmatpush1.bf16.msra.mxu0 %v10519
          %11739 = vmatprep.subr.bf16.mxu0 %v10524
          %11740 = vmatpush1.bf16.msra.mxu0 %v10523
          %11741 = vmatprep.subr.bf16.mxu0 %v10528
          %11742 = vmatpush1.bf16.msra.mxu0 %v10527
          %11743 = vmatprep.subr.bf16.mxu0 %v10532
          %11744 = vmatpush1.bf16.msra.mxu0 %v10531
          %11745 = vmatprep.subr.bf16.mxu0 %v10536
          %11746 = vmatpush1.bf16.msra.mxu0 %v10535
          %11747 = vmatprep.subr.bf16.mxu0 %v10540
          %11748 = vmatpush1.bf16.msra.mxu0 %v10539
          %11749 = vmatprep.subr.bf16.mxu0 %v10544
          %11750 = vmatpush1.bf16.msra.mxu0 %v10543
          %11751 = vmatprep.subr.bf16.mxu0 %v10548
          %11752 = vmatpush1.bf16.msra.mxu0 %v10547
          %11753 = vmatprep.mubr.f32.mxu0 %v8152
          %11754 = vmatmul.mubr.f32.gmra.mrb[0].mxu0 %v8151
          %v11755 = vpop.f32.mrb[0].mxu0
          %v11756 = vadd.f32 %v11717, %v11755
          %v11757 = vpop.f32.mrb[0].mxu0
          %v11758 = vadd.f32 %v11719, %v11757
          %11759 = vdwg.mxu0
          %11760 = vmatprep.subr.bf16.mxu0 %v10552
          %11761 = vmatpush1.bf16.msra.mxu0 %v10551
          %11762 = vmatprep.subr.bf16.mxu0 %v10556
          %11763 = vmatpush1.bf16.msra.mxu0 %v10555
          %11764 = vmatprep.subr.bf16.mxu0 %v10560
          %11765 = vmatpush1.bf16.msra.mxu0 %v10559
          %11766 = vmatprep.subr.bf16.mxu0 %v10564
          %11767 = vmatpush1.bf16.msra.mxu0 %v10563
          %11768 = vmatprep.subr.bf16.mxu0 %v10568
          %11769 = vmatpush1.bf16.msra.mxu0 %v10567
          %11770 = vmatprep.subr.bf16.mxu0 %v10572
          %11771 = vmatpush1.bf16.msra.mxu0 %v10571
          %11772 = vmatprep.subr.bf16.mxu0 %v10576
          %11773 = vmatpush1.bf16.msra.mxu0 %v10575
          %11774 = vmatprep.subr.bf16.mxu0 %v10580
          %11775 = vmatpush1.bf16.msra.mxu0 %v10579
          %11776 = vmatprep.subr.bf16.mxu0 %v10584
          %11777 = vmatpush1.bf16.msra.mxu0 %v10583
          %11778 = vmatprep.subr.bf16.mxu0 %v10588
          %11779 = vmatpush1.bf16.msra.mxu0 %v10587
          %11780 = vmatprep.subr.bf16.mxu0 %v10592
          %11781 = vmatpush1.bf16.msra.mxu0 %v10591
          %11782 = vmatprep.subr.bf16.mxu0 %v10596
          %11783 = vmatpush1.bf16.msra.mxu0 %v10595
          %11784 = vmatprep.subr.bf16.mxu0 %v10600
          %11785 = vmatpush1.bf16.msra.mxu0 %v10599
          %11786 = vmatprep.subr.bf16.mxu0 %v10604
          %11787 = vmatpush1.bf16.msra.mxu0 %v10603
          %11788 = vmatprep.subr.bf16.mxu0 %v10608
          %11789 = vmatpush1.bf16.msra.mxu0 %v10607
          %11790 = vmatprep.subr.bf16.mxu0 %v10612
          %11791 = vmatpush1.bf16.msra.mxu0 %v10611
          %11792 = vmatprep.mubr.f32.mxu0 %v8154
          %11793 = vmatmul.mubr.f32.gmra.mrb[0].mxu0 %v8153
          %v11794 = vpop.f32.mrb[0].mxu0
          %v11795 = vadd.f32 %v11756, %v11794
          %v11796 = vpop.f32.mrb[0].mxu0
          %v11797 = vadd.f32 %v11758, %v11796
          %11798 = vdwg.mxu0
          %11799 = vmatprep.subr.bf16.mxu0 %v10616
          %11800 = vmatpush1.bf16.msra.mxu0 %v10615
          %11801 = vmatprep.subr.bf16.mxu0 %v10620
          %11802 = vmatpush1.bf16.msra.mxu0 %v10619
          %11803 = vmatprep.subr.bf16.mxu0 %v10624
          %11804 = vmatpush1.bf16.msra.mxu0 %v10623
          %11805 = vmatprep.subr.bf16.mxu0 %v10628
          %11806 = vmatpush1.bf16.msra.mxu0 %v10627
          %11807 = vmatprep.subr.bf16.mxu0 %v10632
          %11808 = vmatpush1.bf16.msra.mxu0 %v10631
          %11809 = vmatprep.subr.bf16.mxu0 %v10636
          %11810 = vmatpush1.bf16.msra.mxu0 %v10635
          %11811 = vmatprep.subr.bf16.mxu0 %v10640
          %11812 = vmatpush1.bf16.msra.mxu0 %v10639
          %11813 = vmatprep.subr.bf16.mxu0 %v10644
          %11814 = vmatpush1.bf16.msra.mxu0 %v10643
          %11815 = vmatprep.subr.bf16.mxu0 %v10648
          %11816 = vmatpush1.bf16.msra.mxu0 %v10647
          %11817 = vmatprep.subr.bf16.mxu0 %v10652
          %11818 = vmatpush1.bf16.msra.mxu0 %v10651
          %11819 = vmatprep.subr.bf16.mxu0 %v10656
          %11820 = vmatpush1.bf16.msra.mxu0 %v10655
          %11821 = vmatprep.subr.bf16.mxu0 %v10660
          %11822 = vmatpush1.bf16.msra.mxu0 %v10659
          %11823 = vmatprep.subr.bf16.mxu0 %v10664
          %11824 = vmatpush1.bf16.msra.mxu0 %v10663
          %11825 = vmatprep.subr.bf16.mxu0 %v10668
          %11826 = vmatpush1.bf16.msra.mxu0 %v10667
          %11827 = vmatprep.subr.bf16.mxu0 %v10672
          %11828 = vmatpush1.bf16.msra.mxu0 %v10671
          %11829 = vmatprep.subr.bf16.mxu0 %v10676
          %11830 = vmatpush1.bf16.msra.mxu0 %v10675
          %11831 = vmatprep.mubr.f32.mxu0 %v8156
          %11832 = vmatmul.mubr.f32.gmra.mrb[0].mxu0 %v8155
          %v11833 = vpop.f32.mrb[0].mxu0
          %v11834 = vadd.f32 %v11795, %v11833
          %v11835 = vpop.f32.mrb[0].mxu0
          %v11836 = vadd.f32 %v11797, %v11835
          %11837 = vdwg.mxu0
          %11838 = vmatprep.subr.bf16.mxu0 %v10680
          %11839 = vmatpush1.bf16.msra.mxu0 %v10679
          %11840 = vmatprep.subr.bf16.mxu0 %v10684
          %11841 = vmatpush1.bf16.msra.mxu0 %v10683
          %11842 = vmatprep.subr.bf16.mxu0 %v10688
          %11843 = vmatpush1.bf16.msra.mxu0 %v10687
          %11844 = vmatprep.subr.bf16.mxu0 %v10692
          %11845 = vmatpush1.bf16.msra.mxu0 %v10691
          %11846 = vmatprep.subr.bf16.mxu0 %v10696
          %11847 = vmatpush1.bf16.msra.mxu0 %v10695
          %11848 = vmatprep.subr.bf16.mxu0 %v10700
          %11849 = vmatpush1.bf16.msra.mxu0 %v10699
          %11850 = vmatprep.subr.bf16.mxu0 %v10704
          %11851 = vmatpush1.bf16.msra.mxu0 %v10703
          %11852 = vmatprep.subr.bf16.mxu0 %v10708
          %11853 = vmatpush1.bf16.msra.mxu0 %v10707
          %11854 = vmatprep.subr.bf16.mxu0 %v10712
          %11855 = vmatpush1.bf16.msra.mxu0 %v10711
          %11856 = vmatprep.subr.bf16.mxu0 %v10716
          %11857 = vmatpush1.bf16.msra.mxu0 %v10715
          %11858 = vmatprep.subr.bf16.mxu0 %v10720
          %11859 = vmatpush1.bf16.msra.mxu0 %v10719
          %11860 = vmatprep.subr.bf16.mxu0 %v10724
          %11861 = vmatpush1.bf16.msra.mxu0 %v10723
          %11862 = vmatprep.subr.bf16.mxu0 %v10728
          %11863 = vmatpush1.bf16.msra.mxu0 %v10727
          %11864 = vmatprep.subr.bf16.mxu0 %v10732
          %11865 = vmatpush1.bf16.msra.mxu0 %v10731
          %11866 = vmatprep.subr.bf16.mxu0 %v10736
          %11867 = vmatpush1.bf16.msra.mxu0 %v10735
          %11868 = vmatprep.subr.bf16.mxu0 %v10740
          %11869 = vmatpush1.bf16.msra.mxu0 %v10739
          %11870 = vmatprep.mubr.f32.mxu0 %v8158
          %11871 = vmatmul.mubr.f32.gmra.mrb[0].mxu0 %v8157
          %v11872 = vpop.f32.mrb[0].mxu0
          %v11873 = vadd.f32 %v11834, %v11872
          %v11874 = vpop.f32.mrb[0].mxu0
          %v11875 = vadd.f32 %v11836, %v11874
          %11876 = vdwg.mxu0
          %v11877 = vmax.f32 %v11561, 0.0
          %v11878 = vmax.f32 %v11563, 0.0
          %v11879 = vmax.f32 %v11873, 0.0
          %v11880 = vmax.f32 %v11875, 0.0
          %v11881 = vld [vmem:[#allocation12] sm:$0xf]
          %v11882 = vld [vmem:[#allocation12 + $0x4] sm:$0xf]
          %v11883 = vld [vmem:[#allocation12 + $0x8] sm:$0xf]
          %v11884 = vld [vmem:[#allocation12 + $0xc] sm:$0xf]
          %v11885 = vld [vmem:[#allocation12 + $0x10] sm:$0xf]
          %v11886 = vld [vmem:[#allocation12 + $0x14] sm:$0xf]
          %v11887 = vld [vmem:[#allocation12 + $0x18] sm:$0xf]
          %v11888 = vld [vmem:[#allocation12 + $0x1c] sm:$0xf]
          %v11889 = vld [vmem:[#allocation12 + $0x20] sm:$0xf]
          %v11890 = vld [vmem:[#allocation12 + $0x24] sm:$0xf]
          %v11891 = vld [vmem:[#allocation12 + $0x28] sm:$0xf]
          %v11892 = vld [vmem:[#allocation12 + $0x2c] sm:$0xf]
          %v11893 = vld [vmem:[#allocation12 + $0x30] sm:$0xf]
          %v11894 = vld [vmem:[#allocation12 + $0x34] sm:$0xf]
          %v11895 = vld [vmem:[#allocation12 + $0x38] sm:$0xf]
          %v11896 = vld [vmem:[#allocation12 + $0x3c] sm:$0xf]
          %v11897 = vld [vmem:[#allocation12 + $0x40] sm:$0xf]
          %v11898 = vld [vmem:[#allocation12 + $0x44] sm:$0xf]
          %v11899 = vld [vmem:[#allocation12 + $0x48] sm:$0xf]
          %v11900 = vld [vmem:[#allocation12 + $0x4c] sm:$0xf]
          %v11901 = vld [vmem:[#allocation12 + $0x50] sm:$0xf]
          %v11902 = vld [vmem:[#allocation12 + $0x54] sm:$0xf]
          %v11903 = vld [vmem:[#allocation12 + $0x58] sm:$0xf]
          %v11904 = vld [vmem:[#allocation12 + $0x5c] sm:$0xf]
          %v11905 = vld [vmem:[#allocation12 + $0x60] sm:$0xf]
          %v11906 = vld [vmem:[#allocation12 + $0x64] sm:$0xf]
          %v11907 = vld [vmem:[#allocation12 + $0x68] sm:$0xf]
          %v11908 = vld [vmem:[#allocation12 + $0x6c] sm:$0xf]
          %v11909 = vld [vmem:[#allocation12 + $0x70] sm:$0xf]
          %v11910 = vld [vmem:[#allocation12 + $0x74] sm:$0xf]
          %v11911 = vld [vmem:[#allocation12 + $0x78] sm:$0xf]
          %v11912 = vld [vmem:[#allocation12 + $0x7c] sm:$0xf]
          %v11913 = vld [vmem:[#allocation12 + $0x80] sm:$0xf]
          %v11914 = vld [vmem:[#allocation12 + $0x84] sm:$0xf]
          %v11915 = vld [vmem:[#allocation12 + $0x88] sm:$0xf]
          %v11916 = vld [vmem:[#allocation12 + $0x8c] sm:$0xf]
          %v11917 = vld [vmem:[#allocation12 + $0x90] sm:$0xf]
          %v11918 = vld [vmem:[#allocation12 + $0x94] sm:$0xf]
          %v11919 = vld [vmem:[#allocation12 + $0x98] sm:$0xf]
          %v11920 = vld [vmem:[#allocation12 + $0x9c] sm:$0xf]
          %v11921 = vld [vmem:[#allocation12 + $0xa0] sm:$0xf]
          %v11922 = vld [vmem:[#allocation12 + $0xa4] sm:$0xf]
          %v11923 = vld [vmem:[#allocation12 + $0xa8] sm:$0xf]
          %v11924 = vld [vmem:[#allocation12 + $0xac] sm:$0xf]
          %v11925 = vld [vmem:[#allocation12 + $0xb0] sm:$0xf]
          %v11926 = vld [vmem:[#allocation12 + $0xb4] sm:$0xf]
          %v11927 = vld [vmem:[#allocation12 + $0xb8] sm:$0xf]
          %v11928 = vld [vmem:[#allocation12 + $0xbc] sm:$0xf]
          %v11929 = vld [vmem:[#allocation12 + $0xc0] sm:$0xf]
          %v11930 = vld [vmem:[#allocation12 + $0xc4] sm:$0xf]
          %v11931 = vld [vmem:[#allocation12 + $0xc8] sm:$0xf]
          %v11932 = vld [vmem:[#allocation12 + $0xcc] sm:$0xf]
          %v11933 = vld [vmem:[#allocation12 + $0xd0] sm:$0xf]
          %v11934 = vld [vmem:[#allocation12 + $0xd4] sm:$0xf]
          %v11935 = vld [vmem:[#allocation12 + $0xd8] sm:$0xf]
          %v11936 = vld [vmem:[#allocation12 + $0xdc] sm:$0xf]
          %v11937 = vld [vmem:[#allocation12 + $0xe0] sm:$0xf]
          %v11938 = vld [vmem:[#allocation12 + $0xe4] sm:$0xf]
          %v11939 = vld [vmem:[#allocation12 + $0xe8] sm:$0xf]
          %v11940 = vld [vmem:[#allocation12 + $0xec] sm:$0xf]
          %v11941 = vld [vmem:[#allocation12 + $0xf0] sm:$0xf]
          %v11942 = vld [vmem:[#allocation12 + $0xf4] sm:$0xf]
          %v11943 = vld [vmem:[#allocation12 + $0xf8] sm:$0xf]
          %v11944 = vld [vmem:[#allocation12 + $0xfc] sm:$0xf]
          %v11945 = vld [vmem:[#allocation14] sm:$0x1]
          %v11947 = vlaneseq
          %v11948 = vshrl.u32 %v11947, 7
          %v11949 = vsub.s32 0, %v11948
          %v11950 = vrot.slane %v11945, %v11949
          %v12016 = vunpack.c.l.b16 %v11881
          %v12017 = vunpack.c.l.b16 %v11882
          %v12018 = vunpack.c.l.b16 %v11883
          %v12019 = vunpack.c.l.b16 %v11884
          %v12020 = vunpack.c.l.b16 %v11885
          %v12021 = vunpack.c.l.b16 %v11886
          %v12022 = vunpack.c.l.b16 %v11887
          %v12023 = vunpack.c.l.b16 %v11888
          %v12024 = vunpack.c.l.b16 %v11889
          %v12025 = vunpack.c.l.b16 %v11890
          %v12026 = vunpack.c.l.b16 %v11891
          %v12027 = vunpack.c.l.b16 %v11892
          %v12028 = vunpack.c.l.b16 %v11893
          %v12029 = vunpack.c.l.b16 %v11894
          %v12030 = vunpack.c.l.b16 %v11895
          %v12031 = vunpack.c.l.b16 %v11896
          %v12032 = vunpack.c.l.b16 %v11897
          %v12033 = vunpack.c.l.b16 %v11898
          %v12034 = vunpack.c.l.b16 %v11899
          %v12035 = vunpack.c.l.b16 %v11900
          %v12036 = vunpack.c.l.b16 %v11901
          %v12037 = vunpack.c.l.b16 %v11902
          %v12038 = vunpack.c.l.b16 %v11903
          %v12039 = vunpack.c.l.b16 %v11904
          %v12040 = vunpack.c.l.b16 %v11905
          %v12041 = vunpack.c.l.b16 %v11906
          %v12042 = vunpack.c.l.b16 %v11907
          %v12043 = vunpack.c.l.b16 %v11908
          %v12044 = vunpack.c.l.b16 %v11909
          %v12045 = vunpack.c.l.b16 %v11910
          %v12046 = vunpack.c.l.b16 %v11911
          %v12047 = vunpack.c.l.b16 %v11912
          %v12048 = vunpack.c.l.b16 %v11913
          %v12049 = vunpack.c.l.b16 %v11914
          %v12050 = vunpack.c.l.b16 %v11915
          %v12051 = vunpack.c.l.b16 %v11916
          %v12052 = vunpack.c.l.b16 %v11917
          %v12053 = vunpack.c.l.b16 %v11918
          %v12054 = vunpack.c.l.b16 %v11919
          %v12055 = vunpack.c.l.b16 %v11920
          %v12056 = vunpack.c.l.b16 %v11921
          %v12057 = vunpack.c.l.b16 %v11922
          %v12058 = vunpack.c.l.b16 %v11923
          %v12059 = vunpack.c.l.b16 %v11924
          %v12060 = vunpack.c.l.b16 %v11925
          %v12061 = vunpack.c.l.b16 %v11926
          %v12062 = vunpack.c.l.b16 %v11927
          %v12063 = vunpack.c.l.b16 %v11928
          %v12064 = vunpack.c.l.b16 %v11929
          %v12065 = vunpack.c.l.b16 %v11930
          %v12066 = vunpack.c.l.b16 %v11931
          %v12067 = vunpack.c.l.b16 %v11932
          %v12068 = vunpack.c.l.b16 %v11933
          %v12069 = vunpack.c.l.b16 %v11934
          %v12070 = vunpack.c.l.b16 %v11935
          %v12071 = vunpack.c.l.b16 %v11936
          %v12072 = vunpack.c.l.b16 %v11937
          %v12073 = vunpack.c.l.b16 %v11938
          %v12074 = vunpack.c.l.b16 %v11939
          %v12075 = vunpack.c.l.b16 %v11940
          %v12076 = vunpack.c.l.b16 %v11941
          %v12077 = vunpack.c.l.b16 %v11942
          %v12078 = vunpack.c.l.b16 %v11943
          %v12079 = vunpack.c.l.b16 %v11944
          %v12080 = vpack.c.b16 %v12017, %v12016
          %v12081 = vpack.c.b16 %v12019, %v12018
          %v12082 = vpack.c.b16 %v12021, %v12020
          %v12083 = vpack.c.b16 %v12023, %v12022
          %v12084 = vpack.c.b16 %v12025, %v12024
          %v12085 = vpack.c.b16 %v12027, %v12026
          %v12086 = vpack.c.b16 %v12029, %v12028
          %v12087 = vpack.c.b16 %v12031, %v12030
          %v12088 = vpack.c.b16 %v12033, %v12032
          %v12089 = vpack.c.b16 %v12035, %v12034
          %v12090 = vpack.c.b16 %v12037, %v12036
          %v12091 = vpack.c.b16 %v12039, %v12038
          %v12092 = vpack.c.b16 %v12041, %v12040
          %v12093 = vpack.c.b16 %v12043, %v12042
          %v12094 = vpack.c.b16 %v12045, %v12044
          %v12095 = vpack.c.b16 %v12047, %v12046
          %v12096 = vpack.c.b16 %v12049, %v12048
          %v12097 = vpack.c.b16 %v12051, %v12050
          %v12098 = vpack.c.b16 %v12053, %v12052
          %v12099 = vpack.c.b16 %v12055, %v12054
          %v12100 = vpack.c.b16 %v12057, %v12056
          %v12101 = vpack.c.b16 %v12059, %v12058
          %v12102 = vpack.c.b16 %v12061, %v12060
          %v12103 = vpack.c.b16 %v12063, %v12062
          %v12104 = vpack.c.b16 %v12065, %v12064
          %v12105 = vpack.c.b16 %v12067, %v12066
          %v12106 = vpack.c.b16 %v12069, %v12068
          %v12107 = vpack.c.b16 %v12071, %v12070
          %v12108 = vpack.c.b16 %v12073, %v12072
          %v12109 = vpack.c.b16 %v12075, %v12074
          %v12110 = vpack.c.b16 %v12077, %v12076
          %v12111 = vpack.c.b16 %v12079, %v12078
          %12144 = vmatprep.subr.bf16.mxu0 0
          %12145 = vmatpush1.bf16.msra.mxu0 %v12080
          %12146 = vmatprep.subr.bf16.mxu0 0
          %12147 = vmatpush1.bf16.msra.mxu0 %v12081
          %12148 = vmatprep.subr.bf16.mxu0 0
          %12149 = vmatpush1.bf16.msra.mxu0 %v12082
          %12150 = vmatprep.subr.bf16.mxu0 0
          %12151 = vmatpush1.bf16.msra.mxu0 %v12083
          %12152 = vmatprep.subr.bf16.mxu0 0
          %12153 = vmatpush1.bf16.msra.mxu0 %v12084
          %12154 = vmatprep.subr.bf16.mxu0 0
          %12155 = vmatpush1.bf16.msra.mxu0 %v12085
          %12156 = vmatprep.subr.bf16.mxu0 0
          %12157 = vmatpush1.bf16.msra.mxu0 %v12086
          %12158 = vmatprep.subr.bf16.mxu0 0
          %12159 = vmatpush1.bf16.msra.mxu0 %v12087
          %12160 = vmatprep.subr.bf16.mxu0 0
          %12161 = vmatpush1.bf16.msra.mxu0 %v12088
          %12162 = vmatprep.subr.bf16.mxu0 0
          %12163 = vmatpush1.bf16.msra.mxu0 %v12089
          %12164 = vmatprep.subr.bf16.mxu0 0
          %12165 = vmatpush1.bf16.msra.mxu0 %v12090
          %12166 = vmatprep.subr.bf16.mxu0 0
          %12167 = vmatpush1.bf16.msra.mxu0 %v12091
          %12168 = vmatprep.subr.bf16.mxu0 0
          %12169 = vmatpush1.bf16.msra.mxu0 %v12092
          %12170 = vmatprep.subr.bf16.mxu0 0
          %12171 = vmatpush1.bf16.msra.mxu0 %v12093
          %12172 = vmatprep.subr.bf16.mxu0 0
          %12173 = vmatpush1.bf16.msra.mxu0 %v12094
          %12174 = vmatprep.subr.bf16.mxu0 0
          %12175 = vmatpush1.bf16.msra.mxu0 %v12095
          %12176 = vmatprep.mubr.f32.mxu0 %v11878
          %12177 = vmatmul.mubr.f32.gmra.mrb[0].mxu0 %v11877
          %v12178 = vpop.f32.mrb[0].mxu0
          %v12179 = vadd.f32 %v11950, %v12178
          %v12180 = vpop.f32.mrb[0].mxu0
          %12181 = vdwg.mxu0
          %12182 = vmatprep.subr.bf16.mxu0 0
          %12183 = vmatpush1.bf16.msra.mxu0 %v12096
          %12184 = vmatprep.subr.bf16.mxu0 0
          %12185 = vmatpush1.bf16.msra.mxu0 %v12097
          %12186 = vmatprep.subr.bf16.mxu0 0
          %12187 = vmatpush1.bf16.msra.mxu0 %v12098
          %12188 = vmatprep.subr.bf16.mxu0 0
          %12189 = vmatpush1.bf16.msra.mxu0 %v12099
          %12190 = vmatprep.subr.bf16.mxu0 0
          %12191 = vmatpush1.bf16.msra.mxu0 %v12100
          %12192 = vmatprep.subr.bf16.mxu0 0
          %12193 = vmatpush1.bf16.msra.mxu0 %v12101
          %12194 = vmatprep.subr.bf16.mxu0 0
          %12195 = vmatpush1.bf16.msra.mxu0 %v12102
          %12196 = vmatprep.subr.bf16.mxu0 0
          %12197 = vmatpush1.bf16.msra.mxu0 %v12103
          %12198 = vmatprep.subr.bf16.mxu0 0
          %12199 = vmatpush1.bf16.msra.mxu0 %v12104
          %12200 = vmatprep.subr.bf16.mxu0 0
          %12201 = vmatpush1.bf16.msra.mxu0 %v12105
          %12202 = vmatprep.subr.bf16.mxu0 0
          %12203 = vmatpush1.bf16.msra.mxu0 %v12106
          %12204 = vmatprep.subr.bf16.mxu0 0
          %12205 = vmatpush1.bf16.msra.mxu0 %v12107
          %12206 = vmatprep.subr.bf16.mxu0 0
          %12207 = vmatpush1.bf16.msra.mxu0 %v12108
          %12208 = vmatprep.subr.bf16.mxu0 0
          %12209 = vmatpush1.bf16.msra.mxu0 %v12109
          %12210 = vmatprep.subr.bf16.mxu0 0
          %12211 = vmatpush1.bf16.msra.mxu0 %v12110
          %12212 = vmatprep.subr.bf16.mxu0 0
          %12213 = vmatpush1.bf16.msra.mxu0 %v12111
          %12214 = vmatprep.mubr.f32.mxu0 %v11880
          %12215 = vmatmul.mubr.f32.gmra.mrb[0].mxu0 %v11879
          %v12216 = vpop.f32.mrb[0].mxu0
          %v12217 = vadd.f32 %v12179, %v12216
          %v12218 = vpop.f32.mrb[0].mxu0
          %12219 = vdwg.mxu0
          %v12220 = vmax.f32 %v12217, 0.0
          %v12221 = vld [vmem:[#allocation15] sm:$0xf]
          %v12222 = vld [vmem:[#allocation15 + $0x4] sm:$0xf]
          %v12223 = vld [vmem:[#allocation15 + $0x8] sm:$0xf]
          %v12224 = vld [vmem:[#allocation15 + $0xc] sm:$0xf]
          %v12225 = vld [vmem:[#allocation15 + $0x10] sm:$0xf]
          %v12226 = vld [vmem:[#allocation15 + $0x14] sm:$0xf]
          %v12227 = vld [vmem:[#allocation15 + $0x18] sm:$0xf]
          %v12228 = vld [vmem:[#allocation15 + $0x1c] sm:$0xf]
          %v12229 = vld [vmem:[#allocation15 + $0x20] sm:$0xf]
          %v12230 = vld [vmem:[#allocation15 + $0x24] sm:$0xf]
          %v12231 = vld [vmem:[#allocation15 + $0x28] sm:$0xf]
          %v12232 = vld [vmem:[#allocation15 + $0x2c] sm:$0xf]
          %v12233 = vld [vmem:[#allocation15 + $0x30] sm:$0xf]
          %v12234 = vld [vmem:[#allocation15 + $0x34] sm:$0xf]
          %v12235 = vld [vmem:[#allocation15 + $0x38] sm:$0xf]
          %v12236 = vld [vmem:[#allocation15 + $0x3c] sm:$0xf]
          %v12237 = vld [vmem:[#allocation17] sm:$0x1]
          %v12239 = vlaneseq
          %v12240 = vshrl.u32 %v12239, 7
          %v12241 = vsub.s32 0, %v12240
          %v12242 = vrot.slane %v12237, %v12241
          %v12260 = vunpack.c.l.b16 %v12221
          %v12261 = vunpack.c.l.b16 %v12222
          %v12262 = vunpack.c.l.b16 %v12223
          %v12263 = vunpack.c.l.b16 %v12224
          %v12264 = vunpack.c.l.b16 %v12225
          %v12265 = vunpack.c.l.b16 %v12226
          %v12266 = vunpack.c.l.b16 %v12227
          %v12267 = vunpack.c.l.b16 %v12228
          %v12268 = vunpack.c.l.b16 %v12229
          %v12269 = vunpack.c.l.b16 %v12230
          %v12270 = vunpack.c.l.b16 %v12231
          %v12271 = vunpack.c.l.b16 %v12232
          %v12272 = vunpack.c.l.b16 %v12233
          %v12273 = vunpack.c.l.b16 %v12234
          %v12274 = vunpack.c.l.b16 %v12235
          %v12275 = vunpack.c.l.b16 %v12236
          %v12276 = vpack.c.b16 %v12261, %v12260
          %v12277 = vpack.c.b16 %v12263, %v12262
          %v12278 = vpack.c.b16 %v12265, %v12264
          %v12279 = vpack.c.b16 %v12267, %v12266
          %v12280 = vpack.c.b16 %v12269, %v12268
          %v12281 = vpack.c.b16 %v12271, %v12270
          %v12282 = vpack.c.b16 %v12273, %v12272
          %v12283 = vpack.c.b16 %v12275, %v12274
          %12292 = vmatprep.subr.bf16.mxu0 0
          %12293 = vmatpush1.bf16.msra.mxu0 %v12276
          %12294 = vmatprep.subr.bf16.mxu0 0
          %12295 = vmatpush1.bf16.msra.mxu0 %v12277
          %12296 = vmatprep.subr.bf16.mxu0 0
          %12297 = vmatpush1.bf16.msra.mxu0 %v12278
          %12298 = vmatprep.subr.bf16.mxu0 0
          %12299 = vmatpush1.bf16.msra.mxu0 %v12279
          %12300 = vmatprep.subr.bf16.mxu0 0
          %12301 = vmatpush1.bf16.msra.mxu0 %v12280
          %12302 = vmatprep.subr.bf16.mxu0 0
          %12303 = vmatpush1.bf16.msra.mxu0 %v12281
          %12304 = vmatprep.subr.bf16.mxu0 0
          %12305 = vmatpush1.bf16.msra.mxu0 %v12282
          %12306 = vmatprep.subr.bf16.mxu0 0
          %12307 = vmatpush1.bf16.msra.mxu0 %v12283
          %12308 = vmatprep.subr.bf16.mxu0 0
          %12309 = vmatpush1.bf16.msra.mxu0 0
          %12310 = vmatprep.subr.bf16.mxu0 0
          %12311 = vmatpush1.bf16.msra.mxu0 0
          %12312 = vmatprep.subr.bf16.mxu0 0
          %12313 = vmatpush1.bf16.msra.mxu0 0
          %12314 = vmatprep.subr.bf16.mxu0 0
          %12315 = vmatpush1.bf16.msra.mxu0 0
          %12316 = vmatprep.subr.bf16.mxu0 0
          %12317 = vmatpush1.bf16.msra.mxu0 0
          %12318 = vmatprep.subr.bf16.mxu0 0
          %12319 = vmatpush1.bf16.msra.mxu0 0
          %12320 = vmatprep.subr.bf16.mxu0 0
          %12321 = vmatpush1.bf16.msra.mxu0 0
          %12322 = vmatprep.subr.bf16.mxu0 0
          %12323 = vmatpush1.bf16.msra.mxu0 0
          %12324 = vmatprep.mubr.f32.mxu0 0.0
          %12325 = vmatmul.mubr.f32.gmra.mrb[0].mxu0 %v12220
          %v12326 = vpop.f32.mrb[0].mxu0
          %v12327 = vadd.f32 %v12242, %v12326
          %v12328 = vpop.f32.mrb[0].mxu0
          %12329 = vdwg.mxu0
          %v12330 = vmax.f32 %v12327, 0.0
          %v12331 = vld [vmem:[#allocation18] sm:$0xf]
          %v12332 = vld [vmem:[#allocation18 + $0x4] sm:$0xf]
          %v12333 = vld [vmem:[#allocation18 + $0x8] sm:$0xf]
          %v12334 = vld [vmem:[#allocation18 + $0xc] sm:$0xf]
          %v12335 = vld [vmem:[#allocation18 + $0x10] sm:$0xf]
          %v12336 = vld [vmem:[#allocation18 + $0x14] sm:$0xf]
          %v12337 = vld [vmem:[#allocation18 + $0x18] sm:$0xf]
          %v12338 = vld [vmem:[#allocation18 + $0x1c] sm:$0xf]
          %v12339 = vld [vmem:[#allocation18 + $0x20] sm:$0xf]
          %v12340 = vld [vmem:[#allocation18 + $0x24] sm:$0xf]
          %v12341 = vld [vmem:[#allocation18 + $0x28] sm:$0xf]
          %v12342 = vld [vmem:[#allocation18 + $0x2c] sm:$0xf]
          %v12343 = vld [vmem:[#allocation18 + $0x30] sm:$0xf]
          %v12344 = vld [vmem:[#allocation18 + $0x34] sm:$0xf]
          %v12345 = vld [vmem:[#allocation18 + $0x38] sm:$0xf]
          %v12346 = vld [vmem:[#allocation18 + $0x3c] sm:$0xf]
          %v12347 = vld [vmem:[#allocation20] sm:$0x1]
          %v12349 = vlaneseq
          %v12350 = vshrl.u32 %v12349, 7
          %v12351 = vsub.s32 0, %v12350
          %v12352 = vrot.slane %v12347, %v12351
          %v12370 = vunpack.c.l.b16 %v12331
          %v12371 = vunpack.c.l.b16 %v12332
          %v12372 = vunpack.c.l.b16 %v12333
          %v12373 = vunpack.c.l.b16 %v12334
          %v12374 = vunpack.c.l.b16 %v12335
          %v12375 = vunpack.c.l.b16 %v12336
          %v12376 = vunpack.c.l.b16 %v12337
          %v12377 = vunpack.c.l.b16 %v12338
          %v12378 = vunpack.c.l.b16 %v12339
          %v12379 = vunpack.c.l.b16 %v12340
          %v12380 = vunpack.c.l.b16 %v12341
          %v12381 = vunpack.c.l.b16 %v12342
          %v12382 = vunpack.c.l.b16 %v12343
          %v12383 = vunpack.c.l.b16 %v12344
          %v12384 = vunpack.c.l.b16 %v12345
          %v12385 = vunpack.c.l.b16 %v12346
          %v12386 = vpack.c.b16 %v12371, %v12370
          %v12387 = vpack.c.b16 %v12373, %v12372
          %v12388 = vpack.c.b16 %v12375, %v12374
          %v12389 = vpack.c.b16 %v12377, %v12376
          %v12390 = vpack.c.b16 %v12379, %v12378
          %v12391 = vpack.c.b16 %v12381, %v12380
          %v12392 = vpack.c.b16 %v12383, %v12382
          %v12393 = vpack.c.b16 %v12385, %v12384
          %12402 = vmatprep.subr.bf16.mxu0 0
          %12403 = vmatpush1.bf16.msra.mxu0 %v12386
          %12404 = vmatprep.subr.bf16.mxu0 0
          %12405 = vmatpush1.bf16.msra.mxu0 %v12387
          %12406 = vmatprep.subr.bf16.mxu0 0
          %12407 = vmatpush1.bf16.msra.mxu0 %v12388
          %12408 = vmatprep.subr.bf16.mxu0 0
          %12409 = vmatpush1.bf16.msra.mxu0 %v12389
          %12410 = vmatprep.subr.bf16.mxu0 0
          %12411 = vmatpush1.bf16.msra.mxu0 %v12390
          %12412 = vmatprep.subr.bf16.mxu0 0
          %12413 = vmatpush1.bf16.msra.mxu0 %v12391
          %12414 = vmatprep.subr.bf16.mxu0 0
          %12415 = vmatpush1.bf16.msra.mxu0 %v12392
          %12416 = vmatprep.subr.bf16.mxu0 0
          %12417 = vmatpush1.bf16.msra.mxu0 %v12393
          %12418 = vmatprep.subr.bf16.mxu0 0
          %12419 = vmatpush1.bf16.msra.mxu0 0
          %12420 = vmatprep.subr.bf16.mxu0 0
          %12421 = vmatpush1.bf16.msra.mxu0 0
          %12422 = vmatprep.subr.bf16.mxu0 0
          %12423 = vmatpush1.bf16.msra.mxu0 0
          %12424 = vmatprep.subr.bf16.mxu0 0
          %12425 = vmatpush1.bf16.msra.mxu0 0
          %12426 = vmatprep.subr.bf16.mxu0 0
          %12427 = vmatpush1.bf16.msra.mxu0 0
          %12428 = vmatprep.subr.bf16.mxu0 0
          %12429 = vmatpush1.bf16.msra.mxu0 0
          %12430 = vmatprep.subr.bf16.mxu0 0
          %12431 = vmatpush1.bf16.msra.mxu0 0
          %12432 = vmatprep.subr.bf16.mxu0 0
          %12433 = vmatpush1.bf16.msra.mxu0 0
          %12434 = vmatprep.mubr.f32.mxu0 0.0
          %12435 = vmatmul.mubr.f32.gmra.mrb[0].mxu0 %v12330
          %v12436 = vpop.f32.mrb[0].mxu0
          %v12437 = vadd.f32 %v12352, %v12436
          %v12438 = vpop.f32.mrb[0].mxu0
          %12439 = vdwg.mxu0
          %12440 = vst [vmem:[#allocation21] sm:$0xff] %v12437
        $region116: #{tpu_custom_call.1} parent=63 // pred_fallthru
          _
        // Predicated region
        $region117: #{tpu_custom_call.1} parent=63 // pred_check
          %p12441 = pneg %p287
        $region118: #{tpu_custom_call.1} parent=63 // pred_check_branch
          %12443 = sbr.rel (%p12441) target = $region120
        $region119: #{tpu_custom_call.1} parent=63 // pred_region
          %s12445 = ssub.s32 128, 128
          %12446 = vsyncadd [#allocation5], %s12445
          %s12448 = sshll.u32 [#allocation21], 4
          %s12449 = int_to_ptr.vmem [resolvable:$true] %s12448
          %12451 = dma.vmem_to_hbm [thread:$0]  %s12449, 128, %s11, [#allocation5]
        $region120: #{tpu_custom_call.1} parent=63 // pred_fallthru
          _
        // Predicated region
        $region121: #{tpu_custom_call.1} parent=63 // pred_check
          %p12452 = pneg %p287
        $region122: #{tpu_custom_call.1} parent=63 // pred_check_branch
          %12454 = sbr.rel (%p12452) target = $region124
        $region123: #{tpu_custom_call.1} parent=63 // pred_region
          %12455 = dma.done [#allocation5], 128
        $region124: #{tpu_custom_call.1} parent=63 // pred_fallthru
          _
      $region64: #{tpu_custom_call.1} parent=5 // pred_fallthru
        _
      %p12456 = scmp.le.s32.totalorder 2, %s28
      // Predicated region
      $region125: #{tpu_custom_call.1} parent=5 // pred_check
        %p12457 = pneg %p12456
      $region126: #{tpu_custom_call.1} parent=5 // pred_check_branch
        %12459 = sbr.rel (%p12457) target = $region128
      $region127: #{tpu_custom_call.1} parent=5 // pred_region
        %s12460 = ssub.s32 %s28, 2
      $region128: #{tpu_custom_call.1} parent=5 // pred_fallthru
        _
    $region6: #{tpu_custom_call.1} parent=1 // loop_footer
      %s32 = sadd.s32 1, %s28
    $region7: #{tpu_custom_call.1} parent=1 // loop_footer_branch
      %27 = sbr.rel target = $region3
    $region8: #{tpu_custom_call.1} parent=1 // loop_exit
      _
    %12461 = vsyncpa [#allocation4], 1
    %s12462 = scalar_lea.sflag [#allocation4], 1
    %12463 = vsyncpa %s12462, 1
    %12464 = vsyncpa [#allocation7], 1
    %s12465 = scalar_lea.sflag [#allocation7], 1
    %12466 = vsyncpa %s12465, 1
    %12467 = vsyncpa [#allocation10], 1
    %12468 = vsyncpa [#allocation13], 1
    %12469 = vsyncpa [#allocation16], 1
    %12470 = vsyncpa [#allocation19], 1
    %12471 = vsyncpa [#allocation5], 1
    %s12472 = scalar_lea.sflag [#allocation5], 1
    %12473 = vsyncpa %s12472, 1

</llo_original>
